<compile_context>
chip_gen: v6e
topology: v6e:2x2x1
jax: 0.10.0
libtpu: 0.0.40
codegen_flags: <defaults>
</compile_context>

<pallas_src>
import functools
import math

import jax
import jax.numpy as jnp
from jax.experimental import pallas as pl
from jax.experimental.pallas import tpu as pltpu


_GELU_C = math.sqrt(2.0 / math.pi)
_EPS = 1e-5


# ----------------------------------------------------------------------------
# Generation-aware tuning knobs.
# ----------------------------------------------------------------------------

def _tpu_generation_defaults():
    """Return (vmem_limit_bytes, row_tile) tuned per TPU generation."""
    cap = None
    try:
        get_info = getattr(pltpu, "get_tpu_info", None)
        if get_info is not None:
            cap = int(get_info().vmem_capacity_bytes)
    except Exception:
        cap = None
    if cap is None:
        return 32 * 1024 * 1024, 512                    # conservative fallback
    if cap <= 64 * 1024 * 1024:                         # v7x-class: 64 MiB / TC
        return min(44 * 1024 * 1024, int(cap * 0.7)), 256
    return 96 * 1024 * 1024, 512                        # v5e / v6e: 128 MiB


_VMEM_LIMIT, _TM = _tpu_generation_defaults()

_CONST_PIPE = None  # pl.Buffered(1) if supported; probed in _init_const_pipeline_mode


def _init_const_pipeline_mode():
    """Probe single-buffered pipeline mode for constant weight blocks.

    Constant blocks (index_map always (0, 0)) never change, so double
    buffering them is pure VMEM waste.  Fall back silently if unsupported.
    """
    global _CONST_PIPE
    try:
        buffered = pl.Buffered(1)

        def probe_kernel(x_ref, o_ref):
            o_ref[...] = x_ref[...] + 1.0

        probe = pl.pallas_call(
            probe_kernel,
            grid=(2,),
            in_specs=[pl.BlockSpec((8, 128), lambda i: (0, 0),
                                   pipeline_mode=buffered)],
            out_specs=pl.BlockSpec((8, 128), lambda i: (i, 0)),
            out_shape=jax.ShapeDtypeStruct((16, 128), jnp.float32),
        )
        jax.block_until_ready(probe(jnp.zeros((8, 128), jnp.float32)))
        _CONST_PIPE = buffered
    except Exception:
        _CONST_PIPE = None


# ----------------------------------------------------------------------------
# In-kernel helpers (all math in f32; bf16 only at the MXU boundary).
# ----------------------------------------------------------------------------

def _gelu(x):
    return 0.5 * x * (1.0 + jnp.tanh(_GELU_C * (x + 0.044715 * x * x * x)))


def _layernorm(x, g, b):
    mu = jnp.mean(x, axis=-1, keepdims=True)
    var = jnp.mean(jnp.square(x - mu), axis=-1, keepdims=True)
    return (x - mu) * jax.lax.rsqrt(var + _EPS) * g + b


def _cparams(sem):
    return pltpu.CompilerParams(dimension_semantics=tuple(sem),
                                vmem_limit_bytes=_VMEM_LIMIT)


def _round_up(x, m):
    return -(-x // m) * m


def _row_tiles(m, tm=None):
    """Row-block size; force >=2 tiles (8-aligned) so v7x's 2nd TC gets work."""
    tm = _TM if tm is None else tm
    if m <= 16:
        return m, 1
    bm = min(tm, m, _round_up((m + 1) // 2, 8))
    return bm, pl.cdiv(m, bm)


def _ffn_f_tiles(f):
    """F-tile for the fused FFN: largest divisor of F in {1024,512,256,128}."""
    for cand in (1024, 512, 256, 128):
        if f > cand and f % cand == 0:
            return cand, f // cand
    return f, 1


def _const_spec(shape):
    """BlockSpec for a weight that is identical at every grid step."""
    nd = len(shape)
    idx = lambda *_: (0,) * nd
    if _CONST_PIPE is not None and nd == 2:     # probed only for 2-D blocks
        return pl.BlockSpec(shape, idx, pipeline_mode=_CONST_PIPE)
    return pl.BlockSpec(shape, idx)


def _row_call(kernel, row_args, const_args, n_cols_out, tm=None):
    """Run `kernel` over row tiles of the leading-M 2-D arrays in row_args."""
    M = row_args[0].shape[0]
    bm, gm = _row_tiles(M, tm)
    in_specs = ([pl.BlockSpec((bm, a.shape[1]), lambda i: (i, 0)) for a in row_args]
                + [_const_spec(c.shape) for c in const_args])
    out_spec = pl.BlockSpec((bm, n_cols_out), lambda i: (i, 0))
    return pl.pallas_call(
        kernel,
        grid=(gm,),
        in_specs=in_specs,
        out_specs=out_spec,
        out_shape=jax.ShapeDtypeStruct((M, n_cols_out), jnp.float32),
        compiler_params=_cparams(("parallel",)),
    )(*row_args, *const_args)


# ----------------------------------------------------------------------------
# Row-wise kernels (feature LayerNorm (+ post_extract_proj)).
# ----------------------------------------------------------------------------

def _norm_kernel(x_ref, g_ref, be_ref, o_ref):
    o_ref[...] = _layernorm(x_ref[...], g_ref[...], be_ref[...])


def _norm_linear_kernel(x_ref, g_ref, be_ref, w_ref, b_ref, o_ref):
    """LayerNorm(x) @ w + b  (feature LN fused with post_extract_proj)."""
    x = _layernorm(x_ref[...], g_ref[...], be_ref[...])
    o_ref[...] = jnp.dot(x.astype(jnp.bfloat16), w_ref[...],
                         preferred_element_type=jnp.float32) + b_ref[...]


# ----------------------------------------------------------------------------
# Fused attention block: QKV proj + MHA + out-proj + residual + LN1.
# ----------------------------------------------------------------------------

def _attn_kernel(x_ref, wqkv_ref, bqkv_ref, wo_ref, bo_ref, g_ref, be_ref,
                 o_ref, *, heads, dh, scale):
    x = x_ref[0]                                          # (T, D) f32
    qkv = jnp.dot(x.astype(jnp.bfloat16), wqkv_ref[...],
                  preferred_element_type=jnp.float32) + bqkv_ref[...]
    acc = None
    for h in range(heads):                                # static head loop
        band = qkv[:, h * 3 * dh:(h + 1) * 3 * dh]        # head-major [q|k|v]
        q = (band[:, 0 * dh:1 * dh] * scale).astype(jnp.bfloat16)
        k = band[:, 1 * dh:2 * dh].astype(jnp.bfloat16)
        v = band[:, 2 * dh:3 * dh].astype(jnp.bfloat16)
        s = jax.lax.dot_general(q, k, (((1,), (1,)), ((), ())),
                                preferred_element_type=jnp.float32)   # (T, T)
        m = jnp.max(s, axis=-1, keepdims=True)
        p = jnp.exp(s - m)
        p = p * pl.reciprocal(jnp.sum(p, axis=-1, keepdims=True), approx=True)
        oh = jnp.dot(p.astype(jnp.bfloat16), v,
                     preferred_element_type=jnp.float32)              # (T, dh)
        contrib = jnp.dot(oh.astype(jnp.bfloat16),
                          wo_ref[h * dh:(h + 1) * dh, :],             # out-proj slice
                          preferred_element_type=jnp.float32)
        acc = contrib if acc is None else acc + contrib
    y = acc + bo_ref[...] + x                              # residual
    o_ref[0] = _layernorm(y, g_ref[...], be_ref[...])      # LN1


def attention_block(x, p, heads):
    B, T, D = x.shape
    dh = D // heads
    kern = functools.partial(_attn_kernel, heads=heads, dh=dh,
                             scale=1.0 / math.sqrt(dh))
    return pl.pallas_call(
        kern,
        grid=(B,),
        in_specs=[pl.BlockSpec((1, T, D), lambda b: (b, 0, 0)),
                  _const_spec((D, 3 * D)),
                  _const_spec((1, 3 * D)),
                  _const_spec((D, D)),
                  _const_spec((1, D)),
                  _const_spec((1, D)),
                  _const_spec((1, D))],
        out_specs=pl.BlockSpec((1, T, D), lambda b: (b, 0, 0)),
        out_shape=jax.ShapeDtypeStruct((B, T, D), jnp.float32),
        compiler_params=_cparams(("parallel",)),
    )(x, p["wqkv"], p["bqkv"], p["wo"], p["bo"], p["ln1_g"], p["ln1_b"])


# ----------------------------------------------------------------------------
# Fused FFN block (fc1 + GELU + fc2 + residual + LN2), tiled over F.
# ----------------------------------------------------------------------------

def _ffn_kernel(x_ref, w1_ref, b1_ref, w2_ref, b2_ref, g_ref, be_ref,
                o_ref, acc_ref):
    j = pl.program_id(1)

    @pl.when(j == 0)
    def _():
        acc_ref[...] = jnp.zeros_like(acc_ref)

    h = jnp.dot(x_ref[...].astype(jnp.bfloat16), w1_ref[...],
                preferred_element_type=jnp.float32) + b1_ref[...]
    h = _gelu(h)
    acc_ref[...] += jnp.dot(h.astype(jnp.bfloat16), w2_ref[...],
                            preferred_element_type=jnp.float32)

    @pl.when(j == pl.num_programs(1) - 1)
    def _():
        y = acc_ref[...] + b2_ref[...] + x_ref[...]        # bias + residual
        o_ref[...] = _layernorm(y, g_ref[...], be_ref[...])


def ffn_block(x2d, p):
    M, D = x2d.shape
    F = p["fc1_w"].shape[1]
    bm, gm = _row_tiles(M)
    bf, gf = _ffn_f_tiles(F)
    return pl.pallas_call(
        _ffn_kernel,
        grid=(gm, gf),
        in_specs=[pl.BlockSpec((bm, D), lambda i, j: (i, 0)),
                  pl.BlockSpec((D, bf), lambda i, j: (0, j)),
                  pl.BlockSpec((1, bf), lambda i, j: (0, j)),
                  pl.BlockSpec((bf, D), lambda i, j: (j, 0)),
                  _const_spec((1, D)),
                  _const_spec((1, D)),
                  _const_spec((1, D))],
        out_specs=pl.BlockSpec((bm, D), lambda i, j: (i, 0)),
        out_shape=jax.ShapeDtypeStruct((M, D), jnp.float32),
        scratch_shapes=[pltpu.VMEM((bm, D), jnp.float32)],
        compiler_params=_cparams(("parallel", "arbitrary")),
    )(x2d, p["fc1_w"], p["fc1_b"], p["fc2_w"], p["fc2_b"],
      p["ln2_g"], p["ln2_b"])


def encoder_layer(x, p, heads):
    """Post-LN transformer layer (layer_norm_first=False), 2 pallas_calls."""
    B, T, D = x.shape
    x = attention_block(x, p, heads)
    xf = ffn_block(x.reshape(B * T, D), p)
    return xf.reshape(B, T, D)


# ----------------------------------------------------------------------------
# Positional grouped conv + SamePad + GELU + residual + encoder LayerNorm.
# ----------------------------------------------------------------------------

def _posconv_kernel(xpad_ref, w_ref, b_ref, g_ref, be_ref, o_ref,
                    *, k, T, pad, groups, dg):
    accs = [None] * groups
    for t in range(k):                                    # static tap loop
        xt = xpad_ref[0, t:t + T, :].astype(jnp.bfloat16)  # (T, D) shifted rows
        for gi in range(groups):                          # static group loop
            xg = xt[:, gi * dg:(gi + 1) * dg]             # (T, Dg)
            c = jnp.dot(xg, w_ref[t, gi],                 # (Dg, Dg) group tap
                        preferred_element_type=jnp.float32)
            accs[gi] = c if accs[gi] is None else accs[gi] + c
    y = jnp.concatenate(accs, axis=-1) + b_ref[...]
    y = _gelu(y)
    y = y + xpad_ref[0, pad:pad + T, :]                   # residual (from pad buf)
    o_ref[0] = _layernorm(y, g_ref[...], be_ref[...])     # encoder LayerNorm


def pos_conv_block(x, p, k, groups):
    """x: (B,T,D) -> LayerNorm(x + GELU(SamePad(grouped_conv(x)))), fused."""
    B, T, D = x.shape
    dg = D // groups
    pad = k // 2
    xpad = jnp.pad(x, ((0, 0), (pad, pad), (0, 0)))
    Tp = T + 2 * pad
    kern = functools.partial(_posconv_kernel, k=k, T=T, pad=pad,
                             groups=groups, dg=dg)
    return pl.pallas_call(
        kern,
        grid=(B,),
        in_specs=[pl.BlockSpec((1, Tp, D), lambda b: (b, 0, 0)),
                  _const_spec((k, groups, dg, dg)),
                  _const_spec((1, D)),
                  _const_spec((1, D)),
                  _const_spec((1, D))],
        out_specs=pl.BlockSpec((1, T, D), lambda b: (b, 0, 0)),
        out_shape=jax.ShapeDtypeStruct((B, T, D), jnp.float32),
        compiler_params=_cparams(("parallel",)),
    )(xpad, p["pos_w"], p["pos_b"], p["enc_ln_g"], p["enc_ln_b"])


# ----------------------------------------------------------------------------
# Conv feature extraction: per-batch shifted-tap conv with stride folded into
# the weight ("phase" decomposition), no im2col inflation.
# ----------------------------------------------------------------------------

def _conv_gn_gelu_kernel(x_ref, w_ref, g_ref, b_ref, o_ref, *, kd, To):
    acc = jnp.dot(x_ref[0, 0:To, :].astype(jnp.bfloat16), w_ref[0],
                  preferred_element_type=jnp.float32)
    for d in range(1, kd):                                # static phase-tap loop
        acc += jnp.dot(x_ref[0, d:d + To, :].astype(jnp.bfloat16), w_ref[d],
                       preferred_element_type=jnp.float32)
    mu = jnp.mean(acc, axis=0, keepdims=True)             # GroupNorm(C, C): per
    var = jnp.mean(jnp.square(acc - mu), axis=0, keepdims=True)  # channel over T
    y = (acc - mu) * jax.lax.rsqrt(var + _EPS) * g_ref[...] + b_ref[...]
    o_ref[0] = _gelu(y)


def _conv_gelu_kernel(x_ref, w_ref, o_ref, *, kd, To):
    acc = jnp.dot(x_ref[0, 0:To, :].astype(jnp.bfloat16), w_ref[0],
                  preferred_element_type=jnp.float32)
    for d in range(1, kd):
        acc += jnp.dot(x_ref[0, d:d + To, :].astype(jnp.bfloat16), w_ref[d],
                       preferred_element_type=jnp.float32)
    o_ref[0] = _gelu(acc)


def conv_layer(x_cl, lp, k, s, out_dim, with_gn):
    """x_cl: (B,T,C) channels-last -> (B,To,O).  Weight is phase-folded."""
    B, T, C = x_cl.shape
    To = (T - k) // s + 1
    wf = lp["w"]                                          # (kd, s*C, O) bf16
    kd = wf.shape[0]
    Tpad = _round_up(T, s)
    if Tpad != T:
        x_cl = jnp.pad(x_cl, ((0, 0), (0, Tpad - T), (0, 0)))
    Trs = Tpad // s
    xr = x_cl.reshape(B, Trs, s * C)                      # free reshape
    if with_gn:
        kern = functools.partial(_conv_gn_gelu_kernel, kd=kd, To=To)
        extra = [lp["gn_g"], lp["gn_b"]]
        extra_specs = [_const_spec((1, out_dim)), _const_spec((1, out_dim))]
    else:
        kern = functools.partial(_conv_gelu_kernel, kd=kd, To=To)
        extra, extra_specs = [], []
    return pl.pallas_call(
        kern,
        grid=(B,),
        in_specs=[pl.BlockSpec((1, Trs, s * C), lambda b: (b, 0, 0)),
                  _const_spec((kd, s * C, out_dim))] + extra_specs,
        out_specs=pl.BlockSpec((1, To, out_dim), lambda b: (b, 0, 0)),
        out_shape=jax.ShapeDtypeStruct((B, To, out_dim), jnp.float32),
        compiler_params=_cparams(("parallel",)),
    )(xr, wf, *extra)


# ----------------------------------------------------------------------------
# Nonzero-mean pooling + final projection (fused).
# ----------------------------------------------------------------------------

def _pool_final_kernel(x_ref, w_ref, b_ref, o_ref):
    x = x_ref[0]                                          # (T, D)
    s = jnp.sum(x, axis=0, keepdims=True)
    cnt = jnp.sum((x != 0.0).astype(jnp.float32), axis=0, keepdims=True)
    pooled = s / cnt                                      # torch.div semantics
    o_ref[0] = jnp.dot(pooled, w_ref[...],
                       preferred_element_type=jnp.float32) + b_ref[...]


def pool_and_project(x, wf, bf):
    B, T, D = x.shape
    L = wf.shape[1]
    out = pl.pallas_call(
        _pool_final_kernel,
        grid=(B,),
        in_specs=[pl.BlockSpec((1, T, D), lambda b: (b, 0, 0)),
                  _const_spec((D, L)),
                  _const_spec((1, L))],
        out_specs=pl.BlockSpec((1, 1, L), lambda b: (b, 0, 0)),
        out_shape=jax.ShapeDtypeStruct((B, 1, L), jnp.float32),
        compiler_params=_cparams(("parallel",)),
    )(x, wf, bf)
    return out[:, 0, :]


# ----------------------------------------------------------------------------
# Forward pass.
# ----------------------------------------------------------------------------

def forward(params, source, cfg):
    B = source.shape[0]
    x = source.transpose(0, 2, 1)                         # (B, T, C), channels-last

    # --- ConvFeatureExtraction ('default': Conv1d no-bias, GN layer 0, GELU) ---
    for i, (dim, k, s) in enumerate(cfg["conv_layers"]):
        x = conv_layer(x, params["convs"][i], k, s, dim, with_gn=(i == 0))

    # --- LayerNorm(embed) (+ post_extract_proj, fused when present) ---
    _, T, E = x.shape
    D = cfg["embed_dim"]
    xflat = x.reshape(B * T, E)
    if "proj_w" in params:                                # embed != encoder dim
        xf = _row_call(_norm_linear_kernel, [xflat],
                       [params["ln_feat_g"], params["ln_feat_b"],
                        params["proj_w"], params["proj_b"]], D)
    else:
        xf = _row_call(_norm_kernel, [xflat],
                       [params["ln_feat_g"], params["ln_feat_b"]], E)

    # --- TransformerEncoder (layer_norm_first=False) ---
    x = pos_conv_block(xf.reshape(B, T, D), params,
                       cfg["conv_pos"], cfg["conv_pos_groups"])
    for lp in params["layers"]:
        x = encoder_layer(x, lp, cfg["heads"])

    # --- nonzero-mean pooling + final_proj (fused) ---
    logits = pool_and_project(x, params["final_w"], params["final_b"])
    return {"x": logits, "padding_mask": None}


# ----------------------------------------------------------------------------
# Deterministic parameter initialization (synthetic; shapes follow __init__).
# Matmul weights stored bf16; biases / affines f32 (1, N).
# ----------------------------------------------------------------------------

def _phase_fold_conv_weight(w, s):
    """torch Conv1d weight (O, C, k) -> stride-phase-folded (kd, s*C, O) bf16:
    W[d, r*C + c, o] = w[o, c, d*s + r]  (zero where d*s + r >= k)."""
    O, C, k = w.shape
    kd = -(-k // s)
    wf = jnp.zeros((kd, s * C, O), jnp.float32)
    for d in range(kd):
        for r in range(s):
            j = d * s + r
            if j < k:
                wf = wf.at[d, r * C:(r + 1) * C, :].set(w[:, :, j].T)
    return wf.astype(jnp.bfloat16)


def _grouped_posconv_weight(w, groups):
    """torch grouped Conv1d weight (D, D//groups, k) -> (k, G, Dg_in, Dg_out)."""
    D, Dg, k = w.shape
    wg = w.reshape(groups, Dg, Dg, k)                     # (g, o_local, c, k)
    wg = jnp.transpose(wg, (3, 0, 2, 1))                  # (k, g, c, o_local)
    return wg.astype(jnp.bfloat16)


def init_params(key, cfg):
    keys = iter(jax.random.split(key, 128))

    def nrm(shape, std=0.02):
        return jax.random.normal(next(keys), shape, jnp.float32) * std

    def row(n, v=0.0):
        return jnp.full((1, n), v, jnp.float32)

    D, F, H = cfg["embed_dim"], cfg["ffn_dim"], cfg["heads"]
    dh = D // H
    p = {"convs": []}
    in_c = cfg["in_d"]
    for i, (dim, k, s) in enumerate(cfg["conv_layers"]):
        w = nrm((dim, in_c, k), 0.05)                     # torch (O, C, k)
        layer = {"w": _phase_fold_conv_weight(w, s)}
        if i == 0:
            layer["gn_g"], layer["gn_b"] = row(dim, 1.0), row(dim, 0.0)
        p["convs"].append(layer)
        in_c = dim

    embed = cfg["conv_layers"][-1][0]
    p["ln_feat_g"], p["ln_feat_b"] = row(embed, 1.0), row(embed, 0.0)
    if embed != D:
        p["proj_w"] = nrm((embed, D)).astype(jnp.bfloat16)
        p["proj_b"] = row(D)

    pos_w = nrm((D, D // cfg["conv_pos_groups"], cfg["conv_pos"]), 0.05)
    p["pos_w"] = _grouped_posconv_weight(pos_w, cfg["conv_pos_groups"])
    p["pos_b"] = row(D)
    p["enc_ln_g"], p["enc_ln_b"] = row(D, 1.0), row(D, 0.0)

    layers = []
    for _ in range(cfg["layers"]):
        wq, wk, wv = nrm((D, D)), nrm((D, D)), nrm((D, D))
        # Head-major column layout: [q_h | k_h | v_h] per head (bqkv is zeros,
        # but real weights would need the same column permutation).
        cols = []
        for h in range(H):
            sl = slice(h * dh, (h + 1) * dh)
            cols += [wq[:, sl], wk[:, sl], wv[:, sl]]
        layers.append({
            "wqkv": jnp.concatenate(cols, axis=1).astype(jnp.bfloat16),
            "bqkv": row(3 * D),
            "wo": nrm((D, D)).astype(jnp.bfloat16), "bo": row(D),
            "ln1_g": row(D, 1.0), "ln1_b": row(D),
            "fc1_w": nrm((D, F)).astype(jnp.bfloat16), "fc1_b": row(F),
            "fc2_w": nrm((F, D)).astype(jnp.bfloat16), "fc2_b": row(D),
            "ln2_g": row(D, 1.0), "ln2_b": row(D),
        })
    p["layers"] = layers

    limit = math.sqrt(6.0 / (D + cfg["num_labels"]))      # xavier_uniform
    p["final_w"] = jax.random.uniform(next(keys), (D, cfg["num_labels"]),
                                      jnp.float32, -limit, limit)
    p["final_b"] = row(cfg["num_labels"])
    return p


if __name__ == "__main__":
    # Small configuration consistent with the module's constructor knobs.
    cfg = dict(
        conv_layers=[(32, 3, 2), (32, 3, 2), (32, 2, 2)],  # embed = 32
        in_d=12,
        embed_dim=64,        # encoder_embed_dim
        ffn_dim=128,         # encoder_ffn_embed_dim
        heads=4,             # encoder_attention_heads
        layers=2,            # encoder_layers
        conv_pos=8,
        conv_pos_groups=4,
        num_labels=1,
    )
    _init_const_pipeline_mode()          # probe pl.Buffered(1) support (eager)

    key = jax.random.PRNGKey(0)
    pkey, xkey = jax.random.split(key)
    params = init_params(pkey, cfg)

    B, T = 2, 128
    source = jax.random.normal(xkey, (B, cfg["in_d"], T), jnp.float32)

    fwd = jax.jit(functools.partial(forward, cfg=cfg))
    out = fwd(params, source)
    jax.block_until_ready(out["x"])
    assert out["x"].shape == (B, cfg["num_labels"])
    assert bool(jnp.all(jnp.isfinite(out["x"])))
    print("KERNEL_OK")
</pallas_src>

<mosaic_0001>
module attributes {stable_mosaic.version = 11 : i64} {
  func.func @probe_kernel(%arg0: i32, %arg1: memref<8x128xf32, #tpu.memory_space<vmem>>, %arg2: memref<8x128xf32, #tpu.memory_space<vmem>>) attributes {dimension_semantics = [#tpu.dimension_semantics<arbitrary>], iteration_bounds = array<i64: 2>, scalar_prefetch = 0 : i64, scratch_operands = 0 : i64, tpu.core_type = #tpu.core_type<tc>, window_params = [{pipeline_mode = #tpu.pipeline_mode<synchronous>, transform_indices = @transform_0, window_bounds = array<i64: 8, 128>}, {transform_indices = @transform_1, window_bounds = array<i64: 8, 128>}]} {
    %c0 = arith.constant 0 : index
    %c0_0 = arith.constant 0 : index
    %0 = vector.load %arg1[%c0, %c0_0] : memref<8x128xf32, #tpu.memory_space<vmem>>, vector<8x128xf32>
    %cst = arith.constant 1.000000e+00 : f32
    %1 = vector.broadcast %cst : f32 to vector<8x128xf32>
    %2 = arith.addf %0, %1 : vector<8x128xf32>
    %c0_1 = arith.constant 0 : index
    %c0_2 = arith.constant 0 : index
    %3 = vector.load %arg2[%c0_1, %c0_2] : memref<8x128xf32, #tpu.memory_space<vmem>>, vector<8x128xf32>
    tpu.vector_store %arg2[%c0_1, %c0_2], %2 {strides = array<i32>} : memref<8x128xf32, #tpu.memory_space<vmem>>, vector<8x128xf32>,
    return
  }
  func.func @transform_0(%arg0: i32) -> (i32, i32) {
    %c0_i32 = arith.constant 0 : i32
    %c0_i32_0 = arith.constant 0 : i32
    %c0_i32_1 = arith.constant 0 : i32
    return %c0_i32, %c0_i32_0 : i32, i32
  }
  func.func @transform_1(%arg0: i32) -> (i32, i32) {
    %c0_i32 = arith.constant 0 : i32
    %c0_i32_0 = arith.constant 0 : i32
    return %arg0, %c0_i32 : i32, i32
  }
}

module attributes {stable_mosaic.version = 11 : i64} {
  func.func @_conv_gn_gelu_kernel(%arg0: i32, %arg1: memref<1x64x24xf32, #tpu.memory_space<vmem>>, %arg2: memref<2x24x32xbf16, #tpu.memory_space<vmem>>, %arg3: memref<1x32xf32, #tpu.memory_space<vmem>>, %arg4: memref<1x32xf32, #tpu.memory_space<vmem>>, %arg5: memref<1x63x32xf32, #tpu.memory_space<vmem>>) attributes {dimension_semantics = [#tpu.dimension_semantics<parallel>], iteration_bounds = array<i64: 2>, scalar_prefetch = 0 : i64, scratch_operands = 0 : i64, tpu.core_type = #tpu.core_type<tc>, window_params = [{transform_indices = @transform_0, window_bounds = array<i64: 1, 64, 24>}, {pipeline_mode = #tpu.pipeline_mode<synchronous>, transform_indices = @transform_1, window_bounds = array<i64: 2, 24, 32>}, {pipeline_mode = #tpu.pipeline_mode<synchronous>, transform_indices = @transform_2, window_bounds = array<i64: 1, 32>}, {pipeline_mode = #tpu.pipeline_mode<synchronous>, transform_indices = @transform_3, window_bounds = array<i64: 1, 32>}, {transform_indices = @transform_4, window_bounds = array<i64: 1, 63, 32>}]} {
    %c0 = arith.constant 0 : index
    %c0_0 = arith.constant 0 : index
    %c0_1 = arith.constant 0 : index
    %0 = vector.load %arg1[%c0, %c0_0, %c0_1] : memref<1x64x24xf32, #tpu.memory_space<vmem>>, vector<1x63x24xf32>
    %1 = vector.shape_cast %0 : vector<1x63x24xf32> to vector<63x24xf32>
    %2 = arith.truncf %1 : vector<63x24xf32> to vector<63x24xbf16>
    %c0_2 = arith.constant 0 : index
    %c0_3 = arith.constant 0 : index
    %c0_4 = arith.constant 0 : index
    %3 = vector.load %arg2[%c0_2, %c0_3, %c0_4] : memref<2x24x32xbf16, #tpu.memory_space<vmem>>, vector<1x24x32xbf16>
    %4 = vector.shape_cast %3 : vector<1x24x32xbf16> to vector<24x32xbf16>
    %cst = arith.constant dense<0.000000e+00> : vector<63x32xf32>
    %5 = tpu.matmul %2, %4, %cst {dimension_numbers = #tpu.dot_dimension_numbers<[1], [0], [0], [1], [0, 0, 1, 1], [], []>} : vector<63x24xbf16>, vector<24x32xbf16>, vector<63x32xf32> -> vector<63x32xf32>
    %c0_5 = arith.constant 0 : index
    %c1 = arith.constant 1 : index
    %c0_6 = arith.constant 0 : index
    %6 = vector.load %arg1[%c0_5, %c1, %c0_6] : memref<1x64x24xf32, #tpu.memory_space<vmem>>, vector<1x63x24xf32>
    %7 = vector.shape_cast %6 : vector<1x63x24xf32> to vector<63x24xf32>
    %8 = arith.truncf %7 : vector<63x24xf32> to vector<63x24xbf16>
    %c1_7 = arith.constant 1 : index
    %c0_8 = arith.constant 0 : index
    %c0_9 = arith.constant 0 : index
    %9 = vector.load %arg2[%c1_7, %c0_8, %c0_9] : memref<2x24x32xbf16, #tpu.memory_space<vmem>>, vector<1x24x32xbf16>
    %10 = vector.shape_cast %9 : vector<1x24x32xbf16> to vector<24x32xbf16>
    %cst_10 = arith.constant dense<0.000000e+00> : vector<63x32xf32>
    %11 = tpu.matmul %8, %10, %cst_10 {dimension_numbers = #tpu.dot_dimension_numbers<[1], [0], [0], [1], [0, 0, 1, 1], [], []>} : vector<63x24xbf16>, vector<24x32xbf16>, vector<63x32xf32> -> vector<63x32xf32>
    %12 = arith.addf %5, %11 : vector<63x32xf32>
    %cst_11 = arith.constant dense<0.000000e+00> : vector<32xf32>
    %13 = vector.multi_reduction <add>, %12, %cst_11 [0] : vector<63x32xf32> to vector<32xf32>
    %14 = vector.shape_cast %13 : vector<32xf32> to vector<1x32xf32>
    %cst_12 = arith.constant 6.300000e+01 : f32
    %15 = vector.broadcast %cst_12 : f32 to vector<1x32xf32>
    %16 = arith.divf %14, %15 : vector<1x32xf32>
    %17 = vector.broadcast %16 : vector<1x32xf32> to vector<63x32xf32>
    %18 = arith.subf %12, %17 : vector<63x32xf32>
    %19 = arith.mulf %18, %18 : vector<63x32xf32>
    %cst_13 = arith.constant dense<0.000000e+00> : vector<32xf32>
    %20 = vector.multi_reduction <add>, %19, %cst_13 [0] : vector<63x32xf32> to vector<32xf32>
    %21 = vector.shape_cast %20 : vector<32xf32> to vector<1x32xf32>
    %cst_14 = arith.constant 6.300000e+01 : f32
    %22 = vector.broadcast %cst_14 : f32 to vector<1x32xf32>
    %23 = arith.divf %21, %22 : vector<1x32xf32>
    %24 = vector.broadcast %16 : vector<1x32xf32> to vector<63x32xf32>
    %25 = arith.subf %12, %24 : vector<63x32xf32>
    %cst_15 = arith.constant 9.99999974E-6 : f32
    %26 = vector.broadcast %cst_15 : f32 to vector<1x32xf32>
    %27 = arith.addf %23, %26 : vector<1x32xf32>
    %28 = math.rsqrt %27 : vector<1x32xf32>
    %29 = vector.broadcast %28 : vector<1x32xf32> to vector<63x32xf32>
    %30 = arith.mulf %25, %29 : vector<63x32xf32>
    %c0_16 = arith.constant 0 : index
    %c0_17 = arith.constant 0 : index
    %31 = vector.load %arg3[%c0_16, %c0_17] : memref<1x32xf32, #tpu.memory_space<vmem>>, vector<1x32xf32>
    %32 = vector.broadcast %31 : vector<1x32xf32> to vector<63x32xf32>
    %33 = arith.mulf %30, %32 : vector<63x32xf32>
    %c0_18 = arith.constant 0 : index
    %c0_19 = arith.constant 0 : index
    %34 = vector.load %arg4[%c0_18, %c0_19] : memref<1x32xf32, #tpu.memory_space<vmem>>, vector<1x32xf32>
    %35 = vector.broadcast %34 : vector<1x32xf32> to vector<63x32xf32>
    %36 = arith.addf %33, %35 : vector<63x32xf32>
    %cst_20 = arith.constant 5.000000e-01 : f32
    %37 = vector.broadcast %cst_20 : f32 to vector<63x32xf32>
    %38 = arith.mulf %37, %36 : vector<63x32xf32>
    %cst_21 = arith.constant 4.471500e-02 : f32
    %39 = vector.broadcast %cst_21 : f32 to vector<63x32xf32>
    %40 = arith.mulf %39, %36 : vector<63x32xf32>
    %41 = arith.mulf %40, %36 : vector<63x32xf32>
    %42 = arith.mulf %41, %36 : vector<63x32xf32>
    %43 = arith.addf %36, %42 : vector<63x32xf32>
    %cst_22 = arith.constant 0.797884583 : f32
    %44 = vector.broadcast %cst_22 : f32 to vector<63x32xf32>
    %45 = arith.mulf %44, %43 : vector<63x32xf32>
    %46 = math.tanh %45 : vector<63x32xf32>
    %cst_23 = arith.constant 1.000000e+00 : f32
    %47 = vector.broadcast %cst_23 : f32 to vector<63x32xf32>
    %48 = arith.addf %47, %46 : vector<63x32xf32>
    %49 = arith.mulf %38, %48 : vector<63x32xf32>
    %c0_24 = arith.constant 0 : index
    %c0_25 = arith.constant 0 : index
    %c0_26 = arith.constant 0 : index
    %50 = vector.load %arg5[%c0_24, %c0_25, %c0_26] : memref<1x63x32xf32, #tpu.memory_space<vmem>>, vector<1x63x32xf32>
    %51 = vector.shape_cast %50 : vector<1x63x32xf32> to vector<63x32xf32>
    %52 = vector.shape_cast %49 : vector<63x32xf32> to vector<1x63x32xf32>
    tpu.vector_store %arg5[%c0_24, %c0_25, %c0_26], %52 {strides = array<i32>} : memref<1x63x32xf32, #tpu.memory_space<vmem>>, vector<1x63x32xf32>,
    return
  }
  func.func @transform_0(%arg0: i32) -> (i32, i32, i32) {
    %c0_i32 = arith.constant 0 : i32
    %c0_i32_0 = arith.constant 0 : i32
    %c0_i32_1 = arith.constant 0 : i32
    return %arg0, %c0_i32, %c0_i32_0 : i32, i32, i32
  }
  func.func @transform_1(%arg0: i32) -> (i32, i32, i32) {
    %c0_i32 = arith.constant 0 : i32
    %c0_i32_0 = arith.constant 0 : i32
    %c0_i32_1 = arith.constant 0 : i32
    %c0_i32_2 = arith.constant 0 : i32
    return %c0_i32, %c0_i32_0, %c0_i32_1 : i32, i32, i32
  }
  func.func @transform_2(%arg0: i32) -> (i32, i32) {
    %c0_i32 = arith.constant 0 : i32
    %c0_i32_0 = arith.constant 0 : i32
    %c0_i32_1 = arith.constant 0 : i32
    return %c0_i32, %c0_i32_0 : i32, i32
  }
  func.func @transform_3(%arg0: i32) -> (i32, i32) {
    %c0_i32 = arith.constant 0 : i32
    %c0_i32_0 = arith.constant 0 : i32
    %c0_i32_1 = arith.constant 0 : i32
    return %c0_i32, %c0_i32_0 : i32, i32
  }
  func.func @transform_4(%arg0: i32) -> (i32, i32, i32) {
    %c0_i32 = arith.constant 0 : i32
    %c0_i32_0 = arith.constant 0 : i32
    %c0_i32_1 = arith.constant 0 : i32
    return %arg0, %c0_i32, %c0_i32_0 : i32, i32, i32
  }
}

module attributes {stable_mosaic.version = 11 : i64} {
  func.func @_conv_gelu_kernel(%arg0: i32, %arg1: memref<1x16x64xf32, #tpu.memory_space<vmem>>, %arg2: memref<1x64x32xbf16, #tpu.memory_space<vmem>>, %arg3: memref<1x15x32xf32, #tpu.memory_space<vmem>>) attributes {dimension_semantics = [#tpu.dimension_semantics<parallel>], iteration_bounds = array<i64: 2>, scalar_prefetch = 0 : i64, scratch_operands = 0 : i64, tpu.core_type = #tpu.core_type<tc>, window_params = [{transform_indices = @transform_0, window_bounds = array<i64: 1, 16, 64>}, {pipeline_mode = #tpu.pipeline_mode<synchronous>, transform_indices = @transform_1, window_bounds = array<i64: 1, 64, 32>}, {transform_indices = @transform_2, window_bounds = array<i64: 1, 15, 32>}]} {
    %c0 = arith.constant 0 : index
    %c0_0 = arith.constant 0 : index
    %c0_1 = arith.constant 0 : index
    %0 = vector.load %arg1[%c0, %c0_0, %c0_1] : memref<1x16x64xf32, #tpu.memory_space<vmem>>, vector<1x15x64xf32>
    %1 = vector.shape_cast %0 : vector<1x15x64xf32> to vector<15x64xf32>
    %2 = arith.truncf %1 : vector<15x64xf32> to vector<15x64xbf16>
    %c0_2 = arith.constant 0 : index
    %c0_3 = arith.constant 0 : index
    %c0_4 = arith.constant 0 : index
    %3 = vector.load %arg2[%c0_2, %c0_3, %c0_4] : memref<1x64x32xbf16, #tpu.memory_space<vmem>>, vector<1x64x32xbf16>
    %4 = vector.shape_cast %3 : vector<1x64x32xbf16> to vector<64x32xbf16>
    %cst = arith.constant dense<0.000000e+00> : vector<15x32xf32>
    %5 = tpu.matmul %2, %4, %cst {dimension_numbers = #tpu.dot_dimension_numbers<[1], [0], [0], [1], [0, 0, 1, 1], [], []>} : vector<15x64xbf16>, vector<64x32xbf16>, vector<15x32xf32> -> vector<15x32xf32>
    %cst_5 = arith.constant 5.000000e-01 : f32
    %6 = vector.broadcast %cst_5 : f32 to vector<15x32xf32>
    %7 = arith.mulf %6, %5 : vector<15x32xf32>
    %cst_6 = arith.constant 4.471500e-02 : f32
    %8 = vector.broadcast %cst_6 : f32 to vector<15x32xf32>
    %9 = arith.mulf %8, %5 : vector<15x32xf32>
    %10 = arith.mulf %9, %5 : vector<15x32xf32>
    %11 = arith.mulf %10, %5 : vector<15x32xf32>
    %12 = arith.addf %5, %11 : vector<15x32xf32>
    %cst_7 = arith.constant 0.797884583 : f32
    %13 = vector.broadcast %cst_7 : f32 to vector<15x32xf32>
    %14 = arith.mulf %13, %12 : vector<15x32xf32>
    %15 = math.tanh %14 : vector<15x32xf32>
    %cst_8 = arith.constant 1.000000e+00 : f32
    %16 = vector.broadcast %cst_8 : f32 to vector<15x32xf32>
    %17 = arith.addf %16, %15 : vector<15x32xf32>
    %18 = arith.mulf %7, %17 : vector<15x32xf32>
    %c0_9 = arith.constant 0 : index
    %c0_10 = arith.constant 0 : index
    %c0_11 = arith.constant 0 : index
    %19 = vector.load %arg3[%c0_9, %c0_10, %c0_11] : memref<1x15x32xf32, #tpu.memory_space<vmem>>, vector<1x15x32xf32>
    %20 = vector.shape_cast %19 : vector<1x15x32xf32> to vector<15x32xf32>
    %21 = vector.shape_cast %18 : vector<15x32xf32> to vector<1x15x32xf32>
    tpu.vector_store %arg3[%c0_9, %c0_10, %c0_11], %21 {strides = array<i32>} : memref<1x15x32xf32, #tpu.memory_space<vmem>>, vector<1x15x32xf32>,
    return
  }
  func.func @transform_0(%arg0: i32) -> (i32, i32, i32) {
    %c0_i32 = arith.constant 0 : i32
    %c0_i32_0 = arith.constant 0 : i32
    %c0_i32_1 = arith.constant 0 : i32
    return %arg0, %c0_i32, %c0_i32_0 : i32, i32, i32
  }
  func.func @transform_1(%arg0: i32) -> (i32, i32, i32) {
    %c0_i32 = arith.constant 0 : i32
    %c0_i32_0 = arith.constant 0 : i32
    %c0_i32_1 = arith.constant 0 : i32
    %c0_i32_2 = arith.constant 0 : i32
    return %c0_i32, %c0_i32_0, %c0_i32_1 : i32, i32, i32
  }
  func.func @transform_2(%arg0: i32) -> (i32, i32, i32) {
    %c0_i32 = arith.constant 0 : i32
    %c0_i32_0 = arith.constant 0 : i32
    %c0_i32_1 = arith.constant 0 : i32
    return %arg0, %c0_i32, %c0_i32_0 : i32, i32, i32
  }
}

module attributes {stable_mosaic.version = 11 : i64} {
  func.func @_conv_gelu_kernel(%arg0: i32, %arg1: memref<1x32x64xf32, #tpu.memory_space<vmem>>, %arg2: memref<2x64x32xbf16, #tpu.memory_space<vmem>>, %arg3: memref<1x31x32xf32, #tpu.memory_space<vmem>>) attributes {dimension_semantics = [#tpu.dimension_semantics<parallel>], iteration_bounds = array<i64: 2>, scalar_prefetch = 0 : i64, scratch_operands = 0 : i64, tpu.core_type = #tpu.core_type<tc>, window_params = [{transform_indices = @transform_0, window_bounds = array<i64: 1, 32, 64>}, {pipeline_mode = #tpu.pipeline_mode<synchronous>, transform_indices = @transform_1, window_bounds = array<i64: 2, 64, 32>}, {transform_indices = @transform_2, window_bounds = array<i64: 1, 31, 32>}]} {
    %c0 = arith.constant 0 : index
    %c0_0 = arith.constant 0 : index
    %c0_1 = arith.constant 0 : index
    %0 = vector.load %arg1[%c0, %c0_0, %c0_1] : memref<1x32x64xf32, #tpu.memory_space<vmem>>, vector<1x31x64xf32>
    %1 = vector.shape_cast %0 : vector<1x31x64xf32> to vector<31x64xf32>
    %2 = arith.truncf %1 : vector<31x64xf32> to vector<31x64xbf16>
    %c0_2 = arith.constant 0 : index
    %c0_3 = arith.constant 0 : index
    %c0_4 = arith.constant 0 : index
    %3 = vector.load %arg2[%c0_2, %c0_3, %c0_4] : memref<2x64x32xbf16, #tpu.memory_space<vmem>>, vector<1x64x32xbf16>
    %4 = vector.shape_cast %3 : vector<1x64x32xbf16> to vector<64x32xbf16>
    %cst = arith.constant dense<0.000000e+00> : vector<31x32xf32>
    %5 = tpu.matmul %2, %4, %cst {dimension_numbers = #tpu.dot_dimension_numbers<[1], [0], [0], [1], [0, 0, 1, 1], [], []>} : vector<31x64xbf16>, vector<64x32xbf16>, vector<31x32xf32> -> vector<31x32xf32>
    %c0_5 = arith.constant 0 : index
    %c1 = arith.constant 1 : index
    %c0_6 = arith.constant 0 : index
    %6 = vector.load %arg1[%c0_5, %c1, %c0_6] : memref<1x32x64xf32, #tpu.memory_space<vmem>>, vector<1x31x64xf32>
    %7 = vector.shape_cast %6 : vector<1x31x64xf32> to vector<31x64xf32>
    %8 = arith.truncf %7 : vector<31x64xf32> to vector<31x64xbf16>
    %c1_7 = arith.constant 1 : index
    %c0_8 = arith.constant 0 : index
    %c0_9 = arith.constant 0 : index
    %9 = vector.load %arg2[%c1_7, %c0_8, %c0_9] : memref<2x64x32xbf16, #tpu.memory_space<vmem>>, vector<1x64x32xbf16>
    %10 = vector.shape_cast %9 : vector<1x64x32xbf16> to vector<64x32xbf16>
    %cst_10 = arith.constant dense<0.000000e+00> : vector<31x32xf32>
    %11 = tpu.matmul %8, %10, %cst_10 {dimension_numbers = #tpu.dot_dimension_numbers<[1], [0], [0], [1], [0, 0, 1, 1], [], []>} : vector<31x64xbf16>, vector<64x32xbf16>, vector<31x32xf32> -> vector<31x32xf32>
    %12 = arith.addf %5, %11 : vector<31x32xf32>
    %cst_11 = arith.constant 5.000000e-01 : f32
    %13 = vector.broadcast %cst_11 : f32 to vector<31x32xf32>
    %14 = arith.mulf %13, %12 : vector<31x32xf32>
    %cst_12 = arith.constant 4.471500e-02 : f32
    %15 = vector.broadcast %cst_12 : f32 to vector<31x32xf32>
    %16 = arith.mulf %15, %12 : vector<31x32xf32>
    %17 = arith.mulf %16, %12 : vector<31x32xf32>
    %18 = arith.mulf %17, %12 : vector<31x32xf32>
    %19 = arith.addf %12, %18 : vector<31x32xf32>
    %cst_13 = arith.constant 0.797884583 : f32
    %20 = vector.broadcast %cst_13 : f32 to vector<31x32xf32>
    %21 = arith.mulf %20, %19 : vector<31x32xf32>
    %22 = math.tanh %21 : vector<31x32xf32>
    %cst_14 = arith.constant 1.000000e+00 : f32
    %23 = vector.broadcast %cst_14 : f32 to vector<31x32xf32>
    %24 = arith.addf %23, %22 : vector<31x32xf32>
    %25 = arith.mulf %14, %24 : vector<31x32xf32>
    %c0_15 = arith.constant 0 : index
    %c0_16 = arith.constant 0 : index
    %c0_17 = arith.constant 0 : index
    %26 = vector.load %arg3[%c0_15, %c0_16, %c0_17] : memref<1x31x32xf32, #tpu.memory_space<vmem>>, vector<1x31x32xf32>
    %27 = vector.shape_cast %26 : vector<1x31x32xf32> to vector<31x32xf32>
    %28 = vector.shape_cast %25 : vector<31x32xf32> to vector<1x31x32xf32>
    tpu.vector_store %arg3[%c0_15, %c0_16, %c0_17], %28 {strides = array<i32>} : memref<1x31x32xf32, #tpu.memory_space<vmem>>, vector<1x31x32xf32>,
    return
  }
  func.func @transform_0(%arg0: i32) -> (i32, i32, i32) {
    %c0_i32 = arith.constant 0 : i32
    %c0_i32_0 = arith.constant 0 : i32
    %c0_i32_1 = arith.constant 0 : i32
    return %arg0, %c0_i32, %c0_i32_0 : i32, i32, i32
  }
  func.func @transform_1(%arg0: i32) -> (i32, i32, i32) {
    %c0_i32 = arith.constant 0 : i32
    %c0_i32_0 = arith.constant 0 : i32
    %c0_i32_1 = arith.constant 0 : i32
    %c0_i32_2 = arith.constant 0 : i32
    return %c0_i32, %c0_i32_0, %c0_i32_1 : i32, i32, i32
  }
  func.func @transform_2(%arg0: i32) -> (i32, i32, i32) {
    %c0_i32 = arith.constant 0 : i32
    %c0_i32_0 = arith.constant 0 : i32
    %c0_i32_1 = arith.constant 0 : i32
    return %arg0, %c0_i32, %c0_i32_0 : i32, i32, i32
  }
}

module attributes {stable_mosaic.version = 11 : i64} {
  func.func @_norm_linear_kernel(%arg0: i32, %arg1: memref<16x32xf32, #tpu.memory_space<vmem>>, %arg2: memref<1x32xf32, #tpu.memory_space<vmem>>, %arg3: memref<1x32xf32, #tpu.memory_space<vmem>>, %arg4: memref<32x64xbf16, #tpu.memory_space<vmem>>, %arg5: memref<1x64xf32, #tpu.memory_space<vmem>>, %arg6: memref<16x64xf32, #tpu.memory_space<vmem>>) attributes {dimension_semantics = [#tpu.dimension_semantics<parallel>], iteration_bounds = array<i64: 2>, scalar_prefetch = 0 : i64, scratch_operands = 0 : i64, tpu.core_type = #tpu.core_type<tc>, window_params = [{transform_indices = @transform_0, window_bounds = array<i64: 16, 32>}, {pipeline_mode = #tpu.pipeline_mode<synchronous>, transform_indices = @transform_1, window_bounds = array<i64: 1, 32>}, {pipeline_mode = #tpu.pipeline_mode<synchronous>, transform_indices = @transform_2, window_bounds = array<i64: 1, 32>}, {pipeline_mode = #tpu.pipeline_mode<synchronous>, transform_indices = @transform_3, window_bounds = array<i64: 32, 64>}, {pipeline_mode = #tpu.pipeline_mode<synchronous>, transform_indices = @transform_4, window_bounds = array<i64: 1, 64>}, {transform_indices = @transform_5, window_bounds = array<i64: 16, 64>}]} {
    %c0 = arith.constant 0 : index
    %c0_0 = arith.constant 0 : index
    %0 = vector.load %arg1[%c0, %c0_0] : memref<16x32xf32, #tpu.memory_space<vmem>>, vector<16x32xf32>
    %c0_1 = arith.constant 0 : index
    %c0_2 = arith.constant 0 : index
    %1 = vector.load %arg2[%c0_1, %c0_2] : memref<1x32xf32, #tpu.memory_space<vmem>>, vector<1x32xf32>
    %c0_3 = arith.constant 0 : index
    %c0_4 = arith.constant 0 : index
    %2 = vector.load %arg3[%c0_3, %c0_4] : memref<1x32xf32, #tpu.memory_space<vmem>>, vector<1x32xf32>
    %cst = arith.constant dense<0.000000e+00> : vector<16xf32>
    %3 = vector.multi_reduction <add>, %0, %cst [1] : vector<16x32xf32> to vector<16xf32>
    %4 = vector.shape_cast %3 : vector<16xf32> to vector<16x1xf32>
    %cst_5 = arith.constant 3.200000e+01 : f32
    %5 = vector.broadcast %cst_5 : f32 to vector<16x1xf32>
    %6 = arith.divf %4, %5 : vector<16x1xf32>
    %7 = vector.broadcast %6 : vector<16x1xf32> to vector<16x32xf32>
    %8 = arith.subf %0, %7 : vector<16x32xf32>
    %9 = arith.mulf %8, %8 : vector<16x32xf32>
    %cst_6 = arith.constant dense<0.000000e+00> : vector<16xf32>
    %10 = vector.multi_reduction <add>, %9, %cst_6 [1] : vector<16x32xf32> to vector<16xf32>
    %11 = vector.shape_cast %10 : vector<16xf32> to vector<16x1xf32>
    %cst_7 = arith.constant 3.200000e+01 : f32
    %12 = vector.broadcast %cst_7 : f32 to vector<16x1xf32>
    %13 = arith.divf %11, %12 : vector<16x1xf32>
    %14 = vector.broadcast %6 : vector<16x1xf32> to vector<16x32xf32>
    %15 = arith.subf %0, %14 : vector<16x32xf32>
    %cst_8 = arith.constant 9.99999974E-6 : f32
    %16 = vector.broadcast %cst_8 : f32 to vector<16x1xf32>
    %17 = arith.addf %13, %16 : vector<16x1xf32>
    %18 = math.rsqrt %17 : vector<16x1xf32>
    %19 = vector.broadcast %18 : vector<16x1xf32> to vector<16x32xf32>
    %20 = arith.mulf %15, %19 : vector<16x32xf32>
    %21 = vector.broadcast %1 : vector<1x32xf32> to vector<16x32xf32>
    %22 = arith.mulf %20, %21 : vector<16x32xf32>
    %23 = vector.broadcast %2 : vector<1x32xf32> to vector<16x32xf32>
    %24 = arith.addf %22, %23 : vector<16x32xf32>
    %25 = arith.truncf %24 : vector<16x32xf32> to vector<16x32xbf16>
    %c0_9 = arith.constant 0 : index
    %c0_10 = arith.constant 0 : index
    %26 = vector.load %arg4[%c0_9, %c0_10] : memref<32x64xbf16, #tpu.memory_space<vmem>>, vector<32x64xbf16>
    %cst_11 = arith.constant dense<0.000000e+00> : vector<16x64xf32>
    %27 = tpu.matmul %25, %26, %cst_11 {dimension_numbers = #tpu.dot_dimension_numbers<[1], [0], [0], [1], [0, 0, 1, 1], [], []>} : vector<16x32xbf16>, vector<32x64xbf16>, vector<16x64xf32> -> vector<16x64xf32>
    %c0_12 = arith.constant 0 : index
    %c0_13 = arith.constant 0 : index
    %28 = vector.load %arg5[%c0_12, %c0_13] : memref<1x64xf32, #tpu.memory_space<vmem>>, vector<1x64xf32>
    %29 = vector.broadcast %28 : vector<1x64xf32> to vector<16x64xf32>
    %30 = arith.addf %27, %29 : vector<16x64xf32>
    %c0_14 = arith.constant 0 : index
    %c0_15 = arith.constant 0 : index
    %31 = vector.load %arg6[%c0_14, %c0_15] : memref<16x64xf32, #tpu.memory_space<vmem>>, vector<16x64xf32>
    tpu.vector_store %arg6[%c0_14, %c0_15], %30 {strides = array<i32>} : memref<16x64xf32, #tpu.memory_space<vmem>>, vector<16x64xf32>,
    return
  }
  func.func @transform_0(%arg0: i32) -> (i32, i32) {
    %c0_i32 = arith.constant 0 : i32
    %c0_i32_0 = arith.constant 0 : i32
    return %arg0, %c0_i32 : i32, i32
  }
  func.func @transform_1(%arg0: i32) -> (i32, i32) {
    %c0_i32 = arith.constant 0 : i32
    %c0_i32_0 = arith.constant 0 : i32
    %c0_i32_1 = arith.constant 0 : i32
    return %c0_i32, %c0_i32_0 : i32, i32
  }
  func.func @transform_2(%arg0: i32) -> (i32, i32) {
    %c0_i32 = arith.constant 0 : i32
    %c0_i32_0 = arith.constant 0 : i32
    %c0_i32_1 = arith.constant 0 : i32
    return %c0_i32, %c0_i32_0 : i32, i32
  }
  func.func @transform_3(%arg0: i32) -> (i32, i32) {
    %c0_i32 = arith.constant 0 : i32
    %c0_i32_0 = arith.constant 0 : i32
    %c0_i32_1 = arith.constant 0 : i32
    return %c0_i32, %c0_i32_0 : i32, i32
  }
  func.func @transform_4(%arg0: i32) -> (i32, i32) {
    %c0_i32 = arith.constant 0 : i32
    %c0_i32_0 = arith.constant 0 : i32
    %c0_i32_1 = arith.constant 0 : i32
    return %c0_i32, %c0_i32_0 : i32, i32
  }
  func.func @transform_5(%arg0: i32) -> (i32, i32) {
    %c0_i32 = arith.constant 0 : i32
    %c0_i32_0 = arith.constant 0 : i32
    return %arg0, %c0_i32 : i32, i32
  }
}

module attributes {stable_mosaic.version = 11 : i64} {
  func.func @_posconv_kernel(%arg0: i32, %arg1: memref<1x23x64xf32, #tpu.memory_space<vmem>>, %arg2: memref<8x4x16x16xbf16, #tpu.memory_space<vmem>>, %arg3: memref<1x64xf32, #tpu.memory_space<vmem>>, %arg4: memref<1x64xf32, #tpu.memory_space<vmem>>, %arg5: memref<1x64xf32, #tpu.memory_space<vmem>>, %arg6: memref<1x15x64xf32, #tpu.memory_space<vmem>>) attributes {dimension_semantics = [#tpu.dimension_semantics<parallel>], iteration_bounds = array<i64: 2>, scalar_prefetch = 0 : i64, scratch_operands = 0 : i64, tpu.core_type = #tpu.core_type<tc>, window_params = [{transform_indices = @transform_0, window_bounds = array<i64: 1, 23, 64>}, {pipeline_mode = #tpu.pipeline_mode<synchronous>, transform_indices = @transform_1, window_bounds = array<i64: 8, 4, 16, 16>}, {pipeline_mode = #tpu.pipeline_mode<synchronous>, transform_indices = @transform_2, window_bounds = array<i64: 1, 64>}, {pipeline_mode = #tpu.pipeline_mode<synchronous>, transform_indices = @transform_3, window_bounds = array<i64: 1, 64>}, {pipeline_mode = #tpu.pipeline_mode<synchronous>, transform_indices = @transform_4, window_bounds = array<i64: 1, 64>}, {transform_indices = @transform_5, window_bounds = array<i64: 1, 15, 64>}]} {
    %c0 = arith.constant 0 : index
    %c0_0 = arith.constant 0 : index
    %c0_1 = arith.constant 0 : index
    %0 = vector.load %arg1[%c0, %c0_0, %c0_1] : memref<1x23x64xf32, #tpu.memory_space<vmem>>, vector<1x15x64xf32>
    %1 = vector.shape_cast %0 : vector<1x15x64xf32> to vector<15x64xf32>
    %2 = arith.truncf %1 : vector<15x64xf32> to vector<15x64xbf16>
    %3 = vector.extract_strided_slice %2 {offsets = [0, 0], sizes = [15, 16], strides = [1, 1]} : vector<15x64xbf16> to vector<15x16xbf16>
    %c0_2 = arith.constant 0 : index
    %c0_3 = arith.constant 0 : index
    %c0_4 = arith.constant 0 : index
    %c0_5 = arith.constant 0 : index
    %4 = vector.load %arg2[%c0_2, %c0_3, %c0_4, %c0_5] : memref<8x4x16x16xbf16, #tpu.memory_space<vmem>>, vector<1x1x16x16xbf16>
    %5 = vector.shape_cast %4 : vector<1x1x16x16xbf16> to vector<16x16xbf16>
    %cst = arith.constant dense<0.000000e+00> : vector<15x16xf32>
    %6 = tpu.matmul %3, %5, %cst {dimension_numbers = #tpu.dot_dimension_numbers<[1], [0], [0], [1], [0, 0, 1, 1], [], []>} : vector<15x16xbf16>, vector<16x16xbf16>, vector<15x16xf32> -> vector<15x16xf32>
    %7 = vector.extract_strided_slice %2 {offsets = [0, 16], sizes = [15, 16], strides = [1, 1]} : vector<15x64xbf16> to vector<15x16xbf16>
    %c0_6 = arith.constant 0 : index
    %c1 = arith.constant 1 : index
    %c0_7 = arith.constant 0 : index
    %c0_8 = arith.constant 0 : index
    %8 = vector.load %arg2[%c0_6, %c1, %c0_7, %c0_8] : memref<8x4x16x16xbf16, #tpu.memory_space<vmem>>, vector<1x1x16x16xbf16>
    %9 = vector.shape_cast %8 : vector<1x1x16x16xbf16> to vector<16x16xbf16>
    %cst_9 = arith.constant dense<0.000000e+00> : vector<15x16xf32>
    %10 = tpu.matmul %7, %9, %cst_9 {dimension_numbers = #tpu.dot_dimension_numbers<[1], [0], [0], [1], [0, 0, 1, 1], [], []>} : vector<15x16xbf16>, vector<16x16xbf16>, vector<15x16xf32> -> vector<15x16xf32>
    %11 = vector.extract_strided_slice %2 {offsets = [0, 32], sizes = [15, 16], strides = [1, 1]} : vector<15x64xbf16> to vector<15x16xbf16>
    %c0_10 = arith.constant 0 : index
    %c2 = arith.constant 2 : index
    %c0_11 = arith.constant 0 : index
    %c0_12 = arith.constant 0 : index
    %12 = vector.load %arg2[%c0_10, %c2, %c0_11, %c0_12] : memref<8x4x16x16xbf16, #tpu.memory_space<vmem>>, vector<1x1x16x16xbf16>
    %13 = vector.shape_cast %12 : vector<1x1x16x16xbf16> to vector<16x16xbf16>
    %cst_13 = arith.constant dense<0.000000e+00> : vector<15x16xf32>
    %14 = tpu.matmul %11, %13, %cst_13 {dimension_numbers = #tpu.dot_dimension_numbers<[1], [0], [0], [1], [0, 0, 1, 1], [], []>} : vector<15x16xbf16>, vector<16x16xbf16>, vector<15x16xf32> -> vector<15x16xf32>
    %15 = vector.extract_strided_slice %2 {offsets = [0, 48], sizes = [15, 16], strides = [1, 1]} : vector<15x64xbf16> to vector<15x16xbf16>
    %c0_14 = arith.constant 0 : index
    %c3 = arith.constant 3 : index
    %c0_15 = arith.constant 0 : index
    %c0_16 = arith.constant 0 : index
    %16 = vector.load %arg2[%c0_14, %c3, %c0_15, %c0_16] : memref<8x4x16x16xbf16, #tpu.memory_space<vmem>>, vector<1x1x16x16xbf16>
    %17 = vector.shape_cast %16 : vector<1x1x16x16xbf16> to vector<16x16xbf16>
    %cst_17 = arith.constant dense<0.000000e+00> : vector<15x16xf32>
    %18 = tpu.matmul %15, %17, %cst_17 {dimension_numbers = #tpu.dot_dimension_numbers<[1], [0], [0], [1], [0, 0, 1, 1], [], []>} : vector<15x16xbf16>, vector<16x16xbf16>, vector<15x16xf32> -> vector<15x16xf32>
    %c0_18 = arith.constant 0 : index
    %c1_19 = arith.constant 1 : index
    %c0_20 = arith.constant 0 : index
    %19 = vector.load %arg1[%c0_18, %c1_19, %c0_20] : memref<1x23x64xf32, #tpu.memory_space<vmem>>, vector<1x15x64xf32>
    %20 = vector.shape_cast %19 : vector<1x15x64xf32> to vector<15x64xf32>
    %21 = arith.truncf %20 : vector<15x64xf32> to vector<15x64xbf16>
    %22 = vector.extract_strided_slice %21 {offsets = [0, 0], sizes = [15, 16], strides = [1, 1]} : vector<15x64xbf16> to vector<15x16xbf16>
    %c1_21 = arith.constant 1 : index
    %c0_22 = arith.constant 0 : index
    %c0_23 = arith.constant 0 : index
    %c0_24 = arith.constant 0 : index
    %23 = vector.load %arg2[%c1_21, %c0_22, %c0_23, %c0_24] : memref<8x4x16x16xbf16, #tpu.memory_space<vmem>>, vector<1x1x16x16xbf16>
    %24 = vector.shape_cast %23 : vector<1x1x16x16xbf16> to vector<16x16xbf16>
    %cst_25 = arith.constant dense<0.000000e+00> : vector<15x16xf32>
    %25 = tpu.matmul %22, %24, %cst_25 {dimension_numbers = #tpu.dot_dimension_numbers<[1], [0], [0], [1], [0, 0, 1, 1], [], []>} : vector<15x16xbf16>, vector<16x16xbf16>, vector<15x16xf32> -> vector<15x16xf32>
    %26 = arith.addf %6, %25 : vector<15x16xf32>
    %27 = vector.extract_strided_slice %21 {offsets = [0, 16], sizes = [15, 16], strides = [1, 1]} : vector<15x64xbf16> to vector<15x16xbf16>
    %c1_26 = arith.constant 1 : index
    %c1_27 = arith.constant 1 : index
    %c0_28 = arith.constant 0 : index
    %c0_29 = arith.constant 0 : index
    %28 = vector.load %arg2[%c1_26, %c1_27, %c0_28, %c0_29] : memref<8x4x16x16xbf16, #tpu.memory_space<vmem>>, vector<1x1x16x16xbf16>
    %29 = vector.shape_cast %28 : vector<1x1x16x16xbf16> to vector<16x16xbf16>
    %cst_30 = arith.constant dense<0.000000e+00> : vector<15x16xf32>
    %30 = tpu.matmul %27, %29, %cst_30 {dimension_numbers = #tpu.dot_dimension_numbers<[1], [0], [0], [1], [0, 0, 1, 1], [], []>} : vector<15x16xbf16>, vector<16x16xbf16>, vector<15x16xf32> -> vector<15x16xf32>
    %31 = arith.addf %10, %30 : vector<15x16xf32>
    %32 = vector.extract_strided_slice %21 {offsets = [0, 32], sizes = [15, 16], strides = [1, 1]} : vector<15x64xbf16> to vector<15x16xbf16>
    %c1_31 = arith.constant 1 : index
    %c2_32 = arith.constant 2 : index
    %c0_33 = arith.constant 0 : index
    %c0_34 = arith.constant 0 : index
    %33 = vector.load %arg2[%c1_31, %c2_32, %c0_33, %c0_34] : memref<8x4x16x16xbf16, #tpu.memory_space<vmem>>, vector<1x1x16x16xbf16>
    %34 = vector.shape_cast %33 : vector<1x1x16x16xbf16> to vector<16x16xbf16>
    %cst_35 = arith.constant dense<0.000000e+00> : vector<15x16xf32>
    %35 = tpu.matmul %32, %34, %cst_35 {dimension_numbers = #tpu.dot_dimension_numbers<[1], [0], [0], [1], [0, 0, 1, 1], [], []>} : vector<15x16xbf16>, vector<16x16xbf16>, vector<15x16xf32> -> vector<15x16xf32>
    %36 = arith.addf %14, %35 : vector<15x16xf32>
    %37 = vector.extract_strided_slice %21 {offsets = [0, 48], sizes = [15, 16], strides = [1, 1]} : vector<15x64xbf16> to vector<15x16xbf16>
    %c1_36 = arith.constant 1 : index
    %c3_37 = arith.constant 3 : index
    %c0_38 = arith.constant 0 : index
    %c0_39 = arith.constant 0 : index
    %38 = vector.load %arg2[%c1_36, %c3_37, %c0_38, %c0_39] : memref<8x4x16x16xbf16, #tpu.memory_space<vmem>>, vector<1x1x16x16xbf16>
    %39 = vector.shape_cast %38 : vector<1x1x16x16xbf16> to vector<16x16xbf16>
    %cst_40 = arith.constant dense<0.000000e+00> : vector<15x16xf32>
    %40 = tpu.matmul %37, %39, %cst_40 {dimension_numbers = #tpu.dot_dimension_numbers<[1], [0], [0], [1], [0, 0, 1, 1], [], []>} : vector<15x16xbf16>, vector<16x16xbf16>, vector<15x16xf32> -> vector<15x16xf32>
    %41 = arith.addf %18, %40 : vector<15x16xf32>
    %c0_41 = arith.constant 0 : index
    %c2_42 = arith.constant 2 : index
    %c0_43 = arith.constant 0 : index
    %42 = vector.load %arg1[%c0_41, %c2_42, %c0_43] : memref<1x23x64xf32, #tpu.memory_space<vmem>>, vector<1x15x64xf32>
    %43 = vector.shape_cast %42 : vector<1x15x64xf32> to vector<15x64xf32>
    %44 = arith.truncf %43 : vector<15x64xf32> to vector<15x64xbf16>
    %45 = vector.extract_strided_slice %44 {offsets = [0, 0], sizes = [15, 16], strides = [1, 1]} : vector<15x64xbf16> to vector<15x16xbf16>
    %c2_44 = arith.constant 2 : index
    %c0_45 = arith.constant 0 : index
    %c0_46 = arith.constant 0 : index
    %c0_47 = arith.constant 0 : index
    %46 = vector.load %arg2[%c2_44, %c0_45, %c0_46, %c0_47] : memref<8x4x16x16xbf16, #tpu.memory_space<vmem>>, vector<1x1x16x16xbf16>
    %47 = vector.shape_cast %46 : vector<1x1x16x16xbf16> to vector<16x16xbf16>
    %cst_48 = arith.constant dense<0.000000e+00> : vector<15x16xf32>
    %48 = tpu.matmul %45, %47, %cst_48 {dimension_numbers = #tpu.dot_dimension_numbers<[1], [0], [0], [1], [0, 0, 1, 1], [], []>} : vector<15x16xbf16>, vector<16x16xbf16>, vector<15x16xf32> -> vector<15x16xf32>
    %49 = arith.addf %26, %48 : vector<15x16xf32>
    %50 = vector.extract_strided_slice %44 {offsets = [0, 16], sizes = [15, 16], strides = [1, 1]} : vector<15x64xbf16> to vector<15x16xbf16>
    %c2_49 = arith.constant 2 : index
    %c1_50 = arith.constant 1 : index
    %c0_51 = arith.constant 0 : index
    %c0_52 = arith.constant 0 : index
    %51 = vector.load %arg2[%c2_49, %c1_50, %c0_51, %c0_52] : memref<8x4x16x16xbf16, #tpu.memory_space<vmem>>, vector<1x1x16x16xbf16>
    %52 = vector.shape_cast %51 : vector<1x1x16x16xbf16> to vector<16x16xbf16>
    %cst_53 = arith.constant dense<0.000000e+00> : vector<15x16xf32>
    %53 = tpu.matmul %50, %52, %cst_53 {dimension_numbers = #tpu.dot_dimension_numbers<[1], [0], [0], [1], [0, 0, 1, 1], [], []>} : vector<15x16xbf16>, vector<16x16xbf16>, vector<15x16xf32> -> vector<15x16xf32>
    %54 = arith.addf %31, %53 : vector<15x16xf32>
    %55 = vector.extract_strided_slice %44 {offsets = [0, 32], sizes = [15, 16], strides = [1, 1]} : vector<15x64xbf16> to vector<15x16xbf16>
    %c2_54 = arith.constant 2 : index
    %c2_55 = arith.constant 2 : index
    %c0_56 = arith.constant 0 : index
    %c0_57 = arith.constant 0 : index
    %56 = vector.load %arg2[%c2_54, %c2_55, %c0_56, %c0_57] : memref<8x4x16x16xbf16, #tpu.memory_space<vmem>>, vector<1x1x16x16xbf16>
    %57 = vector.shape_cast %56 : vector<1x1x16x16xbf16> to vector<16x16xbf16>
    %cst_58 = arith.constant dense<0.000000e+00> : vector<15x16xf32>
    %58 = tpu.matmul %55, %57, %cst_58 {dimension_numbers = #tpu.dot_dimension_numbers<[1], [0], [0], [1], [0, 0, 1, 1], [], []>} : vector<15x16xbf16>, vector<16x16xbf16>, vector<15x16xf32> -> vector<15x16xf32>
    %59 = arith.addf %36, %58 : vector<15x16xf32>
    %60 = vector.extract_strided_slice %44 {offsets = [0, 48], sizes = [15, 16], strides = [1, 1]} : vector<15x64xbf16> to vector<15x16xbf16>
    %c2_59 = arith.constant 2 : index
    %c3_60 = arith.constant 3 : index
    %c0_61 = arith.constant 0 : index
    %c0_62 = arith.constant 0 : index
    %61 = vector.load %arg2[%c2_59, %c3_60, %c0_61, %c0_62] : memref<8x4x16x16xbf16, #tpu.memory_space<vmem>>, vector<1x1x16x16xbf16>
    %62 = vector.shape_cast %61 : vector<1x1x16x16xbf16> to vector<16x16xbf16>
    %cst_63 = arith.constant dense<0.000000e+00> : vector<15x16xf32>
    %63 = tpu.matmul %60, %62, %cst_63 {dimension_numbers = #tpu.dot_dimension_numbers<[1], [0], [0], [1], [0, 0, 1, 1], [], []>} : vector<15x16xbf16>, vector<16x16xbf16>, vector<15x16xf32> -> vector<15x16xf32>
    %64 = arith.addf %41, %63 : vector<15x16xf32>
    %c0_64 = arith.constant 0 : index
    %c3_65 = arith.constant 3 : index
    %c0_66 = arith.constant 0 : index
    %65 = vector.load %arg1[%c0_64, %c3_65, %c0_66] : memref<1x23x64xf32, #tpu.memory_space<vmem>>, vector<1x15x64xf32>
    %66 = vector.shape_cast %65 : vector<1x15x64xf32> to vector<15x64xf32>
    %67 = arith.truncf %66 : vector<15x64xf32> to vector<15x64xbf16>
    %68 = vector.extract_strided_slice %67 {offsets = [0, 0], sizes = [15, 16], strides = [1, 1]} : vector<15x64xbf16> to vector<15x16xbf16>
    %c3_67 = arith.constant 3 : index
    %c0_68 = arith.constant 0 : index
    %c0_69 = arith.constant 0 : index
    %c0_70 = arith.constant 0 : index
    %69 = vector.load %arg2[%c3_67, %c0_68, %c0_69, %c0_70] : memref<8x4x16x16xbf16, #tpu.memory_space<vmem>>, vector<1x1x16x16xbf16>
    %70 = vector.shape_cast %69 : vector<1x1x16x16xbf16> to vector<16x16xbf16>
    %cst_71 = arith.constant dense<0.000000e+00> : vector<15x16xf32>
    %71 = tpu.matmul %68, %70, %cst_71 {dimension_numbers = #tpu.dot_dimension_numbers<[1], [0], [0], [1], [0, 0, 1, 1], [], []>} : vector<15x16xbf16>, vector<16x16xbf16>, vector<15x16xf32> -> vector<15x16xf32>
    %72 = arith.addf %49, %71 : vector<15x16xf32>
    %73 = vector.extract_strided_slice %67 {offsets = [0, 16], sizes = [15, 16], strides = [1, 1]} : vector<15x64xbf16> to vector<15x16xbf16>
    %c3_72 = arith.constant 3 : index
    %c1_73 = arith.constant 1 : index
    %c0_74 = arith.constant 0 : index
    %c0_75 = arith.constant 0 : index
    %74 = vector.load %arg2[%c3_72, %c1_73, %c0_74, %c0_75] : memref<8x4x16x16xbf16, #tpu.memory_space<vmem>>, vector<1x1x16x16xbf16>
    %75 = vector.shape_cast %74 : vector<1x1x16x16xbf16> to vector<16x16xbf16>
    %cst_76 = arith.constant dense<0.000000e+00> : vector<15x16xf32>
    %76 = tpu.matmul %73, %75, %cst_76 {dimension_numbers = #tpu.dot_dimension_numbers<[1], [0], [0], [1], [0, 0, 1, 1], [], []>} : vector<15x16xbf16>, vector<16x16xbf16>, vector<15x16xf32> -> vector<15x16xf32>
    %77 = arith.addf %54, %76 : vector<15x16xf32>
    %78 = vector.extract_strided_slice %67 {offsets = [0, 32], sizes = [15, 16], strides = [1, 1]} : vector<15x64xbf16> to vector<15x16xbf16>
    %c3_77 = arith.constant 3 : index
    %c2_78 = arith.constant 2 : index
    %c0_79 = arith.constant 0 : index
    %c0_80 = arith.constant 0 : index
    %79 = vector.load %arg2[%c3_77, %c2_78, %c0_79, %c0_80] : memref<8x4x16x16xbf16, #tpu.memory_space<vmem>>, vector<1x1x16x16xbf16>
    %80 = vector.shape_cast %79 : vector<1x1x16x16xbf16> to vector<16x16xbf16>
    %cst_81 = arith.constant dense<0.000000e+00> : vector<15x16xf32>
    %81 = tpu.matmul %78, %80, %cst_81 {dimension_numbers = #tpu.dot_dimension_numbers<[1], [0], [0], [1], [0, 0, 1, 1], [], []>} : vector<15x16xbf16>, vector<16x16xbf16>, vector<15x16xf32> -> vector<15x16xf32>
    %82 = arith.addf %59, %81 : vector<15x16xf32>
    %83 = vector.extract_strided_slice %67 {offsets = [0, 48], sizes = [15, 16], strides = [1, 1]} : vector<15x64xbf16> to vector<15x16xbf16>
    %c3_82 = arith.constant 3 : index
    %c3_83 = arith.constant 3 : index
    %c0_84 = arith.constant 0 : index
    %c0_85 = arith.constant 0 : index
    %84 = vector.load %arg2[%c3_82, %c3_83, %c0_84, %c0_85] : memref<8x4x16x16xbf16, #tpu.memory_space<vmem>>, vector<1x1x16x16xbf16>
    %85 = vector.shape_cast %84 : vector<1x1x16x16xbf16> to vector<16x16xbf16>
    %cst_86 = arith.constant dense<0.000000e+00> : vector<15x16xf32>
    %86 = tpu.matmul %83, %85, %cst_86 {dimension_numbers = #tpu.dot_dimension_numbers<[1], [0], [0], [1], [0, 0, 1, 1], [], []>} : vector<15x16xbf16>, vector<16x16xbf16>, vector<15x16xf32> -> vector<15x16xf32>
    %87 = arith.addf %64, %86 : vector<15x16xf32>
    %c0_87 = arith.constant 0 : index
    %c4 = arith.constant 4 : index
    %c0_88 = arith.constant 0 : index
    %88 = vector.load %arg1[%c0_87, %c4, %c0_88] : memref<1x23x64xf32, #tpu.memory_space<vmem>>, vector<1x15x64xf32>
    %89 = vector.shape_cast %88 : vector<1x15x64xf32> to vector<15x64xf32>
    %90 = arith.truncf %89 : vector<15x64xf32> to vector<15x64xbf16>
    %91 = vector.extract_strided_slice %90 {offsets = [0, 0], sizes = [15, 16], strides = [1, 1]} : vector<15x64xbf16> to vector<15x16xbf16>
    %c4_89 = arith.constant 4 : index
    %c0_90 = arith.constant 0 : index
    %c0_91 = arith.constant 0 : index
    %c0_92 = arith.constant 0 : index
    %92 = vector.load %arg2[%c4_89, %c0_90, %c0_91, %c0_92] : memref<8x4x16x16xbf16, #tpu.memory_space<vmem>>, vector<1x1x16x16xbf16>
    %93 = vector.shape_cast %92 : vector<1x1x16x16xbf16> to vector<16x16xbf16>
    %cst_93 = arith.constant dense<0.000000e+00> : vector<15x16xf32>
    %94 = tpu.matmul %91, %93, %cst_93 {dimension_numbers = #tpu.dot_dimension_numbers<[1], [0], [0], [1], [0, 0, 1, 1], [], []>} : vector<15x16xbf16>, vector<16x16xbf16>, vector<15x16xf32> -> vector<15x16xf32>
    %95 = arith.addf %72, %94 : vector<15x16xf32>
    %96 = vector.extract_strided_slice %90 {offsets = [0, 16], sizes = [15, 16], strides = [1, 1]} : vector<15x64xbf16> to vector<15x16xbf16>
    %c4_94 = arith.constant 4 : index
    %c1_95 = arith.constant 1 : index
    %c0_96 = arith.constant 0 : index
    %c0_97 = arith.constant 0 : index
    %97 = vector.load %arg2[%c4_94, %c1_95, %c0_96, %c0_97] : memref<8x4x16x16xbf16, #tpu.memory_space<vmem>>, vector<1x1x16x16xbf16>
    %98 = vector.shape_cast %97 : vector<1x1x16x16xbf16> to vector<16x16xbf16>
    %cst_98 = arith.constant dense<0.000000e+00> : vector<15x16xf32>
    %99 = tpu.matmul %96, %98, %cst_98 {dimension_numbers = #tpu.dot_dimension_numbers<[1], [0], [0], [1], [0, 0, 1, 1], [], []>} : vector<15x16xbf16>, vector<16x16xbf16>, vector<15x16xf32> -> vector<15x16xf32>
    %100 = arith.addf %77, %99 : vector<15x16xf32>
    %101 = vector.extract_strided_slice %90 {offsets = [0, 32], sizes = [15, 16], strides = [1, 1]} : vector<15x64xbf16> to vector<15x16xbf16>
    %c4_99 = arith.constant 4 : index
    %c2_100 = arith.constant 2 : index
    %c0_101 = arith.constant 0 : index
    %c0_102 = arith.constant 0 : index
    %102 = vector.load %arg2[%c4_99, %c2_100, %c0_101, %c0_102] : memref<8x4x16x16xbf16, #tpu.memory_space<vmem>>, vector<1x1x16x16xbf16>
    %103 = vector.shape_cast %102 : vector<1x1x16x16xbf16> to vector<16x16xbf16>
    %cst_103 = arith.constant dense<0.000000e+00> : vector<15x16xf32>
    %104 = tpu.matmul %101, %103, %cst_103 {dimension_numbers = #tpu.dot_dimension_numbers<[1], [0], [0], [1], [0, 0, 1, 1], [], []>} : vector<15x16xbf16>, vector<16x16xbf16>, vector<15x16xf32> -> vector<15x16xf32>
    %105 = arith.addf %82, %104 : vector<15x16xf32>
    %106 = vector.extract_strided_slice %90 {offsets = [0, 48], sizes = [15, 16], strides = [1, 1]} : vector<15x64xbf16> to vector<15x16xbf16>
    %c4_104 = arith.constant 4 : index
    %c3_105 = arith.constant 3 : index
    %c0_106 = arith.constant 0 : index
    %c0_107 = arith.constant 0 : index
    %107 = vector.load %arg2[%c4_104, %c3_105, %c0_106, %c0_107] : memref<8x4x16x16xbf16, #tpu.memory_space<vmem>>, vector<1x1x16x16xbf16>
    %108 = vector.shape_cast %107 : vector<1x1x16x16xbf16> to vector<16x16xbf16>
    %cst_108 = arith.constant dense<0.000000e+00> : vector<15x16xf32>
    %109 = tpu.matmul %106, %108, %cst_108 {dimension_numbers = #tpu.dot_dimension_numbers<[1], [0], [0], [1], [0, 0, 1, 1], [], []>} : vector<15x16xbf16>, vector<16x16xbf16>, vector<15x16xf32> -> vector<15x16xf32>
    %110 = arith.addf %87, %109 : vector<15x16xf32>
    %c0_109 = arith.constant 0 : index
    %c5 = arith.constant 5 : index
    %c0_110 = arith.constant 0 : index
    %111 = vector.load %arg1[%c0_109, %c5, %c0_110] : memref<1x23x64xf32, #tpu.memory_space<vmem>>, vector<1x15x64xf32>
    %112 = vector.shape_cast %111 : vector<1x15x64xf32> to vector<15x64xf32>
    %113 = arith.truncf %112 : vector<15x64xf32> to vector<15x64xbf16>
    %114 = vector.extract_strided_slice %113 {offsets = [0, 0], sizes = [15, 16], strides = [1, 1]} : vector<15x64xbf16> to vector<15x16xbf16>
    %c5_111 = arith.constant 5 : index
    %c0_112 = arith.constant 0 : index
    %c0_113 = arith.constant 0 : index
    %c0_114 = arith.constant 0 : index
    %115 = vector.load %arg2[%c5_111, %c0_112, %c0_113, %c0_114] : memref<8x4x16x16xbf16, #tpu.memory_space<vmem>>, vector<1x1x16x16xbf16>
    %116 = vector.shape_cast %115 : vector<1x1x16x16xbf16> to vector<16x16xbf16>
    %cst_115 = arith.constant dense<0.000000e+00> : vector<15x16xf32>
    %117 = tpu.matmul %114, %116, %cst_115 {dimension_numbers = #tpu.dot_dimension_numbers<[1], [0], [0], [1], [0, 0, 1, 1], [], []>} : vector<15x16xbf16>, vector<16x16xbf16>, vector<15x16xf32> -> vector<15x16xf32>
    %118 = arith.addf %95, %117 : vector<15x16xf32>
    %119 = vector.extract_strided_slice %113 {offsets = [0, 16], sizes = [15, 16], strides = [1, 1]} : vector<15x64xbf16> to vector<15x16xbf16>
    %c5_116 = arith.constant 5 : index
    %c1_117 = arith.constant 1 : index
    %c0_118 = arith.constant 0 : index
    %c0_119 = arith.constant 0 : index
    %120 = vector.load %arg2[%c5_116, %c1_117, %c0_118, %c0_119] : memref<8x4x16x16xbf16, #tpu.memory_space<vmem>>, vector<1x1x16x16xbf16>
    %121 = vector.shape_cast %120 : vector<1x1x16x16xbf16> to vector<16x16xbf16>
    %cst_120 = arith.constant dense<0.000000e+00> : vector<15x16xf32>
    %122 = tpu.matmul %119, %121, %cst_120 {dimension_numbers = #tpu.dot_dimension_numbers<[1], [0], [0], [1], [0, 0, 1, 1], [], []>} : vector<15x16xbf16>, vector<16x16xbf16>, vector<15x16xf32> -> vector<15x16xf32>
    %123 = arith.addf %100, %122 : vector<15x16xf32>
    %124 = vector.extract_strided_slice %113 {offsets = [0, 32], sizes = [15, 16], strides = [1, 1]} : vector<15x64xbf16> to vector<15x16xbf16>
    %c5_121 = arith.constant 5 : index
    %c2_122 = arith.constant 2 : index
    %c0_123 = arith.constant 0 : index
    %c0_124 = arith.constant 0 : index
    %125 = vector.load %arg2[%c5_121, %c2_122, %c0_123, %c0_124] : memref<8x4x16x16xbf16, #tpu.memory_space<vmem>>, vector<1x1x16x16xbf16>
    %126 = vector.shape_cast %125 : vector<1x1x16x16xbf16> to vector<16x16xbf16>
    %cst_125 = arith.constant dense<0.000000e+00> : vector<15x16xf32>
    %127 = tpu.matmul %124, %126, %cst_125 {dimension_numbers = #tpu.dot_dimension_numbers<[1], [0], [0], [1], [0, 0, 1, 1], [], []>} : vector<15x16xbf16>, vector<16x16xbf16>, vector<15x16xf32> -> vector<15x16xf32>
    %128 = arith.addf %105, %127 : vector<15x16xf32>
    %129 = vector.extract_strided_slice %113 {offsets = [0, 48], sizes = [15, 16], strides = [1, 1]} : vector<15x64xbf16> to vector<15x16xbf16>
    %c5_126 = arith.constant 5 : index
    %c3_127 = arith.constant 3 : index
    %c0_128 = arith.constant 0 : index
    %c0_129 = arith.constant 0 : index
    %130 = vector.load %arg2[%c5_126, %c3_127, %c0_128, %c0_129] : memref<8x4x16x16xbf16, #tpu.memory_space<vmem>>, vector<1x1x16x16xbf16>
    %131 = vector.shape_cast %130 : vector<1x1x16x16xbf16> to vector<16x16xbf16>
    %cst_130 = arith.constant dense<0.000000e+00> : vector<15x16xf32>
    %132 = tpu.matmul %129, %131, %cst_130 {dimension_numbers = #tpu.dot_dimension_numbers<[1], [0], [0], [1], [0, 0, 1, 1], [], []>} : vector<15x16xbf16>, vector<16x16xbf16>, vector<15x16xf32> -> vector<15x16xf32>
    %133 = arith.addf %110, %132 : vector<15x16xf32>
    %c0_131 = arith.constant 0 : index
    %c6 = arith.constant 6 : index
    %c0_132 = arith.constant 0 : index
    %134 = vector.load %arg1[%c0_131, %c6, %c0_132] : memref<1x23x64xf32, #tpu.memory_space<vmem>>, vector<1x15x64xf32>
    %135 = vector.shape_cast %134 : vector<1x15x64xf32> to vector<15x64xf32>
    %136 = arith.truncf %135 : vector<15x64xf32> to vector<15x64xbf16>
    %137 = vector.extract_strided_slice %136 {offsets = [0, 0], sizes = [15, 16], strides = [1, 1]} : vector<15x64xbf16> to vector<15x16xbf16>
    %c6_133 = arith.constant 6 : index
    %c0_134 = arith.constant 0 : index
    %c0_135 = arith.constant 0 : index
    %c0_136 = arith.constant 0 : index
    %138 = vector.load %arg2[%c6_133, %c0_134, %c0_135, %c0_136] : memref<8x4x16x16xbf16, #tpu.memory_space<vmem>>, vector<1x1x16x16xbf16>
    %139 = vector.shape_cast %138 : vector<1x1x16x16xbf16> to vector<16x16xbf16>
    %cst_137 = arith.constant dense<0.000000e+00> : vector<15x16xf32>
    %140 = tpu.matmul %137, %139, %cst_137 {dimension_numbers = #tpu.dot_dimension_numbers<[1], [0], [0], [1], [0, 0, 1, 1], [], []>} : vector<15x16xbf16>, vector<16x16xbf16>, vector<15x16xf32> -> vector<15x16xf32>
    %141 = arith.addf %118, %140 : vector<15x16xf32>
    %142 = vector.extract_strided_slice %136 {offsets = [0, 16], sizes = [15, 16], strides = [1, 1]} : vector<15x64xbf16> to vector<15x16xbf16>
    %c6_138 = arith.constant 6 : index
    %c1_139 = arith.constant 1 : index
    %c0_140 = arith.constant 0 : index
    %c0_141 = arith.constant 0 : index
    %143 = vector.load %arg2[%c6_138, %c1_139, %c0_140, %c0_141] : memref<8x4x16x16xbf16, #tpu.memory_space<vmem>>, vector<1x1x16x16xbf16>
    %144 = vector.shape_cast %143 : vector<1x1x16x16xbf16> to vector<16x16xbf16>
    %cst_142 = arith.constant dense<0.000000e+00> : vector<15x16xf32>
    %145 = tpu.matmul %142, %144, %cst_142 {dimension_numbers = #tpu.dot_dimension_numbers<[1], [0], [0], [1], [0, 0, 1, 1], [], []>} : vector<15x16xbf16>, vector<16x16xbf16>, vector<15x16xf32> -> vector<15x16xf32>
    %146 = arith.addf %123, %145 : vector<15x16xf32>
    %147 = vector.extract_strided_slice %136 {offsets = [0, 32], sizes = [15, 16], strides = [1, 1]} : vector<15x64xbf16> to vector<15x16xbf16>
    %c6_143 = arith.constant 6 : index
    %c2_144 = arith.constant 2 : index
    %c0_145 = arith.constant 0 : index
    %c0_146 = arith.constant 0 : index
    %148 = vector.load %arg2[%c6_143, %c2_144, %c0_145, %c0_146] : memref<8x4x16x16xbf16, #tpu.memory_space<vmem>>, vector<1x1x16x16xbf16>
    %149 = vector.shape_cast %148 : vector<1x1x16x16xbf16> to vector<16x16xbf16>
    %cst_147 = arith.constant dense<0.000000e+00> : vector<15x16xf32>
    %150 = tpu.matmul %147, %149, %cst_147 {dimension_numbers = #tpu.dot_dimension_numbers<[1], [0], [0], [1], [0, 0, 1, 1], [], []>} : vector<15x16xbf16>, vector<16x16xbf16>, vector<15x16xf32> -> vector<15x16xf32>
    %151 = arith.addf %128, %150 : vector<15x16xf32>
    %152 = vector.extract_strided_slice %136 {offsets = [0, 48], sizes = [15, 16], strides = [1, 1]} : vector<15x64xbf16> to vector<15x16xbf16>
    %c6_148 = arith.constant 6 : index
    %c3_149 = arith.constant 3 : index
    %c0_150 = arith.constant 0 : index
    %c0_151 = arith.constant 0 : index
    %153 = vector.load %arg2[%c6_148, %c3_149, %c0_150, %c0_151] : memref<8x4x16x16xbf16, #tpu.memory_space<vmem>>, vector<1x1x16x16xbf16>
    %154 = vector.shape_cast %153 : vector<1x1x16x16xbf16> to vector<16x16xbf16>
    %cst_152 = arith.constant dense<0.000000e+00> : vector<15x16xf32>
    %155 = tpu.matmul %152, %154, %cst_152 {dimension_numbers = #tpu.dot_dimension_numbers<[1], [0], [0], [1], [0, 0, 1, 1], [], []>} : vector<15x16xbf16>, vector<16x16xbf16>, vector<15x16xf32> -> vector<15x16xf32>
    %156 = arith.addf %133, %155 : vector<15x16xf32>
    %c0_153 = arith.constant 0 : index
    %c7 = arith.constant 7 : index
    %c0_154 = arith.constant 0 : index
    %157 = vector.load %arg1[%c0_153, %c7, %c0_154] : memref<1x23x64xf32, #tpu.memory_space<vmem>>, vector<1x15x64xf32>
    %158 = vector.shape_cast %157 : vector<1x15x64xf32> to vector<15x64xf32>
    %159 = arith.truncf %158 : vector<15x64xf32> to vector<15x64xbf16>
    %160 = vector.extract_strided_slice %159 {offsets = [0, 0], sizes = [15, 16], strides = [1, 1]} : vector<15x64xbf16> to vector<15x16xbf16>
    %c7_155 = arith.constant 7 : index
    %c0_156 = arith.constant 0 : index
    %c0_157 = arith.constant 0 : index
    %c0_158 = arith.constant 0 : index
    %161 = vector.load %arg2[%c7_155, %c0_156, %c0_157, %c0_158] : memref<8x4x16x16xbf16, #tpu.memory_space<vmem>>, vector<1x1x16x16xbf16>
    %162 = vector.shape_cast %161 : vector<1x1x16x16xbf16> to vector<16x16xbf16>
    %cst_159 = arith.constant dense<0.000000e+00> : vector<15x16xf32>
    %163 = tpu.matmul %160, %162, %cst_159 {dimension_numbers = #tpu.dot_dimension_numbers<[1], [0], [0], [1], [0, 0, 1, 1], [], []>} : vector<15x16xbf16>, vector<16x16xbf16>, vector<15x16xf32> -> vector<15x16xf32>
    %164 = arith.addf %141, %163 : vector<15x16xf32>
    %165 = vector.extract_strided_slice %159 {offsets = [0, 16], sizes = [15, 16], strides = [1, 1]} : vector<15x64xbf16> to vector<15x16xbf16>
    %c7_160 = arith.constant 7 : index
    %c1_161 = arith.constant 1 : index
    %c0_162 = arith.constant 0 : index
    %c0_163 = arith.constant 0 : index
    %166 = vector.load %arg2[%c7_160, %c1_161, %c0_162, %c0_163] : memref<8x4x16x16xbf16, #tpu.memory_space<vmem>>, vector<1x1x16x16xbf16>
    %167 = vector.shape_cast %166 : vector<1x1x16x16xbf16> to vector<16x16xbf16>
    %cst_164 = arith.constant dense<0.000000e+00> : vector<15x16xf32>
    %168 = tpu.matmul %165, %167, %cst_164 {dimension_numbers = #tpu.dot_dimension_numbers<[1], [0], [0], [1], [0, 0, 1, 1], [], []>} : vector<15x16xbf16>, vector<16x16xbf16>, vector<15x16xf32> -> vector<15x16xf32>
    %169 = arith.addf %146, %168 : vector<15x16xf32>
    %170 = vector.extract_strided_slice %159 {offsets = [0, 32], sizes = [15, 16], strides = [1, 1]} : vector<15x64xbf16> to vector<15x16xbf16>
    %c7_165 = arith.constant 7 : index
    %c2_166 = arith.constant 2 : index
    %c0_167 = arith.constant 0 : index
    %c0_168 = arith.constant 0 : index
    %171 = vector.load %arg2[%c7_165, %c2_166, %c0_167, %c0_168] : memref<8x4x16x16xbf16, #tpu.memory_space<vmem>>, vector<1x1x16x16xbf16>
    %172 = vector.shape_cast %171 : vector<1x1x16x16xbf16> to vector<16x16xbf16>
    %cst_169 = arith.constant dense<0.000000e+00> : vector<15x16xf32>
    %173 = tpu.matmul %170, %172, %cst_169 {dimension_numbers = #tpu.dot_dimension_numbers<[1], [0], [0], [1], [0, 0, 1, 1], [], []>} : vector<15x16xbf16>, vector<16x16xbf16>, vector<15x16xf32> -> vector<15x16xf32>
    %174 = arith.addf %151, %173 : vector<15x16xf32>
    %175 = vector.extract_strided_slice %159 {offsets = [0, 48], sizes = [15, 16], strides = [1, 1]} : vector<15x64xbf16> to vector<15x16xbf16>
    %c7_170 = arith.constant 7 : index
    %c3_171 = arith.constant 3 : index
    %c0_172 = arith.constant 0 : index
    %c0_173 = arith.constant 0 : index
    %176 = vector.load %arg2[%c7_170, %c3_171, %c0_172, %c0_173] : memref<8x4x16x16xbf16, #tpu.memory_space<vmem>>, vector<1x1x16x16xbf16>
    %177 = vector.shape_cast %176 : vector<1x1x16x16xbf16> to vector<16x16xbf16>
    %cst_174 = arith.constant dense<0.000000e+00> : vector<15x16xf32>
    %178 = tpu.matmul %175, %177, %cst_174 {dimension_numbers = #tpu.dot_dimension_numbers<[1], [0], [0], [1], [0, 0, 1, 1], [], []>} : vector<15x16xbf16>, vector<16x16xbf16>, vector<15x16xf32> -> vector<15x16xf32>
    %179 = arith.addf %156, %178 : vector<15x16xf32>
    %180 = tpu.concatenate %164, %169, %174, %179 in 1 : vector<15x16xf32>, vector<15x16xf32>, vector<15x16xf32>, vector<15x16xf32> -> vector<15x64xf32>
    %c0_175 = arith.constant 0 : index
    %c0_176 = arith.constant 0 : index
    %181 = vector.load %arg3[%c0_175, %c0_176] : memref<1x64xf32, #tpu.memory_space<vmem>>, vector<1x64xf32>
    %182 = vector.broadcast %181 : vector<1x64xf32> to vector<15x64xf32>
    %183 = arith.addf %180, %182 : vector<15x64xf32>
    %cst_177 = arith.constant 5.000000e-01 : f32
    %184 = vector.broadcast %cst_177 : f32 to vector<15x64xf32>
    %185 = arith.mulf %184, %183 : vector<15x64xf32>
    %cst_178 = arith.constant 4.471500e-02 : f32
    %186 = vector.broadcast %cst_178 : f32 to vector<15x64xf32>
    %187 = arith.mulf %186, %183 : vector<15x64xf32>
    %188 = arith.mulf %187, %183 : vector<15x64xf32>
    %189 = arith.mulf %188, %183 : vector<15x64xf32>
    %190 = arith.addf %183, %189 : vector<15x64xf32>
    %cst_179 = arith.constant 0.797884583 : f32
    %191 = vector.broadcast %cst_179 : f32 to vector<15x64xf32>
    %192 = arith.mulf %191, %190 : vector<15x64xf32>
    %193 = math.tanh %192 : vector<15x64xf32>
    %cst_180 = arith.constant 1.000000e+00 : f32
    %194 = vector.broadcast %cst_180 : f32 to vector<15x64xf32>
    %195 = arith.addf %194, %193 : vector<15x64xf32>
    %196 = arith.mulf %185, %195 : vector<15x64xf32>
    %c0_181 = arith.constant 0 : index
    %c4_182 = arith.constant 4 : index
    %c0_183 = arith.constant 0 : index
    %197 = vector.load %arg1[%c0_181, %c4_182, %c0_183] : memref<1x23x64xf32, #tpu.memory_space<vmem>>, vector<1x15x64xf32>
    %198 = vector.shape_cast %197 : vector<1x15x64xf32> to vector<15x64xf32>
    %199 = arith.addf %196, %198 : vector<15x64xf32>
    %c0_184 = arith.constant 0 : index
    %c0_185 = arith.constant 0 : index
    %200 = vector.load %arg4[%c0_184, %c0_185] : memref<1x64xf32, #tpu.memory_space<vmem>>, vector<1x64xf32>
    %c0_186 = arith.constant 0 : index
    %c0_187 = arith.constant 0 : index
    %201 = vector.load %arg5[%c0_186, %c0_187] : memref<1x64xf32, #tpu.memory_space<vmem>>, vector<1x64xf32>
    %cst_188 = arith.constant dense<0.000000e+00> : vector<15xf32>
    %202 = vector.multi_reduction <add>, %199, %cst_188 [1] : vector<15x64xf32> to vector<15xf32>
    %203 = vector.shape_cast %202 : vector<15xf32> to vector<15x1xf32>
    %cst_189 = arith.constant 6.400000e+01 : f32
    %204 = vector.broadcast %cst_189 : f32 to vector<15x1xf32>
    %205 = arith.divf %203, %204 : vector<15x1xf32>
    %206 = vector.broadcast %205 : vector<15x1xf32> to vector<15x64xf32>
    %207 = arith.subf %199, %206 : vector<15x64xf32>
    %208 = arith.mulf %207, %207 : vector<15x64xf32>
    %cst_190 = arith.constant dense<0.000000e+00> : vector<15xf32>
    %209 = vector.multi_reduction <add>, %208, %cst_190 [1] : vector<15x64xf32> to vector<15xf32>
    %210 = vector.shape_cast %209 : vector<15xf32> to vector<15x1xf32>
    %cst_191 = arith.constant 6.400000e+01 : f32
    %211 = vector.broadcast %cst_191 : f32 to vector<15x1xf32>
    %212 = arith.divf %210, %211 : vector<15x1xf32>
    %213 = vector.broadcast %205 : vector<15x1xf32> to vector<15x64xf32>
    %214 = arith.subf %199, %213 : vector<15x64xf32>
    %cst_192 = arith.constant 9.99999974E-6 : f32
    %215 = vector.broadcast %cst_192 : f32 to vector<15x1xf32>
    %216 = arith.addf %212, %215 : vector<15x1xf32>
    %217 = math.rsqrt %216 : vector<15x1xf32>
    %218 = vector.broadcast %217 : vector<15x1xf32> to vector<15x64xf32>
    %219 = arith.mulf %214, %218 : vector<15x64xf32>
    %220 = vector.broadcast %200 : vector<1x64xf32> to vector<15x64xf32>
    %221 = arith.mulf %219, %220 : vector<15x64xf32>
    %222 = vector.broadcast %201 : vector<1x64xf32> to vector<15x64xf32>
    %223 = arith.addf %221, %222 : vector<15x64xf32>
    %c0_193 = arith.constant 0 : index
    %c0_194 = arith.constant 0 : index
    %c0_195 = arith.constant 0 : index
    %224 = vector.load %arg6[%c0_193, %c0_194, %c0_195] : memref<1x15x64xf32, #tpu.memory_space<vmem>>, vector<1x15x64xf32>
    %225 = vector.shape_cast %224 : vector<1x15x64xf32> to vector<15x64xf32>
    %226 = vector.shape_cast %223 : vector<15x64xf32> to vector<1x15x64xf32>
    tpu.vector_store %arg6[%c0_193, %c0_194, %c0_195], %226 {strides = array<i32>} : memref<1x15x64xf32, #tpu.memory_space<vmem>>, vector<1x15x64xf32>,
    return
  }
  func.func @transform_0(%arg0: i32) -> (i32, i32, i32) {
    %c0_i32 = arith.constant 0 : i32
    %c0_i32_0 = arith.constant 0 : i32
    %c0_i32_1 = arith.constant 0 : i32
    return %arg0, %c0_i32, %c0_i32_0 : i32, i32, i32
  }
  func.func @transform_1(%arg0: i32) -> (i32, i32, i32, i32) {
    %c0_i32 = arith.constant 0 : i32
    %c0_i32_0 = arith.constant 0 : i32
    %c0_i32_1 = arith.constant 0 : i32
    %c0_i32_2 = arith.constant 0 : i32
    %c0_i32_3 = arith.constant 0 : i32
    return %c0_i32, %c0_i32_0, %c0_i32_1, %c0_i32_2 : i32, i32, i32, i32
  }
  func.func @transform_2(%arg0: i32) -> (i32, i32) {
    %c0_i32 = arith.constant 0 : i32
    %c0_i32_0 = arith.constant 0 : i32
    %c0_i32_1 = arith.constant 0 : i32
    return %c0_i32, %c0_i32_0 : i32, i32
  }
  func.func @transform_3(%arg0: i32) -> (i32, i32) {
    %c0_i32 = arith.constant 0 : i32
    %c0_i32_0 = arith.constant 0 : i32
    %c0_i32_1 = arith.constant 0 : i32
    return %c0_i32, %c0_i32_0 : i32, i32
  }
  func.func @transform_4(%arg0: i32) -> (i32, i32) {
    %c0_i32 = arith.constant 0 : i32
    %c0_i32_0 = arith.constant 0 : i32
    %c0_i32_1 = arith.constant 0 : i32
    return %c0_i32, %c0_i32_0 : i32, i32
  }
  func.func @transform_5(%arg0: i32) -> (i32, i32, i32) {
    %c0_i32 = arith.constant 0 : i32
    %c0_i32_0 = arith.constant 0 : i32
    %c0_i32_1 = arith.constant 0 : i32
    return %arg0, %c0_i32, %c0_i32_0 : i32, i32, i32
  }
}

module attributes {stable_mosaic.version = 11 : i64} {
  func.func @_ffn_kernel(%arg0: i32, %arg1: i32, %arg2: memref<16x64xf32, #tpu.memory_space<vmem>>, %arg3: memref<64x128xbf16, #tpu.memory_space<vmem>>, %arg4: memref<1x128xf32, #tpu.memory_space<vmem>>, %arg5: memref<128x64xbf16, #tpu.memory_space<vmem>>, %arg6: memref<1x64xf32, #tpu.memory_space<vmem>>, %arg7: memref<1x64xf32, #tpu.memory_space<vmem>>, %arg8: memref<1x64xf32, #tpu.memory_space<vmem>>, %arg9: memref<16x64xf32, #tpu.memory_space<vmem>>, %arg10: memref<16x64xf32, #tpu.memory_space<vmem>>) attributes {dimension_semantics = [#tpu.dimension_semantics<parallel>, #tpu.dimension_semantics<arbitrary>], iteration_bounds = array<i64: 2, 1>, scalar_prefetch = 0 : i64, scratch_operands = 1 : i64, tpu.core_type = #tpu.core_type<tc>, window_params = [{transform_indices = @transform_0, window_bounds = array<i64: 16, 64>}, {transform_indices = @transform_1, window_bounds = array<i64: 64, 128>}, {transform_indices = @transform_2, window_bounds = array<i64: 1, 128>}, {transform_indices = @transform_3, window_bounds = array<i64: 128, 64>}, {pipeline_mode = #tpu.pipeline_mode<synchronous>, transform_indices = @transform_4, window_bounds = array<i64: 1, 64>}, {pipeline_mode = #tpu.pipeline_mode<synchronous>, transform_indices = @transform_5, window_bounds = array<i64: 1, 64>}, {pipeline_mode = #tpu.pipeline_mode<synchronous>, transform_indices = @transform_6, window_bounds = array<i64: 1, 64>}, {transform_indices = @transform_7, window_bounds = array<i64: 16, 64>}]} {
    %c0_i32 = arith.constant 0 : i32
    %0 = arith.cmpi eq, %arg1, %c0_i32 : i32
    %1 = arith.extui %0 : i1 to i32
    %c0_i32_0 = arith.constant 0 : i32
    %2 = arith.cmpi ne, %1, %c0_i32_0 : i32
    scf.if %2 {
      %cst_19 = arith.constant 0.000000e+00 : f32
      %32 = vector.broadcast %cst_19 : f32 to vector<16x64xf32>
      %c0_20 = arith.constant 0 : index
      %c0_21 = arith.constant 0 : index
      %33 = vector.load %arg10[%c0_20, %c0_21] : memref<16x64xf32, #tpu.memory_space<vmem>>, vector<16x64xf32>
      tpu.vector_store %arg10[%c0_20, %c0_21], %32 {strides = array<i32>} : memref<16x64xf32, #tpu.memory_space<vmem>>, vector<16x64xf32>,
    } else {
    }
    %c0 = arith.constant 0 : index
    %c0_1 = arith.constant 0 : index
    %3 = vector.load %arg2[%c0, %c0_1] : memref<16x64xf32, #tpu.memory_space<vmem>>, vector<16x64xf32>
    %4 = arith.truncf %3 : vector<16x64xf32> to vector<16x64xbf16>
    %c0_2 = arith.constant 0 : index
    %c0_3 = arith.constant 0 : index
    %5 = vector.load %arg3[%c0_2, %c0_3] : memref<64x128xbf16, #tpu.memory_space<vmem>>, vector<64x128xbf16>
    %cst = arith.constant dense<0.000000e+00> : vector<16x128xf32>
    %6 = tpu.matmul %4, %5, %cst {dimension_numbers = #tpu.dot_dimension_numbers<[1], [0], [0], [1], [0, 0, 1, 1], [], []>} : vector<16x64xbf16>, vector<64x128xbf16>, vector<16x128xf32> -> vector<16x128xf32>
    %c0_4 = arith.constant 0 : index
    %c0_5 = arith.constant 0 : index
    %7 = vector.load %arg4[%c0_4, %c0_5] : memref<1x128xf32, #tpu.memory_space<vmem>>, vector<1x128xf32>
    %8 = vector.broadcast %7 : vector<1x128xf32> to vector<16x128xf32>
    %9 = arith.addf %6, %8 : vector<16x128xf32>
    %cst_6 = arith.constant 5.000000e-01 : f32
    %10 = vector.broadcast %cst_6 : f32 to vector<16x128xf32>
    %11 = arith.mulf %10, %9 : vector<16x128xf32>
    %cst_7 = arith.constant 4.471500e-02 : f32
    %12 = vector.broadcast %cst_7 : f32 to vector<16x128xf32>
    %13 = arith.mulf %12, %9 : vector<16x128xf32>
    %14 = arith.mulf %13, %9 : vector<16x128xf32>
    %15 = arith.mulf %14, %9 : vector<16x128xf32>
    %16 = arith.addf %9, %15 : vector<16x128xf32>
    %cst_8 = arith.constant 0.797884583 : f32
    %17 = vector.broadcast %cst_8 : f32 to vector<16x128xf32>
    %18 = arith.mulf %17, %16 : vector<16x128xf32>
    %19 = math.tanh %18 : vector<16x128xf32>
    %cst_9 = arith.constant 1.000000e+00 : f32
    %20 = vector.broadcast %cst_9 : f32 to vector<16x128xf32>
    %21 = arith.addf %20, %19 : vector<16x128xf32>
    %22 = arith.mulf %11, %21 : vector<16x128xf32>
    %c0_10 = arith.constant 0 : index
    %c0_11 = arith.constant 0 : index
    %23 = vector.load %arg10[%c0_10, %c0_11] : memref<16x64xf32, #tpu.memory_space<vmem>>, vector<16x64xf32>
    %24 = arith.truncf %22 : vector<16x128xf32> to vector<16x128xbf16>
    %c0_12 = arith.constant 0 : index
    %c0_13 = arith.constant 0 : index
    %25 = vector.load %arg5[%c0_12, %c0_13] : memref<128x64xbf16, #tpu.memory_space<vmem>>, vector<128x64xbf16>
    %cst_14 = arith.constant dense<0.000000e+00> : vector<16x64xf32>
    %26 = tpu.matmul %24, %25, %cst_14 {dimension_numbers = #tpu.dot_dimension_numbers<[1], [0], [0], [1], [0, 0, 1, 1], [], []>} : vector<16x128xbf16>, vector<128x64xbf16>, vector<16x64xf32> -> vector<16x64xf32>
    %27 = arith.addf %23, %26 : vector<16x64xf32>
    %c0_15 = arith.constant 0 : index
    %c0_16 = arith.constant 0 : index
    %28 = vector.load %arg10[%c0_15, %c0_16] : memref<16x64xf32, #tpu.memory_space<vmem>>, vector<16x64xf32>
    tpu.vector_store %arg10[%c0_15, %c0_16], %27 {strides = array<i32>} : memref<16x64xf32, #tpu.memory_space<vmem>>, vector<16x64xf32>,
    %c0_i32_17 = arith.constant 0 : i32
    %29 = arith.cmpi eq, %arg1, %c0_i32_17 : i32
    %30 = arith.extui %29 : i1 to i32
    %c0_i32_18 = arith.constant 0 : i32
    %31 = arith.cmpi ne, %30, %c0_i32_18 : i32
    scf.if %31 {
      %c0_19 = arith.constant 0 : index
      %c0_20 = arith.constant 0 : index
      %32 = vector.load %arg10[%c0_19, %c0_20] : memref<16x64xf32, #tpu.memory_space<vmem>>, vector<16x64xf32>
      %c0_21 = arith.constant 0 : index
      %c0_22 = arith.constant 0 : index
      %33 = vector.load %arg6[%c0_21, %c0_22] : memref<1x64xf32, #tpu.memory_space<vmem>>, vector<1x64xf32>
      %34 = vector.broadcast %33 : vector<1x64xf32> to vector<16x64xf32>
      %35 = arith.addf %32, %34 : vector<16x64xf32>
      %c0_23 = arith.constant 0 : index
      %c0_24 = arith.constant 0 : index
      %36 = vector.load %arg2[%c0_23, %c0_24] : memref<16x64xf32, #tpu.memory_space<vmem>>, vector<16x64xf32>
      %37 = arith.addf %35, %36 : vector<16x64xf32>
      %c0_25 = arith.constant 0 : index
      %c0_26 = arith.constant 0 : index
      %38 = vector.load %arg7[%c0_25, %c0_26] : memref<1x64xf32, #tpu.memory_space<vmem>>, vector<1x64xf32>
      %c0_27 = arith.constant 0 : index
      %c0_28 = arith.constant 0 : index
      %39 = vector.load %arg8[%c0_27, %c0_28] : memref<1x64xf32, #tpu.memory_space<vmem>>, vector<1x64xf32>
      %cst_29 = arith.constant dense<0.000000e+00> : vector<16xf32>
      %40 = vector.multi_reduction <add>, %37, %cst_29 [1] : vector<16x64xf32> to vector<16xf32>
      %41 = vector.shape_cast %40 : vector<16xf32> to vector<16x1xf32>
      %cst_30 = arith.constant 6.400000e+01 : f32
      %42 = vector.broadcast %cst_30 : f32 to vector<16x1xf32>
      %43 = arith.divf %41, %42 : vector<16x1xf32>
      %44 = vector.broadcast %43 : vector<16x1xf32> to vector<16x64xf32>
      %45 = arith.subf %37, %44 : vector<16x64xf32>
      %46 = arith.mulf %45, %45 : vector<16x64xf32>
      %cst_31 = arith.constant dense<0.000000e+00> : vector<16xf32>
      %47 = vector.multi_reduction <add>, %46, %cst_31 [1] : vector<16x64xf32> to vector<16xf32>
      %48 = vector.shape_cast %47 : vector<16xf32> to vector<16x1xf32>
      %cst_32 = arith.constant 6.400000e+01 : f32
      %49 = vector.broadcast %cst_32 : f32 to vector<16x1xf32>
      %50 = arith.divf %48, %49 : vector<16x1xf32>
      %51 = vector.broadcast %43 : vector<16x1xf32> to vector<16x64xf32>
      %52 = arith.subf %37, %51 : vector<16x64xf32>
      %cst_33 = arith.constant 9.99999974E-6 : f32
      %53 = vector.broadcast %cst_33 : f32 to vector<16x1xf32>
      %54 = arith.addf %50, %53 : vector<16x1xf32>
      %55 = math.rsqrt %54 : vector<16x1xf32>
      %56 = vector.broadcast %55 : vector<16x1xf32> to vector<16x64xf32>
      %57 = arith.mulf %52, %56 : vector<16x64xf32>
      %58 = vector.broadcast %38 : vector<1x64xf32> to vector<16x64xf32>
      %59 = arith.mulf %57, %58 : vector<16x64xf32>
      %60 = vector.broadcast %39 : vector<1x64xf32> to vector<16x64xf32>
      %61 = arith.addf %59, %60 : vector<16x64xf32>
      %c0_34 = arith.constant 0 : index
      %c0_35 = arith.constant 0 : index
      %62 = vector.load %arg9[%c0_34, %c0_35] : memref<16x64xf32, #tpu.memory_space<vmem>>, vector<16x64xf32>
      tpu.vector_store %arg9[%c0_34, %c0_35], %61 {strides = array<i32>} : memref<16x64xf32, #tpu.memory_space<vmem>>, vector<16x64xf32>,
    } else {
    }
    return
  }
  func.func @transform_0(%arg0: i32, %arg1: i32) -> (i32, i32) {
    %c0_i32 = arith.constant 0 : i32
    %c0_i32_0 = arith.constant 0 : i32
    return %arg0, %c0_i32 : i32, i32
  }
  func.func @transform_1(%arg0: i32, %arg1: i32) -> (i32, i32) {
    %c0_i32 = arith.constant 0 : i32
    %c0_i32_0 = arith.constant 0 : i32
    return %c0_i32, %arg1 : i32, i32
  }
  func.func @transform_2(%arg0: i32, %arg1: i32) -> (i32, i32) {
    %c0_i32 = arith.constant 0 : i32
    %c0_i32_0 = arith.constant 0 : i32
    return %c0_i32, %arg1 : i32, i32
  }
  func.func @transform_3(%arg0: i32, %arg1: i32) -> (i32, i32) {
    %c0_i32 = arith.constant 0 : i32
    %c0_i32_0 = arith.constant 0 : i32
    return %arg1, %c0_i32 : i32, i32
  }
  func.func @transform_4(%arg0: i32, %arg1: i32) -> (i32, i32) {
    %c0_i32 = arith.constant 0 : i32
    %c0_i32_0 = arith.constant 0 : i32
    %c0_i32_1 = arith.constant 0 : i32
    return %c0_i32, %c0_i32_0 : i32, i32
  }
  func.func @transform_5(%arg0: i32, %arg1: i32) -> (i32, i32) {
    %c0_i32 = arith.constant 0 : i32
    %c0_i32_0 = arith.constant 0 : i32
    %c0_i32_1 = arith.constant 0 : i32
    return %c0_i32, %c0_i32_0 : i32, i32
  }
  func.func @transform_6(%arg0: i32, %arg1: i32) -> (i32, i32) {
    %c0_i32 = arith.constant 0 : i32
    %c0_i32_0 = arith.constant 0 : i32
    %c0_i32_1 = arith.constant 0 : i32
    return %c0_i32, %c0_i32_0 : i32, i32
  }
  func.func @transform_7(%arg0: i32, %arg1: i32) -> (i32, i32) {
    %c0_i32 = arith.constant 0 : i32
    %c0_i32_0 = arith.constant 0 : i32
    return %arg0, %c0_i32 : i32, i32
  }
}

module attributes {stable_mosaic.version = 11 : i64} {
  func.func @_attn_kernel(%arg0: i32, %arg1: memref<1x15x64xf32, #tpu.memory_space<vmem>>, %arg2: memref<64x192xbf16, #tpu.memory_space<vmem>>, %arg3: memref<1x192xf32, #tpu.memory_space<vmem>>, %arg4: memref<64x64xbf16, #tpu.memory_space<vmem>>, %arg5: memref<1x64xf32, #tpu.memory_space<vmem>>, %arg6: memref<1x64xf32, #tpu.memory_space<vmem>>, %arg7: memref<1x64xf32, #tpu.memory_space<vmem>>, %arg8: memref<1x15x64xf32, #tpu.memory_space<vmem>>) attributes {dimension_semantics = [#tpu.dimension_semantics<parallel>], iteration_bounds = array<i64: 2>, scalar_prefetch = 0 : i64, scratch_operands = 0 : i64, tpu.core_type = #tpu.core_type<tc>, window_params = [{transform_indices = @transform_0, window_bounds = array<i64: 1, 15, 64>}, {pipeline_mode = #tpu.pipeline_mode<synchronous>, transform_indices = @transform_1, window_bounds = array<i64: 64, 192>}, {pipeline_mode = #tpu.pipeline_mode<synchronous>, transform_indices = @transform_2, window_bounds = array<i64: 1, 192>}, {pipeline_mode = #tpu.pipeline_mode<synchronous>, transform_indices = @transform_3, window_bounds = array<i64: 64, 64>}, {pipeline_mode = #tpu.pipeline_mode<synchronous>, transform_indices = @transform_4, window_bounds = array<i64: 1, 64>}, {pipeline_mode = #tpu.pipeline_mode<synchronous>, transform_indices = @transform_5, window_bounds = array<i64: 1, 64>}, {pipeline_mode = #tpu.pipeline_mode<synchronous>, transform_indices = @transform_6, window_bounds = array<i64: 1, 64>}, {transform_indices = @transform_7, window_bounds = array<i64: 1, 15, 64>}]} {
    %c0 = arith.constant 0 : index
    %c0_0 = arith.constant 0 : index
    %c0_1 = arith.constant 0 : index
    %0 = vector.load %arg1[%c0, %c0_0, %c0_1] : memref<1x15x64xf32, #tpu.memory_space<vmem>>, vector<1x15x64xf32>
    %1 = vector.shape_cast %0 : vector<1x15x64xf32> to vector<15x64xf32>
    %2 = arith.truncf %1 : vector<15x64xf32> to vector<15x64xbf16>
    %c0_2 = arith.constant 0 : index
    %c0_3 = arith.constant 0 : index
    %3 = vector.load %arg2[%c0_2, %c0_3] : memref<64x192xbf16, #tpu.memory_space<vmem>>, vector<64x192xbf16>
    %cst = arith.constant dense<0.000000e+00> : vector<15x192xf32>
    %4 = tpu.matmul %2, %3, %cst {dimension_numbers = #tpu.dot_dimension_numbers<[1], [0], [0], [1], [0, 0, 1, 1], [], []>} : vector<15x64xbf16>, vector<64x192xbf16>, vector<15x192xf32> -> vector<15x192xf32>
    %c0_4 = arith.constant 0 : index
    %c0_5 = arith.constant 0 : index
    %5 = vector.load %arg3[%c0_4, %c0_5] : memref<1x192xf32, #tpu.memory_space<vmem>>, vector<1x192xf32>
    %6 = vector.broadcast %5 : vector<1x192xf32> to vector<15x192xf32>
    %7 = arith.addf %4, %6 : vector<15x192xf32>
    %8 = vector.extract_strided_slice %7 {offsets = [0, 0], sizes = [15, 48], strides = [1, 1]} : vector<15x192xf32> to vector<15x48xf32>
    %9 = vector.extract_strided_slice %8 {offsets = [0, 0], sizes = [15, 16], strides = [1, 1]} : vector<15x48xf32> to vector<15x16xf32>
    %cst_6 = arith.constant 2.500000e-01 : f32
    %10 = vector.broadcast %cst_6 : f32 to vector<15x16xf32>
    %11 = arith.mulf %9, %10 : vector<15x16xf32>
    %12 = arith.truncf %11 : vector<15x16xf32> to vector<15x16xbf16>
    %13 = vector.extract_strided_slice %8 {offsets = [0, 16], sizes = [15, 16], strides = [1, 1]} : vector<15x48xf32> to vector<15x16xf32>
    %14 = arith.truncf %13 : vector<15x16xf32> to vector<15x16xbf16>
    %15 = vector.extract_strided_slice %8 {offsets = [0, 32], sizes = [15, 16], strides = [1, 1]} : vector<15x48xf32> to vector<15x16xf32>
    %16 = arith.truncf %15 : vector<15x16xf32> to vector<15x16xbf16>
    %cst_7 = arith.constant dense<0.000000e+00> : vector<15x15xf32>
    %17 = tpu.matmul %12, %14, %cst_7 {dimension_numbers = #tpu.dot_dimension_numbers<[1], [1], [0], [0], [0, 0, 1, 0], [], []>} : vector<15x16xbf16>, vector<15x16xbf16>, vector<15x15xf32> -> vector<15x15xf32>
    %cst_8 = arith.constant dense<0xFF800000> : vector<15xf32>
    %18 = vector.multi_reduction <maximumf>, %17, %cst_8 [1] : vector<15x15xf32> to vector<15xf32>
    %19 = vector.shape_cast %18 : vector<15xf32> to vector<15x1xf32>
    %20 = vector.broadcast %19 : vector<15x1xf32> to vector<15x15xf32>
    %21 = arith.subf %17, %20 : vector<15x15xf32>
    %22 = math.exp %21 : vector<15x15xf32>
    %cst_9 = arith.constant dense<0.000000e+00> : vector<15xf32>
    %23 = vector.multi_reduction <add>, %22, %cst_9 [1] : vector<15x15xf32> to vector<15xf32>
    %24 = vector.shape_cast %23 : vector<15xf32> to vector<15x1xf32>
    %25 = tpu.reciprocal %24 {approx = true} : vector<15x1xf32> -> vector<15x1xf32>
    %26 = vector.broadcast %25 : vector<15x1xf32> to vector<15x15xf32>
    %27 = arith.mulf %22, %26 : vector<15x15xf32>
    %28 = arith.truncf %27 : vector<15x15xf32> to vector<15x15xbf16>
    %cst_10 = arith.constant dense<0.000000e+00> : vector<15x16xf32>
    %29 = tpu.matmul %28, %16, %cst_10 {dimension_numbers = #tpu.dot_dimension_numbers<[1], [0], [0], [1], [0, 0, 1, 1], [], []>} : vector<15x15xbf16>, vector<15x16xbf16>, vector<15x16xf32> -> vector<15x16xf32>
    %30 = arith.truncf %29 : vector<15x16xf32> to vector<15x16xbf16>
    %c0_11 = arith.constant 0 : index
    %c0_12 = arith.constant 0 : index
    %31 = vector.load %arg4[%c0_11, %c0_12] : memref<64x64xbf16, #tpu.memory_space<vmem>>, vector<16x64xbf16>
    %cst_13 = arith.constant dense<0.000000e+00> : vector<15x64xf32>
    %32 = tpu.matmul %30, %31, %cst_13 {dimension_numbers = #tpu.dot_dimension_numbers<[1], [0], [0], [1], [0, 0, 1, 1], [], []>} : vector<15x16xbf16>, vector<16x64xbf16>, vector<15x64xf32> -> vector<15x64xf32>
    %33 = vector.extract_strided_slice %7 {offsets = [0, 48], sizes = [15, 48], strides = [1, 1]} : vector<15x192xf32> to vector<15x48xf32>
    %34 = vector.extract_strided_slice %33 {offsets = [0, 0], sizes = [15, 16], strides = [1, 1]} : vector<15x48xf32> to vector<15x16xf32>
    %cst_14 = arith.constant 2.500000e-01 : f32
    %35 = vector.broadcast %cst_14 : f32 to vector<15x16xf32>
    %36 = arith.mulf %34, %35 : vector<15x16xf32>
    %37 = arith.truncf %36 : vector<15x16xf32> to vector<15x16xbf16>
    %38 = vector.extract_strided_slice %33 {offsets = [0, 16], sizes = [15, 16], strides = [1, 1]} : vector<15x48xf32> to vector<15x16xf32>
    %39 = arith.truncf %38 : vector<15x16xf32> to vector<15x16xbf16>
    %40 = vector.extract_strided_slice %33 {offsets = [0, 32], sizes = [15, 16], strides = [1, 1]} : vector<15x48xf32> to vector<15x16xf32>
    %41 = arith.truncf %40 : vector<15x16xf32> to vector<15x16xbf16>
    %cst_15 = arith.constant dense<0.000000e+00> : vector<15x15xf32>
    %42 = tpu.matmul %37, %39, %cst_15 {dimension_numbers = #tpu.dot_dimension_numbers<[1], [1], [0], [0], [0, 0, 1, 0], [], []>} : vector<15x16xbf16>, vector<15x16xbf16>, vector<15x15xf32> -> vector<15x15xf32>
    %cst_16 = arith.constant dense<0xFF800000> : vector<15xf32>
    %43 = vector.multi_reduction <maximumf>, %42, %cst_16 [1] : vector<15x15xf32> to vector<15xf32>
    %44 = vector.shape_cast %43 : vector<15xf32> to vector<15x1xf32>
    %45 = vector.broadcast %44 : vector<15x1xf32> to vector<15x15xf32>
    %46 = arith.subf %42, %45 : vector<15x15xf32>
    %47 = math.exp %46 : vector<15x15xf32>
    %cst_17 = arith.constant dense<0.000000e+00> : vector<15xf32>
    %48 = vector.multi_reduction <add>, %47, %cst_17 [1] : vector<15x15xf32> to vector<15xf32>
    %49 = vector.shape_cast %48 : vector<15xf32> to vector<15x1xf32>
    %50 = tpu.reciprocal %49 {approx = true} : vector<15x1xf32> -> vector<15x1xf32>
    %51 = vector.broadcast %50 : vector<15x1xf32> to vector<15x15xf32>
    %52 = arith.mulf %47, %51 : vector<15x15xf32>
    %53 = arith.truncf %52 : vector<15x15xf32> to vector<15x15xbf16>
    %cst_18 = arith.constant dense<0.000000e+00> : vector<15x16xf32>
    %54 = tpu.matmul %53, %41, %cst_18 {dimension_numbers = #tpu.dot_dimension_numbers<[1], [0], [0], [1], [0, 0, 1, 1], [], []>} : vector<15x15xbf16>, vector<15x16xbf16>, vector<15x16xf32> -> vector<15x16xf32>
    %55 = arith.truncf %54 : vector<15x16xf32> to vector<15x16xbf16>
    %c16 = arith.constant 16 : index
    %c0_19 = arith.constant 0 : index
    %56 = vector.load %arg4[%c16, %c0_19] : memref<64x64xbf16, #tpu.memory_space<vmem>>, vector<16x64xbf16>
    %cst_20 = arith.constant dense<0.000000e+00> : vector<15x64xf32>
    %57 = tpu.matmul %55, %56, %cst_20 {dimension_numbers = #tpu.dot_dimension_numbers<[1], [0], [0], [1], [0, 0, 1, 1], [], []>} : vector<15x16xbf16>, vector<16x64xbf16>, vector<15x64xf32> -> vector<15x64xf32>
    %58 = arith.addf %32, %57 : vector<15x64xf32>
    %59 = vector.extract_strided_slice %7 {offsets = [0, 96], sizes = [15, 48], strides = [1, 1]} : vector<15x192xf32> to vector<15x48xf32>
    %60 = vector.extract_strided_slice %59 {offsets = [0, 0], sizes = [15, 16], strides = [1, 1]} : vector<15x48xf32> to vector<15x16xf32>
    %cst_21 = arith.constant 2.500000e-01 : f32
    %61 = vector.broadcast %cst_21 : f32 to vector<15x16xf32>
    %62 = arith.mulf %60, %61 : vector<15x16xf32>
    %63 = arith.truncf %62 : vector<15x16xf32> to vector<15x16xbf16>
    %64 = vector.extract_strided_slice %59 {offsets = [0, 16], sizes = [15, 16], strides = [1, 1]} : vector<15x48xf32> to vector<15x16xf32>
    %65 = arith.truncf %64 : vector<15x16xf32> to vector<15x16xbf16>
    %66 = vector.extract_strided_slice %59 {offsets = [0, 32], sizes = [15, 16], strides = [1, 1]} : vector<15x48xf32> to vector<15x16xf32>
    %67 = arith.truncf %66 : vector<15x16xf32> to vector<15x16xbf16>
    %cst_22 = arith.constant dense<0.000000e+00> : vector<15x15xf32>
    %68 = tpu.matmul %63, %65, %cst_22 {dimension_numbers = #tpu.dot_dimension_numbers<[1], [1], [0], [0], [0, 0, 1, 0], [], []>} : vector<15x16xbf16>, vector<15x16xbf16>, vector<15x15xf32> -> vector<15x15xf32>
    %cst_23 = arith.constant dense<0xFF800000> : vector<15xf32>
    %69 = vector.multi_reduction <maximumf>, %68, %cst_23 [1] : vector<15x15xf32> to vector<15xf32>
    %70 = vector.shape_cast %69 : vector<15xf32> to vector<15x1xf32>
    %71 = vector.broadcast %70 : vector<15x1xf32> to vector<15x15xf32>
    %72 = arith.subf %68, %71 : vector<15x15xf32>
    %73 = math.exp %72 : vector<15x15xf32>
    %cst_24 = arith.constant dense<0.000000e+00> : vector<15xf32>
    %74 = vector.multi_reduction <add>, %73, %cst_24 [1] : vector<15x15xf32> to vector<15xf32>
    %75 = vector.shape_cast %74 : vector<15xf32> to vector<15x1xf32>
    %76 = tpu.reciprocal %75 {approx = true} : vector<15x1xf32> -> vector<15x1xf32>
    %77 = vector.broadcast %76 : vector<15x1xf32> to vector<15x15xf32>
    %78 = arith.mulf %73, %77 : vector<15x15xf32>
    %79 = arith.truncf %78 : vector<15x15xf32> to vector<15x15xbf16>
    %cst_25 = arith.constant dense<0.000000e+00> : vector<15x16xf32>
    %80 = tpu.matmul %79, %67, %cst_25 {dimension_numbers = #tpu.dot_dimension_numbers<[1], [0], [0], [1], [0, 0, 1, 1], [], []>} : vector<15x15xbf16>, vector<15x16xbf16>, vector<15x16xf32> -> vector<15x16xf32>
    %81 = arith.truncf %80 : vector<15x16xf32> to vector<15x16xbf16>
    %c32 = arith.constant 32 : index
    %c0_26 = arith.constant 0 : index
    %82 = vector.load %arg4[%c32, %c0_26] : memref<64x64xbf16, #tpu.memory_space<vmem>>, vector<16x64xbf16>
    %cst_27 = arith.constant dense<0.000000e+00> : vector<15x64xf32>
    %83 = tpu.matmul %81, %82, %cst_27 {dimension_numbers = #tpu.dot_dimension_numbers<[1], [0], [0], [1], [0, 0, 1, 1], [], []>} : vector<15x16xbf16>, vector<16x64xbf16>, vector<15x64xf32> -> vector<15x64xf32>
    %84 = arith.addf %58, %83 : vector<15x64xf32>
    %85 = vector.extract_strided_slice %7 {offsets = [0, 144], sizes = [15, 48], strides = [1, 1]} : vector<15x192xf32> to vector<15x48xf32>
    %86 = vector.extract_strided_slice %85 {offsets = [0, 0], sizes = [15, 16], strides = [1, 1]} : vector<15x48xf32> to vector<15x16xf32>
    %cst_28 = arith.constant 2.500000e-01 : f32
    %87 = vector.broadcast %cst_28 : f32 to vector<15x16xf32>
    %88 = arith.mulf %86, %87 : vector<15x16xf32>
    %89 = arith.truncf %88 : vector<15x16xf32> to vector<15x16xbf16>
    %90 = vector.extract_strided_slice %85 {offsets = [0, 16], sizes = [15, 16], strides = [1, 1]} : vector<15x48xf32> to vector<15x16xf32>
    %91 = arith.truncf %90 : vector<15x16xf32> to vector<15x16xbf16>
    %92 = vector.extract_strided_slice %85 {offsets = [0, 32], sizes = [15, 16], strides = [1, 1]} : vector<15x48xf32> to vector<15x16xf32>
    %93 = arith.truncf %92 : vector<15x16xf32> to vector<15x16xbf16>
    %cst_29 = arith.constant dense<0.000000e+00> : vector<15x15xf32>
    %94 = tpu.matmul %89, %91, %cst_29 {dimension_numbers = #tpu.dot_dimension_numbers<[1], [1], [0], [0], [0, 0, 1, 0], [], []>} : vector<15x16xbf16>, vector<15x16xbf16>, vector<15x15xf32> -> vector<15x15xf32>
    %cst_30 = arith.constant dense<0xFF800000> : vector<15xf32>
    %95 = vector.multi_reduction <maximumf>, %94, %cst_30 [1] : vector<15x15xf32> to vector<15xf32>
    %96 = vector.shape_cast %95 : vector<15xf32> to vector<15x1xf32>
    %97 = vector.broadcast %96 : vector<15x1xf32> to vector<15x15xf32>
    %98 = arith.subf %94, %97 : vector<15x15xf32>
    %99 = math.exp %98 : vector<15x15xf32>
    %cst_31 = arith.constant dense<0.000000e+00> : vector<15xf32>
    %100 = vector.multi_reduction <add>, %99, %cst_31 [1] : vector<15x15xf32> to vector<15xf32>
    %101 = vector.shape_cast %100 : vector<15xf32> to vector<15x1xf32>
    %102 = tpu.reciprocal %101 {approx = true} : vector<15x1xf32> -> vector<15x1xf32>
    %103 = vector.broadcast %102 : vector<15x1xf32> to vector<15x15xf32>
    %104 = arith.mulf %99, %103 : vector<15x15xf32>
    %105 = arith.truncf %104 : vector<15x15xf32> to vector<15x15xbf16>
    %cst_32 = arith.constant dense<0.000000e+00> : vector<15x16xf32>
    %106 = tpu.matmul %105, %93, %cst_32 {dimension_numbers = #tpu.dot_dimension_numbers<[1], [0], [0], [1], [0, 0, 1, 1], [], []>} : vector<15x15xbf16>, vector<15x16xbf16>, vector<15x16xf32> -> vector<15x16xf32>
    %107 = arith.truncf %106 : vector<15x16xf32> to vector<15x16xbf16>
    %c48 = arith.constant 48 : index
    %c0_33 = arith.constant 0 : index
    %108 = vector.load %arg4[%c48, %c0_33] : memref<64x64xbf16, #tpu.memory_space<vmem>>, vector<16x64xbf16>
    %cst_34 = arith.constant dense<0.000000e+00> : vector<15x64xf32>
    %109 = tpu.matmul %107, %108, %cst_34 {dimension_numbers = #tpu.dot_dimension_numbers<[1], [0], [0], [1], [0, 0, 1, 1], [], []>} : vector<15x16xbf16>, vector<16x64xbf16>, vector<15x64xf32> -> vector<15x64xf32>
    %110 = arith.addf %84, %109 : vector<15x64xf32>
    %c0_35 = arith.constant 0 : index
    %c0_36 = arith.constant 0 : index
    %111 = vector.load %arg5[%c0_35, %c0_36] : memref<1x64xf32, #tpu.memory_space<vmem>>, vector<1x64xf32>
    %112 = vector.broadcast %111 : vector<1x64xf32> to vector<15x64xf32>
    %113 = arith.addf %110, %112 : vector<15x64xf32>
    %114 = arith.addf %113, %1 : vector<15x64xf32>
    %c0_37 = arith.constant 0 : index
    %c0_38 = arith.constant 0 : index
    %115 = vector.load %arg6[%c0_37, %c0_38] : memref<1x64xf32, #tpu.memory_space<vmem>>, vector<1x64xf32>
    %c0_39 = arith.constant 0 : index
    %c0_40 = arith.constant 0 : index
    %116 = vector.load %arg7[%c0_39, %c0_40] : memref<1x64xf32, #tpu.memory_space<vmem>>, vector<1x64xf32>
    %cst_41 = arith.constant dense<0.000000e+00> : vector<15xf32>
    %117 = vector.multi_reduction <add>, %114, %cst_41 [1] : vector<15x64xf32> to vector<15xf32>
    %118 = vector.shape_cast %117 : vector<15xf32> to vector<15x1xf32>
    %cst_42 = arith.constant 6.400000e+01 : f32
    %119 = vector.broadcast %cst_42 : f32 to vector<15x1xf32>
    %120 = arith.divf %118, %119 : vector<15x1xf32>
    %121 = vector.broadcast %120 : vector<15x1xf32> to vector<15x64xf32>
    %122 = arith.subf %114, %121 : vector<15x64xf32>
    %123 = arith.mulf %122, %122 : vector<15x64xf32>
    %cst_43 = arith.constant dense<0.000000e+00> : vector<15xf32>
    %124 = vector.multi_reduction <add>, %123, %cst_43 [1] : vector<15x64xf32> to vector<15xf32>
    %125 = vector.shape_cast %124 : vector<15xf32> to vector<15x1xf32>
    %cst_44 = arith.constant 6.400000e+01 : f32
    %126 = vector.broadcast %cst_44 : f32 to vector<15x1xf32>
    %127 = arith.divf %125, %126 : vector<15x1xf32>
    %128 = vector.broadcast %120 : vector<15x1xf32> to vector<15x64xf32>
    %129 = arith.subf %114, %128 : vector<15x64xf32>
    %cst_45 = arith.constant 9.99999974E-6 : f32
    %130 = vector.broadcast %cst_45 : f32 to vector<15x1xf32>
    %131 = arith.addf %127, %130 : vector<15x1xf32>
    %132 = math.rsqrt %131 : vector<15x1xf32>
    %133 = vector.broadcast %132 : vector<15x1xf32> to vector<15x64xf32>
    %134 = arith.mulf %129, %133 : vector<15x64xf32>
    %135 = vector.broadcast %115 : vector<1x64xf32> to vector<15x64xf32>
    %136 = arith.mulf %134, %135 : vector<15x64xf32>
    %137 = vector.broadcast %116 : vector<1x64xf32> to vector<15x64xf32>
    %138 = arith.addf %136, %137 : vector<15x64xf32>
    %c0_46 = arith.constant 0 : index
    %c0_47 = arith.constant 0 : index
    %c0_48 = arith.constant 0 : index
    %139 = vector.load %arg8[%c0_46, %c0_47, %c0_48] : memref<1x15x64xf32, #tpu.memory_space<vmem>>, vector<1x15x64xf32>
    %140 = vector.shape_cast %139 : vector<1x15x64xf32> to vector<15x64xf32>
    %141 = vector.shape_cast %138 : vector<15x64xf32> to vector<1x15x64xf32>
    tpu.vector_store %arg8[%c0_46, %c0_47, %c0_48], %141 {strides = array<i32>} : memref<1x15x64xf32, #tpu.memory_space<vmem>>, vector<1x15x64xf32>,
    return
  }
  func.func @transform_0(%arg0: i32) -> (i32, i32, i32) {
    %c0_i32 = arith.constant 0 : i32
    %c0_i32_0 = arith.constant 0 : i32
    %c0_i32_1 = arith.constant 0 : i32
    return %arg0, %c0_i32, %c0_i32_0 : i32, i32, i32
  }
  func.func @transform_1(%arg0: i32) -> (i32, i32) {
    %c0_i32 = arith.constant 0 : i32
    %c0_i32_0 = arith.constant 0 : i32
    %c0_i32_1 = arith.constant 0 : i32
    return %c0_i32, %c0_i32_0 : i32, i32
  }
  func.func @transform_2(%arg0: i32) -> (i32, i32) {
    %c0_i32 = arith.constant 0 : i32
    %c0_i32_0 = arith.constant 0 : i32
    %c0_i32_1 = arith.constant 0 : i32
    return %c0_i32, %c0_i32_0 : i32, i32
  }
  func.func @transform_3(%arg0: i32) -> (i32, i32) {
    %c0_i32 = arith.constant 0 : i32
    %c0_i32_0 = arith.constant 0 : i32
    %c0_i32_1 = arith.constant 0 : i32
    return %c0_i32, %c0_i32_0 : i32, i32
  }
  func.func @transform_4(%arg0: i32) -> (i32, i32) {
    %c0_i32 = arith.constant 0 : i32
    %c0_i32_0 = arith.constant 0 : i32
    %c0_i32_1 = arith.constant 0 : i32
    return %c0_i32, %c0_i32_0 : i32, i32
  }
  func.func @transform_5(%arg0: i32) -> (i32, i32) {
    %c0_i32 = arith.constant 0 : i32
    %c0_i32_0 = arith.constant 0 : i32
    %c0_i32_1 = arith.constant 0 : i32
    return %c0_i32, %c0_i32_0 : i32, i32
  }
  func.func @transform_6(%arg0: i32) -> (i32, i32) {
    %c0_i32 = arith.constant 0 : i32
    %c0_i32_0 = arith.constant 0 : i32
    %c0_i32_1 = arith.constant 0 : i32
    return %c0_i32, %c0_i32_0 : i32, i32
  }
  func.func @transform_7(%arg0: i32) -> (i32, i32, i32) {
    %c0_i32 = arith.constant 0 : i32
    %c0_i32_0 = arith.constant 0 : i32
    %c0_i32_1 = arith.constant 0 : i32
    return %arg0, %c0_i32, %c0_i32_0 : i32, i32, i32
  }
}

module attributes {stable_mosaic.version = 11 : i64} {
  func.func @_pool_final_kernel(%arg0: i32, %arg1: memref<1x15x64xf32, #tpu.memory_space<vmem>>, %arg2: memref<64x1xf32, #tpu.memory_space<vmem>>, %arg3: memref<1x1xf32, #tpu.memory_space<vmem>>, %arg4: memref<1x1x1xf32, #tpu.memory_space<vmem>>) attributes {dimension_semantics = [#tpu.dimension_semantics<parallel>], iteration_bounds = array<i64: 2>, scalar_prefetch = 0 : i64, scratch_operands = 0 : i64, tpu.core_type = #tpu.core_type<tc>, window_params = [{transform_indices = @transform_0, window_bounds = array<i64: 1, 15, 64>}, {pipeline_mode = #tpu.pipeline_mode<synchronous>, transform_indices = @transform_1, window_bounds = array<i64: 64, 1>}, {pipeline_mode = #tpu.pipeline_mode<synchronous>, transform_indices = @transform_2, window_bounds = array<i64: 1, 1>}, {transform_indices = @transform_3, window_bounds = array<i64: 1, 1, 1>}]} {
    %c0 = arith.constant 0 : index
    %c0_0 = arith.constant 0 : index
    %c0_1 = arith.constant 0 : index
    %0 = vector.load %arg1[%c0, %c0_0, %c0_1] : memref<1x15x64xf32, #tpu.memory_space<vmem>>, vector<1x15x64xf32>
    %1 = vector.shape_cast %0 : vector<1x15x64xf32> to vector<15x64xf32>
    %cst = arith.constant dense<0.000000e+00> : vector<64xf32>
    %2 = vector.multi_reduction <add>, %1, %cst [0] : vector<15x64xf32> to vector<64xf32>
    %3 = vector.shape_cast %2 : vector<64xf32> to vector<1x64xf32>
    %cst_2 = arith.constant 0.000000e+00 : f32
    %4 = vector.broadcast %cst_2 : f32 to vector<15x64xf32>
    %5 = arith.cmpf one, %1, %4 : vector<15x64xf32>
    %6 = arith.extui %5 : vector<15x64xi1> to vector<15x64xi32>
    %7 = arith.sitofp %6 : vector<15x64xi32> to vector<15x64xf32>
    %cst_3 = arith.constant dense<0.000000e+00> : vector<64xf32>
    %8 = vector.multi_reduction <add>, %7, %cst_3 [0] : vector<15x64xf32> to vector<64xf32>
    %9 = vector.shape_cast %8 : vector<64xf32> to vector<1x64xf32>
    %10 = arith.divf %3, %9 : vector<1x64xf32>
    %c0_4 = arith.constant 0 : index
    %c0_5 = arith.constant 0 : index
    %11 = vector.load %arg2[%c0_4, %c0_5] : memref<64x1xf32, #tpu.memory_space<vmem>>, vector<64x1xf32>
    %cst_6 = arith.constant dense<0.000000e+00> : vector<1x1xf32>
    %12 = tpu.matmul %10, %11, %cst_6 {dimension_numbers = #tpu.dot_dimension_numbers<[1], [0], [0], [1], [0, 0, 1, 1], [], []>} : vector<1x64xf32>, vector<64x1xf32>, vector<1x1xf32> -> vector<1x1xf32>
    %c0_7 = arith.constant 0 : index
    %c0_8 = arith.constant 0 : index
    %13 = vector.load %arg3[%c0_7, %c0_8] : memref<1x1xf32, #tpu.memory_space<vmem>>, vector<1x1xf32>
    %14 = arith.addf %12, %13 : vector<1x1xf32>
    %c0_9 = arith.constant 0 : index
    %c0_10 = arith.constant 0 : index
    %c0_11 = arith.constant 0 : index
    %15 = vector.load %arg4[%c0_9, %c0_10, %c0_11] : memref<1x1x1xf32, #tpu.memory_space<vmem>>, vector<1x1x1xf32>
    %16 = vector.shape_cast %15 : vector<1x1x1xf32> to vector<1x1xf32>
    %17 = vector.shape_cast %14 : vector<1x1xf32> to vector<1x1x1xf32>
    tpu.vector_store %arg4[%c0_9, %c0_10, %c0_11], %17 {strides = array<i32>} : memref<1x1x1xf32, #tpu.memory_space<vmem>>, vector<1x1x1xf32>,
    return
  }
  func.func @transform_0(%arg0: i32) -> (i32, i32, i32) {
    %c0_i32 = arith.constant 0 : i32
    %c0_i32_0 = arith.constant 0 : i32
    %c0_i32_1 = arith.constant 0 : i32
    return %arg0, %c0_i32, %c0_i32_0 : i32, i32, i32
  }
  func.func @transform_1(%arg0: i32) -> (i32, i32) {
    %c0_i32 = arith.constant 0 : i32
    %c0_i32_0 = arith.constant 0 : i32
    %c0_i32_1 = arith.constant 0 : i32
    return %c0_i32, %c0_i32_0 : i32, i32
  }
  func.func @transform_2(%arg0: i32) -> (i32, i32) {
    %c0_i32 = arith.constant 0 : i32
    %c0_i32_0 = arith.constant 0 : i32
    %c0_i32_1 = arith.constant 0 : i32
    return %c0_i32, %c0_i32_0 : i32, i32
  }
  func.func @transform_3(%arg0: i32) -> (i32, i32, i32) {
    %c0_i32 = arith.constant 0 : i32
    %c0_i32_0 = arith.constant 0 : i32
    %c0_i32_1 = arith.constant 0 : i32
    return %arg0, %c0_i32, %c0_i32_0 : i32, i32, i32
  }
}

</mosaic_0001>

<llo_original>
// kernel: tpu_custom_call.1
$region0: #{tpu_custom_call.1}
  #allocation0 [shape = 'u32[]', space=smem, size = 0x4, offset = 0x4, fixed_abs, tag = 'smem constant byte address 0x4 - core index']
  #allocation1 [shape = 'u32[144,128]{1,0:T(1,128)}', space=vmem, size = 0x12000, scoped, tag = 'internal scratch']
  %s0 = inlined_call_operand.hbm [shape: f32[8,128], index: 0, kind: input, shape index: {}]
  %s1 = inlined_call_operand.hbm [shape: f32[16,128], index: 1, kind: output, shape index: {}]
  %s2 = sld [smem:[#allocation0]]
  $region41: #{tpu_custom_call.1} parent=0
    _
  %s4 = ssub.s32 1, %s2
  %s5 = scalar_select 0, %s4, %s2
  $region1: #{tpu_custom_call.1} parent=0
    #allocation2 [shape = 'u8[4096]{0}', space=vmem, size = 0x1000, scoped, tag = 'input window, operand 0, single buffered']
    #allocation3 [shape = 's32[2]{0}', space=sflag, size = 0x8, scoped, tag = 'scoped memory for tpu_custom_call.1']
    #allocation4 [shape = 's32[2]{0}', space=sflag, size = 0x8, scoped, tag = 'scoped memory for tpu_custom_call.1']
    #allocation5 [shape = 'u8[8192]{0}', space=vmem, size = 0x2000, scoped, tag = 'output window, operand 0']
    %6 = vsyncpa [#allocation3], 0
    %7 = vsyncpa [#allocation4], 0
    %s8 = scalar_lea.sflag [#allocation4], 1
    %9 = vsyncpa %s8, 0
    loop: start=0, step=1, limit=4
    $region2: #{tpu_custom_call.1} parent=1 // loop_pre_header
      _
    $region3: #{tpu_custom_call.1} parent=1 // loop_header
      %s11 = sphi 0, %s15
      %p12 = scmp.ge.s32.totalorder %s11, 4
      %s19 = sphi 0, %s19
      %s21 = sphi 0, %s19
      %s22 = sphi 0, %s21
      %s36 = sphi 0, %s22
      %s42 = sphi 0, %s44
      %s45 = sphi 0, %s42
      %s46 = sphi 0, %s45
      %s62 = sphi 0, %s46
    $region4: #{tpu_custom_call.1} parent=1 // loop_header_branch
      %14 = sbr.rel (%p12) target = $region8
    $region5: #{tpu_custom_call.1} parent=1 // loop_body
      %s16 = ssub.s32 %s11, 1
      %s17 = ssub.s32 %s11, 2
      %s18 = sadd.s32 %s11, 1
      %s20 = sadd.s32 %s19, 1
      %p23 = scmp.eq.s32.totalorder %s11, 1
      %p24 = scmp.ne.s32.totalorder %s19, %s21
      %p25 = scmp.eq.s32.totalorder %s11, 0
      %p26 = por %p24, %p25
      %p27 = scmp.ne.s32.totalorder %s19, %s21
      %p28 = scmp.eq.s32.totalorder %s16, 1
      %p29 = por %p27, %p28
      %p30 = scmp.ne.s32.totalorder %s21, %s22
      %p31 = scmp.eq.s32.totalorder %s16, 0
      %p32 = por %p30, %p31
      %p33 = scmp.ne.s32.totalorder %s21, %s22
      %p34 = scmp.eq.s32.totalorder %s17, 1
      %p35 = por %p33, %p34
      %p37 = scmp.ne.s32.totalorder %s22, %s36
      %p38 = scmp.eq.s32.totalorder %s17, 0
      %p39 = por %p37, %p38
      %s40 = ssub.s32 %s11, %s18
      %p41 = scmp.eq.s32.totalorder %s40, 0
      %s43 = sadd.s32 %s42, 1
      %s44 = scalar_select %p41, %s42, %s43
      %p47 = pneg %p41
      %p48 = scmp.eq.s32.totalorder %s11, 1
      %p49 = por %p47, %p48
      %p50 = scmp.ne.s32.totalorder %s42, %s45
      %p51 = scmp.eq.s32.totalorder %s11, 0
      %p52 = por %p50, %p51
      %p53 = scmp.ne.s32.totalorder %s42, %s45
      %p54 = scmp.eq.s32.totalorder %s16, 1
      %p55 = por %p53, %p54
      %p56 = scmp.ne.s32.totalorder %s45, %s46
      %p57 = scmp.eq.s32.totalorder %s16, 0
      %p58 = por %p56, %p57
      %p59 = scmp.ne.s32.totalorder %s45, %s46
      %p60 = scmp.eq.s32.totalorder %s17, 1
      %p61 = por %p59, %p60
      %p63 = scmp.ne.s32.totalorder %s46, %s62
      %p64 = scmp.eq.s32.totalorder %s17, 0
      %p65 = por %p63, %p64
      %p66 = scmp.le.s32.totalorder 1, %s11
      %p67 = scmp.lt.s32.totalorder %s11, 3
      %p68 = pnand %p66, %p67
      %p69 = pneg %p68
      // Predicated region
      $region9: #{tpu_custom_call.1} parent=5 // pred_check
        _
      $region10: #{tpu_custom_call.1} parent=5 // pred_check_branch
        %71 = sbr.rel (%p68) target = $region12
      $region11: #{tpu_custom_call.1} parent=5 // pred_region
        %s72 = ssub.s32 %s11, 1
        // Predicated region
        $region13: #{tpu_custom_call.1} parent=11 // pred_check
          %p73 = pneg %p32
        $region14: #{tpu_custom_call.1} parent=11 // pred_check_branch
          %75 = sbr.rel (%p73) target = $region16
        $region15: #{tpu_custom_call.1} parent=11 // pred_region
          %s77 = ssub.s32 128, 128
          %78 = vsyncadd [#allocation3], %s77
          %s80 = sshll.u32 [#allocation2], 4
          %s81 = int_to_ptr.vmem [resolvable:$true] %s80
          %83 = dma.hbm_to_vmem [thread:$0]  %s0, 128, %s81, [#allocation3]
        $region16: #{tpu_custom_call.1} parent=11 // pred_fallthru
          _
      $region12: #{tpu_custom_call.1} parent=5 // pred_fallthru
        _
      %p84 = scmp.lt.s32.totalorder %s11, 2
      // Predicated region
      $region17: #{tpu_custom_call.1} parent=5 // pred_check
        %p85 = pneg %p84
      $region18: #{tpu_custom_call.1} parent=5 // pred_check_branch
        %87 = sbr.rel (%p85) target = $region20
      $region19: #{tpu_custom_call.1} parent=5 // pred_region
        _
      $region20: #{tpu_custom_call.1} parent=5 // pred_fallthru
        _
      %p88 = scmp.le.s32.totalorder 1, %s11
      %p89 = scmp.lt.s32.totalorder %s11, 3
      %p90 = pnand %p88, %p89
      %p91 = pneg %p90
      // Predicated region
      $region21: #{tpu_custom_call.1} parent=5 // pred_check
        _
      $region22: #{tpu_custom_call.1} parent=5 // pred_check_branch
        %93 = sbr.rel (%p90) target = $region24
      $region23: #{tpu_custom_call.1} parent=5 // pred_region
        %s94 = ssub.s32 %s11, 1
        // Predicated region
        $region25: #{tpu_custom_call.1} parent=23 // pred_check
          %p95 = pneg %p32
        $region26: #{tpu_custom_call.1} parent=23 // pred_check_branch
          %97 = sbr.rel (%p95) target = $region28
        $region27: #{tpu_custom_call.1} parent=23 // pred_region
          %98 = dma.done [#allocation3], 128
        $region28: #{tpu_custom_call.1} parent=23 // pred_fallthru
          _
        %p99 = pneg %p32
        %p100 = pneg %p29
        %p101 = pneg %p58
        %p102 = pneg %p55
        %s103 = sand.u32 %s45, 1
        %s104 = scalar_lea.sflag [#allocation4], %s103
        %s105 = sand.u32 %s45, 1
        %s106 = smul.addr %s105, 8
        %s107 = scalar_lea.vmem [#allocation5], %s106
        %v108 = vld [vmem:[#allocation2] sm:$0xff]
        %v109 = vadd.f32 %v108, 1.0
        %110 = vst [vmem:[%s107] sm:$0xff] %v109
        %s111 = sand.u32 %s45, 1
        %s112 = scalar_lea.sflag [#allocation4], %s111
        %s113 = sand.u32 %s45, 1
        %s114 = smul.addr %s113, 8
        %s115 = scalar_lea.vmem [#allocation5], %s114
        // Predicated region
        $region29: #{tpu_custom_call.1} parent=23 // pred_check
          %p116 = pneg %p55
        $region30: #{tpu_custom_call.1} parent=23 // pred_check_branch
          %118 = sbr.rel (%p116) target = $region32
        $region31: #{tpu_custom_call.1} parent=23 // pred_region
          %s120 = ssub.s32 128, 128
          %121 = vsyncadd %s112, %s120
          %s122 = smul.addr %s16, 128
          %s123 = scalar_lea.hbm %s1, %s122
          %s125 = sshll.u32 %s115, 4
          %s126 = int_to_ptr.vmem [resolvable:$true] %s125
          %128 = dma.vmem_to_hbm [thread:$0]  %s126, 128, %s123, %s112
        $region32: #{tpu_custom_call.1} parent=23 // pred_fallthru
          _
      $region24: #{tpu_custom_call.1} parent=5 // pred_fallthru
        _
      %p129 = scmp.le.s32.totalorder 2, %s11
      // Predicated region
      $region33: #{tpu_custom_call.1} parent=5 // pred_check
        %p130 = pneg %p129
      $region34: #{tpu_custom_call.1} parent=5 // pred_check_branch
        %132 = sbr.rel (%p130) target = $region36
      $region35: #{tpu_custom_call.1} parent=5 // pred_region
        %s133 = ssub.s32 %s11, 2
        // Predicated region
        $region37: #{tpu_custom_call.1} parent=35 // pred_check
          %p134 = pneg %p61
        $region38: #{tpu_custom_call.1} parent=35 // pred_check_branch
          %136 = sbr.rel (%p134) target = $region40
        $region39: #{tpu_custom_call.1} parent=35 // pred_region
          %s137 = sand.u32 %s46, 1
          %s138 = scalar_lea.sflag [#allocation4], %s137
          %s139 = sand.u32 %s46, 1
          %s140 = smul.addr %s139, 8
          %s141 = scalar_lea.vmem [#allocation5], %s140
          %142 = dma.done %s138, 128
        $region40: #{tpu_custom_call.1} parent=35 // pred_fallthru
          _
      $region36: #{tpu_custom_call.1} parent=5 // pred_fallthru
        _
    $region6: #{tpu_custom_call.1} parent=1 // loop_footer
      %s15 = sadd.s32 1, %s11
    $region7: #{tpu_custom_call.1} parent=1 // loop_footer_branch
      %10 = sbr.rel target = $region3
    $region8: #{tpu_custom_call.1} parent=1 // loop_exit
      _
    %143 = vsyncpa [#allocation3], 1
    %s144 = scalar_lea.sflag [#allocation3], 1
    %145 = vsyncpa %s144, 1
    %146 = vsyncpa [#allocation4], 1
    %s147 = scalar_lea.sflag [#allocation4], 1
    %148 = vsyncpa %s147, 1

// kernel: forward.12
$region0: #{forward.12}
  #allocation0 [shape = 'u32[]', space=smem, size = 0x4, offset = 0x4, fixed_abs, tag = 'smem constant byte address 0x4 - core index']
  #allocation1 [shape = 'u32[144,128]{1,0:T(1,128)}', space=vmem, size = 0x12000, scoped, tag = 'internal scratch']
  %s0 = inlined_call_operand.vmem [shape: f32[2,16,64], index: 0, kind: input, shape index: {}]
  %s1 = inlined_call_operand.vmem [shape: bf16[1,64,32], index: 1, kind: input, shape index: {}]
  %s2 = inlined_call_operand.vmem [shape: f32[2,15,32], index: 2, kind: output, shape index: {}]
  %s3 = sld [smem:[#allocation0]]
  $region41: #{forward.12} parent=0
    _
  %s5 = ssub.s32 1, %s3
  %s6 = scalar_select 0, %s5, %s3
  loop: start=0, step=1, limit=4
  $region2: #{forward.12} parent=0 // loop_pre_header
    _
  $region3: #{forward.12} parent=0 // loop_header
    %s8 = sphi 0, %s12
    %p9 = scmp.ge.s32.totalorder %s8, 4
    %s18 = sphi 0, %s20
    %s21 = sphi 0, %s18
    %s22 = sphi 0, %s21
    %s38 = sphi 0, %s22
    %s42 = sphi 0, %s42
    %s44 = sphi 0, %s42
    %s45 = sphi 0, %s44
    %s59 = sphi 0, %s45
    %s65 = sphi 0, %s67
    %s68 = sphi 0, %s65
    %s69 = sphi 0, %s68
    %s85 = sphi 0, %s69
  $region4: #{forward.12} parent=0 // loop_header_branch
    %11 = sbr.rel (%p9) target = $region8
  $region5: #{forward.12} parent=0 // loop_body
    %s13 = ssub.s32 %s8, 1
    %s14 = ssub.s32 %s8, 2
    %s15 = sadd.s32 %s8, 1
    %s16 = ssub.s32 %s8, %s15
    %p17 = scmp.eq.s32.totalorder %s16, 0
    %s19 = sadd.s32 %s18, 1
    %s20 = scalar_select %p17, %s18, %s19
    %p23 = pneg %p17
    %p24 = scmp.eq.s32.totalorder %s8, 1
    %p25 = por %p23, %p24
    %p26 = scmp.ne.s32.totalorder %s18, %s21
    %p27 = scmp.eq.s32.totalorder %s8, 0
    %p28 = por %p26, %p27
    %p29 = scmp.ne.s32.totalorder %s18, %s21
    %p30 = scmp.eq.s32.totalorder %s13, 1
    %p31 = por %p29, %p30
    %p32 = scmp.ne.s32.totalorder %s21, %s22
    %p33 = scmp.eq.s32.totalorder %s13, 0
    %p34 = por %p32, %p33
    %p35 = scmp.ne.s32.totalorder %s21, %s22
    %p36 = scmp.eq.s32.totalorder %s14, 1
    %p37 = por %p35, %p36
    %p39 = scmp.ne.s32.totalorder %s22, %s38
    %p40 = scmp.eq.s32.totalorder %s14, 0
    %p41 = por %p39, %p40
    %s43 = sadd.s32 %s42, 1
    %p46 = scmp.eq.s32.totalorder %s8, 1
    %p47 = scmp.ne.s32.totalorder %s42, %s44
    %p48 = scmp.eq.s32.totalorder %s8, 0
    %p49 = por %p47, %p48
    %p50 = scmp.ne.s32.totalorder %s42, %s44
    %p51 = scmp.eq.s32.totalorder %s13, 1
    %p52 = por %p50, %p51
    %p53 = scmp.ne.s32.totalorder %s44, %s45
    %p54 = scmp.eq.s32.totalorder %s13, 0
    %p55 = por %p53, %p54
    %p56 = scmp.ne.s32.totalorder %s44, %s45
    %p57 = scmp.eq.s32.totalorder %s14, 1
    %p58 = por %p56, %p57
    %p60 = scmp.ne.s32.totalorder %s45, %s59
    %p61 = scmp.eq.s32.totalorder %s14, 0
    %p62 = por %p60, %p61
    %s63 = ssub.s32 %s8, %s15
    %p64 = scmp.eq.s32.totalorder %s63, 0
    %s66 = sadd.s32 %s65, 1
    %s67 = scalar_select %p64, %s65, %s66
    %p70 = pneg %p64
    %p71 = scmp.eq.s32.totalorder %s8, 1
    %p72 = por %p70, %p71
    %p73 = scmp.ne.s32.totalorder %s65, %s68
    %p74 = scmp.eq.s32.totalorder %s8, 0
    %p75 = por %p73, %p74
    %p76 = scmp.ne.s32.totalorder %s65, %s68
    %p77 = scmp.eq.s32.totalorder %s13, 1
    %p78 = por %p76, %p77
    %p79 = scmp.ne.s32.totalorder %s68, %s69
    %p80 = scmp.eq.s32.totalorder %s13, 0
    %p81 = por %p79, %p80
    %p82 = scmp.ne.s32.totalorder %s68, %s69
    %p83 = scmp.eq.s32.totalorder %s14, 1
    %p84 = por %p82, %p83
    %p86 = scmp.ne.s32.totalorder %s69, %s85
    %p87 = scmp.eq.s32.totalorder %s14, 0
    %p88 = por %p86, %p87
    %p89 = scmp.le.s32.totalorder 1, %s8
    %p90 = scmp.lt.s32.totalorder %s8, 3
    %p91 = pnand %p89, %p90
    %p92 = pneg %p91
    // Predicated region
    $region9: #{forward.12} parent=5 // pred_check
      _
    $region10: #{forward.12} parent=5 // pred_check_branch
      %94 = sbr.rel (%p91) target = $region12
    $region11: #{forward.12} parent=5 // pred_region
      %s95 = ssub.s32 %s8, 1
      // Predicated region
      $region13: #{forward.12} parent=11 // pred_check
        %p96 = pneg %p55
      $region14: #{forward.12} parent=11 // pred_check_branch
        %98 = sbr.rel (%p96) target = $region16
      $region15: #{forward.12} parent=11 // pred_region
        _
      $region16: #{forward.12} parent=11 // pred_fallthru
        _
    $region12: #{forward.12} parent=5 // pred_fallthru
      _
    %p99 = scmp.lt.s32.totalorder %s8, 2
    // Predicated region
    $region17: #{forward.12} parent=5 // pred_check
      %p100 = pneg %p99
    $region18: #{forward.12} parent=5 // pred_check_branch
      %102 = sbr.rel (%p100) target = $region20
    $region19: #{forward.12} parent=5 // pred_region
      // Predicated region
      $region21: #{forward.12} parent=19 // pred_check
        %p103 = pneg %p28
      $region22: #{forward.12} parent=19 // pred_check_branch
        %105 = sbr.rel (%p103) target = $region24
      $region23: #{forward.12} parent=19 // pred_region
        %p106 = scmp.lt.s32.totalorder %s8, 1
        %s107 = scalar_select %p106, %s8, 1
        %s108 = smul.addr %s107, 2
        %s109 = smul.addr %s108, 8
        %s110 = scalar_lea.vmem %s0, %s109
      $region24: #{forward.12} parent=19 // pred_fallthru
        _
    $region20: #{forward.12} parent=5 // pred_fallthru
      _
    %p111 = scmp.le.s32.totalorder 1, %s8
    %p112 = scmp.lt.s32.totalorder %s8, 3
    %p113 = pnand %p111, %p112
    %p114 = pneg %p113
    // Predicated region
    $region25: #{forward.12} parent=5 // pred_check
      _
    $region26: #{forward.12} parent=5 // pred_check_branch
      %116 = sbr.rel (%p113) target = $region28
    $region27: #{forward.12} parent=5 // pred_region
      %s117 = ssub.s32 %s8, 1
      %p118 = scmp.lt.s32.totalorder %s13, 1
      %s119 = scalar_select %p118, %s13, 1
      %s120 = smul.addr %s119, 2
      %s121 = smul.addr %s120, 8
      %s122 = scalar_lea.vmem %s0, %s121
      %p123 = pneg %p34
      %p124 = pneg %p31
      %p125 = pneg %p55
      %p126 = pneg %p52
      %p127 = pneg %p81
      %p128 = pneg %p78
      %p129 = scmp.lt.s32.totalorder %s13, 1
      %s130 = scalar_select %p129, %s13, 1
      %s131 = smul.addr %s130, 2
      %s132 = smul.addr %s131, 8
      %s133 = scalar_lea.vmem %s2, %s132
      %p134 = scmp.lt.s32.totalorder %s13, 1
      %s135 = scalar_select %p134, %s13, 1
      %s136 = smul.addr %s135, 2
      %s137 = smul.addr %s136, 8
      %s138 = scalar_lea.vmem %s0, %s137
      %p139 = scmp.lt.s32.totalorder %s13, 1
      %s140 = scalar_select %p139, %s13, 1
      %s141 = smul.addr %s140, 2
      %s142 = smul.addr %s141, 8
      %s143 = scalar_lea.vmem %s2, %s142
      %v145 = vld [vmem:[%s138] sm:$0xff]
      %v146 = vld [vmem:[%s138 + $0x8] sm:$0x7f]
      %v147 = vpack.c.bf16 %v146, %v145
      %v148 = vld [vmem:[%s1] sm:$0xf]
      %v149 = vld [vmem:[%s1 + $0x4] sm:$0xf]
      %v150 = vld [vmem:[%s1 + $0x8] sm:$0xf]
      %v151 = vld [vmem:[%s1 + $0xc] sm:$0xf]
      %v152 = vld [vmem:[%s1 + $0x10] sm:$0xf]
      %v153 = vld [vmem:[%s1 + $0x14] sm:$0xf]
      %v154 = vld [vmem:[%s1 + $0x18] sm:$0xf]
      %v155 = vld [vmem:[%s1 + $0x1c] sm:$0xf]
      %v164 = vunpack.c.l.b16 %v148
      %v165 = vunpack.c.l.b16 %v149
      %v166 = vunpack.c.l.b16 %v150
      %v167 = vunpack.c.l.b16 %v151
      %v168 = vunpack.c.l.b16 %v152
      %v169 = vunpack.c.l.b16 %v153
      %v170 = vunpack.c.l.b16 %v154
      %v171 = vunpack.c.l.b16 %v155
      %v172 = vpack.c.b16 %v165, %v164
      %v173 = vpack.c.b16 %v167, %v166
      %v174 = vpack.c.b16 %v169, %v168
      %v175 = vpack.c.b16 %v171, %v170
      %vm180 = vcmask 523264
      %v182 = vsel %vm180, %v147, 0
      %184 = vmatprep.subr.bf16.mxu0 0
      %185 = vmatpush1.bf16.msra.mxu0 0
      %186 = vmatprep.subr.bf16.mxu0 0
      %187 = vmatpush1.bf16.msra.mxu0 0
      %188 = vmatprep.subr.bf16.mxu0 0
      %189 = vmatpush1.bf16.msra.mxu0 0
      %190 = vmatprep.subr.bf16.mxu0 0
      %191 = vmatpush1.bf16.msra.mxu0 0
      %192 = vmatprep.subr.bf16.mxu0 0
      %193 = vmatpush1.bf16.msra.mxu0 %v175
      %194 = vmatprep.subr.bf16.mxu0 0
      %195 = vmatpush1.bf16.msra.mxu0 %v174
      %196 = vmatprep.subr.bf16.mxu0 0
      %197 = vmatpush1.bf16.msra.mxu0 %v173
      %198 = vmatprep.subr.bf16.mxu0 0
      %199 = vmatpush1.bf16.msra.mxu0 %v172
      %200 = vmatprep.subr.bf16.mxu0 0
      %201 = vmatpush2.bf16.msra.mxu0 0
      %202 = vmatprep.subr.bf16.mxu0 0
      %203 = vmatpush2.bf16.msra.mxu0 0
      %204 = vmatprep.subr.bf16.mxu0 0
      %205 = vmatpush2.bf16.msra.mxu0 0
      %206 = vmatprep.subr.bf16.mxu0 0
      %207 = vmatpush2.bf16.msra.mxu0 0
      %208 = vmatprep.subr.bf16.mxu0 0
      %209 = vmatpush2.bf16.msra.mxu0 0
      %210 = vmatprep.subr.bf16.mxu0 0
      %211 = vmatpush2.bf16.msra.mxu0 0
      %212 = vmatprep.subr.bf16.mxu0 0
      %213 = vmatpush2.bf16.msra.mxu0 0
      %214 = vmatprep.subr.bf16.mxu0 0
      %215 = vmatpush2.bf16.msra.mxu0 0
      %216 = vmatprep.mubr.bf16.mxu0 0
      %217 = vmatmul.mubr.bf16.gmra.mxu0 %v182
      %v218 = vpop.f32.mrf.mxu0
      %v219 = vadd.f32 0.0, %v218
      %v220 = vpop.f32.mrf.mxu0
      %v221 = vpop.f32.mrf.mxu0
      %v222 = vadd.f32 0.0, %v221
      %v223 = vpop.f32.mrf.mxu0
      %224 = vdwg.mxu0
      %v225 = vmul.f32 %v219, 0.5
      %v226 = vmul.f32 %v222, 0.5
      %v227 = vmul.f32 %v219, 0.044715
      %v228 = vmul.f32 %v222, 0.044715
      %v229 = vmul.f32 %v227, %v219
      %v230 = vmul.f32 %v228, %v222
      %v231 = vmul.f32 %v229, %v219
      %v232 = vmul.f32 %v230, %v222
      %v233 = vadd.f32 %v219, %v231
      %v234 = vadd.f32 %v222, %v232
      %v235 = vmul.f32 %v233, 0.7978846
      %v236 = vmul.f32 %v234, 0.7978846
      %v237 = vtanh.pop %v235
      %v238 = vtanh.pop %v236
      %v239 = vadd.f32 %v237, 1.0
      %v240 = vadd.f32 %v238, 1.0
      %v241 = vmul.f32 %v225, %v239
      %v242 = vmul.f32 %v226, %v240
      %vm243 = vcmask 261120
      %244 = vst.msk [vmem:[%s143] sm:$0xff] %vm243, %v241
      %vm245 = vcmask 260096
      %246 = vst.msk [vmem:[%s143 + $0x8] sm:$0x7f] %vm245, %v242
      %p247 = scmp.lt.s32.totalorder %s13, 1
      %s248 = scalar_select %p247, %s13, 1
      %s249 = smul.addr %s248, 2
      %s250 = smul.addr %s249, 8
      %s251 = scalar_lea.vmem %s2, %s250
      // Predicated region
      $region29: #{forward.12} parent=27 // pred_check
        %p252 = pneg %p78
      $region30: #{forward.12} parent=27 // pred_check_branch
        %254 = sbr.rel (%p252) target = $region32
      $region31: #{forward.12} parent=27 // pred_region
        _
      $region32: #{forward.12} parent=27 // pred_fallthru
        _
    $region28: #{forward.12} parent=5 // pred_fallthru
      _
    %p255 = scmp.le.s32.totalorder 2, %s8
    // Predicated region
    $region33: #{forward.12} parent=5 // pred_check
      %p256 = pneg %p255
    $region34: #{forward.12} parent=5 // pred_check_branch
      %258 = sbr.rel (%p256) target = $region36
    $region35: #{forward.12} parent=5 // pred_region
      %s259 = ssub.s32 %s8, 2
      // Predicated region
      $region37: #{forward.12} parent=35 // pred_check
        %p260 = pneg %p84
      $region38: #{forward.12} parent=35 // pred_check_branch
        %262 = sbr.rel (%p260) target = $region40
      $region39: #{forward.12} parent=35 // pred_region
        %p263 = scmp.lt.s32.totalorder %s14, 1
        %s264 = scalar_select %p263, %s14, 1
        %s265 = smul.addr %s264, 2
        %s266 = smul.addr %s265, 8
        %s267 = scalar_lea.vmem %s2, %s266
      $region40: #{forward.12} parent=35 // pred_fallthru
        _
    $region36: #{forward.12} parent=5 // pred_fallthru
      _
  $region6: #{forward.12} parent=0 // loop_footer
    %s12 = sadd.s32 1, %s8
  $region7: #{forward.12} parent=0 // loop_footer_branch
    %7 = sbr.rel target = $region3
  $region8: #{forward.12} parent=0 // loop_exit
    _

// kernel: forward.10
$region0: #{forward.10}
  #allocation0 [shape = 'u32[]', space=smem, size = 0x4, offset = 0x4, fixed_abs, tag = 'smem constant byte address 0x4 - core index']
  #allocation1 [shape = 'u32[144,128]{1,0:T(1,128)}', space=vmem, size = 0x12000, scoped, tag = 'internal scratch']
  %s0 = inlined_call_operand.vmem [shape: f32[2,64,24], index: 0, kind: input, shape index: {}]
  %s1 = inlined_call_operand.vmem [shape: bf16[2,24,32], index: 1, kind: input, shape index: {}]
  %s2 = inlined_call_operand.vmem [shape: f32[1,32], index: 2, kind: input, shape index: {}]
  %s3 = inlined_call_operand.vmem [shape: f32[1,32], index: 3, kind: input, shape index: {}]
  %s4 = inlined_call_operand.vmem [shape: f32[2,63,32], index: 4, kind: output, shape index: {}]
  %s5 = sld [smem:[#allocation0]]
  $region49: #{forward.10} parent=0
    _
  %s7 = ssub.s32 1, %s5
  %s8 = scalar_select 0, %s7, %s5
  loop: start=0, step=1, limit=4
  $region2: #{forward.10} parent=0 // loop_pre_header
    _
  $region3: #{forward.10} parent=0 // loop_header
    %s10 = sphi 0, %s14
    %p11 = scmp.ge.s32.totalorder %s10, 4
    %s20 = sphi 0, %s22
    %s23 = sphi 0, %s20
    %s24 = sphi 0, %s23
    %s40 = sphi 0, %s24
    %s44 = sphi 0, %s44
    %s46 = sphi 0, %s44
    %s47 = sphi 0, %s46
    %s61 = sphi 0, %s47
    %s65 = sphi 0, %s65
    %s67 = sphi 0, %s65
    %s68 = sphi 0, %s67
    %s82 = sphi 0, %s68
    %s86 = sphi 0, %s86
    %s88 = sphi 0, %s86
    %s89 = sphi 0, %s88
    %s103 = sphi 0, %s89
    %s109 = sphi 0, %s111
    %s112 = sphi 0, %s109
    %s113 = sphi 0, %s112
    %s129 = sphi 0, %s113
  $region4: #{forward.10} parent=0 // loop_header_branch
    %13 = sbr.rel (%p11) target = $region8
  $region5: #{forward.10} parent=0 // loop_body
    %s15 = ssub.s32 %s10, 1
    %s16 = ssub.s32 %s10, 2
    %s17 = sadd.s32 %s10, 1
    %s18 = ssub.s32 %s10, %s17
    %p19 = scmp.eq.s32.totalorder %s18, 0
    %s21 = sadd.s32 %s20, 1
    %s22 = scalar_select %p19, %s20, %s21
    %p25 = pneg %p19
    %p26 = scmp.eq.s32.totalorder %s10, 1
    %p27 = por %p25, %p26
    %p28 = scmp.ne.s32.totalorder %s20, %s23
    %p29 = scmp.eq.s32.totalorder %s10, 0
    %p30 = por %p28, %p29
    %p31 = scmp.ne.s32.totalorder %s20, %s23
    %p32 = scmp.eq.s32.totalorder %s15, 1
    %p33 = por %p31, %p32
    %p34 = scmp.ne.s32.totalorder %s23, %s24
    %p35 = scmp.eq.s32.totalorder %s15, 0
    %p36 = por %p34, %p35
    %p37 = scmp.ne.s32.totalorder %s23, %s24
    %p38 = scmp.eq.s32.totalorder %s16, 1
    %p39 = por %p37, %p38
    %p41 = scmp.ne.s32.totalorder %s24, %s40
    %p42 = scmp.eq.s32.totalorder %s16, 0
    %p43 = por %p41, %p42
    %s45 = sadd.s32 %s44, 1
    %p48 = scmp.eq.s32.totalorder %s10, 1
    %p49 = scmp.ne.s32.totalorder %s44, %s46
    %p50 = scmp.eq.s32.totalorder %s10, 0
    %p51 = por %p49, %p50
    %p52 = scmp.ne.s32.totalorder %s44, %s46
    %p53 = scmp.eq.s32.totalorder %s15, 1
    %p54 = por %p52, %p53
    %p55 = scmp.ne.s32.totalorder %s46, %s47
    %p56 = scmp.eq.s32.totalorder %s15, 0
    %p57 = por %p55, %p56
    %p58 = scmp.ne.s32.totalorder %s46, %s47
    %p59 = scmp.eq.s32.totalorder %s16, 1
    %p60 = por %p58, %p59
    %p62 = scmp.ne.s32.totalorder %s47, %s61
    %p63 = scmp.eq.s32.totalorder %s16, 0
    %p64 = por %p62, %p63
    %s66 = sadd.s32 %s65, 1
    %p69 = scmp.eq.s32.totalorder %s10, 1
    %p70 = scmp.ne.s32.totalorder %s65, %s67
    %p71 = scmp.eq.s32.totalorder %s10, 0
    %p72 = por %p70, %p71
    %p73 = scmp.ne.s32.totalorder %s65, %s67
    %p74 = scmp.eq.s32.totalorder %s15, 1
    %p75 = por %p73, %p74
    %p76 = scmp.ne.s32.totalorder %s67, %s68
    %p77 = scmp.eq.s32.totalorder %s15, 0
    %p78 = por %p76, %p77
    %p79 = scmp.ne.s32.totalorder %s67, %s68
    %p80 = scmp.eq.s32.totalorder %s16, 1
    %p81 = por %p79, %p80
    %p83 = scmp.ne.s32.totalorder %s68, %s82
    %p84 = scmp.eq.s32.totalorder %s16, 0
    %p85 = por %p83, %p84
    %s87 = sadd.s32 %s86, 1
    %p90 = scmp.eq.s32.totalorder %s10, 1
    %p91 = scmp.ne.s32.totalorder %s86, %s88
    %p92 = scmp.eq.s32.totalorder %s10, 0
    %p93 = por %p91, %p92
    %p94 = scmp.ne.s32.totalorder %s86, %s88
    %p95 = scmp.eq.s32.totalorder %s15, 1
    %p96 = por %p94, %p95
    %p97 = scmp.ne.s32.totalorder %s88, %s89
    %p98 = scmp.eq.s32.totalorder %s15, 0
    %p99 = por %p97, %p98
    %p100 = scmp.ne.s32.totalorder %s88, %s89
    %p101 = scmp.eq.s32.totalorder %s16, 1
    %p102 = por %p100, %p101
    %p104 = scmp.ne.s32.totalorder %s89, %s103
    %p105 = scmp.eq.s32.totalorder %s16, 0
    %p106 = por %p104, %p105
    %s107 = ssub.s32 %s10, %s17
    %p108 = scmp.eq.s32.totalorder %s107, 0
    %s110 = sadd.s32 %s109, 1
    %s111 = scalar_select %p108, %s109, %s110
    %p114 = pneg %p108
    %p115 = scmp.eq.s32.totalorder %s10, 1
    %p116 = por %p114, %p115
    %p117 = scmp.ne.s32.totalorder %s109, %s112
    %p118 = scmp.eq.s32.totalorder %s10, 0
    %p119 = por %p117, %p118
    %p120 = scmp.ne.s32.totalorder %s109, %s112
    %p121 = scmp.eq.s32.totalorder %s15, 1
    %p122 = por %p120, %p121
    %p123 = scmp.ne.s32.totalorder %s112, %s113
    %p124 = scmp.eq.s32.totalorder %s15, 0
    %p125 = por %p123, %p124
    %p126 = scmp.ne.s32.totalorder %s112, %s113
    %p127 = scmp.eq.s32.totalorder %s16, 1
    %p128 = por %p126, %p127
    %p130 = scmp.ne.s32.totalorder %s113, %s129
    %p131 = scmp.eq.s32.totalorder %s16, 0
    %p132 = por %p130, %p131
    %p133 = scmp.le.s32.totalorder 1, %s10
    %p134 = scmp.lt.s32.totalorder %s10, 3
    %p135 = pnand %p133, %p134
    %p136 = pneg %p135
    // Predicated region
    $region9: #{forward.10} parent=5 // pred_check
      _
    $region10: #{forward.10} parent=5 // pred_check_branch
      %138 = sbr.rel (%p135) target = $region12
    $region11: #{forward.10} parent=5 // pred_region
      %s139 = ssub.s32 %s10, 1
      // Predicated region
      $region13: #{forward.10} parent=11 // pred_check
        %p140 = pneg %p57
      $region14: #{forward.10} parent=11 // pred_check_branch
        %142 = sbr.rel (%p140) target = $region16
      $region15: #{forward.10} parent=11 // pred_region
        _
      $region16: #{forward.10} parent=11 // pred_fallthru
        _
      // Predicated region
      $region17: #{forward.10} parent=11 // pred_check
        %p143 = pneg %p78
      $region18: #{forward.10} parent=11 // pred_check_branch
        %145 = sbr.rel (%p143) target = $region20
      $region19: #{forward.10} parent=11 // pred_region
        _
      $region20: #{forward.10} parent=11 // pred_fallthru
        _
      // Predicated region
      $region21: #{forward.10} parent=11 // pred_check
        %p146 = pneg %p99
      $region22: #{forward.10} parent=11 // pred_check_branch
        %148 = sbr.rel (%p146) target = $region24
      $region23: #{forward.10} parent=11 // pred_region
        _
      $region24: #{forward.10} parent=11 // pred_fallthru
        _
    $region12: #{forward.10} parent=5 // pred_fallthru
      _
    %p149 = scmp.lt.s32.totalorder %s10, 2
    // Predicated region
    $region25: #{forward.10} parent=5 // pred_check
      %p150 = pneg %p149
    $region26: #{forward.10} parent=5 // pred_check_branch
      %152 = sbr.rel (%p150) target = $region28
    $region27: #{forward.10} parent=5 // pred_region
      // Predicated region
      $region29: #{forward.10} parent=27 // pred_check
        %p153 = pneg %p30
      $region30: #{forward.10} parent=27 // pred_check_branch
        %155 = sbr.rel (%p153) target = $region32
      $region31: #{forward.10} parent=27 // pred_region
        %p156 = scmp.lt.s32.totalorder %s10, 1
        %s157 = scalar_select %p156, %s10, 1
        %s158 = smul.addr %s157, 8
        %s159 = smul.addr %s158, 8
        %s160 = scalar_lea.vmem %s0, %s159
      $region32: #{forward.10} parent=27 // pred_fallthru
        _
    $region28: #{forward.10} parent=5 // pred_fallthru
      _
    %p161 = scmp.le.s32.totalorder 1, %s10
    %p162 = scmp.lt.s32.totalorder %s10, 3
    %p163 = pnand %p161, %p162
    %p164 = pneg %p163
    // Predicated region
    $region33: #{forward.10} parent=5 // pred_check
      _
    $region34: #{forward.10} parent=5 // pred_check_branch
      %166 = sbr.rel (%p163) target = $region36
    $region35: #{forward.10} parent=5 // pred_region
      %s167 = ssub.s32 %s10, 1
      %p168 = scmp.lt.s32.totalorder %s15, 1
      %s169 = scalar_select %p168, %s15, 1
      %s170 = smul.addr %s169, 8
      %s171 = smul.addr %s170, 8
      %s172 = scalar_lea.vmem %s0, %s171
      %p173 = pneg %p36
      %p174 = pneg %p33
      %p175 = pneg %p57
      %p176 = pneg %p54
      %p177 = pneg %p78
      %p178 = pneg %p75
      %p179 = pneg %p99
      %p180 = pneg %p96
      %p181 = pneg %p125
      %p182 = pneg %p122
      %p183 = scmp.lt.s32.totalorder %s15, 1
      %s184 = scalar_select %p183, %s15, 1
      %s185 = smul.addr %s184, 8
      %s186 = smul.addr %s185, 8
      %s187 = scalar_lea.vmem %s4, %s186
      %p188 = scmp.lt.s32.totalorder %s15, 1
      %s189 = scalar_select %p188, %s15, 1
      %s190 = smul.addr %s189, 8
      %s191 = smul.addr %s190, 8
      %s192 = scalar_lea.vmem %s0, %s191
      %p193 = scmp.lt.s32.totalorder %s15, 1
      %s194 = scalar_select %p193, %s15, 1
      %s195 = smul.addr %s194, 8
      %s196 = smul.addr %s195, 8
      %s197 = scalar_lea.vmem %s4, %s196
      %v199 = vld [vmem:[%s192] sm:$0xff]
      %v200 = vld [vmem:[%s192 + $0x8] sm:$0xff]
      %v201 = vld [vmem:[%s192 + $0x10] sm:$0xff]
      %v202 = vld [vmem:[%s192 + $0x18] sm:$0xff]
      %v203 = vld [vmem:[%s192 + $0x20] sm:$0xff]
      %v204 = vld [vmem:[%s192 + $0x28] sm:$0xff]
      %v205 = vld [vmem:[%s192 + $0x30] sm:$0xff]
      %v206 = vld [vmem:[%s192 + $0x38] sm:$0x7f]
      %v207 = vpack.c.bf16 %v200, %v199
      %v208 = vpack.c.bf16 %v202, %v201
      %v209 = vpack.c.bf16 %v204, %v203
      %v210 = vpack.c.bf16 %v206, %v205
      %v211 = vld [vmem:[%s1] sm:$0xf]
      %v212 = vld [vmem:[%s1 + $0x4] sm:$0xf]
      %v213 = vld [vmem:[%s1 + $0x8] sm:$0xf]
      %v214 = vld [vmem:[%s192 + $0x1] sm:$0xff]
      %v215 = vld [vmem:[%s192 + $0x9] sm:$0xff]
      %v216 = vld [vmem:[%s192 + $0x11] sm:$0xff]
      %v217 = vld [vmem:[%s192 + $0x19] sm:$0xff]
      %v218 = vld [vmem:[%s192 + $0x21] sm:$0xff]
      %v219 = vld [vmem:[%s192 + $0x29] sm:$0xff]
      %v220 = vld [vmem:[%s192 + $0x31] sm:$0xff]
      %v221 = vld [vmem:[%s192 + $0x39] sm:$0x7f]
      %v222 = vpack.c.bf16 %v215, %v214
      %v223 = vpack.c.bf16 %v217, %v216
      %v224 = vpack.c.bf16 %v219, %v218
      %v225 = vpack.c.bf16 %v221, %v220
      %s226 = scalar_lea.vmem %s1, 12
      %v227 = vld [vmem:[%s226] sm:$0xf]
      %v228 = vld [vmem:[%s226 + $0x4] sm:$0xf]
      %v229 = vld [vmem:[%s226 + $0x8] sm:$0xf]
      %v233 = vunpack.c.l.b16 %v227
      %v234 = vunpack.c.l.b16 %v228
      %v235 = vunpack.c.l.b16 %v229
      %v236 = vpack.c.b16 %v234, %v233
      %v237 = vpack.c.b16 %v235, %v235
      %vm239 = vcmask 195584
      %v241 = vsel %vm239, %v222, 0
      %v244 = vsel %vm239, %v223, 0
      %v247 = vsel %vm239, %v224, 0
      %v250 = vsel %vm239, %v225, 0
      %vm252 = vcmask 1043456
      %v254 = vsel %vm252, %v237, 0
      %256 = vmatprep.subr.bf16.mxu0 0
      %257 = vmatpush1.bf16.msra.mxu0 0
      %258 = vmatprep.subr.bf16.mxu0 0
      %259 = vmatpush1.bf16.msra.mxu0 0
      %260 = vmatprep.subr.bf16.mxu0 0
      %261 = vmatpush1.bf16.msra.mxu0 0
      %262 = vmatprep.subr.bf16.mxu0 0
      %263 = vmatpush1.bf16.msra.mxu0 0
      %264 = vmatprep.subr.bf16.mxu0 0
      %265 = vmatpush1.bf16.msra.mxu0 0
      %266 = vmatprep.subr.bf16.mxu0 0
      %267 = vmatpush1.bf16.msra.mxu0 0
      %268 = vmatprep.subr.bf16.mxu0 0
      %269 = vmatpush1.bf16.msra.mxu0 %v254
      %270 = vmatprep.subr.bf16.mxu0 0
      %271 = vmatpush1.bf16.msra.mxu0 %v236
      %272 = vmatprep.subr.bf16.mxu0 0
      %273 = vmatpush2.bf16.msra.mxu0 0
      %274 = vmatprep.subr.bf16.mxu0 0
      %275 = vmatpush2.bf16.msra.mxu0 0
      %276 = vmatprep.subr.bf16.mxu0 0
      %277 = vmatpush2.bf16.msra.mxu0 0
      %278 = vmatprep.subr.bf16.mxu0 0
      %279 = vmatpush2.bf16.msra.mxu0 0
      %280 = vmatprep.subr.bf16.mxu0 0
      %281 = vmatpush2.bf16.msra.mxu0 0
      %282 = vmatprep.subr.bf16.mxu0 0
      %283 = vmatpush2.bf16.msra.mxu0 0
      %284 = vmatprep.subr.bf16.mxu0 0
      %285 = vmatpush2.bf16.msra.mxu0 0
      %286 = vmatprep.subr.bf16.mxu0 0
      %287 = vmatpush2.bf16.msra.mxu0 0
      %288 = vmatprep.mubr.bf16.mxu0 0
      %289 = vmatmul.mubr.bf16.gmra.mxu0 %v241
      %v290 = vpop.f32.mrf.mxu0
      %v291 = vadd.f32 0.0, %v290
      %v292 = vpop.f32.mrf.mxu0
      %v293 = vpop.f32.mrf.mxu0
      %v294 = vadd.f32 0.0, %v293
      %v295 = vpop.f32.mrf.mxu0
      %296 = vmatprep.mubr.bf16.mxu0 0
      %297 = vmatmul.mubr.bf16.gmra.mxu0 %v244
      %v298 = vpop.f32.mrf.mxu0
      %v299 = vadd.f32 0.0, %v298
      %v300 = vpop.f32.mrf.mxu0
      %v301 = vpop.f32.mrf.mxu0
      %v302 = vadd.f32 0.0, %v301
      %v303 = vpop.f32.mrf.mxu0
      %304 = vmatprep.mubr.bf16.mxu0 0
      %305 = vmatmul.mubr.bf16.gmra.mxu0 %v247
      %v306 = vpop.f32.mrf.mxu0
      %v307 = vadd.f32 0.0, %v306
      %v308 = vpop.f32.mrf.mxu0
      %v309 = vpop.f32.mrf.mxu0
      %v310 = vadd.f32 0.0, %v309
      %v311 = vpop.f32.mrf.mxu0
      %312 = vmatprep.mubr.bf16.mxu0 0
      %313 = vmatmul.mubr.bf16.gmra.mxu0 %v250
      %v314 = vpop.f32.mrf.mxu0
      %v315 = vadd.f32 0.0, %v314
      %v316 = vpop.f32.mrf.mxu0
      %v317 = vpop.f32.mrf.mxu0
      %v318 = vadd.f32 0.0, %v317
      %v319 = vpop.f32.mrf.mxu0
      %320 = vdwg.mxu0
      %v324 = vunpack.c.l.b16 %v211
      %v325 = vunpack.c.l.b16 %v212
      %v326 = vunpack.c.l.b16 %v213
      %v327 = vpack.c.b16 %v325, %v324
      %v328 = vpack.c.b16 %v326, %v326
      %v331 = vsel %vm239, %v207, 0
      %v334 = vsel %vm239, %v208, 0
      %v337 = vsel %vm239, %v209, 0
      %v340 = vsel %vm239, %v210, 0
      %v343 = vsel %vm252, %v328, 0
      %345 = vmatprep.subr.bf16.mxu0 0
      %346 = vmatpush1.bf16.msra.mxu0 0
      %347 = vmatprep.subr.bf16.mxu0 0
      %348 = vmatpush1.bf16.msra.mxu0 0
      %349 = vmatprep.subr.bf16.mxu0 0
      %350 = vmatpush1.bf16.msra.mxu0 0
      %351 = vmatprep.subr.bf16.mxu0 0
      %352 = vmatpush1.bf16.msra.mxu0 0
      %353 = vmatprep.subr.bf16.mxu0 0
      %354 = vmatpush1.bf16.msra.mxu0 0
      %355 = vmatprep.subr.bf16.mxu0 0
      %356 = vmatpush1.bf16.msra.mxu0 0
      %357 = vmatprep.subr.bf16.mxu0 0
      %358 = vmatpush1.bf16.msra.mxu0 %v343
      %359 = vmatprep.subr.bf16.mxu0 0
      %360 = vmatpush1.bf16.msra.mxu0 %v327
      %361 = vmatprep.subr.bf16.mxu0 0
      %362 = vmatpush2.bf16.msra.mxu0 0
      %363 = vmatprep.subr.bf16.mxu0 0
      %364 = vmatpush2.bf16.msra.mxu0 0
      %365 = vmatprep.subr.bf16.mxu0 0
      %366 = vmatpush2.bf16.msra.mxu0 0
      %367 = vmatprep.subr.bf16.mxu0 0
      %368 = vmatpush2.bf16.msra.mxu0 0
      %369 = vmatprep.subr.bf16.mxu0 0
      %370 = vmatpush2.bf16.msra.mxu0 0
      %371 = vmatprep.subr.bf16.mxu0 0
      %372 = vmatpush2.bf16.msra.mxu0 0
      %373 = vmatprep.subr.bf16.mxu0 0
      %374 = vmatpush2.bf16.msra.mxu0 0
      %375 = vmatprep.subr.bf16.mxu0 0
      %376 = vmatpush2.bf16.msra.mxu0 0
      %377 = vmatprep.mubr.bf16.mxu0 0
      %378 = vmatmul.mubr.bf16.gmra.mxu0 %v331
      %v379 = vpop.f32.mrf.mxu0
      %v380 = vadd.f32 %v291, %v379
      %v381 = vpop.f32.mrf.mxu0
      %v382 = vpop.f32.mrf.mxu0
      %v383 = vadd.f32 %v294, %v382
      %v384 = vpop.f32.mrf.mxu0
      %385 = vmatprep.mubr.bf16.mxu0 0
      %386 = vmatmul.mubr.bf16.gmra.mxu0 %v334
      %v387 = vpop.f32.mrf.mxu0
      %v388 = vadd.f32 %v299, %v387
      %v389 = vpop.f32.mrf.mxu0
      %v390 = vpop.f32.mrf.mxu0
      %v391 = vadd.f32 %v302, %v390
      %v392 = vpop.f32.mrf.mxu0
      %393 = vmatprep.mubr.bf16.mxu0 0
      %394 = vmatmul.mubr.bf16.gmra.mxu0 %v337
      %v395 = vpop.f32.mrf.mxu0
      %v396 = vadd.f32 %v307, %v395
      %v397 = vpop.f32.mrf.mxu0
      %v398 = vpop.f32.mrf.mxu0
      %v399 = vadd.f32 %v310, %v398
      %v400 = vpop.f32.mrf.mxu0
      %401 = vmatprep.mubr.bf16.mxu0 0
      %402 = vmatmul.mubr.bf16.gmra.mxu0 %v340
      %v403 = vpop.f32.mrf.mxu0
      %v404 = vadd.f32 %v315, %v403
      %v405 = vpop.f32.mrf.mxu0
      %v406 = vpop.f32.mrf.mxu0
      %v407 = vadd.f32 %v318, %v406
      %v408 = vpop.f32.mrf.mxu0
      %409 = vdwg.mxu0
      %vm410 = vcmask 261120
      %v411 = vsel %vm410, %v380, 0.0
      %v412 = vsel %vm410, %v383, 0.0
      %v413 = vadd.f32 %v411, %v412
      %v414 = vsel %vm410, %v388, 0.0
      %v415 = vadd.f32 %v413, %v414
      %v416 = vsel %vm410, %v391, 0.0
      %v417 = vadd.f32 %v415, %v416
      %v418 = vsel %vm410, %v396, 0.0
      %v419 = vadd.f32 %v417, %v418
      %v420 = vsel %vm410, %v399, 0.0
      %v421 = vadd.f32 %v419, %v420
      %v422 = vsel %vm410, %v404, 0.0
      %v423 = vadd.f32 %v421, %v422
      %vm424 = vcmask 260096
      %v425 = vsel %vm424, %v407, 0.0
      %v426 = vadd.f32 %v423, %v425
      %v427 = vrot.slane %v426, 4
      %v428 = vadd.f32 %v426, %v427
      %v429 = vrot.slane %v428, 2
      %v430 = vadd.f32 %v428, %v429
      %v431 = vrot.slane %v430, 1
      %v432 = vadd.f32 %v430, %v431
      %v433 = vrcp.pop 63.0
      %v434 = vmul.f32 %v432, %v433
      %v435 = vsub.f32 %v380, %v434
      %v436 = vsub.f32 %v383, %v434
      %v437 = vsub.f32 %v388, %v434
      %v438 = vsub.f32 %v391, %v434
      %v439 = vsub.f32 %v396, %v434
      %v440 = vsub.f32 %v399, %v434
      %v441 = vsub.f32 %v404, %v434
      %v442 = vsub.f32 %v407, %v434
      %v443 = vmul.f32 %v435, %v435
      %v444 = vmul.f32 %v436, %v436
      %v445 = vmul.f32 %v437, %v437
      %v446 = vmul.f32 %v438, %v438
      %v447 = vmul.f32 %v439, %v439
      %v448 = vmul.f32 %v440, %v440
      %v449 = vmul.f32 %v441, %v441
      %v450 = vmul.f32 %v442, %v442
      %v451 = vsel %vm410, %v443, 0.0
      %v452 = vsel %vm410, %v444, 0.0
      %v453 = vadd.f32 %v451, %v452
      %v454 = vsel %vm410, %v445, 0.0
      %v455 = vadd.f32 %v453, %v454
      %v456 = vsel %vm410, %v446, 0.0
      %v457 = vadd.f32 %v455, %v456
      %v458 = vsel %vm410, %v447, 0.0
      %v459 = vadd.f32 %v457, %v458
      %v460 = vsel %vm410, %v448, 0.0
      %v461 = vadd.f32 %v459, %v460
      %v462 = vsel %vm410, %v449, 0.0
      %v463 = vadd.f32 %v461, %v462
      %v464 = vsel %vm424, %v450, 0.0
      %v465 = vadd.f32 %v463, %v464
      %v466 = vrot.slane %v465, 4
      %v467 = vadd.f32 %v465, %v466
      %v468 = vrot.slane %v467, 2
      %v469 = vadd.f32 %v467, %v468
      %v470 = vrot.slane %v469, 1
      %v471 = vadd.f32 %v469, %v470
      %v472 = vmul.f32 %v471, %v433
      %v473 = vadd.f32 %v472, 1e-05
      %v474 = vrsqrt.pop %v473
      %v475 = vmul.f32 %v435, %v474
      %v476 = vmul.f32 %v436, %v474
      %v477 = vmul.f32 %v437, %v474
      %v478 = vmul.f32 %v438, %v474
      %v479 = vmul.f32 %v439, %v474
      %v480 = vmul.f32 %v440, %v474
      %v481 = vmul.f32 %v441, %v474
      %v482 = vmul.f32 %v442, %v474
      %v483 = vld [vmem:[%s2] sm:$0x1]
      %v485 = vlaneseq
      %v486 = vshrl.u32 %v485, 7
      %v487 = vsub.s32 0, %v486
      %v488 = vrot.slane %v483, %v487
      %v490 = vmul.f32 %v475, %v488
      %v491 = vmul.f32 %v476, %v488
      %v492 = vmul.f32 %v477, %v488
      %v493 = vmul.f32 %v478, %v488
      %v494 = vmul.f32 %v479, %v488
      %v495 = vmul.f32 %v480, %v488
      %v496 = vmul.f32 %v481, %v488
      %v497 = vmul.f32 %v482, %v488
      %v498 = vld [vmem:[%s3] sm:$0x1]
      %v500 = vlaneseq
      %v501 = vshrl.u32 %v500, 7
      %v502 = vsub.s32 0, %v501
      %v503 = vrot.slane %v498, %v502
      %v505 = vadd.f32 %v490, %v503
      %v506 = vadd.f32 %v491, %v503
      %v507 = vadd.f32 %v492, %v503
      %v508 = vadd.f32 %v493, %v503
      %v509 = vadd.f32 %v494, %v503
      %v510 = vadd.f32 %v495, %v503
      %v511 = vadd.f32 %v496, %v503
      %v512 = vadd.f32 %v497, %v503
      %v513 = vmul.f32 %v505, 0.5
      %v514 = vmul.f32 %v506, 0.5
      %v515 = vmul.f32 %v507, 0.5
      %v516 = vmul.f32 %v508, 0.5
      %v517 = vmul.f32 %v509, 0.5
      %v518 = vmul.f32 %v510, 0.5
      %v519 = vmul.f32 %v511, 0.5
      %v520 = vmul.f32 %v512, 0.5
      %v521 = vmul.f32 %v505, 0.044715
      %v522 = vmul.f32 %v506, 0.044715
      %v523 = vmul.f32 %v507, 0.044715
      %v524 = vmul.f32 %v508, 0.044715
      %v525 = vmul.f32 %v509, 0.044715
      %v526 = vmul.f32 %v510, 0.044715
      %v527 = vmul.f32 %v511, 0.044715
      %v528 = vmul.f32 %v512, 0.044715
      %v529 = vmul.f32 %v521, %v505
      %v530 = vmul.f32 %v522, %v506
      %v531 = vmul.f32 %v523, %v507
      %v532 = vmul.f32 %v524, %v508
      %v533 = vmul.f32 %v525, %v509
      %v534 = vmul.f32 %v526, %v510
      %v535 = vmul.f32 %v527, %v511
      %v536 = vmul.f32 %v528, %v512
      %v537 = vmul.f32 %v529, %v505
      %v538 = vmul.f32 %v530, %v506
      %v539 = vmul.f32 %v531, %v507
      %v540 = vmul.f32 %v532, %v508
      %v541 = vmul.f32 %v533, %v509
      %v542 = vmul.f32 %v534, %v510
      %v543 = vmul.f32 %v535, %v511
      %v544 = vmul.f32 %v536, %v512
      %v545 = vadd.f32 %v505, %v537
      %v546 = vadd.f32 %v506, %v538
      %v547 = vadd.f32 %v507, %v539
      %v548 = vadd.f32 %v508, %v540
      %v549 = vadd.f32 %v509, %v541
      %v550 = vadd.f32 %v510, %v542
      %v551 = vadd.f32 %v511, %v543
      %v552 = vadd.f32 %v512, %v544
      %v553 = vmul.f32 %v545, 0.7978846
      %v554 = vmul.f32 %v546, 0.7978846
      %v555 = vmul.f32 %v547, 0.7978846
      %v556 = vmul.f32 %v548, 0.7978846
      %v557 = vmul.f32 %v549, 0.7978846
      %v558 = vmul.f32 %v550, 0.7978846
      %v559 = vmul.f32 %v551, 0.7978846
      %v560 = vmul.f32 %v552, 0.7978846
      %v561 = vtanh.pop %v553
      %v562 = vtanh.pop %v554
      %v563 = vtanh.pop %v555
      %v564 = vtanh.pop %v556
      %v565 = vtanh.pop %v557
      %v566 = vtanh.pop %v558
      %v567 = vtanh.pop %v559
      %v568 = vtanh.pop %v560
      %v569 = vadd.f32 %v561, 1.0
      %v570 = vadd.f32 %v562, 1.0
      %v571 = vadd.f32 %v563, 1.0
      %v572 = vadd.f32 %v564, 1.0
      %v573 = vadd.f32 %v565, 1.0
      %v574 = vadd.f32 %v566, 1.0
      %v575 = vadd.f32 %v567, 1.0
      %v576 = vadd.f32 %v568, 1.0
      %v577 = vmul.f32 %v513, %v569
      %v578 = vmul.f32 %v514, %v570
      %v579 = vmul.f32 %v515, %v571
      %v580 = vmul.f32 %v516, %v572
      %v581 = vmul.f32 %v517, %v573
      %v582 = vmul.f32 %v518, %v574
      %v583 = vmul.f32 %v519, %v575
      %v584 = vmul.f32 %v520, %v576
      %585 = vst.msk [vmem:[%s197] sm:$0xff] %vm410, %v577
      %586 = vst.msk [vmem:[%s197 + $0x8] sm:$0xff] %vm410, %v578
      %587 = vst.msk [vmem:[%s197 + $0x10] sm:$0xff] %vm410, %v579
      %588 = vst.msk [vmem:[%s197 + $0x18] sm:$0xff] %vm410, %v580
      %589 = vst.msk [vmem:[%s197 + $0x20] sm:$0xff] %vm410, %v581
      %590 = vst.msk [vmem:[%s197 + $0x28] sm:$0xff] %vm410, %v582
      %591 = vst.msk [vmem:[%s197 + $0x30] sm:$0xff] %vm410, %v583
      %592 = vst.msk [vmem:[%s197 + $0x38] sm:$0x7f] %vm424, %v584
      %p593 = scmp.lt.s32.totalorder %s15, 1
      %s594 = scalar_select %p593, %s15, 1
      %s595 = smul.addr %s594, 8
      %s596 = smul.addr %s595, 8
      %s597 = scalar_lea.vmem %s4, %s596
      // Predicated region
      $region37: #{forward.10} parent=35 // pred_check
        %p598 = pneg %p122
      $region38: #{forward.10} parent=35 // pred_check_branch
        %600 = sbr.rel (%p598) target = $region40
      $region39: #{forward.10} parent=35 // pred_region
        _
      $region40: #{forward.10} parent=35 // pred_fallthru
        _
    $region36: #{forward.10} parent=5 // pred_fallthru
      _
    %p601 = scmp.le.s32.totalorder 2, %s10
    // Predicated region
    $region41: #{forward.10} parent=5 // pred_check
      %p602 = pneg %p601
    $region42: #{forward.10} parent=5 // pred_check_branch
      %604 = sbr.rel (%p602) target = $region44
    $region43: #{forward.10} parent=5 // pred_region
      %s605 = ssub.s32 %s10, 2
      // Predicated region
      $region45: #{forward.10} parent=43 // pred_check
        %p606 = pneg %p128
      $region46: #{forward.10} parent=43 // pred_check_branch
        %608 = sbr.rel (%p606) target = $region48
      $region47: #{forward.10} parent=43 // pred_region
        %p609 = scmp.lt.s32.totalorder %s16, 1
        %s610 = scalar_select %p609, %s16, 1
        %s611 = smul.addr %s610, 8
        %s612 = smul.addr %s611, 8
        %s613 = scalar_lea.vmem %s4, %s612
      $region48: #{forward.10} parent=43 // pred_fallthru
        _
    $region44: #{forward.10} parent=5 // pred_fallthru
      _
  $region6: #{forward.10} parent=0 // loop_footer
    %s14 = sadd.s32 1, %s10
  $region7: #{forward.10} parent=0 // loop_footer_branch
    %9 = sbr.rel target = $region3
  $region8: #{forward.10} parent=0 // loop_exit
    _

// kernel: forward.11
$region0: #{forward.11}
  #allocation0 [shape = 'u32[]', space=smem, size = 0x4, offset = 0x4, fixed_abs, tag = 'smem constant byte address 0x4 - core index']
  #allocation1 [shape = 'u32[144,128]{1,0:T(1,128)}', space=vmem, size = 0x12000, scoped, tag = 'internal scratch']
  %s0 = inlined_call_operand.vmem [shape: f32[2,32,64], index: 0, kind: input, shape index: {}]
  %s1 = inlined_call_operand.vmem [shape: bf16[2,64,32], index: 1, kind: input, shape index: {}]
  %s2 = inlined_call_operand.vmem [shape: f32[2,31,32], index: 2, kind: output, shape index: {}]
  %s3 = sld [smem:[#allocation0]]
  $region41: #{forward.11} parent=0
    _
  %s5 = ssub.s32 1, %s3
  %s6 = scalar_select 0, %s5, %s3
  loop: start=0, step=1, limit=4
  $region2: #{forward.11} parent=0 // loop_pre_header
    _
  $region3: #{forward.11} parent=0 // loop_header
    %s8 = sphi 0, %s12
    %p9 = scmp.ge.s32.totalorder %s8, 4
    %s18 = sphi 0, %s20
    %s21 = sphi 0, %s18
    %s22 = sphi 0, %s21
    %s38 = sphi 0, %s22
    %s42 = sphi 0, %s42
    %s44 = sphi 0, %s42
    %s45 = sphi 0, %s44
    %s59 = sphi 0, %s45
    %s65 = sphi 0, %s67
    %s68 = sphi 0, %s65
    %s69 = sphi 0, %s68
    %s85 = sphi 0, %s69
  $region4: #{forward.11} parent=0 // loop_header_branch
    %11 = sbr.rel (%p9) target = $region8
  $region5: #{forward.11} parent=0 // loop_body
    %s13 = ssub.s32 %s8, 1
    %s14 = ssub.s32 %s8, 2
    %s15 = sadd.s32 %s8, 1
    %s16 = ssub.s32 %s8, %s15
    %p17 = scmp.eq.s32.totalorder %s16, 0
    %s19 = sadd.s32 %s18, 1
    %s20 = scalar_select %p17, %s18, %s19
    %p23 = pneg %p17
    %p24 = scmp.eq.s32.totalorder %s8, 1
    %p25 = por %p23, %p24
    %p26 = scmp.ne.s32.totalorder %s18, %s21
    %p27 = scmp.eq.s32.totalorder %s8, 0
    %p28 = por %p26, %p27
    %p29 = scmp.ne.s32.totalorder %s18, %s21
    %p30 = scmp.eq.s32.totalorder %s13, 1
    %p31 = por %p29, %p30
    %p32 = scmp.ne.s32.totalorder %s21, %s22
    %p33 = scmp.eq.s32.totalorder %s13, 0
    %p34 = por %p32, %p33
    %p35 = scmp.ne.s32.totalorder %s21, %s22
    %p36 = scmp.eq.s32.totalorder %s14, 1
    %p37 = por %p35, %p36
    %p39 = scmp.ne.s32.totalorder %s22, %s38
    %p40 = scmp.eq.s32.totalorder %s14, 0
    %p41 = por %p39, %p40
    %s43 = sadd.s32 %s42, 1
    %p46 = scmp.eq.s32.totalorder %s8, 1
    %p47 = scmp.ne.s32.totalorder %s42, %s44
    %p48 = scmp.eq.s32.totalorder %s8, 0
    %p49 = por %p47, %p48
    %p50 = scmp.ne.s32.totalorder %s42, %s44
    %p51 = scmp.eq.s32.totalorder %s13, 1
    %p52 = por %p50, %p51
    %p53 = scmp.ne.s32.totalorder %s44, %s45
    %p54 = scmp.eq.s32.totalorder %s13, 0
    %p55 = por %p53, %p54
    %p56 = scmp.ne.s32.totalorder %s44, %s45
    %p57 = scmp.eq.s32.totalorder %s14, 1
    %p58 = por %p56, %p57
    %p60 = scmp.ne.s32.totalorder %s45, %s59
    %p61 = scmp.eq.s32.totalorder %s14, 0
    %p62 = por %p60, %p61
    %s63 = ssub.s32 %s8, %s15
    %p64 = scmp.eq.s32.totalorder %s63, 0
    %s66 = sadd.s32 %s65, 1
    %s67 = scalar_select %p64, %s65, %s66
    %p70 = pneg %p64
    %p71 = scmp.eq.s32.totalorder %s8, 1
    %p72 = por %p70, %p71
    %p73 = scmp.ne.s32.totalorder %s65, %s68
    %p74 = scmp.eq.s32.totalorder %s8, 0
    %p75 = por %p73, %p74
    %p76 = scmp.ne.s32.totalorder %s65, %s68
    %p77 = scmp.eq.s32.totalorder %s13, 1
    %p78 = por %p76, %p77
    %p79 = scmp.ne.s32.totalorder %s68, %s69
    %p80 = scmp.eq.s32.totalorder %s13, 0
    %p81 = por %p79, %p80
    %p82 = scmp.ne.s32.totalorder %s68, %s69
    %p83 = scmp.eq.s32.totalorder %s14, 1
    %p84 = por %p82, %p83
    %p86 = scmp.ne.s32.totalorder %s69, %s85
    %p87 = scmp.eq.s32.totalorder %s14, 0
    %p88 = por %p86, %p87
    %p89 = scmp.le.s32.totalorder 1, %s8
    %p90 = scmp.lt.s32.totalorder %s8, 3
    %p91 = pnand %p89, %p90
    %p92 = pneg %p91
    // Predicated region
    $region9: #{forward.11} parent=5 // pred_check
      _
    $region10: #{forward.11} parent=5 // pred_check_branch
      %94 = sbr.rel (%p91) target = $region12
    $region11: #{forward.11} parent=5 // pred_region
      %s95 = ssub.s32 %s8, 1
      // Predicated region
      $region13: #{forward.11} parent=11 // pred_check
        %p96 = pneg %p55
      $region14: #{forward.11} parent=11 // pred_check_branch
        %98 = sbr.rel (%p96) target = $region16
      $region15: #{forward.11} parent=11 // pred_region
        _
      $region16: #{forward.11} parent=11 // pred_fallthru
        _
    $region12: #{forward.11} parent=5 // pred_fallthru
      _
    %p99 = scmp.lt.s32.totalorder %s8, 2
    // Predicated region
    $region17: #{forward.11} parent=5 // pred_check
      %p100 = pneg %p99
    $region18: #{forward.11} parent=5 // pred_check_branch
      %102 = sbr.rel (%p100) target = $region20
    $region19: #{forward.11} parent=5 // pred_region
      // Predicated region
      $region21: #{forward.11} parent=19 // pred_check
        %p103 = pneg %p28
      $region22: #{forward.11} parent=19 // pred_check_branch
        %105 = sbr.rel (%p103) target = $region24
      $region23: #{forward.11} parent=19 // pred_region
        %p106 = scmp.lt.s32.totalorder %s8, 1
        %s107 = scalar_select %p106, %s8, 1
        %s108 = smul.addr %s107, 4
        %s109 = smul.addr %s108, 8
        %s110 = scalar_lea.vmem %s0, %s109
      $region24: #{forward.11} parent=19 // pred_fallthru
        _
    $region20: #{forward.11} parent=5 // pred_fallthru
      _
    %p111 = scmp.le.s32.totalorder 1, %s8
    %p112 = scmp.lt.s32.totalorder %s8, 3
    %p113 = pnand %p111, %p112
    %p114 = pneg %p113
    // Predicated region
    $region25: #{forward.11} parent=5 // pred_check
      _
    $region26: #{forward.11} parent=5 // pred_check_branch
      %116 = sbr.rel (%p113) target = $region28
    $region27: #{forward.11} parent=5 // pred_region
      %s117 = ssub.s32 %s8, 1
      %p118 = scmp.lt.s32.totalorder %s13, 1
      %s119 = scalar_select %p118, %s13, 1
      %s120 = smul.addr %s119, 4
      %s121 = smul.addr %s120, 8
      %s122 = scalar_lea.vmem %s0, %s121
      %p123 = pneg %p34
      %p124 = pneg %p31
      %p125 = pneg %p55
      %p126 = pneg %p52
      %p127 = pneg %p81
      %p128 = pneg %p78
      %p129 = scmp.lt.s32.totalorder %s13, 1
      %s130 = scalar_select %p129, %s13, 1
      %s131 = smul.addr %s130, 4
      %s132 = smul.addr %s131, 8
      %s133 = scalar_lea.vmem %s2, %s132
      %p134 = scmp.lt.s32.totalorder %s13, 1
      %s135 = scalar_select %p134, %s13, 1
      %s136 = smul.addr %s135, 4
      %s137 = smul.addr %s136, 8
      %s138 = scalar_lea.vmem %s0, %s137
      %p139 = scmp.lt.s32.totalorder %s13, 1
      %s140 = scalar_select %p139, %s13, 1
      %s141 = smul.addr %s140, 4
      %s142 = smul.addr %s141, 8
      %s143 = scalar_lea.vmem %s2, %s142
      %v145 = vld [vmem:[%s138] sm:$0xff]
      %v146 = vld [vmem:[%s138 + $0x8] sm:$0xff]
      %v147 = vld [vmem:[%s138 + $0x10] sm:$0xff]
      %v148 = vld [vmem:[%s138 + $0x18] sm:$0x7f]
      %v149 = vpack.c.bf16 %v146, %v145
      %v150 = vpack.c.bf16 %v148, %v147
      %v151 = vld [vmem:[%s1] sm:$0xf]
      %v152 = vld [vmem:[%s1 + $0x4] sm:$0xf]
      %v153 = vld [vmem:[%s1 + $0x8] sm:$0xf]
      %v154 = vld [vmem:[%s1 + $0xc] sm:$0xf]
      %v155 = vld [vmem:[%s1 + $0x10] sm:$0xf]
      %v156 = vld [vmem:[%s1 + $0x14] sm:$0xf]
      %v157 = vld [vmem:[%s1 + $0x18] sm:$0xf]
      %v158 = vld [vmem:[%s1 + $0x1c] sm:$0xf]
      %v159 = vld [vmem:[%s138 + $0x1] sm:$0xff]
      %v160 = vld [vmem:[%s138 + $0x9] sm:$0xff]
      %v161 = vld [vmem:[%s138 + $0x11] sm:$0xff]
      %v162 = vld [vmem:[%s138 + $0x19] sm:$0x7f]
      %v163 = vpack.c.bf16 %v160, %v159
      %v164 = vpack.c.bf16 %v162, %v161
      %s165 = scalar_lea.vmem %s1, 32
      %v166 = vld [vmem:[%s165] sm:$0xf]
      %v167 = vld [vmem:[%s165 + $0x4] sm:$0xf]
      %v168 = vld [vmem:[%s165 + $0x8] sm:$0xf]
      %v169 = vld [vmem:[%s165 + $0xc] sm:$0xf]
      %v170 = vld [vmem:[%s165 + $0x10] sm:$0xf]
      %v171 = vld [vmem:[%s165 + $0x14] sm:$0xf]
      %v172 = vld [vmem:[%s165 + $0x18] sm:$0xf]
      %v173 = vld [vmem:[%s165 + $0x1c] sm:$0xf]
      %v182 = vunpack.c.l.b16 %v166
      %v183 = vunpack.c.l.b16 %v167
      %v184 = vunpack.c.l.b16 %v168
      %v185 = vunpack.c.l.b16 %v169
      %v186 = vunpack.c.l.b16 %v170
      %v187 = vunpack.c.l.b16 %v171
      %v188 = vunpack.c.l.b16 %v172
      %v189 = vunpack.c.l.b16 %v173
      %v190 = vpack.c.b16 %v183, %v182
      %v191 = vpack.c.b16 %v185, %v184
      %v192 = vpack.c.b16 %v187, %v186
      %v193 = vpack.c.b16 %v189, %v188
      %vm198 = vcmask 523264
      %v200 = vsel %vm198, %v163, 0
      %v203 = vsel %vm198, %v164, 0
      %205 = vmatprep.subr.bf16.mxu0 0
      %206 = vmatpush1.bf16.msra.mxu0 0
      %207 = vmatprep.subr.bf16.mxu0 0
      %208 = vmatpush1.bf16.msra.mxu0 0
      %209 = vmatprep.subr.bf16.mxu0 0
      %210 = vmatpush1.bf16.msra.mxu0 0
      %211 = vmatprep.subr.bf16.mxu0 0
      %212 = vmatpush1.bf16.msra.mxu0 0
      %213 = vmatprep.subr.bf16.mxu0 0
      %214 = vmatpush1.bf16.msra.mxu0 %v193
      %215 = vmatprep.subr.bf16.mxu0 0
      %216 = vmatpush1.bf16.msra.mxu0 %v192
      %217 = vmatprep.subr.bf16.mxu0 0
      %218 = vmatpush1.bf16.msra.mxu0 %v191
      %219 = vmatprep.subr.bf16.mxu0 0
      %220 = vmatpush1.bf16.msra.mxu0 %v190
      %221 = vmatprep.subr.bf16.mxu0 0
      %222 = vmatpush2.bf16.msra.mxu0 0
      %223 = vmatprep.subr.bf16.mxu0 0
      %224 = vmatpush2.bf16.msra.mxu0 0
      %225 = vmatprep.subr.bf16.mxu0 0
      %226 = vmatpush2.bf16.msra.mxu0 0
      %227 = vmatprep.subr.bf16.mxu0 0
      %228 = vmatpush2.bf16.msra.mxu0 0
      %229 = vmatprep.subr.bf16.mxu0 0
      %230 = vmatpush2.bf16.msra.mxu0 0
      %231 = vmatprep.subr.bf16.mxu0 0
      %232 = vmatpush2.bf16.msra.mxu0 0
      %233 = vmatprep.subr.bf16.mxu0 0
      %234 = vmatpush2.bf16.msra.mxu0 0
      %235 = vmatprep.subr.bf16.mxu0 0
      %236 = vmatpush2.bf16.msra.mxu0 0
      %237 = vmatprep.mubr.bf16.mxu0 0
      %238 = vmatmul.mubr.bf16.gmra.mxu0 %v200
      %v239 = vpop.f32.mrf.mxu0
      %v240 = vadd.f32 0.0, %v239
      %v241 = vpop.f32.mrf.mxu0
      %v242 = vpop.f32.mrf.mxu0
      %v243 = vadd.f32 0.0, %v242
      %v244 = vpop.f32.mrf.mxu0
      %245 = vmatprep.mubr.bf16.mxu0 0
      %246 = vmatmul.mubr.bf16.gmra.mxu0 %v203
      %v247 = vpop.f32.mrf.mxu0
      %v248 = vadd.f32 0.0, %v247
      %v249 = vpop.f32.mrf.mxu0
      %v250 = vpop.f32.mrf.mxu0
      %v251 = vadd.f32 0.0, %v250
      %v252 = vpop.f32.mrf.mxu0
      %253 = vdwg.mxu0
      %v262 = vunpack.c.l.b16 %v151
      %v263 = vunpack.c.l.b16 %v152
      %v264 = vunpack.c.l.b16 %v153
      %v265 = vunpack.c.l.b16 %v154
      %v266 = vunpack.c.l.b16 %v155
      %v267 = vunpack.c.l.b16 %v156
      %v268 = vunpack.c.l.b16 %v157
      %v269 = vunpack.c.l.b16 %v158
      %v270 = vpack.c.b16 %v263, %v262
      %v271 = vpack.c.b16 %v265, %v264
      %v272 = vpack.c.b16 %v267, %v266
      %v273 = vpack.c.b16 %v269, %v268
      %v279 = vsel %vm198, %v149, 0
      %v282 = vsel %vm198, %v150, 0
      %284 = vmatprep.subr.bf16.mxu0 0
      %285 = vmatpush1.bf16.msra.mxu0 0
      %286 = vmatprep.subr.bf16.mxu0 0
      %287 = vmatpush1.bf16.msra.mxu0 0
      %288 = vmatprep.subr.bf16.mxu0 0
      %289 = vmatpush1.bf16.msra.mxu0 0
      %290 = vmatprep.subr.bf16.mxu0 0
      %291 = vmatpush1.bf16.msra.mxu0 0
      %292 = vmatprep.subr.bf16.mxu0 0
      %293 = vmatpush1.bf16.msra.mxu0 %v273
      %294 = vmatprep.subr.bf16.mxu0 0
      %295 = vmatpush1.bf16.msra.mxu0 %v272
      %296 = vmatprep.subr.bf16.mxu0 0
      %297 = vmatpush1.bf16.msra.mxu0 %v271
      %298 = vmatprep.subr.bf16.mxu0 0
      %299 = vmatpush1.bf16.msra.mxu0 %v270
      %300 = vmatprep.subr.bf16.mxu0 0
      %301 = vmatpush2.bf16.msra.mxu0 0
      %302 = vmatprep.subr.bf16.mxu0 0
      %303 = vmatpush2.bf16.msra.mxu0 0
      %304 = vmatprep.subr.bf16.mxu0 0
      %305 = vmatpush2.bf16.msra.mxu0 0
      %306 = vmatprep.subr.bf16.mxu0 0
      %307 = vmatpush2.bf16.msra.mxu0 0
      %308 = vmatprep.subr.bf16.mxu0 0
      %309 = vmatpush2.bf16.msra.mxu0 0
      %310 = vmatprep.subr.bf16.mxu0 0
      %311 = vmatpush2.bf16.msra.mxu0 0
      %312 = vmatprep.subr.bf16.mxu0 0
      %313 = vmatpush2.bf16.msra.mxu0 0
      %314 = vmatprep.subr.bf16.mxu0 0
      %315 = vmatpush2.bf16.msra.mxu0 0
      %316 = vmatprep.mubr.bf16.mxu0 0
      %317 = vmatmul.mubr.bf16.gmra.mxu0 %v279
      %v318 = vpop.f32.mrf.mxu0
      %v319 = vadd.f32 %v240, %v318
      %v320 = vpop.f32.mrf.mxu0
      %v321 = vpop.f32.mrf.mxu0
      %v322 = vadd.f32 %v243, %v321
      %v323 = vpop.f32.mrf.mxu0
      %324 = vmatprep.mubr.bf16.mxu0 0
      %325 = vmatmul.mubr.bf16.gmra.mxu0 %v282
      %v326 = vpop.f32.mrf.mxu0
      %v327 = vadd.f32 %v248, %v326
      %v328 = vpop.f32.mrf.mxu0
      %v329 = vpop.f32.mrf.mxu0
      %v330 = vadd.f32 %v251, %v329
      %v331 = vpop.f32.mrf.mxu0
      %332 = vdwg.mxu0
      %v333 = vmul.f32 %v319, 0.5
      %v334 = vmul.f32 %v322, 0.5
      %v335 = vmul.f32 %v327, 0.5
      %v336 = vmul.f32 %v330, 0.5
      %v337 = vmul.f32 %v319, 0.044715
      %v338 = vmul.f32 %v322, 0.044715
      %v339 = vmul.f32 %v327, 0.044715
      %v340 = vmul.f32 %v330, 0.044715
      %v341 = vmul.f32 %v337, %v319
      %v342 = vmul.f32 %v338, %v322
      %v343 = vmul.f32 %v339, %v327
      %v344 = vmul.f32 %v340, %v330
      %v345 = vmul.f32 %v341, %v319
      %v346 = vmul.f32 %v342, %v322
      %v347 = vmul.f32 %v343, %v327
      %v348 = vmul.f32 %v344, %v330
      %v349 = vadd.f32 %v319, %v345
      %v350 = vadd.f32 %v322, %v346
      %v351 = vadd.f32 %v327, %v347
      %v352 = vadd.f32 %v330, %v348
      %v353 = vmul.f32 %v349, 0.7978846
      %v354 = vmul.f32 %v350, 0.7978846
      %v355 = vmul.f32 %v351, 0.7978846
      %v356 = vmul.f32 %v352, 0.7978846
      %v357 = vtanh.pop %v353
      %v358 = vtanh.pop %v354
      %v359 = vtanh.pop %v355
      %v360 = vtanh.pop %v356
      %v361 = vadd.f32 %v357, 1.0
      %v362 = vadd.f32 %v358, 1.0
      %v363 = vadd.f32 %v359, 1.0
      %v364 = vadd.f32 %v360, 1.0
      %v365 = vmul.f32 %v333, %v361
      %v366 = vmul.f32 %v334, %v362
      %v367 = vmul.f32 %v335, %v363
      %v368 = vmul.f32 %v336, %v364
      %vm369 = vcmask 261120
      %370 = vst.msk [vmem:[%s143] sm:$0xff] %vm369, %v365
      %371 = vst.msk [vmem:[%s143 + $0x8] sm:$0xff] %vm369, %v366
      %372 = vst.msk [vmem:[%s143 + $0x10] sm:$0xff] %vm369, %v367
      %vm373 = vcmask 260096
      %374 = vst.msk [vmem:[%s143 + $0x18] sm:$0x7f] %vm373, %v368
      %p375 = scmp.lt.s32.totalorder %s13, 1
      %s376 = scalar_select %p375, %s13, 1
      %s377 = smul.addr %s376, 4
      %s378 = smul.addr %s377, 8
      %s379 = scalar_lea.vmem %s2, %s378
      // Predicated region
      $region29: #{forward.11} parent=27 // pred_check
        %p380 = pneg %p78
      $region30: #{forward.11} parent=27 // pred_check_branch
        %382 = sbr.rel (%p380) target = $region32
      $region31: #{forward.11} parent=27 // pred_region
        _
      $region32: #{forward.11} parent=27 // pred_fallthru
        _
    $region28: #{forward.11} parent=5 // pred_fallthru
      _
    %p383 = scmp.le.s32.totalorder 2, %s8
    // Predicated region
    $region33: #{forward.11} parent=5 // pred_check
      %p384 = pneg %p383
    $region34: #{forward.11} parent=5 // pred_check_branch
      %386 = sbr.rel (%p384) target = $region36
    $region35: #{forward.11} parent=5 // pred_region
      %s387 = ssub.s32 %s8, 2
      // Predicated region
      $region37: #{forward.11} parent=35 // pred_check
        %p388 = pneg %p84
      $region38: #{forward.11} parent=35 // pred_check_branch
        %390 = sbr.rel (%p388) target = $region40
      $region39: #{forward.11} parent=35 // pred_region
        %p391 = scmp.lt.s32.totalorder %s14, 1
        %s392 = scalar_select %p391, %s14, 1
        %s393 = smul.addr %s392, 4
        %s394 = smul.addr %s393, 8
        %s395 = scalar_lea.vmem %s2, %s394
      $region40: #{forward.11} parent=35 // pred_fallthru
        _
    $region36: #{forward.11} parent=5 // pred_fallthru
      _
  $region6: #{forward.11} parent=0 // loop_footer
    %s12 = sadd.s32 1, %s8
  $region7: #{forward.11} parent=0 // loop_footer_branch
    %7 = sbr.rel target = $region3
  $region8: #{forward.11} parent=0 // loop_exit
    _

// kernel: forward.13
$region0: #{forward.13}
  #allocation0 [shape = 'u32[]', space=smem, size = 0x4, offset = 0x4, fixed_abs, tag = 'smem constant byte address 0x4 - core index']
  #allocation1 [shape = 'u32[144,128]{1,0:T(1,128)}', space=vmem, size = 0x12000, scoped, tag = 'internal scratch']
  %s0 = inlined_call_operand.vmem [shape: f32[30,32], index: 0, kind: input, shape index: {}]
  %s1 = inlined_call_operand.vmem [shape: f32[1,32], index: 1, kind: input, shape index: {}]
  %s2 = inlined_call_operand.vmem [shape: f32[1,32], index: 2, kind: input, shape index: {}]
  %s3 = inlined_call_operand.vmem [shape: bf16[32,64], index: 3, kind: input, shape index: {}]
  %s4 = inlined_call_operand.vmem [shape: f32[1,64], index: 4, kind: input, shape index: {}]
  %s5 = inlined_call_operand.vmem [shape: f32[30,64], index: 5, kind: output, shape index: {}]
  %s6 = sld [smem:[#allocation0]]
  $region53: #{forward.13} parent=0
    _
  %s8 = ssub.s32 1, %s6
  %s9 = scalar_select 0, %s8, %s6
  loop: start=0, step=1, limit=4
  $region2: #{forward.13} parent=0 // loop_pre_header
    _
  $region3: #{forward.13} parent=0 // loop_header
    %s11 = sphi 0, %s15
    %p12 = scmp.ge.s32.totalorder %s11, 4
    %s21 = sphi 0, %s23
    %s24 = sphi 0, %s21
    %s25 = sphi 0, %s24
    %s41 = sphi 0, %s25
    %s45 = sphi 0, %s45
    %s47 = sphi 0, %s45
    %s48 = sphi 0, %s47
    %s62 = sphi 0, %s48
    %s66 = sphi 0, %s66
    %s68 = sphi 0, %s66
    %s69 = sphi 0, %s68
    %s83 = sphi 0, %s69
    %s87 = sphi 0, %s87
    %s89 = sphi 0, %s87
    %s90 = sphi 0, %s89
    %s104 = sphi 0, %s90
    %s108 = sphi 0, %s108
    %s110 = sphi 0, %s108
    %s111 = sphi 0, %s110
    %s125 = sphi 0, %s111
    %s131 = sphi 0, %s133
    %s134 = sphi 0, %s131
    %s135 = sphi 0, %s134
    %s151 = sphi 0, %s135
  $region4: #{forward.13} parent=0 // loop_header_branch
    %14 = sbr.rel (%p12) target = $region8
  $region5: #{forward.13} parent=0 // loop_body
    %s16 = ssub.s32 %s11, 1
    %s17 = ssub.s32 %s11, 2
    %s18 = sadd.s32 %s11, 1
    %s19 = ssub.s32 %s11, %s18
    %p20 = scmp.eq.s32.totalorder %s19, 0
    %s22 = sadd.s32 %s21, 1
    %s23 = scalar_select %p20, %s21, %s22
    %p26 = pneg %p20
    %p27 = scmp.eq.s32.totalorder %s11, 1
    %p28 = por %p26, %p27
    %p29 = scmp.ne.s32.totalorder %s21, %s24
    %p30 = scmp.eq.s32.totalorder %s11, 0
    %p31 = por %p29, %p30
    %p32 = scmp.ne.s32.totalorder %s21, %s24
    %p33 = scmp.eq.s32.totalorder %s16, 1
    %p34 = por %p32, %p33
    %p35 = scmp.ne.s32.totalorder %s24, %s25
    %p36 = scmp.eq.s32.totalorder %s16, 0
    %p37 = por %p35, %p36
    %p38 = scmp.ne.s32.totalorder %s24, %s25
    %p39 = scmp.eq.s32.totalorder %s17, 1
    %p40 = por %p38, %p39
    %p42 = scmp.ne.s32.totalorder %s25, %s41
    %p43 = scmp.eq.s32.totalorder %s17, 0
    %p44 = por %p42, %p43
    %s46 = sadd.s32 %s45, 1
    %p49 = scmp.eq.s32.totalorder %s11, 1
    %p50 = scmp.ne.s32.totalorder %s45, %s47
    %p51 = scmp.eq.s32.totalorder %s11, 0
    %p52 = por %p50, %p51
    %p53 = scmp.ne.s32.totalorder %s45, %s47
    %p54 = scmp.eq.s32.totalorder %s16, 1
    %p55 = por %p53, %p54
    %p56 = scmp.ne.s32.totalorder %s47, %s48
    %p57 = scmp.eq.s32.totalorder %s16, 0
    %p58 = por %p56, %p57
    %p59 = scmp.ne.s32.totalorder %s47, %s48
    %p60 = scmp.eq.s32.totalorder %s17, 1
    %p61 = por %p59, %p60
    %p63 = scmp.ne.s32.totalorder %s48, %s62
    %p64 = scmp.eq.s32.totalorder %s17, 0
    %p65 = por %p63, %p64
    %s67 = sadd.s32 %s66, 1
    %p70 = scmp.eq.s32.totalorder %s11, 1
    %p71 = scmp.ne.s32.totalorder %s66, %s68
    %p72 = scmp.eq.s32.totalorder %s11, 0
    %p73 = por %p71, %p72
    %p74 = scmp.ne.s32.totalorder %s66, %s68
    %p75 = scmp.eq.s32.totalorder %s16, 1
    %p76 = por %p74, %p75
    %p77 = scmp.ne.s32.totalorder %s68, %s69
    %p78 = scmp.eq.s32.totalorder %s16, 0
    %p79 = por %p77, %p78
    %p80 = scmp.ne.s32.totalorder %s68, %s69
    %p81 = scmp.eq.s32.totalorder %s17, 1
    %p82 = por %p80, %p81
    %p84 = scmp.ne.s32.totalorder %s69, %s83
    %p85 = scmp.eq.s32.totalorder %s17, 0
    %p86 = por %p84, %p85
    %s88 = sadd.s32 %s87, 1
    %p91 = scmp.eq.s32.totalorder %s11, 1
    %p92 = scmp.ne.s32.totalorder %s87, %s89
    %p93 = scmp.eq.s32.totalorder %s11, 0
    %p94 = por %p92, %p93
    %p95 = scmp.ne.s32.totalorder %s87, %s89
    %p96 = scmp.eq.s32.totalorder %s16, 1
    %p97 = por %p95, %p96
    %p98 = scmp.ne.s32.totalorder %s89, %s90
    %p99 = scmp.eq.s32.totalorder %s16, 0
    %p100 = por %p98, %p99
    %p101 = scmp.ne.s32.totalorder %s89, %s90
    %p102 = scmp.eq.s32.totalorder %s17, 1
    %p103 = por %p101, %p102
    %p105 = scmp.ne.s32.totalorder %s90, %s104
    %p106 = scmp.eq.s32.totalorder %s17, 0
    %p107 = por %p105, %p106
    %s109 = sadd.s32 %s108, 1
    %p112 = scmp.eq.s32.totalorder %s11, 1
    %p113 = scmp.ne.s32.totalorder %s108, %s110
    %p114 = scmp.eq.s32.totalorder %s11, 0
    %p115 = por %p113, %p114
    %p116 = scmp.ne.s32.totalorder %s108, %s110
    %p117 = scmp.eq.s32.totalorder %s16, 1
    %p118 = por %p116, %p117
    %p119 = scmp.ne.s32.totalorder %s110, %s111
    %p120 = scmp.eq.s32.totalorder %s16, 0
    %p121 = por %p119, %p120
    %p122 = scmp.ne.s32.totalorder %s110, %s111
    %p123 = scmp.eq.s32.totalorder %s17, 1
    %p124 = por %p122, %p123
    %p126 = scmp.ne.s32.totalorder %s111, %s125
    %p127 = scmp.eq.s32.totalorder %s17, 0
    %p128 = por %p126, %p127
    %s129 = ssub.s32 %s11, %s18
    %p130 = scmp.eq.s32.totalorder %s129, 0
    %s132 = sadd.s32 %s131, 1
    %s133 = scalar_select %p130, %s131, %s132
    %p136 = pneg %p130
    %p137 = scmp.eq.s32.totalorder %s11, 1
    %p138 = por %p136, %p137
    %p139 = scmp.ne.s32.totalorder %s131, %s134
    %p140 = scmp.eq.s32.totalorder %s11, 0
    %p141 = por %p139, %p140
    %p142 = scmp.ne.s32.totalorder %s131, %s134
    %p143 = scmp.eq.s32.totalorder %s16, 1
    %p144 = por %p142, %p143
    %p145 = scmp.ne.s32.totalorder %s134, %s135
    %p146 = scmp.eq.s32.totalorder %s16, 0
    %p147 = por %p145, %p146
    %p148 = scmp.ne.s32.totalorder %s134, %s135
    %p149 = scmp.eq.s32.totalorder %s17, 1
    %p150 = por %p148, %p149
    %p152 = scmp.ne.s32.totalorder %s135, %s151
    %p153 = scmp.eq.s32.totalorder %s17, 0
    %p154 = por %p152, %p153
    %p155 = scmp.le.s32.totalorder 1, %s11
    %p156 = scmp.lt.s32.totalorder %s11, 3
    %p157 = pnand %p155, %p156
    %p158 = pneg %p157
    // Predicated region
    $region9: #{forward.13} parent=5 // pred_check
      _
    $region10: #{forward.13} parent=5 // pred_check_branch
      %160 = sbr.rel (%p157) target = $region12
    $region11: #{forward.13} parent=5 // pred_region
      %s161 = ssub.s32 %s11, 1
      // Predicated region
      $region13: #{forward.13} parent=11 // pred_check
        %p162 = pneg %p58
      $region14: #{forward.13} parent=11 // pred_check_branch
        %164 = sbr.rel (%p162) target = $region16
      $region15: #{forward.13} parent=11 // pred_region
        _
      $region16: #{forward.13} parent=11 // pred_fallthru
        _
      // Predicated region
      $region17: #{forward.13} parent=11 // pred_check
        %p165 = pneg %p79
      $region18: #{forward.13} parent=11 // pred_check_branch
        %167 = sbr.rel (%p165) target = $region20
      $region19: #{forward.13} parent=11 // pred_region
        _
      $region20: #{forward.13} parent=11 // pred_fallthru
        _
      // Predicated region
      $region21: #{forward.13} parent=11 // pred_check
        %p168 = pneg %p100
      $region22: #{forward.13} parent=11 // pred_check_branch
        %170 = sbr.rel (%p168) target = $region24
      $region23: #{forward.13} parent=11 // pred_region
        _
      $region24: #{forward.13} parent=11 // pred_fallthru
        _
      // Predicated region
      $region25: #{forward.13} parent=11 // pred_check
        %p171 = pneg %p121
      $region26: #{forward.13} parent=11 // pred_check_branch
        %173 = sbr.rel (%p171) target = $region28
      $region27: #{forward.13} parent=11 // pred_region
        _
      $region28: #{forward.13} parent=11 // pred_fallthru
        _
    $region12: #{forward.13} parent=5 // pred_fallthru
      _
    %p174 = scmp.lt.s32.totalorder %s11, 2
    // Predicated region
    $region29: #{forward.13} parent=5 // pred_check
      %p175 = pneg %p174
    $region30: #{forward.13} parent=5 // pred_check_branch
      %177 = sbr.rel (%p175) target = $region32
    $region31: #{forward.13} parent=5 // pred_region
      // Predicated region
      $region33: #{forward.13} parent=31 // pred_check
        %p178 = pneg %p31
      $region34: #{forward.13} parent=31 // pred_check_branch
        %180 = sbr.rel (%p178) target = $region36
      $region35: #{forward.13} parent=31 // pred_region
        %s181 = smul.u32 2, %s11
        %p182 = scmp.lt.s32.totalorder %s181, 3
        %s183 = scalar_select %p182, %s181, 3
        %s184 = smul.addr %s183, 8
        %s185 = scalar_lea.vmem %s0, %s184
        %s186 = smul.u32 2, %s11
      $region36: #{forward.13} parent=31 // pred_fallthru
        _
    $region32: #{forward.13} parent=5 // pred_fallthru
      _
    %p187 = scmp.le.s32.totalorder 1, %s11
    %p188 = scmp.lt.s32.totalorder %s11, 3
    %p189 = pnand %p187, %p188
    %p190 = pneg %p189
    // Predicated region
    $region37: #{forward.13} parent=5 // pred_check
      _
    $region38: #{forward.13} parent=5 // pred_check_branch
      %192 = sbr.rel (%p189) target = $region40
    $region39: #{forward.13} parent=5 // pred_region
      %s193 = ssub.s32 %s11, 1
      %s194 = smul.u32 2, %s16
      %p195 = scmp.lt.s32.totalorder %s194, 3
      %s196 = scalar_select %p195, %s194, 3
      %s197 = smul.addr %s196, 8
      %s198 = scalar_lea.vmem %s0, %s197
      %p199 = pneg %p37
      %p200 = pneg %p34
      %p201 = pneg %p58
      %p202 = pneg %p55
      %p203 = pneg %p79
      %p204 = pneg %p76
      %p205 = pneg %p100
      %p206 = pneg %p97
      %p207 = pneg %p121
      %p208 = pneg %p118
      %p209 = pneg %p147
      %p210 = pneg %p144
      %s211 = smul.u32 2, %s16
      %p212 = scmp.lt.s32.totalorder %s211, 3
      %s213 = scalar_select %p212, %s211, 3
      %s214 = smul.addr %s213, 8
      %s215 = scalar_lea.vmem %s5, %s214
      %s216 = smul.u32 2, %s16
      %p217 = scmp.lt.s32.totalorder %s216, 3
      %s218 = scalar_select %p217, %s216, 3
      %s219 = smul.addr %s218, 8
      %s220 = scalar_lea.vmem %s0, %s219
      %s221 = smul.u32 2, %s16
      %s222 = smul.u32 2, %s16
      %p223 = scmp.lt.s32.totalorder %s222, 3
      %s224 = scalar_select %p223, %s222, 3
      %s225 = smul.addr %s224, 8
      %s226 = scalar_lea.vmem %s5, %s225
      %s227 = smul.u32 2, %s16
      %v229 = vld [vmem:[%s220] sm:$0xff]
      %v230 = vld [vmem:[%s220 + $0x8] sm:$0xff]
      %v231 = vld [vmem:[%s1] sm:$0x1]
      %v232 = vld [vmem:[%s2] sm:$0x1]
      %vm233 = vcmask 261120
      %v234 = vsel %vm233, %v229, 0.0
      %235 = vadd.xlane.f32.xlu0 %v234
      %v236 = vpop.xlane.xlu0 %235
      %v237 = vsel %vm233, %v230, 0.0
      %238 = vadd.xlane.f32.xlu0 %v237
      %v239 = vpop.xlane.xlu0 %238
      %v240 = vrcp.pop 32.0
      %v241 = vmul.f32 %v236, %v240
      %v242 = vmul.f32 %v239, %v240
      %v243 = vsub.f32 %v229, %v241
      %v244 = vsub.f32 %v230, %v242
      %v245 = vmul.f32 %v243, %v243
      %v246 = vmul.f32 %v244, %v244
      %v247 = vsel %vm233, %v245, 0.0
      %248 = vadd.xlane.f32.xlu0 %v247
      %v249 = vpop.xlane.xlu0 %248
      %v250 = vsel %vm233, %v246, 0.0
      %251 = vadd.xlane.f32.xlu0 %v250
      %v252 = vpop.xlane.xlu0 %251
      %v253 = vmul.f32 %v249, %v240
      %v254 = vmul.f32 %v252, %v240
      %v255 = vadd.f32 %v253, 1e-05
      %v256 = vadd.f32 %v254, 1e-05
      %v257 = vrsqrt.pop %v255
      %v258 = vrsqrt.pop %v256
      %v259 = vmul.f32 %v243, %v257
      %v260 = vmul.f32 %v244, %v258
      %v262 = vlaneseq
      %v263 = vshrl.u32 %v262, 7
      %v264 = vsub.s32 0, %v263
      %v265 = vrot.slane %v231, %v264
      %v267 = vmul.f32 %v259, %v265
      %v268 = vmul.f32 %v260, %v265
      %v270 = vlaneseq
      %v271 = vshrl.u32 %v270, 7
      %v272 = vsub.s32 0, %v271
      %v273 = vrot.slane %v232, %v272
      %v275 = vadd.f32 %v267, %v273
      %v276 = vadd.f32 %v268, %v273
      %v277 = vpack.c.bf16 %v276, %v275
      %v278 = vld [vmem:[%s3] sm:$0xf]
      %v279 = vld [vmem:[%s3 + $0x4] sm:$0xf]
      %v280 = vld [vmem:[%s3 + $0x8] sm:$0xf]
      %v281 = vld [vmem:[%s3 + $0xc] sm:$0xf]
      %v282 = vld [vmem:[%s4] sm:$0x1]
      %v284 = vlaneseq
      %v285 = vshrl.u32 %v284, 7
      %v286 = vsub.s32 0, %v285
      %v287 = vrot.slane %v282, %v286
      %v293 = vunpack.c.l.b16 %v278
      %v294 = vunpack.c.l.b16 %v279
      %v295 = vunpack.c.l.b16 %v280
      %v296 = vunpack.c.l.b16 %v281
      %v297 = vpack.c.b16 %v294, %v293
      %v298 = vpack.c.b16 %v296, %v295
      %v302 = vsel %vm233, %v277, 0
      %304 = vmatprep.subr.bf16.mxu0 0
      %305 = vmatpush1.bf16.msra.mxu0 0
      %306 = vmatprep.subr.bf16.mxu0 0
      %307 = vmatpush1.bf16.msra.mxu0 0
      %308 = vmatprep.subr.bf16.mxu0 0
      %309 = vmatpush1.bf16.msra.mxu0 0
      %310 = vmatprep.subr.bf16.mxu0 0
      %311 = vmatpush1.bf16.msra.mxu0 0
      %312 = vmatprep.subr.bf16.mxu0 0
      %313 = vmatpush1.bf16.msra.mxu0 0
      %314 = vmatprep.subr.bf16.mxu0 0
      %315 = vmatpush1.bf16.msra.mxu0 0
      %316 = vmatprep.subr.bf16.mxu0 0
      %317 = vmatpush1.bf16.msra.mxu0 %v298
      %318 = vmatprep.subr.bf16.mxu0 0
      %319 = vmatpush1.bf16.msra.mxu0 %v297
      %320 = vmatprep.subr.bf16.mxu0 0
      %321 = vmatpush2.bf16.msra.mxu0 0
      %322 = vmatprep.subr.bf16.mxu0 0
      %323 = vmatpush2.bf16.msra.mxu0 0
      %324 = vmatprep.subr.bf16.mxu0 0
      %325 = vmatpush2.bf16.msra.mxu0 0
      %326 = vmatprep.subr.bf16.mxu0 0
      %327 = vmatpush2.bf16.msra.mxu0 0
      %328 = vmatprep.subr.bf16.mxu0 0
      %329 = vmatpush2.bf16.msra.mxu0 0
      %330 = vmatprep.subr.bf16.mxu0 0
      %331 = vmatpush2.bf16.msra.mxu0 0
      %332 = vmatprep.subr.bf16.mxu0 0
      %333 = vmatpush2.bf16.msra.mxu0 0
      %334 = vmatprep.subr.bf16.mxu0 0
      %335 = vmatpush2.bf16.msra.mxu0 0
      %336 = vmatprep.mubr.bf16.mxu0 0
      %337 = vmatmul.mubr.bf16.gmra.mxu0 %v302
      %v338 = vpop.f32.mrf.mxu0
      %v339 = vadd.f32 %v287, %v338
      %v340 = vpop.f32.mrf.mxu0
      %v341 = vpop.f32.mrf.mxu0
      %v342 = vadd.f32 %v287, %v341
      %v343 = vpop.f32.mrf.mxu0
      %344 = vdwg.mxu0
      %vm345 = vcmask 523264
      %346 = vst.msk [vmem:[%s226] sm:$0xff] %vm345, %v339
      %347 = vst.msk [vmem:[%s226 + $0x8] sm:$0xff] %vm345, %v342
      %s348 = smul.u32 2, %s16
      %p349 = scmp.lt.s32.totalorder %s348, 3
      %s350 = scalar_select %p349, %s348, 3
      %s351 = smul.addr %s350, 8
      %s352 = scalar_lea.vmem %s5, %s351
      // Predicated region
      $region41: #{forward.13} parent=39 // pred_check
        %p353 = pneg %p144
      $region42: #{forward.13} parent=39 // pred_check_branch
        %355 = sbr.rel (%p353) target = $region44
      $region43: #{forward.13} parent=39 // pred_region
        %s356 = smul.u32 2, %s16
      $region44: #{forward.13} parent=39 // pred_fallthru
        _
    $region40: #{forward.13} parent=5 // pred_fallthru
      _
    %p357 = scmp.le.s32.totalorder 2, %s11
    // Predicated region
    $region45: #{forward.13} parent=5 // pred_check
      %p358 = pneg %p357
    $region46: #{forward.13} parent=5 // pred_check_branch
      %360 = sbr.rel (%p358) target = $region48
    $region47: #{forward.13} parent=5 // pred_region
      %s361 = ssub.s32 %s11, 2
      // Predicated region
      $region49: #{forward.13} parent=47 // pred_check
        %p362 = pneg %p150
      $region50: #{forward.13} parent=47 // pred_check_branch
        %364 = sbr.rel (%p362) target = $region52
      $region51: #{forward.13} parent=47 // pred_region
        %s365 = smul.u32 2, %s17
        %p366 = scmp.lt.s32.totalorder %s365, 3
        %s367 = scalar_select %p366, %s365, 3
        %s368 = smul.addr %s367, 8
        %s369 = scalar_lea.vmem %s5, %s368
      $region52: #{forward.13} parent=47 // pred_fallthru
        _
    $region48: #{forward.13} parent=5 // pred_fallthru
      _
  $region6: #{forward.13} parent=0 // loop_footer
    %s15 = sadd.s32 1, %s11
  $region7: #{forward.13} parent=0 // loop_footer_branch
    %10 = sbr.rel target = $region3
  $region8: #{forward.13} parent=0 // loop_exit
    _

// kernel: forward.16
$region0: #{forward.16}
  #allocation0 [shape = 'u32[]', space=smem, size = 0x4, offset = 0x4, fixed_abs, tag = 'smem constant byte address 0x4 - core index']
  #allocation1 [shape = 'u32[144,128]{1,0:T(1,128)}', space=vmem, size = 0x12000, scoped, tag = 'internal scratch']
  #allocation2 [shape = 'f32[16,64]{1,0:T(8,128)}', space=vmem, size = 0x2000, scoped, tag = 'scratch operand']
  %s0 = inlined_call_operand.vmem [shape: f32[30,64], index: 0, kind: input, shape index: {}]
  %s1 = inlined_call_operand.vmem [shape: bf16[64,128], index: 1, kind: input, shape index: {}]
  %s2 = inlined_call_operand.vmem [shape: f32[1,128], index: 2, kind: input, shape index: {}]
  %s3 = inlined_call_operand.vmem [shape: bf16[128,64], index: 3, kind: input, shape index: {}]
  %s4 = inlined_call_operand.vmem [shape: f32[1,64], index: 4, kind: input, shape index: {}]
  %s5 = inlined_call_operand.vmem [shape: f32[1,64], index: 5, kind: input, shape index: {}]
  %s6 = inlined_call_operand.vmem [shape: f32[1,64], index: 6, kind: input, shape index: {}]
  %s7 = inlined_call_operand.vmem [shape: f32[30,64], index: 7, kind: output, shape index: {}]
  %s8 = sld [smem:[#allocation0]]
  $region69: #{forward.16} parent=0
    _
  %s10 = ssub.s32 1, %s8
  %s11 = scalar_select 0, %s10, %s8
  loop: start=0, step=1, limit=4
  $region2: #{forward.16} parent=0 // loop_pre_header
    _
  $region3: #{forward.16} parent=0 // loop_header
    %s13 = sphi 0, %s17
    %p14 = scmp.ge.s32.totalorder %s13, 4
    %s20 = sphi 0, %s32
    %s21 = sphi 0, %s28
    %s22 = sphi 0, %s20
    %s23 = sphi 0, %s21
    %s24 = sphi 0, %s22
    %s25 = sphi 0, %s23
    %s35 = sphi 0, %s37
    %s38 = sphi 0, %s35
    %s39 = sphi 0, %s38
    %s55 = sphi 0, %s39
    %s61 = sphi 0, %s63
    %s64 = sphi 0, %s61
    %s65 = sphi 0, %s64
    %s81 = sphi 0, %s65
    %s87 = sphi 0, %s89
    %s90 = sphi 0, %s87
    %s91 = sphi 0, %s90
    %s107 = sphi 0, %s91
    %s113 = sphi 0, %s115
    %s116 = sphi 0, %s113
    %s117 = sphi 0, %s116
    %s133 = sphi 0, %s117
    %s137 = sphi 0, %s137
    %s139 = sphi 0, %s137
    %s140 = sphi 0, %s139
    %s154 = sphi 0, %s140
    %s158 = sphi 0, %s158
    %s160 = sphi 0, %s158
    %s161 = sphi 0, %s160
    %s175 = sphi 0, %s161
    %s179 = sphi 0, %s179
    %s181 = sphi 0, %s179
    %s182 = sphi 0, %s181
    %s196 = sphi 0, %s182
    %s202 = sphi 0, %s204
    %s205 = sphi 0, %s202
    %s206 = sphi 0, %s205
    %s222 = sphi 0, %s206
  $region4: #{forward.16} parent=0 // loop_header_branch
    %16 = sbr.rel (%p14) target = $region8
  $region5: #{forward.16} parent=0 // loop_body
    %s18 = ssub.s32 %s13, 1
    %s19 = ssub.s32 %s13, 2
    %s26 = sadd.s32 1, %s21
    %p27 = scmp.ge.s32.totalorder %s26, 1
    %s28 = scalar_select %p27, 0, %s26
    %s29 = sadd.s32 1, %s20
    %s30 = scalar_select %p27, %s29, %s20
    %p31 = scmp.ge.s32.totalorder %s30, 2
    %s32 = scalar_select %p31, 0, %s30
    %s33 = ssub.s32 %s20, %s32
    %p34 = scmp.eq.s32.totalorder %s33, 0
    %s36 = sadd.s32 %s35, 1
    %s37 = scalar_select %p34, %s35, %s36
    %p40 = pneg %p34
    %p41 = scmp.eq.s32.totalorder %s13, 1
    %p42 = por %p40, %p41
    %p43 = scmp.ne.s32.totalorder %s35, %s38
    %p44 = scmp.eq.s32.totalorder %s13, 0
    %p45 = por %p43, %p44
    %p46 = scmp.ne.s32.totalorder %s35, %s38
    %p47 = scmp.eq.s32.totalorder %s18, 1
    %p48 = por %p46, %p47
    %p49 = scmp.ne.s32.totalorder %s38, %s39
    %p50 = scmp.eq.s32.totalorder %s18, 0
    %p51 = por %p49, %p50
    %p52 = scmp.ne.s32.totalorder %s38, %s39
    %p53 = scmp.eq.s32.totalorder %s19, 1
    %p54 = por %p52, %p53
    %p56 = scmp.ne.s32.totalorder %s39, %s55
    %p57 = scmp.eq.s32.totalorder %s19, 0
    %p58 = por %p56, %p57
    %s59 = ssub.s32 %s21, %s28
    %p60 = scmp.eq.s32.totalorder %s59, 0
    %s62 = sadd.s32 %s61, 1
    %s63 = scalar_select %p60, %s61, %s62
    %p66 = pneg %p60
    %p67 = scmp.eq.s32.totalorder %s13, 1
    %p68 = por %p66, %p67
    %p69 = scmp.ne.s32.totalorder %s61, %s64
    %p70 = scmp.eq.s32.totalorder %s13, 0
    %p71 = por %p69, %p70
    %p72 = scmp.ne.s32.totalorder %s61, %s64
    %p73 = scmp.eq.s32.totalorder %s18, 1
    %p74 = por %p72, %p73
    %p75 = scmp.ne.s32.totalorder %s64, %s65
    %p76 = scmp.eq.s32.totalorder %s18, 0
    %p77 = por %p75, %p76
    %p78 = scmp.ne.s32.totalorder %s64, %s65
    %p79 = scmp.eq.s32.totalorder %s19, 1
    %p80 = por %p78, %p79
    %p82 = scmp.ne.s32.totalorder %s65, %s81
    %p83 = scmp.eq.s32.totalorder %s19, 0
    %p84 = por %p82, %p83
    %s85 = ssub.s32 %s21, %s28
    %p86 = scmp.eq.s32.totalorder %s85, 0
    %s88 = sadd.s32 %s87, 1
    %s89 = scalar_select %p86, %s87, %s88
    %p92 = pneg %p86
    %p93 = scmp.eq.s32.totalorder %s13, 1
    %p94 = por %p92, %p93
    %p95 = scmp.ne.s32.totalorder %s87, %s90
    %p96 = scmp.eq.s32.totalorder %s13, 0
    %p97 = por %p95, %p96
    %p98 = scmp.ne.s32.totalorder %s87, %s90
    %p99 = scmp.eq.s32.totalorder %s18, 1
    %p100 = por %p98, %p99
    %p101 = scmp.ne.s32.totalorder %s90, %s91
    %p102 = scmp.eq.s32.totalorder %s18, 0
    %p103 = por %p101, %p102
    %p104 = scmp.ne.s32.totalorder %s90, %s91
    %p105 = scmp.eq.s32.totalorder %s19, 1
    %p106 = por %p104, %p105
    %p108 = scmp.ne.s32.totalorder %s91, %s107
    %p109 = scmp.eq.s32.totalorder %s19, 0
    %p110 = por %p108, %p109
    %s111 = ssub.s32 %s21, %s28
    %p112 = scmp.eq.s32.totalorder %s111, 0
    %s114 = sadd.s32 %s113, 1
    %s115 = scalar_select %p112, %s113, %s114
    %p118 = pneg %p112
    %p119 = scmp.eq.s32.totalorder %s13, 1
    %p120 = por %p118, %p119
    %p121 = scmp.ne.s32.totalorder %s113, %s116
    %p122 = scmp.eq.s32.totalorder %s13, 0
    %p123 = por %p121, %p122
    %p124 = scmp.ne.s32.totalorder %s113, %s116
    %p125 = scmp.eq.s32.totalorder %s18, 1
    %p126 = por %p124, %p125
    %p127 = scmp.ne.s32.totalorder %s116, %s117
    %p128 = scmp.eq.s32.totalorder %s18, 0
    %p129 = por %p127, %p128
    %p130 = scmp.ne.s32.totalorder %s116, %s117
    %p131 = scmp.eq.s32.totalorder %s19, 1
    %p132 = por %p130, %p131
    %p134 = scmp.ne.s32.totalorder %s117, %s133
    %p135 = scmp.eq.s32.totalorder %s19, 0
    %p136 = por %p134, %p135
    %s138 = sadd.s32 %s137, 1
    %p141 = scmp.eq.s32.totalorder %s13, 1
    %p142 = scmp.ne.s32.totalorder %s137, %s139
    %p143 = scmp.eq.s32.totalorder %s13, 0
    %p144 = por %p142, %p143
    %p145 = scmp.ne.s32.totalorder %s137, %s139
    %p146 = scmp.eq.s32.totalorder %s18, 1
    %p147 = por %p145, %p146
    %p148 = scmp.ne.s32.totalorder %s139, %s140
    %p149 = scmp.eq.s32.totalorder %s18, 0
    %p150 = por %p148, %p149
    %p151 = scmp.ne.s32.totalorder %s139, %s140
    %p152 = scmp.eq.s32.totalorder %s19, 1
    %p153 = por %p151, %p152
    %p155 = scmp.ne.s32.totalorder %s140, %s154
    %p156 = scmp.eq.s32.totalorder %s19, 0
    %p157 = por %p155, %p156
    %s159 = sadd.s32 %s158, 1
    %p162 = scmp.eq.s32.totalorder %s13, 1
    %p163 = scmp.ne.s32.totalorder %s158, %s160
    %p164 = scmp.eq.s32.totalorder %s13, 0
    %p165 = por %p163, %p164
    %p166 = scmp.ne.s32.totalorder %s158, %s160
    %p167 = scmp.eq.s32.totalorder %s18, 1
    %p168 = por %p166, %p167
    %p169 = scmp.ne.s32.totalorder %s160, %s161
    %p170 = scmp.eq.s32.totalorder %s18, 0
    %p171 = por %p169, %p170
    %p172 = scmp.ne.s32.totalorder %s160, %s161
    %p173 = scmp.eq.s32.totalorder %s19, 1
    %p174 = por %p172, %p173
    %p176 = scmp.ne.s32.totalorder %s161, %s175
    %p177 = scmp.eq.s32.totalorder %s19, 0
    %p178 = por %p176, %p177
    %s180 = sadd.s32 %s179, 1
    %p183 = scmp.eq.s32.totalorder %s13, 1
    %p184 = scmp.ne.s32.totalorder %s179, %s181
    %p185 = scmp.eq.s32.totalorder %s13, 0
    %p186 = por %p184, %p185
    %p187 = scmp.ne.s32.totalorder %s179, %s181
    %p188 = scmp.eq.s32.totalorder %s18, 1
    %p189 = por %p187, %p188
    %p190 = scmp.ne.s32.totalorder %s181, %s182
    %p191 = scmp.eq.s32.totalorder %s18, 0
    %p192 = por %p190, %p191
    %p193 = scmp.ne.s32.totalorder %s181, %s182
    %p194 = scmp.eq.s32.totalorder %s19, 1
    %p195 = por %p193, %p194
    %p197 = scmp.ne.s32.totalorder %s182, %s196
    %p198 = scmp.eq.s32.totalorder %s19, 0
    %p199 = por %p197, %p198
    %s200 = ssub.s32 %s20, %s32
    %p201 = scmp.eq.s32.totalorder %s200, 0
    %s203 = sadd.s32 %s202, 1
    %s204 = scalar_select %p201, %s202, %s203
    %p207 = pneg %p201
    %p208 = scmp.eq.s32.totalorder %s13, 1
    %p209 = por %p207, %p208
    %p210 = scmp.ne.s32.totalorder %s202, %s205
    %p211 = scmp.eq.s32.totalorder %s13, 0
    %p212 = por %p210, %p211
    %p213 = scmp.ne.s32.totalorder %s202, %s205
    %p214 = scmp.eq.s32.totalorder %s18, 1
    %p215 = por %p213, %p214
    %p216 = scmp.ne.s32.totalorder %s205, %s206
    %p217 = scmp.eq.s32.totalorder %s18, 0
    %p218 = por %p216, %p217
    %p219 = scmp.ne.s32.totalorder %s205, %s206
    %p220 = scmp.eq.s32.totalorder %s19, 1
    %p221 = por %p219, %p220
    %p223 = scmp.ne.s32.totalorder %s206, %s222
    %p224 = scmp.eq.s32.totalorder %s19, 0
    %p225 = por %p223, %p224
    %p226 = scmp.le.s32.totalorder 1, %s13
    %p227 = scmp.lt.s32.totalorder %s13, 3
    %p228 = pnand %p226, %p227
    %p229 = pneg %p228
    // Predicated region
    $region9: #{forward.16} parent=5 // pred_check
      _
    $region10: #{forward.16} parent=5 // pred_check_branch
      %231 = sbr.rel (%p228) target = $region12
    $region11: #{forward.16} parent=5 // pred_region
      %s232 = ssub.s32 %s13, 1
      // Predicated region
      $region13: #{forward.16} parent=11 // pred_check
        %p233 = pneg %p77
      $region14: #{forward.16} parent=11 // pred_check_branch
        %235 = sbr.rel (%p233) target = $region16
      $region15: #{forward.16} parent=11 // pred_region
        %p236 = scmp.lt.s32.totalorder %s23, 0
        %s237 = scalar_select %p236, %s23, 0
        %s238 = smul.addr %s237, 4
        %s239 = scalar_lea.vmem %s1, %s238
      $region16: #{forward.16} parent=11 // pred_fallthru
        _
      // Predicated region
      $region17: #{forward.16} parent=11 // pred_check
        %p240 = pneg %p103
      $region18: #{forward.16} parent=11 // pred_check_branch
        %242 = sbr.rel (%p240) target = $region20
      $region19: #{forward.16} parent=11 // pred_region
        %p243 = scmp.lt.s32.totalorder %s23, 0
        %s244 = scalar_select %p243, %s23, 0
        %s245 = scalar_lea.vmem %s2, %s244
      $region20: #{forward.16} parent=11 // pred_fallthru
        _
      // Predicated region
      $region21: #{forward.16} parent=11 // pred_check
        %p246 = pneg %p129
      $region22: #{forward.16} parent=11 // pred_check_branch
        %248 = sbr.rel (%p246) target = $region24
      $region23: #{forward.16} parent=11 // pred_region
        %s249 = smul.u32 16, %s23
        %p250 = scmp.lt.s32.totalorder %s249, 15
        %s251 = scalar_select %p250, %s249, 15
        %s252 = smul.addr %s251, 4
        %s253 = scalar_lea.vmem %s3, %s252
        %s254 = smul.u32 16, %s23
      $region24: #{forward.16} parent=11 // pred_fallthru
        _
      // Predicated region
      $region25: #{forward.16} parent=11 // pred_check
        %p255 = pneg %p150
      $region26: #{forward.16} parent=11 // pred_check_branch
        %257 = sbr.rel (%p255) target = $region28
      $region27: #{forward.16} parent=11 // pred_region
        _
      $region28: #{forward.16} parent=11 // pred_fallthru
        _
      // Predicated region
      $region29: #{forward.16} parent=11 // pred_check
        %p258 = pneg %p171
      $region30: #{forward.16} parent=11 // pred_check_branch
        %260 = sbr.rel (%p258) target = $region32
      $region31: #{forward.16} parent=11 // pred_region
        _
      $region32: #{forward.16} parent=11 // pred_fallthru
        _
      // Predicated region
      $region33: #{forward.16} parent=11 // pred_check
        %p261 = pneg %p192
      $region34: #{forward.16} parent=11 // pred_check_branch
        %263 = sbr.rel (%p261) target = $region36
      $region35: #{forward.16} parent=11 // pred_region
        _
      $region36: #{forward.16} parent=11 // pred_fallthru
        _
    $region12: #{forward.16} parent=5 // pred_fallthru
      _
    %p264 = scmp.lt.s32.totalorder %s13, 2
    // Predicated region
    $region37: #{forward.16} parent=5 // pred_check
      %p265 = pneg %p264
    $region38: #{forward.16} parent=5 // pred_check_branch
      %267 = sbr.rel (%p265) target = $region40
    $region39: #{forward.16} parent=5 // pred_region
      // Predicated region
      $region41: #{forward.16} parent=39 // pred_check
        %p268 = pneg %p45
      $region42: #{forward.16} parent=39 // pred_check_branch
        %270 = sbr.rel (%p268) target = $region44
      $region43: #{forward.16} parent=39 // pred_region
        %s271 = smul.u32 2, %s20
        %p272 = scmp.lt.s32.totalorder %s271, 3
        %s273 = scalar_select %p272, %s271, 3
        %s274 = smul.addr %s273, 8
        %s275 = scalar_lea.vmem %s0, %s274
        %s276 = smul.u32 2, %s20
      $region44: #{forward.16} parent=39 // pred_fallthru
        _
    $region40: #{forward.16} parent=5 // pred_fallthru
      _
    %p277 = scmp.le.s32.totalorder 1, %s13
    %p278 = scmp.lt.s32.totalorder %s13, 3
    %p279 = pnand %p277, %p278
    %p280 = pneg %p279
    // Predicated region
    $region45: #{forward.16} parent=5 // pred_check
      _
    $region46: #{forward.16} parent=5 // pred_check_branch
      %282 = sbr.rel (%p279) target = $region48
    $region47: #{forward.16} parent=5 // pred_region
      %s283 = ssub.s32 %s13, 1
      %s284 = smul.u32 2, %s22
      %p285 = scmp.lt.s32.totalorder %s284, 3
      %s286 = scalar_select %p285, %s284, 3
      %s287 = smul.addr %s286, 8
      %s288 = scalar_lea.vmem %s0, %s287
      %p289 = pneg %p51
      %p290 = pneg %p48
      %p291 = scmp.lt.s32.totalorder %s23, 0
      %s292 = scalar_select %p291, %s23, 0
      %s293 = smul.addr %s292, 4
      %s294 = scalar_lea.vmem %s1, %s293
      %p295 = pneg %p77
      %p296 = pneg %p74
      %p297 = scmp.lt.s32.totalorder %s23, 0
      %s298 = scalar_select %p297, %s23, 0
      %s299 = scalar_lea.vmem %s2, %s298
      %p300 = pneg %p103
      %p301 = pneg %p100
      %s302 = smul.u32 16, %s23
      %p303 = scmp.lt.s32.totalorder %s302, 15
      %s304 = scalar_select %p303, %s302, 15
      %s305 = smul.addr %s304, 4
      %s306 = scalar_lea.vmem %s3, %s305
      %p307 = pneg %p129
      %p308 = pneg %p126
      %p309 = pneg %p150
      %p310 = pneg %p147
      %p311 = pneg %p171
      %p312 = pneg %p168
      %p313 = pneg %p192
      %p314 = pneg %p189
      %p315 = pneg %p218
      %p316 = pneg %p215
      %s317 = smul.u32 2, %s22
      %p318 = scmp.lt.s32.totalorder %s317, 3
      %s319 = scalar_select %p318, %s317, 3
      %s320 = smul.addr %s319, 8
      %s321 = scalar_lea.vmem %s7, %s320
      %s322 = smul.u32 2, %s22
      %p323 = scmp.lt.s32.totalorder %s322, 3
      %s324 = scalar_select %p323, %s322, 3
      %s325 = smul.addr %s324, 8
      %s326 = scalar_lea.vmem %s0, %s325
      %s327 = smul.u32 2, %s22
      %p328 = scmp.lt.s32.totalorder %s23, 0
      %s329 = scalar_select %p328, %s23, 0
      %s330 = smul.addr %s329, 4
      %s331 = scalar_lea.vmem %s1, %s330
      %p332 = scmp.lt.s32.totalorder %s23, 0
      %s333 = scalar_select %p332, %s23, 0
      %s334 = scalar_lea.vmem %s2, %s333
      %s335 = smul.u32 16, %s23
      %p336 = scmp.lt.s32.totalorder %s335, 15
      %s337 = scalar_select %p336, %s335, 15
      %s338 = smul.addr %s337, 4
      %s339 = scalar_lea.vmem %s3, %s338
      %s340 = smul.u32 16, %s23
      %s341 = smul.u32 2, %s22
      %p342 = scmp.lt.s32.totalorder %s341, 3
      %s343 = scalar_select %p342, %s341, 3
      %s344 = smul.addr %s343, 8
      %s345 = scalar_lea.vmem %s7, %s344
      %s346 = smul.u32 2, %s22
      %p348 = scmp.eq.s32.totalorder %s23, 0
      // Predicated region
      $region49: #{forward.16} parent=47 // pred_check
        %p349 = pneg %p348
      $region50: #{forward.16} parent=47 // pred_check_branch
        %351 = sbr.rel (%p349) target = $region52
      $region51: #{forward.16} parent=47 // pred_region
        %vm352 = vcmask 523264
        %353 = vst.msk [vmem:[#allocation2] sm:$0xff] %vm352, 0.0
        %354 = vst.msk [vmem:[#allocation2 + $0x8] sm:$0xff] %vm352, 0.0
      $region52: #{forward.16} parent=47 // pred_fallthru
        _
      %v355 = vld [vmem:[%s326] sm:$0xff]
      %v356 = vld [vmem:[%s326 + $0x8] sm:$0xff]
      %v357 = vpack.c.bf16 %v356, %v355
      %v358 = vld [vmem:[%s331] sm:$0xf]
      %v359 = vld [vmem:[%s331 + $0x4] sm:$0xf]
      %v360 = vld [vmem:[%s331 + $0x8] sm:$0xf]
      %v361 = vld [vmem:[%s331 + $0xc] sm:$0xf]
      %v362 = vld [vmem:[%s331 + $0x10] sm:$0xf]
      %v363 = vld [vmem:[%s331 + $0x14] sm:$0xf]
      %v364 = vld [vmem:[%s331 + $0x18] sm:$0xf]
      %v365 = vld [vmem:[%s331 + $0x1c] sm:$0xf]
      %v366 = vld [vmem:[%s334] sm:$0x1]
      %v368 = vlaneseq
      %v369 = vshrl.u32 %v368, 7
      %v370 = vsub.s32 0, %v369
      %v371 = vrot.slane %v366, %v370
      %v381 = vunpack.c.l.b16 %v358
      %v382 = vunpack.c.l.b16 %v359
      %v383 = vunpack.c.l.b16 %v360
      %v384 = vunpack.c.l.b16 %v361
      %v385 = vunpack.c.l.b16 %v362
      %v386 = vunpack.c.l.b16 %v363
      %v387 = vunpack.c.l.b16 %v364
      %v388 = vunpack.c.l.b16 %v365
      %v389 = vpack.c.b16 %v382, %v381
      %v390 = vpack.c.b16 %v384, %v383
      %v391 = vpack.c.b16 %v386, %v385
      %v392 = vpack.c.b16 %v388, %v387
      %vm397 = vcmask 523264
      %v399 = vsel %vm397, %v357, 0
      %401 = vmatprep.subr.bf16.mxu0 0
      %402 = vmatpush1.bf16.msra.mxu0 0
      %403 = vmatprep.subr.bf16.mxu0 0
      %404 = vmatpush1.bf16.msra.mxu0 0
      %405 = vmatprep.subr.bf16.mxu0 0
      %406 = vmatpush1.bf16.msra.mxu0 0
      %407 = vmatprep.subr.bf16.mxu0 0
      %408 = vmatpush1.bf16.msra.mxu0 0
      %409 = vmatprep.subr.bf16.mxu0 0
      %410 = vmatpush1.bf16.msra.mxu0 %v392
      %411 = vmatprep.subr.bf16.mxu0 0
      %412 = vmatpush1.bf16.msra.mxu0 %v391
      %413 = vmatprep.subr.bf16.mxu0 0
      %414 = vmatpush1.bf16.msra.mxu0 %v390
      %415 = vmatprep.subr.bf16.mxu0 0
      %416 = vmatpush1.bf16.msra.mxu0 %v389
      %417 = vmatprep.subr.bf16.mxu0 0
      %418 = vmatpush2.bf16.msra.mxu0 0
      %419 = vmatprep.subr.bf16.mxu0 0
      %420 = vmatpush2.bf16.msra.mxu0 0
      %421 = vmatprep.subr.bf16.mxu0 0
      %422 = vmatpush2.bf16.msra.mxu0 0
      %423 = vmatprep.subr.bf16.mxu0 0
      %424 = vmatpush2.bf16.msra.mxu0 0
      %425 = vmatprep.subr.bf16.mxu0 0
      %426 = vmatpush2.bf16.msra.mxu0 0
      %427 = vmatprep.subr.bf16.mxu0 0
      %428 = vmatpush2.bf16.msra.mxu0 0
      %429 = vmatprep.subr.bf16.mxu0 0
      %430 = vmatpush2.bf16.msra.mxu0 0
      %431 = vmatprep.subr.bf16.mxu0 0
      %432 = vmatpush2.bf16.msra.mxu0 0
      %433 = vmatprep.mubr.bf16.mxu0 0
      %434 = vmatmul.mubr.bf16.gmra.mxu0 %v399
      %v435 = vpop.f32.mrf.mxu0
      %v436 = vadd.f32 %v371, %v435
      %v437 = vpop.f32.mrf.mxu0
      %v438 = vpop.f32.mrf.mxu0
      %v439 = vadd.f32 %v371, %v438
      %v440 = vpop.f32.mrf.mxu0
      %441 = vdwg.mxu0
      %v442 = vmul.f32 %v436, 0.5
      %v443 = vmul.f32 %v439, 0.5
      %v444 = vmul.f32 %v436, 0.044715
      %v445 = vmul.f32 %v439, 0.044715
      %v446 = vmul.f32 %v444, %v436
      %v447 = vmul.f32 %v445, %v439
      %v448 = vmul.f32 %v446, %v436
      %v449 = vmul.f32 %v447, %v439
      %v450 = vadd.f32 %v436, %v448
      %v451 = vadd.f32 %v439, %v449
      %v452 = vmul.f32 %v450, 0.7978846
      %v453 = vmul.f32 %v451, 0.7978846
      %v454 = vtanh.pop %v452
      %v455 = vtanh.pop %v453
      %v456 = vadd.f32 %v454, 1.0
      %v457 = vadd.f32 %v455, 1.0
      %v458 = vmul.f32 %v442, %v456
      %v459 = vmul.f32 %v443, %v457
      %v460 = vld [vmem:[#allocation2] sm:$0xff]
      %v461 = vld [vmem:[#allocation2 + $0x8] sm:$0xff]
      %v462 = vpack.c.bf16 %v459, %v458
      %v463 = vld [vmem:[%s339] sm:$0xf]
      %v464 = vld [vmem:[%s339 + $0x4] sm:$0xf]
      %v465 = vld [vmem:[%s339 + $0x8] sm:$0xf]
      %v466 = vld [vmem:[%s339 + $0xc] sm:$0xf]
      %v467 = vld [vmem:[%s339 + $0x10] sm:$0xf]
      %v468 = vld [vmem:[%s339 + $0x14] sm:$0xf]
      %v469 = vld [vmem:[%s339 + $0x18] sm:$0xf]
      %v470 = vld [vmem:[%s339 + $0x1c] sm:$0xf]
      %v471 = vld [vmem:[%s339 + $0x20] sm:$0xf]
      %v472 = vld [vmem:[%s339 + $0x24] sm:$0xf]
      %v473 = vld [vmem:[%s339 + $0x28] sm:$0xf]
      %v474 = vld [vmem:[%s339 + $0x2c] sm:$0xf]
      %v475 = vld [vmem:[%s339 + $0x30] sm:$0xf]
      %v476 = vld [vmem:[%s339 + $0x34] sm:$0xf]
      %v477 = vld [vmem:[%s339 + $0x38] sm:$0xf]
      %v478 = vld [vmem:[%s339 + $0x3c] sm:$0xf]
      %v495 = vunpack.c.l.b16 %v463
      %v496 = vunpack.c.l.b16 %v464
      %v497 = vunpack.c.l.b16 %v465
      %v498 = vunpack.c.l.b16 %v466
      %v499 = vunpack.c.l.b16 %v467
      %v500 = vunpack.c.l.b16 %v468
      %v501 = vunpack.c.l.b16 %v469
      %v502 = vunpack.c.l.b16 %v470
      %v503 = vunpack.c.l.b16 %v471
      %v504 = vunpack.c.l.b16 %v472
      %v505 = vunpack.c.l.b16 %v473
      %v506 = vunpack.c.l.b16 %v474
      %v507 = vunpack.c.l.b16 %v475
      %v508 = vunpack.c.l.b16 %v476
      %v509 = vunpack.c.l.b16 %v477
      %v510 = vunpack.c.l.b16 %v478
      %v511 = vpack.c.b16 %v496, %v495
      %v512 = vpack.c.b16 %v498, %v497
      %v513 = vpack.c.b16 %v500, %v499
      %v514 = vpack.c.b16 %v502, %v501
      %v515 = vpack.c.b16 %v504, %v503
      %v516 = vpack.c.b16 %v506, %v505
      %v517 = vpack.c.b16 %v508, %v507
      %v518 = vpack.c.b16 %v510, %v509
      %527 = vmatprep.subr.bf16.mxu0 0
      %528 = vmatpush1.bf16.msra.mxu0 %v518
      %529 = vmatprep.subr.bf16.mxu0 0
      %530 = vmatpush1.bf16.msra.mxu0 %v517
      %531 = vmatprep.subr.bf16.mxu0 0
      %532 = vmatpush1.bf16.msra.mxu0 %v516
      %533 = vmatprep.subr.bf16.mxu0 0
      %534 = vmatpush1.bf16.msra.mxu0 %v515
      %535 = vmatprep.subr.bf16.mxu0 0
      %536 = vmatpush1.bf16.msra.mxu0 %v514
      %537 = vmatprep.subr.bf16.mxu0 0
      %538 = vmatpush1.bf16.msra.mxu0 %v513
      %539 = vmatprep.subr.bf16.mxu0 0
      %540 = vmatpush1.bf16.msra.mxu0 %v512
      %541 = vmatprep.subr.bf16.mxu0 0
      %542 = vmatpush1.bf16.msra.mxu0 %v511
      %543 = vmatprep.subr.bf16.mxu0 0
      %544 = vmatpush2.bf16.msra.mxu0 0
      %545 = vmatprep.subr.bf16.mxu0 0
      %546 = vmatpush2.bf16.msra.mxu0 0
      %547 = vmatprep.subr.bf16.mxu0 0
      %548 = vmatpush2.bf16.msra.mxu0 0
      %549 = vmatprep.subr.bf16.mxu0 0
      %550 = vmatpush2.bf16.msra.mxu0 0
      %551 = vmatprep.subr.bf16.mxu0 0
      %552 = vmatpush2.bf16.msra.mxu0 0
      %553 = vmatprep.subr.bf16.mxu0 0
      %554 = vmatpush2.bf16.msra.mxu0 0
      %555 = vmatprep.subr.bf16.mxu0 0
      %556 = vmatpush2.bf16.msra.mxu0 0
      %557 = vmatprep.subr.bf16.mxu0 0
      %558 = vmatpush2.bf16.msra.mxu0 0
      %559 = vmatprep.mubr.bf16.mxu0 0
      %560 = vmatmul.mubr.bf16.gmra.mxu0 %v462
      %v561 = vpop.f32.mrf.mxu0
      %v562 = vadd.f32 0.0, %v561
      %v563 = vpop.f32.mrf.mxu0
      %v564 = vpop.f32.mrf.mxu0
      %v565 = vadd.f32 0.0, %v564
      %v566 = vpop.f32.mrf.mxu0
      %567 = vdwg.mxu0
      %v568 = vadd.f32 %v460, %v562
      %v569 = vadd.f32 %v461, %v565
      %570 = vst.msk [vmem:[#allocation2] sm:$0xff] %vm397, %v568
      %571 = vst.msk [vmem:[#allocation2 + $0x8] sm:$0xff] %vm397, %v569
      // Predicated region
      $region53: #{forward.16} parent=47 // pred_check
        %p572 = pneg %p348
      $region54: #{forward.16} parent=47 // pred_check_branch
        %574 = sbr.rel (%p572) target = $region56
      $region55: #{forward.16} parent=47 // pred_region
        %v575 = vld [vmem:[#allocation2] sm:$0xff]
        %v576 = vld [vmem:[#allocation2 + $0x8] sm:$0xff]
        %v577 = vld [vmem:[%s4] sm:$0x1]
        %v579 = vlaneseq
        %v580 = vshrl.u32 %v579, 7
        %v581 = vsub.s32 0, %v580
        %v582 = vrot.slane %v577, %v581
        %v584 = vadd.f32 %v575, %v582
        %v585 = vadd.f32 %v576, %v582
        %v586 = vld [vmem:[%s326] sm:$0xff]
        %v587 = vld [vmem:[%s326 + $0x8] sm:$0xff]
        %v588 = vadd.f32 %v584, %v586
        %v589 = vadd.f32 %v585, %v587
        %v590 = vld [vmem:[%s5] sm:$0x1]
        %v591 = vld [vmem:[%s6] sm:$0x1]
        %v592 = vsel %vm397, %v588, 0.0
        %593 = vadd.xlane.f32.xlu0 %v592
        %v594 = vpop.xlane.xlu0 %593
        %v595 = vsel %vm397, %v589, 0.0
        %596 = vadd.xlane.f32.xlu0 %v595
        %v597 = vpop.xlane.xlu0 %596
        %v598 = vrcp.pop 64.0
        %v599 = vmul.f32 %v594, %v598
        %v600 = vmul.f32 %v597, %v598
        %v601 = vsub.f32 %v588, %v599
        %v602 = vsub.f32 %v589, %v600
        %v603 = vmul.f32 %v601, %v601
        %v604 = vmul.f32 %v602, %v602
        %v605 = vsel %vm397, %v603, 0.0
        %606 = vadd.xlane.f32.xlu0 %v605
        %v607 = vpop.xlane.xlu0 %606
        %v608 = vsel %vm397, %v604, 0.0
        %609 = vadd.xlane.f32.xlu0 %v608
        %v610 = vpop.xlane.xlu0 %609
        %v611 = vmul.f32 %v607, %v598
        %v612 = vmul.f32 %v610, %v598
        %v613 = vadd.f32 %v611, 1e-05
        %v614 = vadd.f32 %v612, 1e-05
        %v615 = vrsqrt.pop %v613
        %v616 = vrsqrt.pop %v614
        %v617 = vmul.f32 %v601, %v615
        %v618 = vmul.f32 %v602, %v616
        %v620 = vlaneseq
        %v621 = vshrl.u32 %v620, 7
        %v622 = vsub.s32 0, %v621
        %v623 = vrot.slane %v590, %v622
        %v625 = vmul.f32 %v617, %v623
        %v626 = vmul.f32 %v618, %v623
        %v628 = vlaneseq
        %v629 = vshrl.u32 %v628, 7
        %v630 = vsub.s32 0, %v629
        %v631 = vrot.slane %v591, %v630
        %v633 = vadd.f32 %v625, %v631
        %v634 = vadd.f32 %v626, %v631
        %635 = vst.msk [vmem:[%s345] sm:$0xff] %vm397, %v633
        %636 = vst.msk [vmem:[%s345 + $0x8] sm:$0xff] %vm397, %v634
      $region56: #{forward.16} parent=47 // pred_fallthru
        _
      %s637 = smul.u32 2, %s22
      %p638 = scmp.lt.s32.totalorder %s637, 3
      %s639 = scalar_select %p638, %s637, 3
      %s640 = smul.addr %s639, 8
      %s641 = scalar_lea.vmem %s7, %s640
      // Predicated region
      $region57: #{forward.16} parent=47 // pred_check
        %p642 = pneg %p215
      $region58: #{forward.16} parent=47 // pred_check_branch
        %644 = sbr.rel (%p642) target = $region60
      $region59: #{forward.16} parent=47 // pred_region
        %s645 = smul.u32 2, %s22
      $region60: #{forward.16} parent=47 // pred_fallthru
        _
    $region48: #{forward.16} parent=5 // pred_fallthru
      _
    %p646 = scmp.le.s32.totalorder 2, %s13
    // Predicated region
    $region61: #{forward.16} parent=5 // pred_check
      %p647 = pneg %p646
    $region62: #{forward.16} parent=5 // pred_check_branch
      %649 = sbr.rel (%p647) target = $region64
    $region63: #{forward.16} parent=5 // pred_region
      %s650 = ssub.s32 %s13, 2
      // Predicated region
      $region65: #{forward.16} parent=63 // pred_check
        %p651 = pneg %p221
      $region66: #{forward.16} parent=63 // pred_check_branch
        %653 = sbr.rel (%p651) target = $region68
      $region67: #{forward.16} parent=63 // pred_region
        %s654 = smul.u32 2, %s24
        %p655 = scmp.lt.s32.totalorder %s654, 3
        %s656 = scalar_select %p655, %s654, 3
        %s657 = smul.addr %s656, 8
        %s658 = scalar_lea.vmem %s7, %s657
      $region68: #{forward.16} parent=63 // pred_fallthru
        _
    $region64: #{forward.16} parent=5 // pred_fallthru
      _
  $region6: #{forward.16} parent=0 // loop_footer
    %s17 = sadd.s32 1, %s13
  $region7: #{forward.16} parent=0 // loop_footer_branch
    %12 = sbr.rel target = $region3
  $region8: #{forward.16} parent=0 // loop_exit
    _

// kernel: forward.19
$region0: #{forward.19}
  #allocation0 [shape = 'u32[]', space=smem, size = 0x4, offset = 0x4, fixed_abs, tag = 'smem constant byte address 0x4 - core index']
  #allocation1 [shape = 'u32[144,128]{1,0:T(1,128)}', space=vmem, size = 0x12000, scoped, tag = 'internal scratch']
  #allocation2 [shape = 'f32[1,1]{1,0:T(1,128)S(1)}', space=vmem, size = 0x200, scoped, tag = 'scoped memory for forward.19']
  %s0 = inlined_call_operand.vmem [shape: f32[2,15,64], index: 0, kind: input, shape index: {}]
  %s1 = inlined_call_operand.vmem [shape: f32[64,1], index: 1, kind: input, shape index: {}]
  %s2 = inlined_call_operand.<no memory space> [shape: f32[1,1], index: 2, kind: input, shape index: {}]
  %s3 = inlined_call_operand.vmem [shape: f32[2,1,1], index: 3, kind: output, shape index: {}]
  %s4 = sld [smem:[#allocation0]]
  $region45: #{forward.19} parent=0
    _
  %s6 = ssub.s32 1, %s4
  %s7 = scalar_select 0, %s6, %s4
  %v8 = vstv %s2
  %9 = vst [vmem:[#allocation2] sm:$0x1] %v8
  loop: start=0, step=1, limit=4
  $region2: #{forward.19} parent=0 // loop_pre_header
    _
  $region3: #{forward.19} parent=0 // loop_header
    %s11 = sphi 0, %s15
    %p12 = scmp.ge.s32.totalorder %s11, 4
    %s21 = sphi 0, %s23
    %s24 = sphi 0, %s21
    %s25 = sphi 0, %s24
    %s41 = sphi 0, %s25
    %s45 = sphi 0, %s45
    %s47 = sphi 0, %s45
    %s48 = sphi 0, %s47
    %s62 = sphi 0, %s48
    %s66 = sphi 0, %s66
    %s68 = sphi 0, %s66
    %s69 = sphi 0, %s68
    %s83 = sphi 0, %s69
    %s89 = sphi 0, %s91
    %s92 = sphi 0, %s89
    %s93 = sphi 0, %s92
    %s109 = sphi 0, %s93
  $region4: #{forward.19} parent=0 // loop_header_branch
    %14 = sbr.rel (%p12) target = $region8
  $region5: #{forward.19} parent=0 // loop_body
    %s16 = ssub.s32 %s11, 1
    %s17 = ssub.s32 %s11, 2
    %s18 = sadd.s32 %s11, 1
    %s19 = ssub.s32 %s11, %s18
    %p20 = scmp.eq.s32.totalorder %s19, 0
    %s22 = sadd.s32 %s21, 1
    %s23 = scalar_select %p20, %s21, %s22
    %p26 = pneg %p20
    %p27 = scmp.eq.s32.totalorder %s11, 1
    %p28 = por %p26, %p27
    %p29 = scmp.ne.s32.totalorder %s21, %s24
    %p30 = scmp.eq.s32.totalorder %s11, 0
    %p31 = por %p29, %p30
    %p32 = scmp.ne.s32.totalorder %s21, %s24
    %p33 = scmp.eq.s32.totalorder %s16, 1
    %p34 = por %p32, %p33
    %p35 = scmp.ne.s32.totalorder %s24, %s25
    %p36 = scmp.eq.s32.totalorder %s16, 0
    %p37 = por %p35, %p36
    %p38 = scmp.ne.s32.totalorder %s24, %s25
    %p39 = scmp.eq.s32.totalorder %s17, 1
    %p40 = por %p38, %p39
    %p42 = scmp.ne.s32.totalorder %s25, %s41
    %p43 = scmp.eq.s32.totalorder %s17, 0
    %p44 = por %p42, %p43
    %s46 = sadd.s32 %s45, 1
    %p49 = scmp.eq.s32.totalorder %s11, 1
    %p50 = scmp.ne.s32.totalorder %s45, %s47
    %p51 = scmp.eq.s32.totalorder %s11, 0
    %p52 = por %p50, %p51
    %p53 = scmp.ne.s32.totalorder %s45, %s47
    %p54 = scmp.eq.s32.totalorder %s16, 1
    %p55 = por %p53, %p54
    %p56 = scmp.ne.s32.totalorder %s47, %s48
    %p57 = scmp.eq.s32.totalorder %s16, 0
    %p58 = por %p56, %p57
    %p59 = scmp.ne.s32.totalorder %s47, %s48
    %p60 = scmp.eq.s32.totalorder %s17, 1
    %p61 = por %p59, %p60
    %p63 = scmp.ne.s32.totalorder %s48, %s62
    %p64 = scmp.eq.s32.totalorder %s17, 0
    %p65 = por %p63, %p64
    %s67 = sadd.s32 %s66, 1
    %p70 = scmp.eq.s32.totalorder %s11, 1
    %p71 = scmp.ne.s32.totalorder %s66, %s68
    %p72 = scmp.eq.s32.totalorder %s11, 0
    %p73 = por %p71, %p72
    %p74 = scmp.ne.s32.totalorder %s66, %s68
    %p75 = scmp.eq.s32.totalorder %s16, 1
    %p76 = por %p74, %p75
    %p77 = scmp.ne.s32.totalorder %s68, %s69
    %p78 = scmp.eq.s32.totalorder %s16, 0
    %p79 = por %p77, %p78
    %p80 = scmp.ne.s32.totalorder %s68, %s69
    %p81 = scmp.eq.s32.totalorder %s17, 1
    %p82 = por %p80, %p81
    %p84 = scmp.ne.s32.totalorder %s69, %s83
    %p85 = scmp.eq.s32.totalorder %s17, 0
    %p86 = por %p84, %p85
    %s87 = ssub.s32 %s11, %s18
    %p88 = scmp.eq.s32.totalorder %s87, 0
    %s90 = sadd.s32 %s89, 1
    %s91 = scalar_select %p88, %s89, %s90
    %p94 = pneg %p88
    %p95 = scmp.eq.s32.totalorder %s11, 1
    %p96 = por %p94, %p95
    %p97 = scmp.ne.s32.totalorder %s89, %s92
    %p98 = scmp.eq.s32.totalorder %s11, 0
    %p99 = por %p97, %p98
    %p100 = scmp.ne.s32.totalorder %s89, %s92
    %p101 = scmp.eq.s32.totalorder %s16, 1
    %p102 = por %p100, %p101
    %p103 = scmp.ne.s32.totalorder %s92, %s93
    %p104 = scmp.eq.s32.totalorder %s16, 0
    %p105 = por %p103, %p104
    %p106 = scmp.ne.s32.totalorder %s92, %s93
    %p107 = scmp.eq.s32.totalorder %s17, 1
    %p108 = por %p106, %p107
    %p110 = scmp.ne.s32.totalorder %s93, %s109
    %p111 = scmp.eq.s32.totalorder %s17, 0
    %p112 = por %p110, %p111
    %p113 = scmp.le.s32.totalorder 1, %s11
    %p114 = scmp.lt.s32.totalorder %s11, 3
    %p115 = pnand %p113, %p114
    %p116 = pneg %p115
    // Predicated region
    $region9: #{forward.19} parent=5 // pred_check
      _
    $region10: #{forward.19} parent=5 // pred_check_branch
      %118 = sbr.rel (%p115) target = $region12
    $region11: #{forward.19} parent=5 // pred_region
      %s119 = ssub.s32 %s11, 1
      // Predicated region
      $region13: #{forward.19} parent=11 // pred_check
        %p120 = pneg %p58
      $region14: #{forward.19} parent=11 // pred_check_branch
        %122 = sbr.rel (%p120) target = $region16
      $region15: #{forward.19} parent=11 // pred_region
        _
      $region16: #{forward.19} parent=11 // pred_fallthru
        _
      // Predicated region
      $region17: #{forward.19} parent=11 // pred_check
        %p123 = pneg %p79
      $region18: #{forward.19} parent=11 // pred_check_branch
        %125 = sbr.rel (%p123) target = $region20
      $region19: #{forward.19} parent=11 // pred_region
        _
      $region20: #{forward.19} parent=11 // pred_fallthru
        _
    $region12: #{forward.19} parent=5 // pred_fallthru
      _
    %p126 = scmp.lt.s32.totalorder %s11, 2
    // Predicated region
    $region21: #{forward.19} parent=5 // pred_check
      %p127 = pneg %p126
    $region22: #{forward.19} parent=5 // pred_check_branch
      %129 = sbr.rel (%p127) target = $region24
    $region23: #{forward.19} parent=5 // pred_region
      // Predicated region
      $region25: #{forward.19} parent=23 // pred_check
        %p130 = pneg %p31
      $region26: #{forward.19} parent=23 // pred_check_branch
        %132 = sbr.rel (%p130) target = $region28
      $region27: #{forward.19} parent=23 // pred_region
        %p133 = scmp.lt.s32.totalorder %s11, 1
        %s134 = scalar_select %p133, %s11, 1
        %s135 = smul.addr %s134, 2
        %s136 = smul.addr %s135, 8
        %s137 = scalar_lea.vmem %s0, %s136
      $region28: #{forward.19} parent=23 // pred_fallthru
        _
    $region24: #{forward.19} parent=5 // pred_fallthru
      _
    %p138 = scmp.le.s32.totalorder 1, %s11
    %p139 = scmp.lt.s32.totalorder %s11, 3
    %p140 = pnand %p138, %p139
    %p141 = pneg %p140
    // Predicated region
    $region29: #{forward.19} parent=5 // pred_check
      _
    $region30: #{forward.19} parent=5 // pred_check_branch
      %143 = sbr.rel (%p140) target = $region32
    $region31: #{forward.19} parent=5 // pred_region
      %s144 = ssub.s32 %s11, 1
      %p145 = scmp.lt.s32.totalorder %s16, 1
      %s146 = scalar_select %p145, %s16, 1
      %s147 = smul.addr %s146, 2
      %s148 = smul.addr %s147, 8
      %s149 = scalar_lea.vmem %s0, %s148
      %p150 = pneg %p37
      %p151 = pneg %p34
      %p152 = pneg %p58
      %p153 = pneg %p55
      %p154 = pneg %p79
      %p155 = pneg %p76
      %p156 = pneg %p105
      %p157 = pneg %p102
      %p158 = scmp.lt.s32.totalorder %s16, 1
      %s159 = scalar_select %p158, %s16, 1
      %s160 = scalar_lea.vmem %s3, %s159
      %p161 = scmp.lt.s32.totalorder %s16, 1
      %s162 = scalar_select %p161, %s16, 1
      %s163 = smul.addr %s162, 2
      %s164 = smul.addr %s163, 8
      %s165 = scalar_lea.vmem %s0, %s164
      %p166 = scmp.lt.s32.totalorder %s16, 1
      %s167 = scalar_select %p166, %s16, 1
      %s168 = scalar_lea.vmem %s3, %s167
      %v169 = vld [vmem:[%s165] sm:$0xff]
      %v170 = vld [vmem:[%s165 + $0x8] sm:$0x7f]
      %vm171 = vcmask 523264
      %v172 = vsel %vm171, %v169, 0.0
      %vm173 = vcmask 522240
      %v174 = vsel %vm173, %v170, 0.0
      %v175 = vadd.f32 %v172, %v174
      %v176 = vrot.slane %v175, 4
      %v177 = vadd.f32 %v175, %v176
      %v178 = vrot.slane %v177, 2
      %v179 = vadd.f32 %v177, %v178
      %v180 = vrot.slane %v179, 1
      %v181 = vadd.f32 %v179, %v180
      %vm182 = vcmp.ne.f32.partialorder %v169, 0.0
      %vm183 = vcmp.ne.f32.partialorder %v170, 0.0
      %v184 = vsel %vm182, 1, 0
      %v185 = vsel %vm183, 1, 0
      %v186 = vcvt.s32.f32 %v184
      %v187 = vcvt.s32.f32 %v185
      %v188 = vsel %vm171, %v186, 0.0
      %v189 = vsel %vm173, %v187, 0.0
      %v190 = vadd.f32 %v188, %v189
      %v191 = vrot.slane %v190, 4
      %v192 = vadd.f32 %v190, %v191
      %v193 = vrot.slane %v192, 2
      %v194 = vadd.f32 %v192, %v193
      %v195 = vrot.slane %v194, 1
      %v196 = vadd.f32 %v194, %v195
      %v197 = vrcp.pop %v196
      %v198 = vmul.f32 %v181, %v197
      %v199 = vld [vmem:[%s1] sm:$0xff]
      %v200 = vld [vmem:[%s1 + $0x8] sm:$0xff]
      %v201 = vld [vmem:[%s1 + $0x10] sm:$0xff]
      %v202 = vld [vmem:[%s1 + $0x18] sm:$0xff]
      %v203 = vld [vmem:[%s1 + $0x20] sm:$0xff]
      %v204 = vld [vmem:[%s1 + $0x28] sm:$0xff]
      %v205 = vld [vmem:[%s1 + $0x30] sm:$0xff]
      %v206 = vld [vmem:[%s1 + $0x38] sm:$0xff]
      %v207 = vld [vmem:[#allocation2] sm:$0x1]
      %v209 = vsel %vm171, %v198, 0
      %211 = vmatprep.subr.mxu0 0.0
      %212 = vmatpush1.msra.mxu0 0.0
      %213 = vmatprep.subr.mxu0 0.0
      %214 = vmatpush1.msra.mxu0 0.0
      %215 = vmatprep.subr.mxu0 0.0
      %216 = vmatpush1.msra.mxu0 0.0
      %217 = vmatprep.subr.mxu0 0.0
      %218 = vmatpush1.msra.mxu0 0.0
      %219 = vmatprep.subr.mxu0 0.0
      %220 = vmatpush1.msra.mxu0 0.0
      %221 = vmatprep.subr.mxu0 0.0
      %222 = vmatpush1.msra.mxu0 0.0
      %223 = vmatprep.subr.mxu0 0.0
      %224 = vmatpush1.msra.mxu0 0.0
      %225 = vmatprep.subr.mxu0 0.0
      %226 = vmatpush1.msra.mxu0 0.0
      %227 = vmatprep.subr.mxu0 0.0
      %228 = vmatpush1.msra.mxu0 %v206
      %229 = vmatprep.subr.mxu0 0.0
      %230 = vmatpush1.msra.mxu0 %v205
      %231 = vmatprep.subr.mxu0 0.0
      %232 = vmatpush1.msra.mxu0 %v204
      %233 = vmatprep.subr.mxu0 0.0
      %234 = vmatpush1.msra.mxu0 %v203
      %235 = vmatprep.subr.mxu0 0.0
      %236 = vmatpush1.msra.mxu0 %v202
      %237 = vmatprep.subr.mxu0 0.0
      %238 = vmatpush1.msra.mxu0 %v201
      %239 = vmatprep.subr.mxu0 0.0
      %240 = vmatpush1.msra.mxu0 %v200
      %241 = vmatprep.subr.mxu0 0.0
      %242 = vmatpush1.msra.mxu0 %v199
      %243 = vmatprep.subr.mxu0 0.0
      %244 = vmatpush2.msra.mxu0 0.0
      %245 = vmatprep.subr.mxu0 0.0
      %246 = vmatpush2.msra.mxu0 0.0
      %247 = vmatprep.subr.mxu0 0.0
      %248 = vmatpush2.msra.mxu0 0.0
      %249 = vmatprep.subr.mxu0 0.0
      %250 = vmatpush2.msra.mxu0 0.0
      %251 = vmatprep.subr.mxu0 0.0
      %252 = vmatpush2.msra.mxu0 0.0
      %253 = vmatprep.subr.mxu0 0.0
      %254 = vmatpush2.msra.mxu0 0.0
      %255 = vmatprep.subr.mxu0 0.0
      %256 = vmatpush2.msra.mxu0 0.0
      %257 = vmatprep.subr.mxu0 0.0
      %258 = vmatpush2.msra.mxu0 0.0
      %259 = vmatprep.subr.mxu0 0.0
      %260 = vmatpush2.msra.mxu0 0.0
      %261 = vmatprep.subr.mxu0 0.0
      %262 = vmatpush2.msra.mxu0 0.0
      %263 = vmatprep.subr.mxu0 0.0
      %264 = vmatpush2.msra.mxu0 0.0
      %265 = vmatprep.subr.mxu0 0.0
      %266 = vmatpush2.msra.mxu0 0.0
      %267 = vmatprep.subr.mxu0 0.0
      %268 = vmatpush2.msra.mxu0 0.0
      %269 = vmatprep.subr.mxu0 0.0
      %270 = vmatpush2.msra.mxu0 0.0
      %271 = vmatprep.subr.mxu0 0.0
      %272 = vmatpush2.msra.mxu0 0.0
      %273 = vmatprep.subr.mxu0 0.0
      %274 = vmatpush2.msra.mxu0 0.0
      %275 = vmatprep.mubr.f32.mxu0 0.0
      %276 = vmatmul.mubr.f32.gmra.mxu0 %v209
      %v277 = vpop.f32.mrf.mxu0
      %v278 = vadd.f32 %v207, %v277
      %v279 = vpop.f32.mrf.mxu0
      %280 = vdwg.mxu0
      %vm281 = vcmask 0
      %282 = vst.msk [vmem:[%s168] sm:$0x1] %vm281, %v278
      %p283 = scmp.lt.s32.totalorder %s16, 1
      %s284 = scalar_select %p283, %s16, 1
      %s285 = scalar_lea.vmem %s3, %s284
      // Predicated region
      $region33: #{forward.19} parent=31 // pred_check
        %p286 = pneg %p102
      $region34: #{forward.19} parent=31 // pred_check_branch
        %288 = sbr.rel (%p286) target = $region36
      $region35: #{forward.19} parent=31 // pred_region
        _
      $region36: #{forward.19} parent=31 // pred_fallthru
        _
    $region32: #{forward.19} parent=5 // pred_fallthru
      _
    %p289 = scmp.le.s32.totalorder 2, %s11
    // Predicated region
    $region37: #{forward.19} parent=5 // pred_check
      %p290 = pneg %p289
    $region38: #{forward.19} parent=5 // pred_check_branch
      %292 = sbr.rel (%p290) target = $region40
    $region39: #{forward.19} parent=5 // pred_region
      %s293 = ssub.s32 %s11, 2
      // Predicated region
      $region41: #{forward.19} parent=39 // pred_check
        %p294 = pneg %p108
      $region42: #{forward.19} parent=39 // pred_check_branch
        %296 = sbr.rel (%p294) target = $region44
      $region43: #{forward.19} parent=39 // pred_region
        %p297 = scmp.lt.s32.totalorder %s17, 1
        %s298 = scalar_select %p297, %s17, 1
        %s299 = scalar_lea.vmem %s3, %s298
      $region44: #{forward.19} parent=39 // pred_fallthru
        _
    $region40: #{forward.19} parent=5 // pred_fallthru
      _
  $region6: #{forward.19} parent=0 // loop_footer
    %s15 = sadd.s32 1, %s11
  $region7: #{forward.19} parent=0 // loop_footer_branch
    %10 = sbr.rel target = $region3
  $region8: #{forward.19} parent=0 // loop_exit
    _

// kernel: forward.15
$region0: #{forward.15}
  #allocation0 [shape = 'u32[]', space=smem, size = 0x4, offset = 0x4, fixed_abs, tag = 'smem constant byte address 0x4 - core index']
  #allocation1 [shape = 'u32[144,128]{1,0:T(1,128)}', space=vmem, size = 0x12000, scoped, tag = 'internal scratch']
  %s0 = inlined_call_operand.vmem [shape: f32[2,15,64], index: 0, kind: input, shape index: {}]
  %s1 = inlined_call_operand.vmem [shape: bf16[64,192], index: 1, kind: input, shape index: {}]
  %s2 = inlined_call_operand.vmem [shape: f32[1,192], index: 2, kind: input, shape index: {}]
  %s3 = inlined_call_operand.vmem [shape: bf16[64,64], index: 3, kind: input, shape index: {}]
  %s4 = inlined_call_operand.vmem [shape: f32[1,64], index: 4, kind: input, shape index: {}]
  %s5 = inlined_call_operand.vmem [shape: f32[1,64], index: 5, kind: input, shape index: {}]
  %s6 = inlined_call_operand.vmem [shape: f32[1,64], index: 6, kind: input, shape index: {}]
  %s7 = inlined_call_operand.vmem [shape: f32[2,15,64], index: 7, kind: output, shape index: {}]
  %s8 = sld [smem:[#allocation0]]
  $region61: #{forward.15} parent=0
    _
  %s10 = ssub.s32 1, %s8
  %s11 = scalar_select 0, %s10, %s8
  loop: start=0, step=1, limit=4
  $region2: #{forward.15} parent=0 // loop_pre_header
    _
  $region3: #{forward.15} parent=0 // loop_header
    %s13 = sphi 0, %s17
    %p14 = scmp.ge.s32.totalorder %s13, 4
    %s23 = sphi 0, %s25
    %s26 = sphi 0, %s23
    %s27 = sphi 0, %s26
    %s43 = sphi 0, %s27
    %s47 = sphi 0, %s47
    %s49 = sphi 0, %s47
    %s50 = sphi 0, %s49
    %s64 = sphi 0, %s50
    %s68 = sphi 0, %s68
    %s70 = sphi 0, %s68
    %s71 = sphi 0, %s70
    %s85 = sphi 0, %s71
    %s89 = sphi 0, %s89
    %s91 = sphi 0, %s89
    %s92 = sphi 0, %s91
    %s106 = sphi 0, %s92
    %s110 = sphi 0, %s110
    %s112 = sphi 0, %s110
    %s113 = sphi 0, %s112
    %s127 = sphi 0, %s113
    %s131 = sphi 0, %s131
    %s133 = sphi 0, %s131
    %s134 = sphi 0, %s133
    %s148 = sphi 0, %s134
    %s152 = sphi 0, %s152
    %s154 = sphi 0, %s152
    %s155 = sphi 0, %s154
    %s169 = sphi 0, %s155
    %s175 = sphi 0, %s177
    %s178 = sphi 0, %s175
    %s179 = sphi 0, %s178
    %s195 = sphi 0, %s179
  $region4: #{forward.15} parent=0 // loop_header_branch
    %16 = sbr.rel (%p14) target = $region8
  $region5: #{forward.15} parent=0 // loop_body
    %s18 = ssub.s32 %s13, 1
    %s19 = ssub.s32 %s13, 2
    %s20 = sadd.s32 %s13, 1
    %s21 = ssub.s32 %s13, %s20
    %p22 = scmp.eq.s32.totalorder %s21, 0
    %s24 = sadd.s32 %s23, 1
    %s25 = scalar_select %p22, %s23, %s24
    %p28 = pneg %p22
    %p29 = scmp.eq.s32.totalorder %s13, 1
    %p30 = por %p28, %p29
    %p31 = scmp.ne.s32.totalorder %s23, %s26
    %p32 = scmp.eq.s32.totalorder %s13, 0
    %p33 = por %p31, %p32
    %p34 = scmp.ne.s32.totalorder %s23, %s26
    %p35 = scmp.eq.s32.totalorder %s18, 1
    %p36 = por %p34, %p35
    %p37 = scmp.ne.s32.totalorder %s26, %s27
    %p38 = scmp.eq.s32.totalorder %s18, 0
    %p39 = por %p37, %p38
    %p40 = scmp.ne.s32.totalorder %s26, %s27
    %p41 = scmp.eq.s32.totalorder %s19, 1
    %p42 = por %p40, %p41
    %p44 = scmp.ne.s32.totalorder %s27, %s43
    %p45 = scmp.eq.s32.totalorder %s19, 0
    %p46 = por %p44, %p45
    %s48 = sadd.s32 %s47, 1
    %p51 = scmp.eq.s32.totalorder %s13, 1
    %p52 = scmp.ne.s32.totalorder %s47, %s49
    %p53 = scmp.eq.s32.totalorder %s13, 0
    %p54 = por %p52, %p53
    %p55 = scmp.ne.s32.totalorder %s47, %s49
    %p56 = scmp.eq.s32.totalorder %s18, 1
    %p57 = por %p55, %p56
    %p58 = scmp.ne.s32.totalorder %s49, %s50
    %p59 = scmp.eq.s32.totalorder %s18, 0
    %p60 = por %p58, %p59
    %p61 = scmp.ne.s32.totalorder %s49, %s50
    %p62 = scmp.eq.s32.totalorder %s19, 1
    %p63 = por %p61, %p62
    %p65 = scmp.ne.s32.totalorder %s50, %s64
    %p66 = scmp.eq.s32.totalorder %s19, 0
    %p67 = por %p65, %p66
    %s69 = sadd.s32 %s68, 1
    %p72 = scmp.eq.s32.totalorder %s13, 1
    %p73 = scmp.ne.s32.totalorder %s68, %s70
    %p74 = scmp.eq.s32.totalorder %s13, 0
    %p75 = por %p73, %p74
    %p76 = scmp.ne.s32.totalorder %s68, %s70
    %p77 = scmp.eq.s32.totalorder %s18, 1
    %p78 = por %p76, %p77
    %p79 = scmp.ne.s32.totalorder %s70, %s71
    %p80 = scmp.eq.s32.totalorder %s18, 0
    %p81 = por %p79, %p80
    %p82 = scmp.ne.s32.totalorder %s70, %s71
    %p83 = scmp.eq.s32.totalorder %s19, 1
    %p84 = por %p82, %p83
    %p86 = scmp.ne.s32.totalorder %s71, %s85
    %p87 = scmp.eq.s32.totalorder %s19, 0
    %p88 = por %p86, %p87
    %s90 = sadd.s32 %s89, 1
    %p93 = scmp.eq.s32.totalorder %s13, 1
    %p94 = scmp.ne.s32.totalorder %s89, %s91
    %p95 = scmp.eq.s32.totalorder %s13, 0
    %p96 = por %p94, %p95
    %p97 = scmp.ne.s32.totalorder %s89, %s91
    %p98 = scmp.eq.s32.totalorder %s18, 1
    %p99 = por %p97, %p98
    %p100 = scmp.ne.s32.totalorder %s91, %s92
    %p101 = scmp.eq.s32.totalorder %s18, 0
    %p102 = por %p100, %p101
    %p103 = scmp.ne.s32.totalorder %s91, %s92
    %p104 = scmp.eq.s32.totalorder %s19, 1
    %p105 = por %p103, %p104
    %p107 = scmp.ne.s32.totalorder %s92, %s106
    %p108 = scmp.eq.s32.totalorder %s19, 0
    %p109 = por %p107, %p108
    %s111 = sadd.s32 %s110, 1
    %p114 = scmp.eq.s32.totalorder %s13, 1
    %p115 = scmp.ne.s32.totalorder %s110, %s112
    %p116 = scmp.eq.s32.totalorder %s13, 0
    %p117 = por %p115, %p116
    %p118 = scmp.ne.s32.totalorder %s110, %s112
    %p119 = scmp.eq.s32.totalorder %s18, 1
    %p120 = por %p118, %p119
    %p121 = scmp.ne.s32.totalorder %s112, %s113
    %p122 = scmp.eq.s32.totalorder %s18, 0
    %p123 = por %p121, %p122
    %p124 = scmp.ne.s32.totalorder %s112, %s113
    %p125 = scmp.eq.s32.totalorder %s19, 1
    %p126 = por %p124, %p125
    %p128 = scmp.ne.s32.totalorder %s113, %s127
    %p129 = scmp.eq.s32.totalorder %s19, 0
    %p130 = por %p128, %p129
    %s132 = sadd.s32 %s131, 1
    %p135 = scmp.eq.s32.totalorder %s13, 1
    %p136 = scmp.ne.s32.totalorder %s131, %s133
    %p137 = scmp.eq.s32.totalorder %s13, 0
    %p138 = por %p136, %p137
    %p139 = scmp.ne.s32.totalorder %s131, %s133
    %p140 = scmp.eq.s32.totalorder %s18, 1
    %p141 = por %p139, %p140
    %p142 = scmp.ne.s32.totalorder %s133, %s134
    %p143 = scmp.eq.s32.totalorder %s18, 0
    %p144 = por %p142, %p143
    %p145 = scmp.ne.s32.totalorder %s133, %s134
    %p146 = scmp.eq.s32.totalorder %s19, 1
    %p147 = por %p145, %p146
    %p149 = scmp.ne.s32.totalorder %s134, %s148
    %p150 = scmp.eq.s32.totalorder %s19, 0
    %p151 = por %p149, %p150
    %s153 = sadd.s32 %s152, 1
    %p156 = scmp.eq.s32.totalorder %s13, 1
    %p157 = scmp.ne.s32.totalorder %s152, %s154
    %p158 = scmp.eq.s32.totalorder %s13, 0
    %p159 = por %p157, %p158
    %p160 = scmp.ne.s32.totalorder %s152, %s154
    %p161 = scmp.eq.s32.totalorder %s18, 1
    %p162 = por %p160, %p161
    %p163 = scmp.ne.s32.totalorder %s154, %s155
    %p164 = scmp.eq.s32.totalorder %s18, 0
    %p165 = por %p163, %p164
    %p166 = scmp.ne.s32.totalorder %s154, %s155
    %p167 = scmp.eq.s32.totalorder %s19, 1
    %p168 = por %p166, %p167
    %p170 = scmp.ne.s32.totalorder %s155, %s169
    %p171 = scmp.eq.s32.totalorder %s19, 0
    %p172 = por %p170, %p171
    %s173 = ssub.s32 %s13, %s20
    %p174 = scmp.eq.s32.totalorder %s173, 0
    %s176 = sadd.s32 %s175, 1
    %s177 = scalar_select %p174, %s175, %s176
    %p180 = pneg %p174
    %p181 = scmp.eq.s32.totalorder %s13, 1
    %p182 = por %p180, %p181
    %p183 = scmp.ne.s32.totalorder %s175, %s178
    %p184 = scmp.eq.s32.totalorder %s13, 0
    %p185 = por %p183, %p184
    %p186 = scmp.ne.s32.totalorder %s175, %s178
    %p187 = scmp.eq.s32.totalorder %s18, 1
    %p188 = por %p186, %p187
    %p189 = scmp.ne.s32.totalorder %s178, %s179
    %p190 = scmp.eq.s32.totalorder %s18, 0
    %p191 = por %p189, %p190
    %p192 = scmp.ne.s32.totalorder %s178, %s179
    %p193 = scmp.eq.s32.totalorder %s19, 1
    %p194 = por %p192, %p193
    %p196 = scmp.ne.s32.totalorder %s179, %s195
    %p197 = scmp.eq.s32.totalorder %s19, 0
    %p198 = por %p196, %p197
    %p199 = scmp.le.s32.totalorder 1, %s13
    %p200 = scmp.lt.s32.totalorder %s13, 3
    %p201 = pnand %p199, %p200
    %p202 = pneg %p201
    // Predicated region
    $region9: #{forward.15} parent=5 // pred_check
      _
    $region10: #{forward.15} parent=5 // pred_check_branch
      %204 = sbr.rel (%p201) target = $region12
    $region11: #{forward.15} parent=5 // pred_region
      %s205 = ssub.s32 %s13, 1
      // Predicated region
      $region13: #{forward.15} parent=11 // pred_check
        %p206 = pneg %p60
      $region14: #{forward.15} parent=11 // pred_check_branch
        %208 = sbr.rel (%p206) target = $region16
      $region15: #{forward.15} parent=11 // pred_region
        _
      $region16: #{forward.15} parent=11 // pred_fallthru
        _
      // Predicated region
      $region17: #{forward.15} parent=11 // pred_check
        %p209 = pneg %p81
      $region18: #{forward.15} parent=11 // pred_check_branch
        %211 = sbr.rel (%p209) target = $region20
      $region19: #{forward.15} parent=11 // pred_region
        _
      $region20: #{forward.15} parent=11 // pred_fallthru
        _
      // Predicated region
      $region21: #{forward.15} parent=11 // pred_check
        %p212 = pneg %p102
      $region22: #{forward.15} parent=11 // pred_check_branch
        %214 = sbr.rel (%p212) target = $region24
      $region23: #{forward.15} parent=11 // pred_region
        _
      $region24: #{forward.15} parent=11 // pred_fallthru
        _
      // Predicated region
      $region25: #{forward.15} parent=11 // pred_check
        %p215 = pneg %p123
      $region26: #{forward.15} parent=11 // pred_check_branch
        %217 = sbr.rel (%p215) target = $region28
      $region27: #{forward.15} parent=11 // pred_region
        _
      $region28: #{forward.15} parent=11 // pred_fallthru
        _
      // Predicated region
      $region29: #{forward.15} parent=11 // pred_check
        %p218 = pneg %p144
      $region30: #{forward.15} parent=11 // pred_check_branch
        %220 = sbr.rel (%p218) target = $region32
      $region31: #{forward.15} parent=11 // pred_region
        _
      $region32: #{forward.15} parent=11 // pred_fallthru
        _
      // Predicated region
      $region33: #{forward.15} parent=11 // pred_check
        %p221 = pneg %p165
      $region34: #{forward.15} parent=11 // pred_check_branch
        %223 = sbr.rel (%p221) target = $region36
      $region35: #{forward.15} parent=11 // pred_region
        _
      $region36: #{forward.15} parent=11 // pred_fallthru
        _
    $region12: #{forward.15} parent=5 // pred_fallthru
      _
    %p224 = scmp.lt.s32.totalorder %s13, 2
    // Predicated region
    $region37: #{forward.15} parent=5 // pred_check
      %p225 = pneg %p224
    $region38: #{forward.15} parent=5 // pred_check_branch
      %227 = sbr.rel (%p225) target = $region40
    $region39: #{forward.15} parent=5 // pred_region
      // Predicated region
      $region41: #{forward.15} parent=39 // pred_check
        %p228 = pneg %p33
      $region42: #{forward.15} parent=39 // pred_check_branch
        %230 = sbr.rel (%p228) target = $region44
      $region43: #{forward.15} parent=39 // pred_region
        %p231 = scmp.lt.s32.totalorder %s13, 1
        %s232 = scalar_select %p231, %s13, 1
        %s233 = smul.addr %s232, 2
        %s234 = smul.addr %s233, 8
        %s235 = scalar_lea.vmem %s0, %s234
      $region44: #{forward.15} parent=39 // pred_fallthru
        _
    $region40: #{forward.15} parent=5 // pred_fallthru
      _
    %p236 = scmp.le.s32.totalorder 1, %s13
    %p237 = scmp.lt.s32.totalorder %s13, 3
    %p238 = pnand %p236, %p237
    %p239 = pneg %p238
    // Predicated region
    $region45: #{forward.15} parent=5 // pred_check
      _
    $region46: #{forward.15} parent=5 // pred_check_branch
      %241 = sbr.rel (%p238) target = $region48
    $region47: #{forward.15} parent=5 // pred_region
      %s242 = ssub.s32 %s13, 1
      %p243 = scmp.lt.s32.totalorder %s18, 1
      %s244 = scalar_select %p243, %s18, 1
      %s245 = smul.addr %s244, 2
      %s246 = smul.addr %s245, 8
      %s247 = scalar_lea.vmem %s0, %s246
      %p248 = pneg %p39
      %p249 = pneg %p36
      %p250 = pneg %p60
      %p251 = pneg %p57
      %p252 = pneg %p81
      %p253 = pneg %p78
      %p254 = pneg %p102
      %p255 = pneg %p99
      %p256 = pneg %p123
      %p257 = pneg %p120
      %p258 = pneg %p144
      %p259 = pneg %p141
      %p260 = pneg %p165
      %p261 = pneg %p162
      %p262 = pneg %p191
      %p263 = pneg %p188
      %p264 = scmp.lt.s32.totalorder %s18, 1
      %s265 = scalar_select %p264, %s18, 1
      %s266 = smul.addr %s265, 2
      %s267 = smul.addr %s266, 8
      %s268 = scalar_lea.vmem %s7, %s267
      %p269 = scmp.lt.s32.totalorder %s18, 1
      %s270 = scalar_select %p269, %s18, 1
      %s271 = smul.addr %s270, 2
      %s272 = smul.addr %s271, 8
      %s273 = scalar_lea.vmem %s0, %s272
      %p274 = scmp.lt.s32.totalorder %s18, 1
      %s275 = scalar_select %p274, %s18, 1
      %s276 = smul.addr %s275, 2
      %s277 = smul.addr %s276, 8
      %s278 = scalar_lea.vmem %s7, %s277
      %v280 = vld [vmem:[%s273] sm:$0xff]
      %v281 = vld [vmem:[%s273 + $0x8] sm:$0x7f]
      %v282 = vpack.c.bf16 %v281, %v280
      %v283 = vld [vmem:[%s1] sm:$0xff]
      %v284 = vld [vmem:[%s1 + $0x8] sm:$0xff]
      %v285 = vld [vmem:[%s1 + $0x10] sm:$0xff]
      %v286 = vld [vmem:[%s1 + $0x18] sm:$0xff]
      %v287 = vld [vmem:[%s1 + $0x20] sm:$0xff]
      %v288 = vld [vmem:[%s1 + $0x28] sm:$0xff]
      %v289 = vld [vmem:[%s1 + $0x30] sm:$0xff]
      %v290 = vld [vmem:[%s1 + $0x38] sm:$0xff]
      %v291 = vld [vmem:[%s2] sm:$0x3]
      %v293 = vlaneseq
      %v294 = vshrl.u32 %v293, 7
      %v295 = vsub.s32 0, %v294
      %v296 = vrot.slane %v291, %v295
      %v297 = vlaneseq
      %v298 = vshrl.u32 %v297, 7
      %v299 = vsub.s32 1, %v298
      %v300 = vrot.slane %v291, %v299
      %v311 = vunpack.c.l.b16 %v283
      %v312 = vunpack.c.h.b16 %v283
      %v313 = vunpack.c.l.b16 %v284
      %v314 = vunpack.c.h.b16 %v284
      %v315 = vunpack.c.l.b16 %v285
      %v316 = vunpack.c.h.b16 %v285
      %v317 = vunpack.c.l.b16 %v286
      %v318 = vunpack.c.h.b16 %v286
      %v319 = vunpack.c.l.b16 %v287
      %v320 = vunpack.c.h.b16 %v287
      %v321 = vunpack.c.l.b16 %v288
      %v322 = vunpack.c.h.b16 %v288
      %v323 = vunpack.c.l.b16 %v289
      %v324 = vunpack.c.h.b16 %v289
      %v325 = vunpack.c.l.b16 %v290
      %v326 = vunpack.c.h.b16 %v290
      %v327 = vpack.c.b16 %v313, %v311
      %v328 = vpack.c.b16 %v314, %v312
      %v329 = vpack.c.b16 %v317, %v315
      %v330 = vpack.c.b16 %v318, %v316
      %v331 = vpack.c.b16 %v321, %v319
      %v332 = vpack.c.b16 %v322, %v320
      %v333 = vpack.c.b16 %v325, %v323
      %v334 = vpack.c.b16 %v326, %v324
      %vm343 = vcmask 523264
      %v345 = vsel %vm343, %v282, 0
      %347 = vmatprep.subr.bf16.mxu0 0
      %348 = vmatpush1.bf16.msra.mxu0 0
      %349 = vmatprep.subr.bf16.mxu0 0
      %350 = vmatpush1.bf16.msra.mxu0 0
      %351 = vmatprep.subr.bf16.mxu0 0
      %352 = vmatpush1.bf16.msra.mxu0 0
      %353 = vmatprep.subr.bf16.mxu0 0
      %354 = vmatpush1.bf16.msra.mxu0 0
      %355 = vmatprep.subr.bf16.mxu0 %v334
      %356 = vmatpush1.bf16.msra.mxu0 %v333
      %357 = vmatprep.subr.bf16.mxu0 %v332
      %358 = vmatpush1.bf16.msra.mxu0 %v331
      %359 = vmatprep.subr.bf16.mxu0 %v330
      %360 = vmatpush1.bf16.msra.mxu0 %v329
      %361 = vmatprep.subr.bf16.mxu0 %v328
      %362 = vmatpush1.bf16.msra.mxu0 %v327
      %363 = vmatprep.subr.bf16.mxu0 0
      %364 = vmatpush2.bf16.msra.mxu0 0
      %365 = vmatprep.subr.bf16.mxu0 0
      %366 = vmatpush2.bf16.msra.mxu0 0
      %367 = vmatprep.subr.bf16.mxu0 0
      %368 = vmatpush2.bf16.msra.mxu0 0
      %369 = vmatprep.subr.bf16.mxu0 0
      %370 = vmatpush2.bf16.msra.mxu0 0
      %371 = vmatprep.subr.bf16.mxu0 0
      %372 = vmatpush2.bf16.msra.mxu0 0
      %373 = vmatprep.subr.bf16.mxu0 0
      %374 = vmatpush2.bf16.msra.mxu0 0
      %375 = vmatprep.subr.bf16.mxu0 0
      %376 = vmatpush2.bf16.msra.mxu0 0
      %377 = vmatprep.subr.bf16.mxu0 0
      %378 = vmatpush2.bf16.msra.mxu0 0
      %379 = vmatprep.mubr.bf16.mxu0 0
      %380 = vmatmul.mubr.bf16.gmra.mxu0 %v345
      %v381 = vpop.f32.mrf.mxu0
      %v382 = vadd.f32 %v296, %v381
      %v383 = vpop.f32.mrf.mxu0
      %v384 = vadd.f32 %v300, %v383
      %v385 = vpop.f32.mrf.mxu0
      %v386 = vadd.f32 %v296, %v385
      %v387 = vpop.f32.mrf.mxu0
      %v388 = vadd.f32 %v300, %v387
      %389 = vdwg.mxu0
      %v390 = vmul.f32 %v382, 0.25
      %v391 = vmul.f32 %v386, 0.25
      %v392 = vpack.c.bf16 %v391, %v390
      %v393 = vpack.c.bf16 %v386, %v382
      %395 = vrot.lane.b32.xlu0 %v393, 112
      %v396 = vpop.permute.xlu0 %395
      %vm397 = vcmask 130048
      %v399 = vsel %vm397, %v392, 0
      %v402 = vsel %vm397, %v396, 0
      %404 = vmatprep.subr.bf16.mxu0 0
      %405 = vmatpush1.bf16.xpose.msra.mxu0 0
      %406 = vmatprep.subr.bf16.mxu0 0
      %407 = vmatpush1.bf16.xpose.msra.mxu0 0
      %408 = vmatprep.subr.bf16.mxu0 0
      %409 = vmatpush1.bf16.xpose.msra.mxu0 0
      %410 = vmatprep.subr.bf16.mxu0 0
      %411 = vmatpush1.bf16.xpose.msra.mxu0 0
      %412 = vmatprep.subr.bf16.mxu0 0
      %413 = vmatpush1.bf16.xpose.msra.mxu0 0
      %414 = vmatprep.subr.bf16.mxu0 0
      %415 = vmatpush1.bf16.xpose.msra.mxu0 0
      %416 = vmatprep.subr.bf16.mxu0 0
      %417 = vmatpush1.bf16.xpose.msra.mxu0 0
      %418 = vmatprep.subr.bf16.mxu0 0
      %419 = vmatpush1.bf16.xpose.msra.mxu0 %v402
      %420 = vmatprep.subr.bf16.mxu0 0
      %421 = vmatpush2.bf16.xpose.msra.mxu0 0
      %422 = vmatprep.subr.bf16.mxu0 0
      %423 = vmatpush2.bf16.xpose.msra.mxu0 0
      %424 = vmatprep.subr.bf16.mxu0 0
      %425 = vmatpush2.bf16.xpose.msra.mxu0 0
      %426 = vmatprep.subr.bf16.mxu0 0
      %427 = vmatpush2.bf16.xpose.msra.mxu0 0
      %428 = vmatprep.subr.bf16.mxu0 0
      %429 = vmatpush2.bf16.xpose.msra.mxu0 0
      %430 = vmatprep.subr.bf16.mxu0 0
      %431 = vmatpush2.bf16.xpose.msra.mxu0 0
      %432 = vmatprep.subr.bf16.mxu0 0
      %433 = vmatpush2.bf16.xpose.msra.mxu0 0
      %434 = vmatprep.subr.bf16.mxu0 0
      %435 = vmatpush2.bf16.xpose.msra.mxu0 0
      %436 = vmatprep.mubr.bf16.mxu0 0
      %437 = vmatmul.mubr.bf16.gmra.mxu0 %v399
      %v438 = vpop.f32.mrf.mxu0
      %v439 = vadd.f32 0.0, %v438
      %v440 = vpop.f32.mrf.mxu0
      %v441 = vpop.f32.mrf.mxu0
      %v442 = vadd.f32 0.0, %v441
      %v443 = vpop.f32.mrf.mxu0
      %444 = vdwg.mxu0
      %vm445 = vcmask 121856
      %v446 = vsel %vm445, %v439, -inf
      %447 = vmax.xlane.f32.xlu0 %v446
      %v448 = vpop.xlane.xlu0 %447
      %vm449 = vcmask 120832
      %v450 = vsel %vm449, %v442, -inf
      %451 = vmax.xlane.f32.xlu0 %v450
      %v452 = vpop.xlane.xlu0 %451
      %v453 = vsub.f32 %v439, %v448
      %v454 = vsub.f32 %v442, %v452
      %v455 = vmul.f32 %v453, 1.442695
      %v456 = vpow.pop %v455
      %v457 = vmul.f32 %v454, 1.442695
      %v458 = vpow.pop %v457
      %v459 = vsel %vm445, %v456, 0.0
      %460 = vadd.xlane.f32.xlu0 %v459
      %v461 = vpop.xlane.xlu0 %460
      %v462 = vsel %vm449, %v458, 0.0
      %463 = vadd.xlane.f32.xlu0 %v462
      %v464 = vpop.xlane.xlu0 %463
      %v465 = vrcp.pop %v461
      %v466 = vrcp.pop %v464
      %v467 = vmul.f32 %v456, %v465
      %v468 = vmul.f32 %v458, %v466
      %v469 = vpack.c.bf16 %v468, %v467
      %470 = vrot.lane.b32.xlu0 %v393, 96
      %v471 = vpop.permute.xlu0 %470
      %v473 = vsel %vm445, %v469, 0
      %vm475 = vcmask 1046528
      %vm476 = vcmask 1047552
      %v477 = vsel %vm475, 4294967295, 65535
      %v478 = vsel %vm476, %v477, 0
      %v480 = vand.u32 %v471, %v478
      %482 = vmatprep.subr.bf16.mxu0 0
      %483 = vmatpush1.bf16.msra.mxu0 0
      %484 = vmatprep.subr.bf16.mxu0 0
      %485 = vmatpush1.bf16.msra.mxu0 0
      %486 = vmatprep.subr.bf16.mxu0 0
      %487 = vmatpush1.bf16.msra.mxu0 0
      %488 = vmatprep.subr.bf16.mxu0 0
      %489 = vmatpush1.bf16.msra.mxu0 0
      %490 = vmatprep.subr.bf16.mxu0 0
      %491 = vmatpush1.bf16.msra.mxu0 0
      %492 = vmatprep.subr.bf16.mxu0 0
      %493 = vmatpush1.bf16.msra.mxu0 0
      %494 = vmatprep.subr.bf16.mxu0 0
      %495 = vmatpush1.bf16.msra.mxu0 0
      %496 = vmatprep.subr.bf16.mxu0 0
      %497 = vmatpush1.bf16.msra.mxu0 %v480
      %498 = vmatprep.subr.bf16.mxu0 0
      %499 = vmatpush2.bf16.msra.mxu0 0
      %500 = vmatprep.subr.bf16.mxu0 0
      %501 = vmatpush2.bf16.msra.mxu0 0
      %502 = vmatprep.subr.bf16.mxu0 0
      %503 = vmatpush2.bf16.msra.mxu0 0
      %504 = vmatprep.subr.bf16.mxu0 0
      %505 = vmatpush2.bf16.msra.mxu0 0
      %506 = vmatprep.subr.bf16.mxu0 0
      %507 = vmatpush2.bf16.msra.mxu0 0
      %508 = vmatprep.subr.bf16.mxu0 0
      %509 = vmatpush2.bf16.msra.mxu0 0
      %510 = vmatprep.subr.bf16.mxu0 0
      %511 = vmatpush2.bf16.msra.mxu0 0
      %512 = vmatprep.subr.bf16.mxu0 0
      %513 = vmatpush2.bf16.msra.mxu0 0
      %514 = vmatprep.mubr.bf16.mxu0 0
      %515 = vmatmul.mubr.bf16.gmra.mxu0 %v473
      %v516 = vpop.f32.mrf.mxu0
      %v517 = vadd.f32 0.0, %v516
      %v518 = vpop.f32.mrf.mxu0
      %v519 = vpop.f32.mrf.mxu0
      %v520 = vadd.f32 0.0, %v519
      %v521 = vpop.f32.mrf.mxu0
      %522 = vdwg.mxu0
      %v523 = vpack.c.bf16 %v520, %v517
      %v524 = vld [vmem:[%s3] sm:$0xf]
      %v525 = vld [vmem:[%s3 + $0x4] sm:$0xf]
      %527 = vrot.lane.b32.xlu0 %v392, 80
      %v528 = vpop.permute.xlu0 %527
      %529 = vrot.lane.b32.xlu0 %v393, 64
      %v530 = vpop.permute.xlu0 %529
      %v532 = vsel %vm397, %v528, 0
      %v535 = vsel %vm397, %v530, 0
      %537 = vmatprep.subr.bf16.mxu0 0
      %538 = vmatpush1.bf16.xpose.msra.mxu0 0
      %539 = vmatprep.subr.bf16.mxu0 0
      %540 = vmatpush1.bf16.xpose.msra.mxu0 0
      %541 = vmatprep.subr.bf16.mxu0 0
      %542 = vmatpush1.bf16.xpose.msra.mxu0 0
      %543 = vmatprep.subr.bf16.mxu0 0
      %544 = vmatpush1.bf16.xpose.msra.mxu0 0
      %545 = vmatprep.subr.bf16.mxu0 0
      %546 = vmatpush1.bf16.xpose.msra.mxu0 0
      %547 = vmatprep.subr.bf16.mxu0 0
      %548 = vmatpush1.bf16.xpose.msra.mxu0 0
      %549 = vmatprep.subr.bf16.mxu0 0
      %550 = vmatpush1.bf16.xpose.msra.mxu0 0
      %551 = vmatprep.subr.bf16.mxu0 0
      %552 = vmatpush1.bf16.xpose.msra.mxu0 %v535
      %553 = vmatprep.subr.bf16.mxu0 0
      %554 = vmatpush2.bf16.xpose.msra.mxu0 0
      %555 = vmatprep.subr.bf16.mxu0 0
      %556 = vmatpush2.bf16.xpose.msra.mxu0 0
      %557 = vmatprep.subr.bf16.mxu0 0
      %558 = vmatpush2.bf16.xpose.msra.mxu0 0
      %559 = vmatprep.subr.bf16.mxu0 0
      %560 = vmatpush2.bf16.xpose.msra.mxu0 0
      %561 = vmatprep.subr.bf16.mxu0 0
      %562 = vmatpush2.bf16.xpose.msra.mxu0 0
      %563 = vmatprep.subr.bf16.mxu0 0
      %564 = vmatpush2.bf16.xpose.msra.mxu0 0
      %565 = vmatprep.subr.bf16.mxu0 0
      %566 = vmatpush2.bf16.xpose.msra.mxu0 0
      %567 = vmatprep.subr.bf16.mxu0 0
      %568 = vmatpush2.bf16.xpose.msra.mxu0 0
      %569 = vmatprep.mubr.bf16.mxu0 0
      %570 = vmatmul.mubr.bf16.gmra.mxu0 %v532
      %v571 = vpop.f32.mrf.mxu0
      %v572 = vadd.f32 0.0, %v571
      %v573 = vpop.f32.mrf.mxu0
      %v574 = vpop.f32.mrf.mxu0
      %v575 = vadd.f32 0.0, %v574
      %v576 = vpop.f32.mrf.mxu0
      %577 = vdwg.mxu0
      %v578 = vsel %vm445, %v572, -inf
      %579 = vmax.xlane.f32.xlu0 %v578
      %v580 = vpop.xlane.xlu0 %579
      %v581 = vsel %vm449, %v575, -inf
      %582 = vmax.xlane.f32.xlu0 %v581
      %v583 = vpop.xlane.xlu0 %582
      %v584 = vsub.f32 %v572, %v580
      %v585 = vsub.f32 %v575, %v583
      %v586 = vmul.f32 %v584, 1.442695
      %v587 = vpow.pop %v586
      %v588 = vmul.f32 %v585, 1.442695
      %v589 = vpow.pop %v588
      %v590 = vsel %vm445, %v587, 0.0
      %591 = vadd.xlane.f32.xlu0 %v590
      %v592 = vpop.xlane.xlu0 %591
      %v593 = vsel %vm449, %v589, 0.0
      %594 = vadd.xlane.f32.xlu0 %v593
      %v595 = vpop.xlane.xlu0 %594
      %v596 = vrcp.pop %v592
      %v597 = vrcp.pop %v595
      %v598 = vmul.f32 %v587, %v596
      %v599 = vmul.f32 %v589, %v597
      %v600 = vpack.c.bf16 %v599, %v598
      %601 = vrot.lane.b32.xlu0 %v393, 48
      %v602 = vpop.permute.xlu0 %601
      %v604 = vsel %vm445, %v600, 0
      %v607 = vand.u32 %v602, %v478
      %609 = vmatprep.subr.bf16.mxu0 0
      %610 = vmatpush1.bf16.msra.mxu0 0
      %611 = vmatprep.subr.bf16.mxu0 0
      %612 = vmatpush1.bf16.msra.mxu0 0
      %613 = vmatprep.subr.bf16.mxu0 0
      %614 = vmatpush1.bf16.msra.mxu0 0
      %615 = vmatprep.subr.bf16.mxu0 0
      %616 = vmatpush1.bf16.msra.mxu0 0
      %617 = vmatprep.subr.bf16.mxu0 0
      %618 = vmatpush1.bf16.msra.mxu0 0
      %619 = vmatprep.subr.bf16.mxu0 0
      %620 = vmatpush1.bf16.msra.mxu0 0
      %621 = vmatprep.subr.bf16.mxu0 0
      %622 = vmatpush1.bf16.msra.mxu0 0
      %623 = vmatprep.subr.bf16.mxu0 0
      %624 = vmatpush1.bf16.msra.mxu0 %v607
      %625 = vmatprep.subr.bf16.mxu0 0
      %626 = vmatpush2.bf16.msra.mxu0 0
      %627 = vmatprep.subr.bf16.mxu0 0
      %628 = vmatpush2.bf16.msra.mxu0 0
      %629 = vmatprep.subr.bf16.mxu0 0
      %630 = vmatpush2.bf16.msra.mxu0 0
      %631 = vmatprep.subr.bf16.mxu0 0
      %632 = vmatpush2.bf16.msra.mxu0 0
      %633 = vmatprep.subr.bf16.mxu0 0
      %634 = vmatpush2.bf16.msra.mxu0 0
      %635 = vmatprep.subr.bf16.mxu0 0
      %636 = vmatpush2.bf16.msra.mxu0 0
      %637 = vmatprep.subr.bf16.mxu0 0
      %638 = vmatpush2.bf16.msra.mxu0 0
      %639 = vmatprep.subr.bf16.mxu0 0
      %640 = vmatpush2.bf16.msra.mxu0 0
      %641 = vmatprep.mubr.bf16.mxu0 0
      %642 = vmatmul.mubr.bf16.gmra.mxu0 %v604
      %v643 = vpop.f32.mrf.mxu0
      %v644 = vadd.f32 0.0, %v643
      %v645 = vpop.f32.mrf.mxu0
      %v646 = vpop.f32.mrf.mxu0
      %v647 = vadd.f32 0.0, %v646
      %v648 = vpop.f32.mrf.mxu0
      %649 = vdwg.mxu0
      %v650 = vpack.c.bf16 %v647, %v644
      %v651 = vld [vmem:[%s3 + $0x8] sm:$0xf]
      %v652 = vld [vmem:[%s3 + $0xc] sm:$0xf]
      %v655 = vunpack.c.l.b16 %v651
      %v656 = vunpack.c.l.b16 %v652
      %v657 = vpack.c.b16 %v656, %v655
      %v660 = vsel %vm397, %v650, 0
      %662 = vmatprep.subr.bf16.mxu0 0
      %663 = vmatpush1.bf16.msra.mxu0 0
      %664 = vmatprep.subr.bf16.mxu0 0
      %665 = vmatpush1.bf16.msra.mxu0 0
      %666 = vmatprep.subr.bf16.mxu0 0
      %667 = vmatpush1.bf16.msra.mxu0 0
      %668 = vmatprep.subr.bf16.mxu0 0
      %669 = vmatpush1.bf16.msra.mxu0 0
      %670 = vmatprep.subr.bf16.mxu0 0
      %671 = vmatpush1.bf16.msra.mxu0 0
      %672 = vmatprep.subr.bf16.mxu0 0
      %673 = vmatpush1.bf16.msra.mxu0 0
      %674 = vmatprep.subr.bf16.mxu0 0
      %675 = vmatpush1.bf16.msra.mxu0 0
      %676 = vmatprep.subr.bf16.mxu0 0
      %677 = vmatpush1.bf16.msra.mxu0 %v657
      %678 = vmatprep.subr.bf16.mxu0 0
      %679 = vmatpush2.bf16.msra.mxu0 0
      %680 = vmatprep.subr.bf16.mxu0 0
      %681 = vmatpush2.bf16.msra.mxu0 0
      %682 = vmatprep.subr.bf16.mxu0 0
      %683 = vmatpush2.bf16.msra.mxu0 0
      %684 = vmatprep.subr.bf16.mxu0 0
      %685 = vmatpush2.bf16.msra.mxu0 0
      %686 = vmatprep.subr.bf16.mxu0 0
      %687 = vmatpush2.bf16.msra.mxu0 0
      %688 = vmatprep.subr.bf16.mxu0 0
      %689 = vmatpush2.bf16.msra.mxu0 0
      %690 = vmatprep.subr.bf16.mxu0 0
      %691 = vmatpush2.bf16.msra.mxu0 0
      %692 = vmatprep.subr.bf16.mxu0 0
      %693 = vmatpush2.bf16.msra.mxu0 0
      %694 = vmatprep.mubr.bf16.mxu0 0
      %695 = vmatmul.mubr.bf16.gmra.mxu0 %v660
      %v696 = vpop.f32.mrf.mxu0
      %v697 = vadd.f32 0.0, %v696
      %v698 = vpop.f32.mrf.mxu0
      %v699 = vpop.f32.mrf.mxu0
      %v700 = vadd.f32 0.0, %v699
      %v701 = vpop.f32.mrf.mxu0
      %702 = vdwg.mxu0
      %v705 = vunpack.c.l.b16 %v524
      %v706 = vunpack.c.l.b16 %v525
      %v707 = vpack.c.b16 %v706, %v705
      %v710 = vsel %vm397, %v523, 0
      %712 = vmatprep.subr.bf16.mxu0 0
      %713 = vmatpush1.bf16.msra.mxu0 0
      %714 = vmatprep.subr.bf16.mxu0 0
      %715 = vmatpush1.bf16.msra.mxu0 0
      %716 = vmatprep.subr.bf16.mxu0 0
      %717 = vmatpush1.bf16.msra.mxu0 0
      %718 = vmatprep.subr.bf16.mxu0 0
      %719 = vmatpush1.bf16.msra.mxu0 0
      %720 = vmatprep.subr.bf16.mxu0 0
      %721 = vmatpush1.bf16.msra.mxu0 0
      %722 = vmatprep.subr.bf16.mxu0 0
      %723 = vmatpush1.bf16.msra.mxu0 0
      %724 = vmatprep.subr.bf16.mxu0 0
      %725 = vmatpush1.bf16.msra.mxu0 0
      %726 = vmatprep.subr.bf16.mxu0 0
      %727 = vmatpush1.bf16.msra.mxu0 %v707
      %728 = vmatprep.subr.bf16.mxu0 0
      %729 = vmatpush2.bf16.msra.mxu0 0
      %730 = vmatprep.subr.bf16.mxu0 0
      %731 = vmatpush2.bf16.msra.mxu0 0
      %732 = vmatprep.subr.bf16.mxu0 0
      %733 = vmatpush2.bf16.msra.mxu0 0
      %734 = vmatprep.subr.bf16.mxu0 0
      %735 = vmatpush2.bf16.msra.mxu0 0
      %736 = vmatprep.subr.bf16.mxu0 0
      %737 = vmatpush2.bf16.msra.mxu0 0
      %738 = vmatprep.subr.bf16.mxu0 0
      %739 = vmatpush2.bf16.msra.mxu0 0
      %740 = vmatprep.subr.bf16.mxu0 0
      %741 = vmatpush2.bf16.msra.mxu0 0
      %742 = vmatprep.subr.bf16.mxu0 0
      %743 = vmatpush2.bf16.msra.mxu0 0
      %744 = vmatprep.mubr.bf16.mxu0 0
      %745 = vmatmul.mubr.bf16.gmra.mxu0 %v710
      %v746 = vpop.f32.mrf.mxu0
      %v747 = vadd.f32 %v697, %v746
      %v748 = vpop.f32.mrf.mxu0
      %v749 = vpop.f32.mrf.mxu0
      %v750 = vadd.f32 %v700, %v749
      %v751 = vpop.f32.mrf.mxu0
      %752 = vdwg.mxu0
      %v753 = vpack.c.bf16 %v388, %v384
      %754 = vrot.lane.b32.xlu0 %v392, 32
      %v755 = vpop.permute.xlu0 %754
      %756 = vrot.lane.b32.xlu0 %v393, 16
      %v757 = vpop.permute.xlu0 %756
      %v759 = vsel %vm397, %v755, 0
      %v762 = vsel %vm397, %v757, 0
      %764 = vmatprep.subr.bf16.mxu0 0
      %765 = vmatpush1.bf16.xpose.msra.mxu0 0
      %766 = vmatprep.subr.bf16.mxu0 0
      %767 = vmatpush1.bf16.xpose.msra.mxu0 0
      %768 = vmatprep.subr.bf16.mxu0 0
      %769 = vmatpush1.bf16.xpose.msra.mxu0 0
      %770 = vmatprep.subr.bf16.mxu0 0
      %771 = vmatpush1.bf16.xpose.msra.mxu0 0
      %772 = vmatprep.subr.bf16.mxu0 0
      %773 = vmatpush1.bf16.xpose.msra.mxu0 0
      %774 = vmatprep.subr.bf16.mxu0 0
      %775 = vmatpush1.bf16.xpose.msra.mxu0 0
      %776 = vmatprep.subr.bf16.mxu0 0
      %777 = vmatpush1.bf16.xpose.msra.mxu0 0
      %778 = vmatprep.subr.bf16.mxu0 0
      %779 = vmatpush1.bf16.xpose.msra.mxu0 %v762
      %780 = vmatprep.subr.bf16.mxu0 0
      %781 = vmatpush2.bf16.xpose.msra.mxu0 0
      %782 = vmatprep.subr.bf16.mxu0 0
      %783 = vmatpush2.bf16.xpose.msra.mxu0 0
      %784 = vmatprep.subr.bf16.mxu0 0
      %785 = vmatpush2.bf16.xpose.msra.mxu0 0
      %786 = vmatprep.subr.bf16.mxu0 0
      %787 = vmatpush2.bf16.xpose.msra.mxu0 0
      %788 = vmatprep.subr.bf16.mxu0 0
      %789 = vmatpush2.bf16.xpose.msra.mxu0 0
      %790 = vmatprep.subr.bf16.mxu0 0
      %791 = vmatpush2.bf16.xpose.msra.mxu0 0
      %792 = vmatprep.subr.bf16.mxu0 0
      %793 = vmatpush2.bf16.xpose.msra.mxu0 0
      %794 = vmatprep.subr.bf16.mxu0 0
      %795 = vmatpush2.bf16.xpose.msra.mxu0 0
      %796 = vmatprep.mubr.bf16.mxu0 0
      %797 = vmatmul.mubr.bf16.gmra.mxu0 %v759
      %v798 = vpop.f32.mrf.mxu0
      %v799 = vadd.f32 0.0, %v798
      %v800 = vpop.f32.mrf.mxu0
      %v801 = vpop.f32.mrf.mxu0
      %v802 = vadd.f32 0.0, %v801
      %v803 = vpop.f32.mrf.mxu0
      %804 = vdwg.mxu0
      %v805 = vsel %vm445, %v799, -inf
      %806 = vmax.xlane.f32.xlu0 %v805
      %v807 = vpop.xlane.xlu0 %806
      %v808 = vsel %vm449, %v802, -inf
      %809 = vmax.xlane.f32.xlu0 %v808
      %v810 = vpop.xlane.xlu0 %809
      %v811 = vsub.f32 %v799, %v807
      %v812 = vsub.f32 %v802, %v810
      %v813 = vmul.f32 %v811, 1.442695
      %v814 = vpow.pop %v813
      %v815 = vmul.f32 %v812, 1.442695
      %v816 = vpow.pop %v815
      %v817 = vsel %vm445, %v814, 0.0
      %818 = vadd.xlane.f32.xlu0 %v817
      %v819 = vpop.xlane.xlu0 %818
      %v820 = vsel %vm449, %v816, 0.0
      %821 = vadd.xlane.f32.xlu0 %v820
      %v822 = vpop.xlane.xlu0 %821
      %v823 = vrcp.pop %v819
      %v824 = vrcp.pop %v822
      %v825 = vmul.f32 %v814, %v823
      %v826 = vmul.f32 %v816, %v824
      %v827 = vpack.c.bf16 %v826, %v825
      %v829 = vsel %vm445, %v827, 0
      %v832 = vand.u32 %v753, %v478
      %834 = vmatprep.subr.bf16.mxu0 0
      %835 = vmatpush1.bf16.msra.mxu0 0
      %836 = vmatprep.subr.bf16.mxu0 0
      %837 = vmatpush1.bf16.msra.mxu0 0
      %838 = vmatprep.subr.bf16.mxu0 0
      %839 = vmatpush1.bf16.msra.mxu0 0
      %840 = vmatprep.subr.bf16.mxu0 0
      %841 = vmatpush1.bf16.msra.mxu0 0
      %842 = vmatprep.subr.bf16.mxu0 0
      %843 = vmatpush1.bf16.msra.mxu0 0
      %844 = vmatprep.subr.bf16.mxu0 0
      %845 = vmatpush1.bf16.msra.mxu0 0
      %846 = vmatprep.subr.bf16.mxu0 0
      %847 = vmatpush1.bf16.msra.mxu0 0
      %848 = vmatprep.subr.bf16.mxu0 0
      %849 = vmatpush1.bf16.msra.mxu0 %v832
      %850 = vmatprep.subr.bf16.mxu0 0
      %851 = vmatpush2.bf16.msra.mxu0 0
      %852 = vmatprep.subr.bf16.mxu0 0
      %853 = vmatpush2.bf16.msra.mxu0 0
      %854 = vmatprep.subr.bf16.mxu0 0
      %855 = vmatpush2.bf16.msra.mxu0 0
      %856 = vmatprep.subr.bf16.mxu0 0
      %857 = vmatpush2.bf16.msra.mxu0 0
      %858 = vmatprep.subr.bf16.mxu0 0
      %859 = vmatpush2.bf16.msra.mxu0 0
      %860 = vmatprep.subr.bf16.mxu0 0
      %861 = vmatpush2.bf16.msra.mxu0 0
      %862 = vmatprep.subr.bf16.mxu0 0
      %863 = vmatpush2.bf16.msra.mxu0 0
      %864 = vmatprep.subr.bf16.mxu0 0
      %865 = vmatpush2.bf16.msra.mxu0 0
      %866 = vmatprep.mubr.bf16.mxu0 0
      %867 = vmatmul.mubr.bf16.gmra.mxu0 %v829
      %v868 = vpop.f32.mrf.mxu0
      %v869 = vadd.f32 0.0, %v868
      %v870 = vpop.f32.mrf.mxu0
      %v871 = vpop.f32.mrf.mxu0
      %v872 = vadd.f32 0.0, %v871
      %v873 = vpop.f32.mrf.mxu0
      %874 = vdwg.mxu0
      %v875 = vpack.c.bf16 %v872, %v869
      %v876 = vld [vmem:[%s3 + $0x10] sm:$0xf]
      %v877 = vld [vmem:[%s3 + $0x14] sm:$0xf]
      %v880 = vunpack.c.l.b16 %v876
      %v881 = vunpack.c.l.b16 %v877
      %v882 = vpack.c.b16 %v881, %v880
      %v885 = vsel %vm397, %v875, 0
      %887 = vmatprep.subr.bf16.mxu0 0
      %888 = vmatpush1.bf16.msra.mxu0 0
      %889 = vmatprep.subr.bf16.mxu0 0
      %890 = vmatpush1.bf16.msra.mxu0 0
      %891 = vmatprep.subr.bf16.mxu0 0
      %892 = vmatpush1.bf16.msra.mxu0 0
      %893 = vmatprep.subr.bf16.mxu0 0
      %894 = vmatpush1.bf16.msra.mxu0 0
      %895 = vmatprep.subr.bf16.mxu0 0
      %896 = vmatpush1.bf16.msra.mxu0 0
      %897 = vmatprep.subr.bf16.mxu0 0
      %898 = vmatpush1.bf16.msra.mxu0 0
      %899 = vmatprep.subr.bf16.mxu0 0
      %900 = vmatpush1.bf16.msra.mxu0 0
      %901 = vmatprep.subr.bf16.mxu0 0
      %902 = vmatpush1.bf16.msra.mxu0 %v882
      %903 = vmatprep.subr.bf16.mxu0 0
      %904 = vmatpush2.bf16.msra.mxu0 0
      %905 = vmatprep.subr.bf16.mxu0 0
      %906 = vmatpush2.bf16.msra.mxu0 0
      %907 = vmatprep.subr.bf16.mxu0 0
      %908 = vmatpush2.bf16.msra.mxu0 0
      %909 = vmatprep.subr.bf16.mxu0 0
      %910 = vmatpush2.bf16.msra.mxu0 0
      %911 = vmatprep.subr.bf16.mxu0 0
      %912 = vmatpush2.bf16.msra.mxu0 0
      %913 = vmatprep.subr.bf16.mxu0 0
      %914 = vmatpush2.bf16.msra.mxu0 0
      %915 = vmatprep.subr.bf16.mxu0 0
      %916 = vmatpush2.bf16.msra.mxu0 0
      %917 = vmatprep.subr.bf16.mxu0 0
      %918 = vmatpush2.bf16.msra.mxu0 0
      %919 = vmatprep.mubr.bf16.mxu0 0
      %920 = vmatmul.mubr.bf16.gmra.mxu0 %v885
      %v921 = vpop.f32.mrf.mxu0
      %v922 = vadd.f32 0.0, %v921
      %v923 = vpop.f32.mrf.mxu0
      %v924 = vpop.f32.mrf.mxu0
      %v925 = vadd.f32 0.0, %v924
      %v926 = vpop.f32.mrf.mxu0
      %927 = vdwg.mxu0
      %v928 = vadd.f32 %v747, %v922
      %v929 = vadd.f32 %v750, %v925
      %v930 = vmul.f32 %v384, 0.25
      %v931 = vmul.f32 %v388, 0.25
      %v932 = vpack.c.bf16 %v931, %v930
      %934 = vrot.lane.b32.xlu0 %v932, 112
      %v935 = vpop.permute.xlu0 %934
      %937 = vrot.lane.b32.xlu0 %v753, 96
      %v938 = vpop.permute.xlu0 %937
      %v940 = vsel %vm397, %v935, 0
      %v943 = vsel %vm397, %v938, 0
      %945 = vmatprep.subr.bf16.mxu0 0
      %946 = vmatpush1.bf16.xpose.msra.mxu0 0
      %947 = vmatprep.subr.bf16.mxu0 0
      %948 = vmatpush1.bf16.xpose.msra.mxu0 0
      %949 = vmatprep.subr.bf16.mxu0 0
      %950 = vmatpush1.bf16.xpose.msra.mxu0 0
      %951 = vmatprep.subr.bf16.mxu0 0
      %952 = vmatpush1.bf16.xpose.msra.mxu0 0
      %953 = vmatprep.subr.bf16.mxu0 0
      %954 = vmatpush1.bf16.xpose.msra.mxu0 0
      %955 = vmatprep.subr.bf16.mxu0 0
      %956 = vmatpush1.bf16.xpose.msra.mxu0 0
      %957 = vmatprep.subr.bf16.mxu0 0
      %958 = vmatpush1.bf16.xpose.msra.mxu0 0
      %959 = vmatprep.subr.bf16.mxu0 0
      %960 = vmatpush1.bf16.xpose.msra.mxu0 %v943
      %961 = vmatprep.subr.bf16.mxu0 0
      %962 = vmatpush2.bf16.xpose.msra.mxu0 0
      %963 = vmatprep.subr.bf16.mxu0 0
      %964 = vmatpush2.bf16.xpose.msra.mxu0 0
      %965 = vmatprep.subr.bf16.mxu0 0
      %966 = vmatpush2.bf16.xpose.msra.mxu0 0
      %967 = vmatprep.subr.bf16.mxu0 0
      %968 = vmatpush2.bf16.xpose.msra.mxu0 0
      %969 = vmatprep.subr.bf16.mxu0 0
      %970 = vmatpush2.bf16.xpose.msra.mxu0 0
      %971 = vmatprep.subr.bf16.mxu0 0
      %972 = vmatpush2.bf16.xpose.msra.mxu0 0
      %973 = vmatprep.subr.bf16.mxu0 0
      %974 = vmatpush2.bf16.xpose.msra.mxu0 0
      %975 = vmatprep.subr.bf16.mxu0 0
      %976 = vmatpush2.bf16.xpose.msra.mxu0 0
      %977 = vmatprep.mubr.bf16.mxu0 0
      %978 = vmatmul.mubr.bf16.gmra.mxu0 %v940
      %v979 = vpop.f32.mrf.mxu0
      %v980 = vadd.f32 0.0, %v979
      %v981 = vpop.f32.mrf.mxu0
      %v982 = vpop.f32.mrf.mxu0
      %v983 = vadd.f32 0.0, %v982
      %v984 = vpop.f32.mrf.mxu0
      %985 = vdwg.mxu0
      %v986 = vsel %vm445, %v980, -inf
      %987 = vmax.xlane.f32.xlu0 %v986
      %v988 = vpop.xlane.xlu0 %987
      %v989 = vsel %vm449, %v983, -inf
      %990 = vmax.xlane.f32.xlu0 %v989
      %v991 = vpop.xlane.xlu0 %990
      %v992 = vsub.f32 %v980, %v988
      %v993 = vsub.f32 %v983, %v991
      %v994 = vmul.f32 %v992, 1.442695
      %v995 = vpow.pop %v994
      %v996 = vmul.f32 %v993, 1.442695
      %v997 = vpow.pop %v996
      %v998 = vsel %vm445, %v995, 0.0
      %999 = vadd.xlane.f32.xlu0 %v998
      %v1000 = vpop.xlane.xlu0 %999
      %v1001 = vsel %vm449, %v997, 0.0
      %1002 = vadd.xlane.f32.xlu0 %v1001
      %v1003 = vpop.xlane.xlu0 %1002
      %v1004 = vrcp.pop %v1000
      %v1005 = vrcp.pop %v1003
      %v1006 = vmul.f32 %v995, %v1004
      %v1007 = vmul.f32 %v997, %v1005
      %v1008 = vpack.c.bf16 %v1007, %v1006
      %1009 = vrot.lane.b32.xlu0 %v753, 80
      %v1010 = vpop.permute.xlu0 %1009
      %v1012 = vsel %vm445, %v1008, 0
      %v1015 = vand.u32 %v1010, %v478
      %1017 = vmatprep.subr.bf16.mxu0 0
      %1018 = vmatpush1.bf16.msra.mxu0 0
      %1019 = vmatprep.subr.bf16.mxu0 0
      %1020 = vmatpush1.bf16.msra.mxu0 0
      %1021 = vmatprep.subr.bf16.mxu0 0
      %1022 = vmatpush1.bf16.msra.mxu0 0
      %1023 = vmatprep.subr.bf16.mxu0 0
      %1024 = vmatpush1.bf16.msra.mxu0 0
      %1025 = vmatprep.subr.bf16.mxu0 0
      %1026 = vmatpush1.bf16.msra.mxu0 0
      %1027 = vmatprep.subr.bf16.mxu0 0
      %1028 = vmatpush1.bf16.msra.mxu0 0
      %1029 = vmatprep.subr.bf16.mxu0 0
      %1030 = vmatpush1.bf16.msra.mxu0 0
      %1031 = vmatprep.subr.bf16.mxu0 0
      %1032 = vmatpush1.bf16.msra.mxu0 %v1015
      %1033 = vmatprep.subr.bf16.mxu0 0
      %1034 = vmatpush2.bf16.msra.mxu0 0
      %1035 = vmatprep.subr.bf16.mxu0 0
      %1036 = vmatpush2.bf16.msra.mxu0 0
      %1037 = vmatprep.subr.bf16.mxu0 0
      %1038 = vmatpush2.bf16.msra.mxu0 0
      %1039 = vmatprep.subr.bf16.mxu0 0
      %1040 = vmatpush2.bf16.msra.mxu0 0
      %1041 = vmatprep.subr.bf16.mxu0 0
      %1042 = vmatpush2.bf16.msra.mxu0 0
      %1043 = vmatprep.subr.bf16.mxu0 0
      %1044 = vmatpush2.bf16.msra.mxu0 0
      %1045 = vmatprep.subr.bf16.mxu0 0
      %1046 = vmatpush2.bf16.msra.mxu0 0
      %1047 = vmatprep.subr.bf16.mxu0 0
      %1048 = vmatpush2.bf16.msra.mxu0 0
      %1049 = vmatprep.mubr.bf16.mxu0 0
      %1050 = vmatmul.mubr.bf16.gmra.mxu0 %v1012
      %v1051 = vpop.f32.mrf.mxu0
      %v1052 = vadd.f32 0.0, %v1051
      %v1053 = vpop.f32.mrf.mxu0
      %v1054 = vpop.f32.mrf.mxu0
      %v1055 = vadd.f32 0.0, %v1054
      %v1056 = vpop.f32.mrf.mxu0
      %1057 = vdwg.mxu0
      %v1058 = vpack.c.bf16 %v1055, %v1052
      %v1059 = vld [vmem:[%s3 + $0x18] sm:$0xf]
      %v1060 = vld [vmem:[%s3 + $0x1c] sm:$0xf]
      %v1063 = vunpack.c.l.b16 %v1059
      %v1064 = vunpack.c.l.b16 %v1060
      %v1065 = vpack.c.b16 %v1064, %v1063
      %v1068 = vsel %vm397, %v1058, 0
      %1070 = vmatprep.subr.bf16.mxu0 0
      %1071 = vmatpush1.bf16.msra.mxu0 0
      %1072 = vmatprep.subr.bf16.mxu0 0
      %1073 = vmatpush1.bf16.msra.mxu0 0
      %1074 = vmatprep.subr.bf16.mxu0 0
      %1075 = vmatpush1.bf16.msra.mxu0 0
      %1076 = vmatprep.subr.bf16.mxu0 0
      %1077 = vmatpush1.bf16.msra.mxu0 0
      %1078 = vmatprep.subr.bf16.mxu0 0
      %1079 = vmatpush1.bf16.msra.mxu0 0
      %1080 = vmatprep.subr.bf16.mxu0 0
      %1081 = vmatpush1.bf16.msra.mxu0 0
      %1082 = vmatprep.subr.bf16.mxu0 0
      %1083 = vmatpush1.bf16.msra.mxu0 0
      %1084 = vmatprep.subr.bf16.mxu0 0
      %1085 = vmatpush1.bf16.msra.mxu0 %v1065
      %1086 = vmatprep.subr.bf16.mxu0 0
      %1087 = vmatpush2.bf16.msra.mxu0 0
      %1088 = vmatprep.subr.bf16.mxu0 0
      %1089 = vmatpush2.bf16.msra.mxu0 0
      %1090 = vmatprep.subr.bf16.mxu0 0
      %1091 = vmatpush2.bf16.msra.mxu0 0
      %1092 = vmatprep.subr.bf16.mxu0 0
      %1093 = vmatpush2.bf16.msra.mxu0 0
      %1094 = vmatprep.subr.bf16.mxu0 0
      %1095 = vmatpush2.bf16.msra.mxu0 0
      %1096 = vmatprep.subr.bf16.mxu0 0
      %1097 = vmatpush2.bf16.msra.mxu0 0
      %1098 = vmatprep.subr.bf16.mxu0 0
      %1099 = vmatpush2.bf16.msra.mxu0 0
      %1100 = vmatprep.subr.bf16.mxu0 0
      %1101 = vmatpush2.bf16.msra.mxu0 0
      %1102 = vmatprep.mubr.bf16.mxu0 0
      %1103 = vmatmul.mubr.bf16.gmra.mxu0 %v1068
      %v1104 = vpop.f32.mrf.mxu0
      %v1105 = vadd.f32 0.0, %v1104
      %v1106 = vpop.f32.mrf.mxu0
      %v1107 = vpop.f32.mrf.mxu0
      %v1108 = vadd.f32 0.0, %v1107
      %v1109 = vpop.f32.mrf.mxu0
      %1110 = vdwg.mxu0
      %v1111 = vadd.f32 %v928, %v1105
      %v1112 = vadd.f32 %v929, %v1108
      %v1113 = vld [vmem:[%s4] sm:$0x1]
      %v1115 = vlaneseq
      %v1116 = vshrl.u32 %v1115, 7
      %v1117 = vsub.s32 0, %v1116
      %v1118 = vrot.slane %v1113, %v1117
      %v1120 = vadd.f32 %v1111, %v1118
      %v1121 = vadd.f32 %v1112, %v1118
      %v1122 = vadd.f32 %v1120, %v280
      %v1123 = vadd.f32 %v1121, %v281
      %v1124 = vld [vmem:[%s5] sm:$0x1]
      %v1125 = vld [vmem:[%s6] sm:$0x1]
      %v1126 = vsel %vm343, %v1122, 0.0
      %1127 = vadd.xlane.f32.xlu0 %v1126
      %v1128 = vpop.xlane.xlu0 %1127
      %vm1129 = vcmask 522240
      %v1130 = vsel %vm1129, %v1123, 0.0
      %1131 = vadd.xlane.f32.xlu0 %v1130
      %v1132 = vpop.xlane.xlu0 %1131
      %v1133 = vrcp.pop 64.0
      %v1134 = vmul.f32 %v1128, %v1133
      %v1135 = vmul.f32 %v1132, %v1133
      %v1136 = vsub.f32 %v1122, %v1134
      %v1137 = vsub.f32 %v1123, %v1135
      %v1138 = vmul.f32 %v1136, %v1136
      %v1139 = vmul.f32 %v1137, %v1137
      %v1140 = vsel %vm343, %v1138, 0.0
      %1141 = vadd.xlane.f32.xlu0 %v1140
      %v1142 = vpop.xlane.xlu0 %1141
      %v1143 = vsel %vm1129, %v1139, 0.0
      %1144 = vadd.xlane.f32.xlu0 %v1143
      %v1145 = vpop.xlane.xlu0 %1144
      %v1146 = vmul.f32 %v1142, %v1133
      %v1147 = vmul.f32 %v1145, %v1133
      %v1148 = vadd.f32 %v1146, 1e-05
      %v1149 = vadd.f32 %v1147, 1e-05
      %v1150 = vrsqrt.pop %v1148
      %v1151 = vrsqrt.pop %v1149
      %v1152 = vmul.f32 %v1136, %v1150
      %v1153 = vmul.f32 %v1137, %v1151
      %v1155 = vlaneseq
      %v1156 = vshrl.u32 %v1155, 7
      %v1157 = vsub.s32 0, %v1156
      %v1158 = vrot.slane %v1124, %v1157
      %v1160 = vmul.f32 %v1152, %v1158
      %v1161 = vmul.f32 %v1153, %v1158
      %v1163 = vlaneseq
      %v1164 = vshrl.u32 %v1163, 7
      %v1165 = vsub.s32 0, %v1164
      %v1166 = vrot.slane %v1125, %v1165
      %v1168 = vadd.f32 %v1160, %v1166
      %v1169 = vadd.f32 %v1161, %v1166
      %1170 = vst.msk [vmem:[%s278] sm:$0xff] %vm343, %v1168
      %1171 = vst.msk [vmem:[%s278 + $0x8] sm:$0x7f] %vm1129, %v1169
      %p1172 = scmp.lt.s32.totalorder %s18, 1
      %s1173 = scalar_select %p1172, %s18, 1
      %s1174 = smul.addr %s1173, 2
      %s1175 = smul.addr %s1174, 8
      %s1176 = scalar_lea.vmem %s7, %s1175
      // Predicated region
      $region49: #{forward.15} parent=47 // pred_check
        %p1177 = pneg %p188
      $region50: #{forward.15} parent=47 // pred_check_branch
        %1179 = sbr.rel (%p1177) target = $region52
      $region51: #{forward.15} parent=47 // pred_region
        _
      $region52: #{forward.15} parent=47 // pred_fallthru
        _
    $region48: #{forward.15} parent=5 // pred_fallthru
      _
    %p1180 = scmp.le.s32.totalorder 2, %s13
    // Predicated region
    $region53: #{forward.15} parent=5 // pred_check
      %p1181 = pneg %p1180
    $region54: #{forward.15} parent=5 // pred_check_branch
      %1183 = sbr.rel (%p1181) target = $region56
    $region55: #{forward.15} parent=5 // pred_region
      %s1184 = ssub.s32 %s13, 2
      // Predicated region
      $region57: #{forward.15} parent=55 // pred_check
        %p1185 = pneg %p194
      $region58: #{forward.15} parent=55 // pred_check_branch
        %1187 = sbr.rel (%p1185) target = $region60
      $region59: #{forward.15} parent=55 // pred_region
        %p1188 = scmp.lt.s32.totalorder %s19, 1
        %s1189 = scalar_select %p1188, %s19, 1
        %s1190 = smul.addr %s1189, 2
        %s1191 = smul.addr %s1190, 8
        %s1192 = scalar_lea.vmem %s7, %s1191
      $region60: #{forward.15} parent=55 // pred_fallthru
        _
    $region56: #{forward.15} parent=5 // pred_fallthru
      _
  $region6: #{forward.15} parent=0 // loop_footer
    %s17 = sadd.s32 1, %s13
  $region7: #{forward.15} parent=0 // loop_footer_branch
    %12 = sbr.rel target = $region3
  $region8: #{forward.15} parent=0 // loop_exit
    _

// kernel: forward.14
$region0: #{forward.14}
  #allocation0 [shape = 'u32[]', space=smem, size = 0x4, offset = 0x4, fixed_abs, tag = 'smem constant byte address 0x4 - core index']
  #allocation1 [shape = 'u32[144,128]{1,0:T(1,128)}', space=vmem, size = 0x12000, scoped, tag = 'internal scratch']
  %s0 = inlined_call_operand.vmem [shape: f32[2,23,64], index: 0, kind: input, shape index: {}]
  %s1 = inlined_call_operand.vmem [shape: bf16[8,4,16,16], index: 1, kind: input, shape index: {}]
  %s2 = inlined_call_operand.vmem [shape: f32[1,64], index: 2, kind: input, shape index: {}]
  %s3 = inlined_call_operand.vmem [shape: f32[1,64], index: 3, kind: input, shape index: {}]
  %s4 = inlined_call_operand.vmem [shape: f32[1,64], index: 4, kind: input, shape index: {}]
  %s5 = inlined_call_operand.vmem [shape: f32[2,15,64], index: 5, kind: output, shape index: {}]
  %s6 = sld [smem:[#allocation0]]
  $region53: #{forward.14} parent=0
    _
  %s8 = ssub.s32 1, %s6
  %s9 = scalar_select 0, %s8, %s6
  loop: start=0, step=1, limit=4
  $region2: #{forward.14} parent=0 // loop_pre_header
    _
  $region3: #{forward.14} parent=0 // loop_header
    %s11 = sphi 0, %s15
    %p12 = scmp.ge.s32.totalorder %s11, 4
    %s21 = sphi 0, %s23
    %s24 = sphi 0, %s21
    %s25 = sphi 0, %s24
    %s41 = sphi 0, %s25
    %s45 = sphi 0, %s45
    %s47 = sphi 0, %s45
    %s48 = sphi 0, %s47
    %s62 = sphi 0, %s48
    %s66 = sphi 0, %s66
    %s68 = sphi 0, %s66
    %s69 = sphi 0, %s68
    %s83 = sphi 0, %s69
    %s87 = sphi 0, %s87
    %s89 = sphi 0, %s87
    %s90 = sphi 0, %s89
    %s104 = sphi 0, %s90
    %s108 = sphi 0, %s108
    %s110 = sphi 0, %s108
    %s111 = sphi 0, %s110
    %s125 = sphi 0, %s111
    %s131 = sphi 0, %s133
    %s134 = sphi 0, %s131
    %s135 = sphi 0, %s134
    %s151 = sphi 0, %s135
  $region4: #{forward.14} parent=0 // loop_header_branch
    %14 = sbr.rel (%p12) target = $region8
  $region5: #{forward.14} parent=0 // loop_body
    %s16 = ssub.s32 %s11, 1
    %s17 = ssub.s32 %s11, 2
    %s18 = sadd.s32 %s11, 1
    %s19 = ssub.s32 %s11, %s18
    %p20 = scmp.eq.s32.totalorder %s19, 0
    %s22 = sadd.s32 %s21, 1
    %s23 = scalar_select %p20, %s21, %s22
    %p26 = pneg %p20
    %p27 = scmp.eq.s32.totalorder %s11, 1
    %p28 = por %p26, %p27
    %p29 = scmp.ne.s32.totalorder %s21, %s24
    %p30 = scmp.eq.s32.totalorder %s11, 0
    %p31 = por %p29, %p30
    %p32 = scmp.ne.s32.totalorder %s21, %s24
    %p33 = scmp.eq.s32.totalorder %s16, 1
    %p34 = por %p32, %p33
    %p35 = scmp.ne.s32.totalorder %s24, %s25
    %p36 = scmp.eq.s32.totalorder %s16, 0
    %p37 = por %p35, %p36
    %p38 = scmp.ne.s32.totalorder %s24, %s25
    %p39 = scmp.eq.s32.totalorder %s17, 1
    %p40 = por %p38, %p39
    %p42 = scmp.ne.s32.totalorder %s25, %s41
    %p43 = scmp.eq.s32.totalorder %s17, 0
    %p44 = por %p42, %p43
    %s46 = sadd.s32 %s45, 1
    %p49 = scmp.eq.s32.totalorder %s11, 1
    %p50 = scmp.ne.s32.totalorder %s45, %s47
    %p51 = scmp.eq.s32.totalorder %s11, 0
    %p52 = por %p50, %p51
    %p53 = scmp.ne.s32.totalorder %s45, %s47
    %p54 = scmp.eq.s32.totalorder %s16, 1
    %p55 = por %p53, %p54
    %p56 = scmp.ne.s32.totalorder %s47, %s48
    %p57 = scmp.eq.s32.totalorder %s16, 0
    %p58 = por %p56, %p57
    %p59 = scmp.ne.s32.totalorder %s47, %s48
    %p60 = scmp.eq.s32.totalorder %s17, 1
    %p61 = por %p59, %p60
    %p63 = scmp.ne.s32.totalorder %s48, %s62
    %p64 = scmp.eq.s32.totalorder %s17, 0
    %p65 = por %p63, %p64
    %s67 = sadd.s32 %s66, 1
    %p70 = scmp.eq.s32.totalorder %s11, 1
    %p71 = scmp.ne.s32.totalorder %s66, %s68
    %p72 = scmp.eq.s32.totalorder %s11, 0
    %p73 = por %p71, %p72
    %p74 = scmp.ne.s32.totalorder %s66, %s68
    %p75 = scmp.eq.s32.totalorder %s16, 1
    %p76 = por %p74, %p75
    %p77 = scmp.ne.s32.totalorder %s68, %s69
    %p78 = scmp.eq.s32.totalorder %s16, 0
    %p79 = por %p77, %p78
    %p80 = scmp.ne.s32.totalorder %s68, %s69
    %p81 = scmp.eq.s32.totalorder %s17, 1
    %p82 = por %p80, %p81
    %p84 = scmp.ne.s32.totalorder %s69, %s83
    %p85 = scmp.eq.s32.totalorder %s17, 0
    %p86 = por %p84, %p85
    %s88 = sadd.s32 %s87, 1
    %p91 = scmp.eq.s32.totalorder %s11, 1
    %p92 = scmp.ne.s32.totalorder %s87, %s89
    %p93 = scmp.eq.s32.totalorder %s11, 0
    %p94 = por %p92, %p93
    %p95 = scmp.ne.s32.totalorder %s87, %s89
    %p96 = scmp.eq.s32.totalorder %s16, 1
    %p97 = por %p95, %p96
    %p98 = scmp.ne.s32.totalorder %s89, %s90
    %p99 = scmp.eq.s32.totalorder %s16, 0
    %p100 = por %p98, %p99
    %p101 = scmp.ne.s32.totalorder %s89, %s90
    %p102 = scmp.eq.s32.totalorder %s17, 1
    %p103 = por %p101, %p102
    %p105 = scmp.ne.s32.totalorder %s90, %s104
    %p106 = scmp.eq.s32.totalorder %s17, 0
    %p107 = por %p105, %p106
    %s109 = sadd.s32 %s108, 1
    %p112 = scmp.eq.s32.totalorder %s11, 1
    %p113 = scmp.ne.s32.totalorder %s108, %s110
    %p114 = scmp.eq.s32.totalorder %s11, 0
    %p115 = por %p113, %p114
    %p116 = scmp.ne.s32.totalorder %s108, %s110
    %p117 = scmp.eq.s32.totalorder %s16, 1
    %p118 = por %p116, %p117
    %p119 = scmp.ne.s32.totalorder %s110, %s111
    %p120 = scmp.eq.s32.totalorder %s16, 0
    %p121 = por %p119, %p120
    %p122 = scmp.ne.s32.totalorder %s110, %s111
    %p123 = scmp.eq.s32.totalorder %s17, 1
    %p124 = por %p122, %p123
    %p126 = scmp.ne.s32.totalorder %s111, %s125
    %p127 = scmp.eq.s32.totalorder %s17, 0
    %p128 = por %p126, %p127
    %s129 = ssub.s32 %s11, %s18
    %p130 = scmp.eq.s32.totalorder %s129, 0
    %s132 = sadd.s32 %s131, 1
    %s133 = scalar_select %p130, %s131, %s132
    %p136 = pneg %p130
    %p137 = scmp.eq.s32.totalorder %s11, 1
    %p138 = por %p136, %p137
    %p139 = scmp.ne.s32.totalorder %s131, %s134
    %p140 = scmp.eq.s32.totalorder %s11, 0
    %p141 = por %p139, %p140
    %p142 = scmp.ne.s32.totalorder %s131, %s134
    %p143 = scmp.eq.s32.totalorder %s16, 1
    %p144 = por %p142, %p143
    %p145 = scmp.ne.s32.totalorder %s134, %s135
    %p146 = scmp.eq.s32.totalorder %s16, 0
    %p147 = por %p145, %p146
    %p148 = scmp.ne.s32.totalorder %s134, %s135
    %p149 = scmp.eq.s32.totalorder %s17, 1
    %p150 = por %p148, %p149
    %p152 = scmp.ne.s32.totalorder %s135, %s151
    %p153 = scmp.eq.s32.totalorder %s17, 0
    %p154 = por %p152, %p153
    %p155 = scmp.le.s32.totalorder 1, %s11
    %p156 = scmp.lt.s32.totalorder %s11, 3
    %p157 = pnand %p155, %p156
    %p158 = pneg %p157
    // Predicated region
    $region9: #{forward.14} parent=5 // pred_check
      _
    $region10: #{forward.14} parent=5 // pred_check_branch
      %160 = sbr.rel (%p157) target = $region12
    $region11: #{forward.14} parent=5 // pred_region
      %s161 = ssub.s32 %s11, 1
      // Predicated region
      $region13: #{forward.14} parent=11 // pred_check
        %p162 = pneg %p58
      $region14: #{forward.14} parent=11 // pred_check_branch
        %164 = sbr.rel (%p162) target = $region16
      $region15: #{forward.14} parent=11 // pred_region
        _
      $region16: #{forward.14} parent=11 // pred_fallthru
        _
      // Predicated region
      $region17: #{forward.14} parent=11 // pred_check
        %p165 = pneg %p79
      $region18: #{forward.14} parent=11 // pred_check_branch
        %167 = sbr.rel (%p165) target = $region20
      $region19: #{forward.14} parent=11 // pred_region
        _
      $region20: #{forward.14} parent=11 // pred_fallthru
        _
      // Predicated region
      $region21: #{forward.14} parent=11 // pred_check
        %p168 = pneg %p100
      $region22: #{forward.14} parent=11 // pred_check_branch
        %170 = sbr.rel (%p168) target = $region24
      $region23: #{forward.14} parent=11 // pred_region
        _
      $region24: #{forward.14} parent=11 // pred_fallthru
        _
      // Predicated region
      $region25: #{forward.14} parent=11 // pred_check
        %p171 = pneg %p121
      $region26: #{forward.14} parent=11 // pred_check_branch
        %173 = sbr.rel (%p171) target = $region28
      $region27: #{forward.14} parent=11 // pred_region
        _
      $region28: #{forward.14} parent=11 // pred_fallthru
        _
    $region12: #{forward.14} parent=5 // pred_fallthru
      _
    %p174 = scmp.lt.s32.totalorder %s11, 2
    // Predicated region
    $region29: #{forward.14} parent=5 // pred_check
      %p175 = pneg %p174
    $region30: #{forward.14} parent=5 // pred_check_branch
      %177 = sbr.rel (%p175) target = $region32
    $region31: #{forward.14} parent=5 // pred_region
      // Predicated region
      $region33: #{forward.14} parent=31 // pred_check
        %p178 = pneg %p31
      $region34: #{forward.14} parent=31 // pred_check_branch
        %180 = sbr.rel (%p178) target = $region36
      $region35: #{forward.14} parent=31 // pred_region
        %p181 = scmp.lt.s32.totalorder %s11, 1
        %s182 = scalar_select %p181, %s11, 1
        %s183 = smul.addr %s182, 3
        %s184 = smul.addr %s183, 8
        %s185 = scalar_lea.vmem %s0, %s184
      $region36: #{forward.14} parent=31 // pred_fallthru
        _
    $region32: #{forward.14} parent=5 // pred_fallthru
      _
    %p186 = scmp.le.s32.totalorder 1, %s11
    %p187 = scmp.lt.s32.totalorder %s11, 3
    %p188 = pnand %p186, %p187
    %p189 = pneg %p188
    // Predicated region
    $region37: #{forward.14} parent=5 // pred_check
      _
    $region38: #{forward.14} parent=5 // pred_check_branch
      %191 = sbr.rel (%p188) target = $region40
    $region39: #{forward.14} parent=5 // pred_region
      %s192 = ssub.s32 %s11, 1
      %p193 = scmp.lt.s32.totalorder %s16, 1
      %s194 = scalar_select %p193, %s16, 1
      %s195 = smul.addr %s194, 3
      %s196 = smul.addr %s195, 8
      %s197 = scalar_lea.vmem %s0, %s196
      %p198 = pneg %p37
      %p199 = pneg %p34
      %p200 = pneg %p58
      %p201 = pneg %p55
      %p202 = pneg %p79
      %p203 = pneg %p76
      %p204 = pneg %p100
      %p205 = pneg %p97
      %p206 = pneg %p121
      %p207 = pneg %p118
      %p208 = pneg %p147
      %p209 = pneg %p144
      %p210 = scmp.lt.s32.totalorder %s16, 1
      %s211 = scalar_select %p210, %s16, 1
      %s212 = smul.addr %s211, 2
      %s213 = smul.addr %s212, 8
      %s214 = scalar_lea.vmem %s5, %s213
      %p215 = scmp.lt.s32.totalorder %s16, 1
      %s216 = scalar_select %p215, %s16, 1
      %s217 = smul.addr %s216, 3
      %s218 = smul.addr %s217, 8
      %s219 = scalar_lea.vmem %s0, %s218
      %p220 = scmp.lt.s32.totalorder %s16, 1
      %s221 = scalar_select %p220, %s16, 1
      %s222 = smul.addr %s221, 2
      %s223 = smul.addr %s222, 8
      %s224 = scalar_lea.vmem %s5, %s223
      %v226 = vld [vmem:[%s219] sm:$0xff]
      %v227 = vld [vmem:[%s219 + $0x8] sm:$0x7f]
      %v228 = vpack.c.bf16 %v227, %v226
      %v229 = vld [vmem:[%s1] sm:$0xf]
      %v230 = vld [vmem:[%s1 + $0x4] sm:$0xf]
      %s231 = scalar_lea.vmem %s1, 8
      %v232 = vld [vmem:[%s231] sm:$0xf]
      %v233 = vld [vmem:[%s231 + $0x4] sm:$0xf]
      %s234 = scalar_lea.vmem %s1, 16
      %v235 = vld [vmem:[%s234] sm:$0xf]
      %v236 = vld [vmem:[%s234 + $0x4] sm:$0xf]
      %s237 = scalar_lea.vmem %s1, 24
      %v238 = vld [vmem:[%s237] sm:$0xf]
      %v239 = vld [vmem:[%s237 + $0x4] sm:$0xf]
      %v240 = vld [vmem:[%s219 + $0x1] sm:$0xff]
      %v241 = vld [vmem:[%s219 + $0x9] sm:$0x7f]
      %v242 = vpack.c.bf16 %v241, %v240
      %s243 = scalar_lea.vmem %s1, 32
      %v244 = vld [vmem:[%s243] sm:$0xf]
      %v245 = vld [vmem:[%s243 + $0x4] sm:$0xf]
      %v248 = vunpack.c.l.b16 %v244
      %v249 = vunpack.c.l.b16 %v245
      %v250 = vpack.c.b16 %v249, %v248
      %vm252 = vcmask 130048
      %v254 = vsel %vm252, %v242, 0
      %256 = vmatprep.subr.bf16.mxu0 0
      %257 = vmatpush1.bf16.msra.mxu0 0
      %258 = vmatprep.subr.bf16.mxu0 0
      %259 = vmatpush1.bf16.msra.mxu0 0
      %260 = vmatprep.subr.bf16.mxu0 0
      %261 = vmatpush1.bf16.msra.mxu0 0
      %262 = vmatprep.subr.bf16.mxu0 0
      %263 = vmatpush1.bf16.msra.mxu0 0
      %264 = vmatprep.subr.bf16.mxu0 0
      %265 = vmatpush1.bf16.msra.mxu0 0
      %266 = vmatprep.subr.bf16.mxu0 0
      %267 = vmatpush1.bf16.msra.mxu0 0
      %268 = vmatprep.subr.bf16.mxu0 0
      %269 = vmatpush1.bf16.msra.mxu0 0
      %270 = vmatprep.subr.bf16.mxu0 0
      %271 = vmatpush1.bf16.msra.mxu0 %v250
      %272 = vmatprep.subr.bf16.mxu0 0
      %273 = vmatpush2.bf16.msra.mxu0 0
      %274 = vmatprep.subr.bf16.mxu0 0
      %275 = vmatpush2.bf16.msra.mxu0 0
      %276 = vmatprep.subr.bf16.mxu0 0
      %277 = vmatpush2.bf16.msra.mxu0 0
      %278 = vmatprep.subr.bf16.mxu0 0
      %279 = vmatpush2.bf16.msra.mxu0 0
      %280 = vmatprep.subr.bf16.mxu0 0
      %281 = vmatpush2.bf16.msra.mxu0 0
      %282 = vmatprep.subr.bf16.mxu0 0
      %283 = vmatpush2.bf16.msra.mxu0 0
      %284 = vmatprep.subr.bf16.mxu0 0
      %285 = vmatpush2.bf16.msra.mxu0 0
      %286 = vmatprep.subr.bf16.mxu0 0
      %287 = vmatpush2.bf16.msra.mxu0 0
      %288 = vmatprep.mubr.bf16.mxu0 0
      %289 = vmatmul.mubr.bf16.gmra.mxu0 %v254
      %v290 = vpop.f32.mrf.mxu0
      %v291 = vadd.f32 0.0, %v290
      %v292 = vpop.f32.mrf.mxu0
      %v293 = vpop.f32.mrf.mxu0
      %v294 = vadd.f32 0.0, %v293
      %v295 = vpop.f32.mrf.mxu0
      %296 = vdwg.mxu0
      %v299 = vunpack.c.l.b16 %v229
      %v300 = vunpack.c.l.b16 %v230
      %v301 = vpack.c.b16 %v300, %v299
      %v304 = vsel %vm252, %v228, 0
      %306 = vmatprep.subr.bf16.mxu0 0
      %307 = vmatpush1.bf16.msra.mxu0 0
      %308 = vmatprep.subr.bf16.mxu0 0
      %309 = vmatpush1.bf16.msra.mxu0 0
      %310 = vmatprep.subr.bf16.mxu0 0
      %311 = vmatpush1.bf16.msra.mxu0 0
      %312 = vmatprep.subr.bf16.mxu0 0
      %313 = vmatpush1.bf16.msra.mxu0 0
      %314 = vmatprep.subr.bf16.mxu0 0
      %315 = vmatpush1.bf16.msra.mxu0 0
      %316 = vmatprep.subr.bf16.mxu0 0
      %317 = vmatpush1.bf16.msra.mxu0 0
      %318 = vmatprep.subr.bf16.mxu0 0
      %319 = vmatpush1.bf16.msra.mxu0 0
      %320 = vmatprep.subr.bf16.mxu0 0
      %321 = vmatpush1.bf16.msra.mxu0 %v301
      %322 = vmatprep.subr.bf16.mxu0 0
      %323 = vmatpush2.bf16.msra.mxu0 0
      %324 = vmatprep.subr.bf16.mxu0 0
      %325 = vmatpush2.bf16.msra.mxu0 0
      %326 = vmatprep.subr.bf16.mxu0 0
      %327 = vmatpush2.bf16.msra.mxu0 0
      %328 = vmatprep.subr.bf16.mxu0 0
      %329 = vmatpush2.bf16.msra.mxu0 0
      %330 = vmatprep.subr.bf16.mxu0 0
      %331 = vmatpush2.bf16.msra.mxu0 0
      %332 = vmatprep.subr.bf16.mxu0 0
      %333 = vmatpush2.bf16.msra.mxu0 0
      %334 = vmatprep.subr.bf16.mxu0 0
      %335 = vmatpush2.bf16.msra.mxu0 0
      %336 = vmatprep.subr.bf16.mxu0 0
      %337 = vmatpush2.bf16.msra.mxu0 0
      %338 = vmatprep.mubr.bf16.mxu0 0
      %339 = vmatmul.mubr.bf16.gmra.mxu0 %v304
      %v340 = vpop.f32.mrf.mxu0
      %v341 = vadd.f32 %v291, %v340
      %v342 = vpop.f32.mrf.mxu0
      %v343 = vpop.f32.mrf.mxu0
      %v344 = vadd.f32 %v294, %v343
      %v345 = vpop.f32.mrf.mxu0
      %346 = vdwg.mxu0
      %s347 = scalar_lea.vmem %s1, 40
      %v348 = vld [vmem:[%s347] sm:$0xf]
      %v349 = vld [vmem:[%s347 + $0x4] sm:$0xf]
      %351 = vrot.lane.b32.xlu0 %v242, 112
      %v352 = vpop.permute.xlu0 %351
      %v355 = vunpack.c.l.b16 %v348
      %v356 = vunpack.c.l.b16 %v349
      %v357 = vpack.c.b16 %v356, %v355
      %v360 = vsel %vm252, %v352, 0
      %362 = vmatprep.subr.bf16.mxu0 0
      %363 = vmatpush1.bf16.msra.mxu0 0
      %364 = vmatprep.subr.bf16.mxu0 0
      %365 = vmatpush1.bf16.msra.mxu0 0
      %366 = vmatprep.subr.bf16.mxu0 0
      %367 = vmatpush1.bf16.msra.mxu0 0
      %368 = vmatprep.subr.bf16.mxu0 0
      %369 = vmatpush1.bf16.msra.mxu0 0
      %370 = vmatprep.subr.bf16.mxu0 0
      %371 = vmatpush1.bf16.msra.mxu0 0
      %372 = vmatprep.subr.bf16.mxu0 0
      %373 = vmatpush1.bf16.msra.mxu0 0
      %374 = vmatprep.subr.bf16.mxu0 0
      %375 = vmatpush1.bf16.msra.mxu0 0
      %376 = vmatprep.subr.bf16.mxu0 0
      %377 = vmatpush1.bf16.msra.mxu0 %v357
      %378 = vmatprep.subr.bf16.mxu0 0
      %379 = vmatpush2.bf16.msra.mxu0 0
      %380 = vmatprep.subr.bf16.mxu0 0
      %381 = vmatpush2.bf16.msra.mxu0 0
      %382 = vmatprep.subr.bf16.mxu0 0
      %383 = vmatpush2.bf16.msra.mxu0 0
      %384 = vmatprep.subr.bf16.mxu0 0
      %385 = vmatpush2.bf16.msra.mxu0 0
      %386 = vmatprep.subr.bf16.mxu0 0
      %387 = vmatpush2.bf16.msra.mxu0 0
      %388 = vmatprep.subr.bf16.mxu0 0
      %389 = vmatpush2.bf16.msra.mxu0 0
      %390 = vmatprep.subr.bf16.mxu0 0
      %391 = vmatpush2.bf16.msra.mxu0 0
      %392 = vmatprep.subr.bf16.mxu0 0
      %393 = vmatpush2.bf16.msra.mxu0 0
      %394 = vmatprep.mubr.bf16.mxu0 0
      %395 = vmatmul.mubr.bf16.gmra.mxu0 %v360
      %v396 = vpop.f32.mrf.mxu0
      %v397 = vadd.f32 0.0, %v396
      %v398 = vpop.f32.mrf.mxu0
      %v399 = vpop.f32.mrf.mxu0
      %v400 = vadd.f32 0.0, %v399
      %v401 = vpop.f32.mrf.mxu0
      %402 = vdwg.mxu0
      %404 = vrot.lane.b32.xlu0 %v228, 112
      %v405 = vpop.permute.xlu0 %404
      %v408 = vunpack.c.l.b16 %v232
      %v409 = vunpack.c.l.b16 %v233
      %v410 = vpack.c.b16 %v409, %v408
      %v413 = vsel %vm252, %v405, 0
      %415 = vmatprep.subr.bf16.mxu0 0
      %416 = vmatpush1.bf16.msra.mxu0 0
      %417 = vmatprep.subr.bf16.mxu0 0
      %418 = vmatpush1.bf16.msra.mxu0 0
      %419 = vmatprep.subr.bf16.mxu0 0
      %420 = vmatpush1.bf16.msra.mxu0 0
      %421 = vmatprep.subr.bf16.mxu0 0
      %422 = vmatpush1.bf16.msra.mxu0 0
      %423 = vmatprep.subr.bf16.mxu0 0
      %424 = vmatpush1.bf16.msra.mxu0 0
      %425 = vmatprep.subr.bf16.mxu0 0
      %426 = vmatpush1.bf16.msra.mxu0 0
      %427 = vmatprep.subr.bf16.mxu0 0
      %428 = vmatpush1.bf16.msra.mxu0 0
      %429 = vmatprep.subr.bf16.mxu0 0
      %430 = vmatpush1.bf16.msra.mxu0 %v410
      %431 = vmatprep.subr.bf16.mxu0 0
      %432 = vmatpush2.bf16.msra.mxu0 0
      %433 = vmatprep.subr.bf16.mxu0 0
      %434 = vmatpush2.bf16.msra.mxu0 0
      %435 = vmatprep.subr.bf16.mxu0 0
      %436 = vmatpush2.bf16.msra.mxu0 0
      %437 = vmatprep.subr.bf16.mxu0 0
      %438 = vmatpush2.bf16.msra.mxu0 0
      %439 = vmatprep.subr.bf16.mxu0 0
      %440 = vmatpush2.bf16.msra.mxu0 0
      %441 = vmatprep.subr.bf16.mxu0 0
      %442 = vmatpush2.bf16.msra.mxu0 0
      %443 = vmatprep.subr.bf16.mxu0 0
      %444 = vmatpush2.bf16.msra.mxu0 0
      %445 = vmatprep.subr.bf16.mxu0 0
      %446 = vmatpush2.bf16.msra.mxu0 0
      %447 = vmatprep.mubr.bf16.mxu0 0
      %448 = vmatmul.mubr.bf16.gmra.mxu0 %v413
      %v449 = vpop.f32.mrf.mxu0
      %v450 = vadd.f32 %v397, %v449
      %v451 = vpop.f32.mrf.mxu0
      %v452 = vpop.f32.mrf.mxu0
      %v453 = vadd.f32 %v400, %v452
      %v454 = vpop.f32.mrf.mxu0
      %455 = vdwg.mxu0
      %s456 = scalar_lea.vmem %s1, 48
      %v457 = vld [vmem:[%s456] sm:$0xf]
      %v458 = vld [vmem:[%s456 + $0x4] sm:$0xf]
      %459 = vrot.lane.b32.xlu0 %v242, 96
      %v460 = vpop.permute.xlu0 %459
      %v463 = vunpack.c.l.b16 %v457
      %v464 = vunpack.c.l.b16 %v458
      %v465 = vpack.c.b16 %v464, %v463
      %v468 = vsel %vm252, %v460, 0
      %470 = vmatprep.subr.bf16.mxu0 0
      %471 = vmatpush1.bf16.msra.mxu0 0
      %472 = vmatprep.subr.bf16.mxu0 0
      %473 = vmatpush1.bf16.msra.mxu0 0
      %474 = vmatprep.subr.bf16.mxu0 0
      %475 = vmatpush1.bf16.msra.mxu0 0
      %476 = vmatprep.subr.bf16.mxu0 0
      %477 = vmatpush1.bf16.msra.mxu0 0
      %478 = vmatprep.subr.bf16.mxu0 0
      %479 = vmatpush1.bf16.msra.mxu0 0
      %480 = vmatprep.subr.bf16.mxu0 0
      %481 = vmatpush1.bf16.msra.mxu0 0
      %482 = vmatprep.subr.bf16.mxu0 0
      %483 = vmatpush1.bf16.msra.mxu0 0
      %484 = vmatprep.subr.bf16.mxu0 0
      %485 = vmatpush1.bf16.msra.mxu0 %v465
      %486 = vmatprep.subr.bf16.mxu0 0
      %487 = vmatpush2.bf16.msra.mxu0 0
      %488 = vmatprep.subr.bf16.mxu0 0
      %489 = vmatpush2.bf16.msra.mxu0 0
      %490 = vmatprep.subr.bf16.mxu0 0
      %491 = vmatpush2.bf16.msra.mxu0 0
      %492 = vmatprep.subr.bf16.mxu0 0
      %493 = vmatpush2.bf16.msra.mxu0 0
      %494 = vmatprep.subr.bf16.mxu0 0
      %495 = vmatpush2.bf16.msra.mxu0 0
      %496 = vmatprep.subr.bf16.mxu0 0
      %497 = vmatpush2.bf16.msra.mxu0 0
      %498 = vmatprep.subr.bf16.mxu0 0
      %499 = vmatpush2.bf16.msra.mxu0 0
      %500 = vmatprep.subr.bf16.mxu0 0
      %501 = vmatpush2.bf16.msra.mxu0 0
      %502 = vmatprep.mubr.bf16.mxu0 0
      %503 = vmatmul.mubr.bf16.gmra.mxu0 %v468
      %v504 = vpop.f32.mrf.mxu0
      %v505 = vadd.f32 0.0, %v504
      %v506 = vpop.f32.mrf.mxu0
      %v507 = vpop.f32.mrf.mxu0
      %v508 = vadd.f32 0.0, %v507
      %v509 = vpop.f32.mrf.mxu0
      %510 = vdwg.mxu0
      %511 = vrot.lane.b32.xlu0 %v228, 96
      %v512 = vpop.permute.xlu0 %511
      %v515 = vunpack.c.l.b16 %v235
      %v516 = vunpack.c.l.b16 %v236
      %v517 = vpack.c.b16 %v516, %v515
      %v520 = vsel %vm252, %v512, 0
      %522 = vmatprep.subr.bf16.mxu0 0
      %523 = vmatpush1.bf16.msra.mxu0 0
      %524 = vmatprep.subr.bf16.mxu0 0
      %525 = vmatpush1.bf16.msra.mxu0 0
      %526 = vmatprep.subr.bf16.mxu0 0
      %527 = vmatpush1.bf16.msra.mxu0 0
      %528 = vmatprep.subr.bf16.mxu0 0
      %529 = vmatpush1.bf16.msra.mxu0 0
      %530 = vmatprep.subr.bf16.mxu0 0
      %531 = vmatpush1.bf16.msra.mxu0 0
      %532 = vmatprep.subr.bf16.mxu0 0
      %533 = vmatpush1.bf16.msra.mxu0 0
      %534 = vmatprep.subr.bf16.mxu0 0
      %535 = vmatpush1.bf16.msra.mxu0 0
      %536 = vmatprep.subr.bf16.mxu0 0
      %537 = vmatpush1.bf16.msra.mxu0 %v517
      %538 = vmatprep.subr.bf16.mxu0 0
      %539 = vmatpush2.bf16.msra.mxu0 0
      %540 = vmatprep.subr.bf16.mxu0 0
      %541 = vmatpush2.bf16.msra.mxu0 0
      %542 = vmatprep.subr.bf16.mxu0 0
      %543 = vmatpush2.bf16.msra.mxu0 0
      %544 = vmatprep.subr.bf16.mxu0 0
      %545 = vmatpush2.bf16.msra.mxu0 0
      %546 = vmatprep.subr.bf16.mxu0 0
      %547 = vmatpush2.bf16.msra.mxu0 0
      %548 = vmatprep.subr.bf16.mxu0 0
      %549 = vmatpush2.bf16.msra.mxu0 0
      %550 = vmatprep.subr.bf16.mxu0 0
      %551 = vmatpush2.bf16.msra.mxu0 0
      %552 = vmatprep.subr.bf16.mxu0 0
      %553 = vmatpush2.bf16.msra.mxu0 0
      %554 = vmatprep.mubr.bf16.mxu0 0
      %555 = vmatmul.mubr.bf16.gmra.mxu0 %v520
      %v556 = vpop.f32.mrf.mxu0
      %v557 = vadd.f32 %v505, %v556
      %v558 = vpop.f32.mrf.mxu0
      %v559 = vpop.f32.mrf.mxu0
      %v560 = vadd.f32 %v508, %v559
      %v561 = vpop.f32.mrf.mxu0
      %562 = vdwg.mxu0
      %s563 = scalar_lea.vmem %s1, 56
      %v564 = vld [vmem:[%s563] sm:$0xf]
      %v565 = vld [vmem:[%s563 + $0x4] sm:$0xf]
      %566 = vrot.lane.b32.xlu0 %v242, 80
      %v567 = vpop.permute.xlu0 %566
      %v570 = vunpack.c.l.b16 %v564
      %v571 = vunpack.c.l.b16 %v565
      %v572 = vpack.c.b16 %v571, %v570
      %v575 = vsel %vm252, %v567, 0
      %577 = vmatprep.subr.bf16.mxu0 0
      %578 = vmatpush1.bf16.msra.mxu0 0
      %579 = vmatprep.subr.bf16.mxu0 0
      %580 = vmatpush1.bf16.msra.mxu0 0
      %581 = vmatprep.subr.bf16.mxu0 0
      %582 = vmatpush1.bf16.msra.mxu0 0
      %583 = vmatprep.subr.bf16.mxu0 0
      %584 = vmatpush1.bf16.msra.mxu0 0
      %585 = vmatprep.subr.bf16.mxu0 0
      %586 = vmatpush1.bf16.msra.mxu0 0
      %587 = vmatprep.subr.bf16.mxu0 0
      %588 = vmatpush1.bf16.msra.mxu0 0
      %589 = vmatprep.subr.bf16.mxu0 0
      %590 = vmatpush1.bf16.msra.mxu0 0
      %591 = vmatprep.subr.bf16.mxu0 0
      %592 = vmatpush1.bf16.msra.mxu0 %v572
      %593 = vmatprep.subr.bf16.mxu0 0
      %594 = vmatpush2.bf16.msra.mxu0 0
      %595 = vmatprep.subr.bf16.mxu0 0
      %596 = vmatpush2.bf16.msra.mxu0 0
      %597 = vmatprep.subr.bf16.mxu0 0
      %598 = vmatpush2.bf16.msra.mxu0 0
      %599 = vmatprep.subr.bf16.mxu0 0
      %600 = vmatpush2.bf16.msra.mxu0 0
      %601 = vmatprep.subr.bf16.mxu0 0
      %602 = vmatpush2.bf16.msra.mxu0 0
      %603 = vmatprep.subr.bf16.mxu0 0
      %604 = vmatpush2.bf16.msra.mxu0 0
      %605 = vmatprep.subr.bf16.mxu0 0
      %606 = vmatpush2.bf16.msra.mxu0 0
      %607 = vmatprep.subr.bf16.mxu0 0
      %608 = vmatpush2.bf16.msra.mxu0 0
      %609 = vmatprep.mubr.bf16.mxu0 0
      %610 = vmatmul.mubr.bf16.gmra.mxu0 %v575
      %v611 = vpop.f32.mrf.mxu0
      %v612 = vadd.f32 0.0, %v611
      %v613 = vpop.f32.mrf.mxu0
      %v614 = vpop.f32.mrf.mxu0
      %v615 = vadd.f32 0.0, %v614
      %v616 = vpop.f32.mrf.mxu0
      %617 = vdwg.mxu0
      %618 = vrot.lane.b32.xlu0 %v228, 80
      %v619 = vpop.permute.xlu0 %618
      %v622 = vunpack.c.l.b16 %v238
      %v623 = vunpack.c.l.b16 %v239
      %v624 = vpack.c.b16 %v623, %v622
      %v627 = vsel %vm252, %v619, 0
      %629 = vmatprep.subr.bf16.mxu0 0
      %630 = vmatpush1.bf16.msra.mxu0 0
      %631 = vmatprep.subr.bf16.mxu0 0
      %632 = vmatpush1.bf16.msra.mxu0 0
      %633 = vmatprep.subr.bf16.mxu0 0
      %634 = vmatpush1.bf16.msra.mxu0 0
      %635 = vmatprep.subr.bf16.mxu0 0
      %636 = vmatpush1.bf16.msra.mxu0 0
      %637 = vmatprep.subr.bf16.mxu0 0
      %638 = vmatpush1.bf16.msra.mxu0 0
      %639 = vmatprep.subr.bf16.mxu0 0
      %640 = vmatpush1.bf16.msra.mxu0 0
      %641 = vmatprep.subr.bf16.mxu0 0
      %642 = vmatpush1.bf16.msra.mxu0 0
      %643 = vmatprep.subr.bf16.mxu0 0
      %644 = vmatpush1.bf16.msra.mxu0 %v624
      %645 = vmatprep.subr.bf16.mxu0 0
      %646 = vmatpush2.bf16.msra.mxu0 0
      %647 = vmatprep.subr.bf16.mxu0 0
      %648 = vmatpush2.bf16.msra.mxu0 0
      %649 = vmatprep.subr.bf16.mxu0 0
      %650 = vmatpush2.bf16.msra.mxu0 0
      %651 = vmatprep.subr.bf16.mxu0 0
      %652 = vmatpush2.bf16.msra.mxu0 0
      %653 = vmatprep.subr.bf16.mxu0 0
      %654 = vmatpush2.bf16.msra.mxu0 0
      %655 = vmatprep.subr.bf16.mxu0 0
      %656 = vmatpush2.bf16.msra.mxu0 0
      %657 = vmatprep.subr.bf16.mxu0 0
      %658 = vmatpush2.bf16.msra.mxu0 0
      %659 = vmatprep.subr.bf16.mxu0 0
      %660 = vmatpush2.bf16.msra.mxu0 0
      %661 = vmatprep.mubr.bf16.mxu0 0
      %662 = vmatmul.mubr.bf16.gmra.mxu0 %v627
      %v663 = vpop.f32.mrf.mxu0
      %v664 = vadd.f32 %v612, %v663
      %v665 = vpop.f32.mrf.mxu0
      %v666 = vpop.f32.mrf.mxu0
      %v667 = vadd.f32 %v615, %v666
      %v668 = vpop.f32.mrf.mxu0
      %669 = vdwg.mxu0
      %v670 = vld [vmem:[%s219 + $0x2] sm:$0xff]
      %v671 = vld [vmem:[%s219 + $0xa] sm:$0x7f]
      %v672 = vpack.c.bf16 %v671, %v670
      %s673 = scalar_lea.vmem %s1, 64
      %v674 = vld [vmem:[%s673] sm:$0xf]
      %v675 = vld [vmem:[%s673 + $0x4] sm:$0xf]
      %v678 = vunpack.c.l.b16 %v674
      %v679 = vunpack.c.l.b16 %v675
      %v680 = vpack.c.b16 %v679, %v678
      %v683 = vsel %vm252, %v672, 0
      %685 = vmatprep.subr.bf16.mxu0 0
      %686 = vmatpush1.bf16.msra.mxu0 0
      %687 = vmatprep.subr.bf16.mxu0 0
      %688 = vmatpush1.bf16.msra.mxu0 0
      %689 = vmatprep.subr.bf16.mxu0 0
      %690 = vmatpush1.bf16.msra.mxu0 0
      %691 = vmatprep.subr.bf16.mxu0 0
      %692 = vmatpush1.bf16.msra.mxu0 0
      %693 = vmatprep.subr.bf16.mxu0 0
      %694 = vmatpush1.bf16.msra.mxu0 0
      %695 = vmatprep.subr.bf16.mxu0 0
      %696 = vmatpush1.bf16.msra.mxu0 0
      %697 = vmatprep.subr.bf16.mxu0 0
      %698 = vmatpush1.bf16.msra.mxu0 0
      %699 = vmatprep.subr.bf16.mxu0 0
      %700 = vmatpush1.bf16.msra.mxu0 %v680
      %701 = vmatprep.subr.bf16.mxu0 0
      %702 = vmatpush2.bf16.msra.mxu0 0
      %703 = vmatprep.subr.bf16.mxu0 0
      %704 = vmatpush2.bf16.msra.mxu0 0
      %705 = vmatprep.subr.bf16.mxu0 0
      %706 = vmatpush2.bf16.msra.mxu0 0
      %707 = vmatprep.subr.bf16.mxu0 0
      %708 = vmatpush2.bf16.msra.mxu0 0
      %709 = vmatprep.subr.bf16.mxu0 0
      %710 = vmatpush2.bf16.msra.mxu0 0
      %711 = vmatprep.subr.bf16.mxu0 0
      %712 = vmatpush2.bf16.msra.mxu0 0
      %713 = vmatprep.subr.bf16.mxu0 0
      %714 = vmatpush2.bf16.msra.mxu0 0
      %715 = vmatprep.subr.bf16.mxu0 0
      %716 = vmatpush2.bf16.msra.mxu0 0
      %717 = vmatprep.mubr.bf16.mxu0 0
      %718 = vmatmul.mubr.bf16.gmra.mxu0 %v683
      %v719 = vpop.f32.mrf.mxu0
      %v720 = vadd.f32 0.0, %v719
      %v721 = vpop.f32.mrf.mxu0
      %v722 = vpop.f32.mrf.mxu0
      %v723 = vadd.f32 0.0, %v722
      %v724 = vpop.f32.mrf.mxu0
      %725 = vdwg.mxu0
      %v726 = vadd.f32 %v341, %v720
      %v727 = vadd.f32 %v344, %v723
      %s728 = scalar_lea.vmem %s1, 72
      %v729 = vld [vmem:[%s728] sm:$0xf]
      %v730 = vld [vmem:[%s728 + $0x4] sm:$0xf]
      %732 = vrot.lane.b32.xlu0 %v672, 112
      %v733 = vpop.permute.xlu0 %732
      %v736 = vunpack.c.l.b16 %v729
      %v737 = vunpack.c.l.b16 %v730
      %v738 = vpack.c.b16 %v737, %v736
      %v741 = vsel %vm252, %v733, 0
      %743 = vmatprep.subr.bf16.mxu0 0
      %744 = vmatpush1.bf16.msra.mxu0 0
      %745 = vmatprep.subr.bf16.mxu0 0
      %746 = vmatpush1.bf16.msra.mxu0 0
      %747 = vmatprep.subr.bf16.mxu0 0
      %748 = vmatpush1.bf16.msra.mxu0 0
      %749 = vmatprep.subr.bf16.mxu0 0
      %750 = vmatpush1.bf16.msra.mxu0 0
      %751 = vmatprep.subr.bf16.mxu0 0
      %752 = vmatpush1.bf16.msra.mxu0 0
      %753 = vmatprep.subr.bf16.mxu0 0
      %754 = vmatpush1.bf16.msra.mxu0 0
      %755 = vmatprep.subr.bf16.mxu0 0
      %756 = vmatpush1.bf16.msra.mxu0 0
      %757 = vmatprep.subr.bf16.mxu0 0
      %758 = vmatpush1.bf16.msra.mxu0 %v738
      %759 = vmatprep.subr.bf16.mxu0 0
      %760 = vmatpush2.bf16.msra.mxu0 0
      %761 = vmatprep.subr.bf16.mxu0 0
      %762 = vmatpush2.bf16.msra.mxu0 0
      %763 = vmatprep.subr.bf16.mxu0 0
      %764 = vmatpush2.bf16.msra.mxu0 0
      %765 = vmatprep.subr.bf16.mxu0 0
      %766 = vmatpush2.bf16.msra.mxu0 0
      %767 = vmatprep.subr.bf16.mxu0 0
      %768 = vmatpush2.bf16.msra.mxu0 0
      %769 = vmatprep.subr.bf16.mxu0 0
      %770 = vmatpush2.bf16.msra.mxu0 0
      %771 = vmatprep.subr.bf16.mxu0 0
      %772 = vmatpush2.bf16.msra.mxu0 0
      %773 = vmatprep.subr.bf16.mxu0 0
      %774 = vmatpush2.bf16.msra.mxu0 0
      %775 = vmatprep.mubr.bf16.mxu0 0
      %776 = vmatmul.mubr.bf16.gmra.mxu0 %v741
      %v777 = vpop.f32.mrf.mxu0
      %v778 = vadd.f32 0.0, %v777
      %v779 = vpop.f32.mrf.mxu0
      %v780 = vpop.f32.mrf.mxu0
      %v781 = vadd.f32 0.0, %v780
      %v782 = vpop.f32.mrf.mxu0
      %783 = vdwg.mxu0
      %v784 = vadd.f32 %v450, %v778
      %v785 = vadd.f32 %v453, %v781
      %s786 = scalar_lea.vmem %s1, 80
      %v787 = vld [vmem:[%s786] sm:$0xf]
      %v788 = vld [vmem:[%s786 + $0x4] sm:$0xf]
      %789 = vrot.lane.b32.xlu0 %v672, 96
      %v790 = vpop.permute.xlu0 %789
      %v793 = vunpack.c.l.b16 %v787
      %v794 = vunpack.c.l.b16 %v788
      %v795 = vpack.c.b16 %v794, %v793
      %v798 = vsel %vm252, %v790, 0
      %800 = vmatprep.subr.bf16.mxu0 0
      %801 = vmatpush1.bf16.msra.mxu0 0
      %802 = vmatprep.subr.bf16.mxu0 0
      %803 = vmatpush1.bf16.msra.mxu0 0
      %804 = vmatprep.subr.bf16.mxu0 0
      %805 = vmatpush1.bf16.msra.mxu0 0
      %806 = vmatprep.subr.bf16.mxu0 0
      %807 = vmatpush1.bf16.msra.mxu0 0
      %808 = vmatprep.subr.bf16.mxu0 0
      %809 = vmatpush1.bf16.msra.mxu0 0
      %810 = vmatprep.subr.bf16.mxu0 0
      %811 = vmatpush1.bf16.msra.mxu0 0
      %812 = vmatprep.subr.bf16.mxu0 0
      %813 = vmatpush1.bf16.msra.mxu0 0
      %814 = vmatprep.subr.bf16.mxu0 0
      %815 = vmatpush1.bf16.msra.mxu0 %v795
      %816 = vmatprep.subr.bf16.mxu0 0
      %817 = vmatpush2.bf16.msra.mxu0 0
      %818 = vmatprep.subr.bf16.mxu0 0
      %819 = vmatpush2.bf16.msra.mxu0 0
      %820 = vmatprep.subr.bf16.mxu0 0
      %821 = vmatpush2.bf16.msra.mxu0 0
      %822 = vmatprep.subr.bf16.mxu0 0
      %823 = vmatpush2.bf16.msra.mxu0 0
      %824 = vmatprep.subr.bf16.mxu0 0
      %825 = vmatpush2.bf16.msra.mxu0 0
      %826 = vmatprep.subr.bf16.mxu0 0
      %827 = vmatpush2.bf16.msra.mxu0 0
      %828 = vmatprep.subr.bf16.mxu0 0
      %829 = vmatpush2.bf16.msra.mxu0 0
      %830 = vmatprep.subr.bf16.mxu0 0
      %831 = vmatpush2.bf16.msra.mxu0 0
      %832 = vmatprep.mubr.bf16.mxu0 0
      %833 = vmatmul.mubr.bf16.gmra.mxu0 %v798
      %v834 = vpop.f32.mrf.mxu0
      %v835 = vadd.f32 0.0, %v834
      %v836 = vpop.f32.mrf.mxu0
      %v837 = vpop.f32.mrf.mxu0
      %v838 = vadd.f32 0.0, %v837
      %v839 = vpop.f32.mrf.mxu0
      %840 = vdwg.mxu0
      %v841 = vadd.f32 %v557, %v835
      %v842 = vadd.f32 %v560, %v838
      %s843 = scalar_lea.vmem %s1, 88
      %v844 = vld [vmem:[%s843] sm:$0xf]
      %v845 = vld [vmem:[%s843 + $0x4] sm:$0xf]
      %846 = vrot.lane.b32.xlu0 %v672, 80
      %v847 = vpop.permute.xlu0 %846
      %v850 = vunpack.c.l.b16 %v844
      %v851 = vunpack.c.l.b16 %v845
      %v852 = vpack.c.b16 %v851, %v850
      %v855 = vsel %vm252, %v847, 0
      %857 = vmatprep.subr.bf16.mxu0 0
      %858 = vmatpush1.bf16.msra.mxu0 0
      %859 = vmatprep.subr.bf16.mxu0 0
      %860 = vmatpush1.bf16.msra.mxu0 0
      %861 = vmatprep.subr.bf16.mxu0 0
      %862 = vmatpush1.bf16.msra.mxu0 0
      %863 = vmatprep.subr.bf16.mxu0 0
      %864 = vmatpush1.bf16.msra.mxu0 0
      %865 = vmatprep.subr.bf16.mxu0 0
      %866 = vmatpush1.bf16.msra.mxu0 0
      %867 = vmatprep.subr.bf16.mxu0 0
      %868 = vmatpush1.bf16.msra.mxu0 0
      %869 = vmatprep.subr.bf16.mxu0 0
      %870 = vmatpush1.bf16.msra.mxu0 0
      %871 = vmatprep.subr.bf16.mxu0 0
      %872 = vmatpush1.bf16.msra.mxu0 %v852
      %873 = vmatprep.subr.bf16.mxu0 0
      %874 = vmatpush2.bf16.msra.mxu0 0
      %875 = vmatprep.subr.bf16.mxu0 0
      %876 = vmatpush2.bf16.msra.mxu0 0
      %877 = vmatprep.subr.bf16.mxu0 0
      %878 = vmatpush2.bf16.msra.mxu0 0
      %879 = vmatprep.subr.bf16.mxu0 0
      %880 = vmatpush2.bf16.msra.mxu0 0
      %881 = vmatprep.subr.bf16.mxu0 0
      %882 = vmatpush2.bf16.msra.mxu0 0
      %883 = vmatprep.subr.bf16.mxu0 0
      %884 = vmatpush2.bf16.msra.mxu0 0
      %885 = vmatprep.subr.bf16.mxu0 0
      %886 = vmatpush2.bf16.msra.mxu0 0
      %887 = vmatprep.subr.bf16.mxu0 0
      %888 = vmatpush2.bf16.msra.mxu0 0
      %889 = vmatprep.mubr.bf16.mxu0 0
      %890 = vmatmul.mubr.bf16.gmra.mxu0 %v855
      %v891 = vpop.f32.mrf.mxu0
      %v892 = vadd.f32 0.0, %v891
      %v893 = vpop.f32.mrf.mxu0
      %v894 = vpop.f32.mrf.mxu0
      %v895 = vadd.f32 0.0, %v894
      %v896 = vpop.f32.mrf.mxu0
      %897 = vdwg.mxu0
      %v898 = vadd.f32 %v664, %v892
      %v899 = vadd.f32 %v667, %v895
      %v900 = vld [vmem:[%s219 + $0x3] sm:$0xff]
      %v901 = vld [vmem:[%s219 + $0xb] sm:$0x7f]
      %v902 = vpack.c.bf16 %v901, %v900
      %s903 = scalar_lea.vmem %s1, 96
      %v904 = vld [vmem:[%s903] sm:$0xf]
      %v905 = vld [vmem:[%s903 + $0x4] sm:$0xf]
      %v908 = vunpack.c.l.b16 %v904
      %v909 = vunpack.c.l.b16 %v905
      %v910 = vpack.c.b16 %v909, %v908
      %v913 = vsel %vm252, %v902, 0
      %915 = vmatprep.subr.bf16.mxu0 0
      %916 = vmatpush1.bf16.msra.mxu0 0
      %917 = vmatprep.subr.bf16.mxu0 0
      %918 = vmatpush1.bf16.msra.mxu0 0
      %919 = vmatprep.subr.bf16.mxu0 0
      %920 = vmatpush1.bf16.msra.mxu0 0
      %921 = vmatprep.subr.bf16.mxu0 0
      %922 = vmatpush1.bf16.msra.mxu0 0
      %923 = vmatprep.subr.bf16.mxu0 0
      %924 = vmatpush1.bf16.msra.mxu0 0
      %925 = vmatprep.subr.bf16.mxu0 0
      %926 = vmatpush1.bf16.msra.mxu0 0
      %927 = vmatprep.subr.bf16.mxu0 0
      %928 = vmatpush1.bf16.msra.mxu0 0
      %929 = vmatprep.subr.bf16.mxu0 0
      %930 = vmatpush1.bf16.msra.mxu0 %v910
      %931 = vmatprep.subr.bf16.mxu0 0
      %932 = vmatpush2.bf16.msra.mxu0 0
      %933 = vmatprep.subr.bf16.mxu0 0
      %934 = vmatpush2.bf16.msra.mxu0 0
      %935 = vmatprep.subr.bf16.mxu0 0
      %936 = vmatpush2.bf16.msra.mxu0 0
      %937 = vmatprep.subr.bf16.mxu0 0
      %938 = vmatpush2.bf16.msra.mxu0 0
      %939 = vmatprep.subr.bf16.mxu0 0
      %940 = vmatpush2.bf16.msra.mxu0 0
      %941 = vmatprep.subr.bf16.mxu0 0
      %942 = vmatpush2.bf16.msra.mxu0 0
      %943 = vmatprep.subr.bf16.mxu0 0
      %944 = vmatpush2.bf16.msra.mxu0 0
      %945 = vmatprep.subr.bf16.mxu0 0
      %946 = vmatpush2.bf16.msra.mxu0 0
      %947 = vmatprep.mubr.bf16.mxu0 0
      %948 = vmatmul.mubr.bf16.gmra.mxu0 %v913
      %v949 = vpop.f32.mrf.mxu0
      %v950 = vadd.f32 0.0, %v949
      %v951 = vpop.f32.mrf.mxu0
      %v952 = vpop.f32.mrf.mxu0
      %v953 = vadd.f32 0.0, %v952
      %v954 = vpop.f32.mrf.mxu0
      %955 = vdwg.mxu0
      %v956 = vadd.f32 %v726, %v950
      %v957 = vadd.f32 %v727, %v953
      %s958 = scalar_lea.vmem %s1, 104
      %v959 = vld [vmem:[%s958] sm:$0xf]
      %v960 = vld [vmem:[%s958 + $0x4] sm:$0xf]
      %962 = vrot.lane.b32.xlu0 %v902, 112
      %v963 = vpop.permute.xlu0 %962
      %v966 = vunpack.c.l.b16 %v959
      %v967 = vunpack.c.l.b16 %v960
      %v968 = vpack.c.b16 %v967, %v966
      %v971 = vsel %vm252, %v963, 0
      %973 = vmatprep.subr.bf16.mxu0 0
      %974 = vmatpush1.bf16.msra.mxu0 0
      %975 = vmatprep.subr.bf16.mxu0 0
      %976 = vmatpush1.bf16.msra.mxu0 0
      %977 = vmatprep.subr.bf16.mxu0 0
      %978 = vmatpush1.bf16.msra.mxu0 0
      %979 = vmatprep.subr.bf16.mxu0 0
      %980 = vmatpush1.bf16.msra.mxu0 0
      %981 = vmatprep.subr.bf16.mxu0 0
      %982 = vmatpush1.bf16.msra.mxu0 0
      %983 = vmatprep.subr.bf16.mxu0 0
      %984 = vmatpush1.bf16.msra.mxu0 0
      %985 = vmatprep.subr.bf16.mxu0 0
      %986 = vmatpush1.bf16.msra.mxu0 0
      %987 = vmatprep.subr.bf16.mxu0 0
      %988 = vmatpush1.bf16.msra.mxu0 %v968
      %989 = vmatprep.subr.bf16.mxu0 0
      %990 = vmatpush2.bf16.msra.mxu0 0
      %991 = vmatprep.subr.bf16.mxu0 0
      %992 = vmatpush2.bf16.msra.mxu0 0
      %993 = vmatprep.subr.bf16.mxu0 0
      %994 = vmatpush2.bf16.msra.mxu0 0
      %995 = vmatprep.subr.bf16.mxu0 0
      %996 = vmatpush2.bf16.msra.mxu0 0
      %997 = vmatprep.subr.bf16.mxu0 0
      %998 = vmatpush2.bf16.msra.mxu0 0
      %999 = vmatprep.subr.bf16.mxu0 0
      %1000 = vmatpush2.bf16.msra.mxu0 0
      %1001 = vmatprep.subr.bf16.mxu0 0
      %1002 = vmatpush2.bf16.msra.mxu0 0
      %1003 = vmatprep.subr.bf16.mxu0 0
      %1004 = vmatpush2.bf16.msra.mxu0 0
      %1005 = vmatprep.mubr.bf16.mxu0 0
      %1006 = vmatmul.mubr.bf16.gmra.mxu0 %v971
      %v1007 = vpop.f32.mrf.mxu0
      %v1008 = vadd.f32 0.0, %v1007
      %v1009 = vpop.f32.mrf.mxu0
      %v1010 = vpop.f32.mrf.mxu0
      %v1011 = vadd.f32 0.0, %v1010
      %v1012 = vpop.f32.mrf.mxu0
      %1013 = vdwg.mxu0
      %v1014 = vadd.f32 %v784, %v1008
      %v1015 = vadd.f32 %v785, %v1011
      %s1016 = scalar_lea.vmem %s1, 112
      %v1017 = vld [vmem:[%s1016] sm:$0xf]
      %v1018 = vld [vmem:[%s1016 + $0x4] sm:$0xf]
      %1019 = vrot.lane.b32.xlu0 %v902, 96
      %v1020 = vpop.permute.xlu0 %1019
      %v1023 = vunpack.c.l.b16 %v1017
      %v1024 = vunpack.c.l.b16 %v1018
      %v1025 = vpack.c.b16 %v1024, %v1023
      %v1028 = vsel %vm252, %v1020, 0
      %1030 = vmatprep.subr.bf16.mxu0 0
      %1031 = vmatpush1.bf16.msra.mxu0 0
      %1032 = vmatprep.subr.bf16.mxu0 0
      %1033 = vmatpush1.bf16.msra.mxu0 0
      %1034 = vmatprep.subr.bf16.mxu0 0
      %1035 = vmatpush1.bf16.msra.mxu0 0
      %1036 = vmatprep.subr.bf16.mxu0 0
      %1037 = vmatpush1.bf16.msra.mxu0 0
      %1038 = vmatprep.subr.bf16.mxu0 0
      %1039 = vmatpush1.bf16.msra.mxu0 0
      %1040 = vmatprep.subr.bf16.mxu0 0
      %1041 = vmatpush1.bf16.msra.mxu0 0
      %1042 = vmatprep.subr.bf16.mxu0 0
      %1043 = vmatpush1.bf16.msra.mxu0 0
      %1044 = vmatprep.subr.bf16.mxu0 0
      %1045 = vmatpush1.bf16.msra.mxu0 %v1025
      %1046 = vmatprep.subr.bf16.mxu0 0
      %1047 = vmatpush2.bf16.msra.mxu0 0
      %1048 = vmatprep.subr.bf16.mxu0 0
      %1049 = vmatpush2.bf16.msra.mxu0 0
      %1050 = vmatprep.subr.bf16.mxu0 0
      %1051 = vmatpush2.bf16.msra.mxu0 0
      %1052 = vmatprep.subr.bf16.mxu0 0
      %1053 = vmatpush2.bf16.msra.mxu0 0
      %1054 = vmatprep.subr.bf16.mxu0 0
      %1055 = vmatpush2.bf16.msra.mxu0 0
      %1056 = vmatprep.subr.bf16.mxu0 0
      %1057 = vmatpush2.bf16.msra.mxu0 0
      %1058 = vmatprep.subr.bf16.mxu0 0
      %1059 = vmatpush2.bf16.msra.mxu0 0
      %1060 = vmatprep.subr.bf16.mxu0 0
      %1061 = vmatpush2.bf16.msra.mxu0 0
      %1062 = vmatprep.mubr.bf16.mxu0 0
      %1063 = vmatmul.mubr.bf16.gmra.mxu0 %v1028
      %v1064 = vpop.f32.mrf.mxu0
      %v1065 = vadd.f32 0.0, %v1064
      %v1066 = vpop.f32.mrf.mxu0
      %v1067 = vpop.f32.mrf.mxu0
      %v1068 = vadd.f32 0.0, %v1067
      %v1069 = vpop.f32.mrf.mxu0
      %1070 = vdwg.mxu0
      %v1071 = vadd.f32 %v841, %v1065
      %v1072 = vadd.f32 %v842, %v1068
      %s1073 = scalar_lea.vmem %s1, 120
      %v1074 = vld [vmem:[%s1073] sm:$0xf]
      %v1075 = vld [vmem:[%s1073 + $0x4] sm:$0xf]
      %1076 = vrot.lane.b32.xlu0 %v902, 80
      %v1077 = vpop.permute.xlu0 %1076
      %v1080 = vunpack.c.l.b16 %v1074
      %v1081 = vunpack.c.l.b16 %v1075
      %v1082 = vpack.c.b16 %v1081, %v1080
      %v1085 = vsel %vm252, %v1077, 0
      %1087 = vmatprep.subr.bf16.mxu0 0
      %1088 = vmatpush1.bf16.msra.mxu0 0
      %1089 = vmatprep.subr.bf16.mxu0 0
      %1090 = vmatpush1.bf16.msra.mxu0 0
      %1091 = vmatprep.subr.bf16.mxu0 0
      %1092 = vmatpush1.bf16.msra.mxu0 0
      %1093 = vmatprep.subr.bf16.mxu0 0
      %1094 = vmatpush1.bf16.msra.mxu0 0
      %1095 = vmatprep.subr.bf16.mxu0 0
      %1096 = vmatpush1.bf16.msra.mxu0 0
      %1097 = vmatprep.subr.bf16.mxu0 0
      %1098 = vmatpush1.bf16.msra.mxu0 0
      %1099 = vmatprep.subr.bf16.mxu0 0
      %1100 = vmatpush1.bf16.msra.mxu0 0
      %1101 = vmatprep.subr.bf16.mxu0 0
      %1102 = vmatpush1.bf16.msra.mxu0 %v1082
      %1103 = vmatprep.subr.bf16.mxu0 0
      %1104 = vmatpush2.bf16.msra.mxu0 0
      %1105 = vmatprep.subr.bf16.mxu0 0
      %1106 = vmatpush2.bf16.msra.mxu0 0
      %1107 = vmatprep.subr.bf16.mxu0 0
      %1108 = vmatpush2.bf16.msra.mxu0 0
      %1109 = vmatprep.subr.bf16.mxu0 0
      %1110 = vmatpush2.bf16.msra.mxu0 0
      %1111 = vmatprep.subr.bf16.mxu0 0
      %1112 = vmatpush2.bf16.msra.mxu0 0
      %1113 = vmatprep.subr.bf16.mxu0 0
      %1114 = vmatpush2.bf16.msra.mxu0 0
      %1115 = vmatprep.subr.bf16.mxu0 0
      %1116 = vmatpush2.bf16.msra.mxu0 0
      %1117 = vmatprep.subr.bf16.mxu0 0
      %1118 = vmatpush2.bf16.msra.mxu0 0
      %1119 = vmatprep.mubr.bf16.mxu0 0
      %1120 = vmatmul.mubr.bf16.gmra.mxu0 %v1085
      %v1121 = vpop.f32.mrf.mxu0
      %v1122 = vadd.f32 0.0, %v1121
      %v1123 = vpop.f32.mrf.mxu0
      %v1124 = vpop.f32.mrf.mxu0
      %v1125 = vadd.f32 0.0, %v1124
      %v1126 = vpop.f32.mrf.mxu0
      %1127 = vdwg.mxu0
      %v1128 = vadd.f32 %v898, %v1122
      %v1129 = vadd.f32 %v899, %v1125
      %v1130 = vld [vmem:[%s219 + $0x4] sm:$0xff]
      %v1131 = vld [vmem:[%s219 + $0xc] sm:$0x7f]
      %v1132 = vpack.c.bf16 %v1131, %v1130
      %s1133 = scalar_lea.vmem %s1, 128
      %v1134 = vld [vmem:[%s1133] sm:$0xf]
      %v1135 = vld [vmem:[%s1133 + $0x4] sm:$0xf]
      %v1138 = vunpack.c.l.b16 %v1134
      %v1139 = vunpack.c.l.b16 %v1135
      %v1140 = vpack.c.b16 %v1139, %v1138
      %v1143 = vsel %vm252, %v1132, 0
      %1145 = vmatprep.subr.bf16.mxu0 0
      %1146 = vmatpush1.bf16.msra.mxu0 0
      %1147 = vmatprep.subr.bf16.mxu0 0
      %1148 = vmatpush1.bf16.msra.mxu0 0
      %1149 = vmatprep.subr.bf16.mxu0 0
      %1150 = vmatpush1.bf16.msra.mxu0 0
      %1151 = vmatprep.subr.bf16.mxu0 0
      %1152 = vmatpush1.bf16.msra.mxu0 0
      %1153 = vmatprep.subr.bf16.mxu0 0
      %1154 = vmatpush1.bf16.msra.mxu0 0
      %1155 = vmatprep.subr.bf16.mxu0 0
      %1156 = vmatpush1.bf16.msra.mxu0 0
      %1157 = vmatprep.subr.bf16.mxu0 0
      %1158 = vmatpush1.bf16.msra.mxu0 0
      %1159 = vmatprep.subr.bf16.mxu0 0
      %1160 = vmatpush1.bf16.msra.mxu0 %v1140
      %1161 = vmatprep.subr.bf16.mxu0 0
      %1162 = vmatpush2.bf16.msra.mxu0 0
      %1163 = vmatprep.subr.bf16.mxu0 0
      %1164 = vmatpush2.bf16.msra.mxu0 0
      %1165 = vmatprep.subr.bf16.mxu0 0
      %1166 = vmatpush2.bf16.msra.mxu0 0
      %1167 = vmatprep.subr.bf16.mxu0 0
      %1168 = vmatpush2.bf16.msra.mxu0 0
      %1169 = vmatprep.subr.bf16.mxu0 0
      %1170 = vmatpush2.bf16.msra.mxu0 0
      %1171 = vmatprep.subr.bf16.mxu0 0
      %1172 = vmatpush2.bf16.msra.mxu0 0
      %1173 = vmatprep.subr.bf16.mxu0 0
      %1174 = vmatpush2.bf16.msra.mxu0 0
      %1175 = vmatprep.subr.bf16.mxu0 0
      %1176 = vmatpush2.bf16.msra.mxu0 0
      %1177 = vmatprep.mubr.bf16.mxu0 0
      %1178 = vmatmul.mubr.bf16.gmra.mxu0 %v1143
      %v1179 = vpop.f32.mrf.mxu0
      %v1180 = vadd.f32 0.0, %v1179
      %v1181 = vpop.f32.mrf.mxu0
      %v1182 = vpop.f32.mrf.mxu0
      %v1183 = vadd.f32 0.0, %v1182
      %v1184 = vpop.f32.mrf.mxu0
      %1185 = vdwg.mxu0
      %v1186 = vadd.f32 %v956, %v1180
      %v1187 = vadd.f32 %v957, %v1183
      %s1188 = scalar_lea.vmem %s1, 136
      %v1189 = vld [vmem:[%s1188] sm:$0xf]
      %v1190 = vld [vmem:[%s1188 + $0x4] sm:$0xf]
      %1192 = vrot.lane.b32.xlu0 %v1132, 112
      %v1193 = vpop.permute.xlu0 %1192
      %v1196 = vunpack.c.l.b16 %v1189
      %v1197 = vunpack.c.l.b16 %v1190
      %v1198 = vpack.c.b16 %v1197, %v1196
      %v1201 = vsel %vm252, %v1193, 0
      %1203 = vmatprep.subr.bf16.mxu0 0
      %1204 = vmatpush1.bf16.msra.mxu0 0
      %1205 = vmatprep.subr.bf16.mxu0 0
      %1206 = vmatpush1.bf16.msra.mxu0 0
      %1207 = vmatprep.subr.bf16.mxu0 0
      %1208 = vmatpush1.bf16.msra.mxu0 0
      %1209 = vmatprep.subr.bf16.mxu0 0
      %1210 = vmatpush1.bf16.msra.mxu0 0
      %1211 = vmatprep.subr.bf16.mxu0 0
      %1212 = vmatpush1.bf16.msra.mxu0 0
      %1213 = vmatprep.subr.bf16.mxu0 0
      %1214 = vmatpush1.bf16.msra.mxu0 0
      %1215 = vmatprep.subr.bf16.mxu0 0
      %1216 = vmatpush1.bf16.msra.mxu0 0
      %1217 = vmatprep.subr.bf16.mxu0 0
      %1218 = vmatpush1.bf16.msra.mxu0 %v1198
      %1219 = vmatprep.subr.bf16.mxu0 0
      %1220 = vmatpush2.bf16.msra.mxu0 0
      %1221 = vmatprep.subr.bf16.mxu0 0
      %1222 = vmatpush2.bf16.msra.mxu0 0
      %1223 = vmatprep.subr.bf16.mxu0 0
      %1224 = vmatpush2.bf16.msra.mxu0 0
      %1225 = vmatprep.subr.bf16.mxu0 0
      %1226 = vmatpush2.bf16.msra.mxu0 0
      %1227 = vmatprep.subr.bf16.mxu0 0
      %1228 = vmatpush2.bf16.msra.mxu0 0
      %1229 = vmatprep.subr.bf16.mxu0 0
      %1230 = vmatpush2.bf16.msra.mxu0 0
      %1231 = vmatprep.subr.bf16.mxu0 0
      %1232 = vmatpush2.bf16.msra.mxu0 0
      %1233 = vmatprep.subr.bf16.mxu0 0
      %1234 = vmatpush2.bf16.msra.mxu0 0
      %1235 = vmatprep.mubr.bf16.mxu0 0
      %1236 = vmatmul.mubr.bf16.gmra.mxu0 %v1201
      %v1237 = vpop.f32.mrf.mxu0
      %v1238 = vadd.f32 0.0, %v1237
      %v1239 = vpop.f32.mrf.mxu0
      %v1240 = vpop.f32.mrf.mxu0
      %v1241 = vadd.f32 0.0, %v1240
      %v1242 = vpop.f32.mrf.mxu0
      %1243 = vdwg.mxu0
      %v1244 = vadd.f32 %v1014, %v1238
      %v1245 = vadd.f32 %v1015, %v1241
      %s1246 = scalar_lea.vmem %s1, 144
      %v1247 = vld [vmem:[%s1246] sm:$0xf]
      %v1248 = vld [vmem:[%s1246 + $0x4] sm:$0xf]
      %1249 = vrot.lane.b32.xlu0 %v1132, 96
      %v1250 = vpop.permute.xlu0 %1249
      %v1253 = vunpack.c.l.b16 %v1247
      %v1254 = vunpack.c.l.b16 %v1248
      %v1255 = vpack.c.b16 %v1254, %v1253
      %v1258 = vsel %vm252, %v1250, 0
      %1260 = vmatprep.subr.bf16.mxu0 0
      %1261 = vmatpush1.bf16.msra.mxu0 0
      %1262 = vmatprep.subr.bf16.mxu0 0
      %1263 = vmatpush1.bf16.msra.mxu0 0
      %1264 = vmatprep.subr.bf16.mxu0 0
      %1265 = vmatpush1.bf16.msra.mxu0 0
      %1266 = vmatprep.subr.bf16.mxu0 0
      %1267 = vmatpush1.bf16.msra.mxu0 0
      %1268 = vmatprep.subr.bf16.mxu0 0
      %1269 = vmatpush1.bf16.msra.mxu0 0
      %1270 = vmatprep.subr.bf16.mxu0 0
      %1271 = vmatpush1.bf16.msra.mxu0 0
      %1272 = vmatprep.subr.bf16.mxu0 0
      %1273 = vmatpush1.bf16.msra.mxu0 0
      %1274 = vmatprep.subr.bf16.mxu0 0
      %1275 = vmatpush1.bf16.msra.mxu0 %v1255
      %1276 = vmatprep.subr.bf16.mxu0 0
      %1277 = vmatpush2.bf16.msra.mxu0 0
      %1278 = vmatprep.subr.bf16.mxu0 0
      %1279 = vmatpush2.bf16.msra.mxu0 0
      %1280 = vmatprep.subr.bf16.mxu0 0
      %1281 = vmatpush2.bf16.msra.mxu0 0
      %1282 = vmatprep.subr.bf16.mxu0 0
      %1283 = vmatpush2.bf16.msra.mxu0 0
      %1284 = vmatprep.subr.bf16.mxu0 0
      %1285 = vmatpush2.bf16.msra.mxu0 0
      %1286 = vmatprep.subr.bf16.mxu0 0
      %1287 = vmatpush2.bf16.msra.mxu0 0
      %1288 = vmatprep.subr.bf16.mxu0 0
      %1289 = vmatpush2.bf16.msra.mxu0 0
      %1290 = vmatprep.subr.bf16.mxu0 0
      %1291 = vmatpush2.bf16.msra.mxu0 0
      %1292 = vmatprep.mubr.bf16.mxu0 0
      %1293 = vmatmul.mubr.bf16.gmra.mxu0 %v1258
      %v1294 = vpop.f32.mrf.mxu0
      %v1295 = vadd.f32 0.0, %v1294
      %v1296 = vpop.f32.mrf.mxu0
      %v1297 = vpop.f32.mrf.mxu0
      %v1298 = vadd.f32 0.0, %v1297
      %v1299 = vpop.f32.mrf.mxu0
      %1300 = vdwg.mxu0
      %v1301 = vadd.f32 %v1071, %v1295
      %v1302 = vadd.f32 %v1072, %v1298
      %s1303 = scalar_lea.vmem %s1, 152
      %v1304 = vld [vmem:[%s1303] sm:$0xf]
      %v1305 = vld [vmem:[%s1303 + $0x4] sm:$0xf]
      %1306 = vrot.lane.b32.xlu0 %v1132, 80
      %v1307 = vpop.permute.xlu0 %1306
      %v1310 = vunpack.c.l.b16 %v1304
      %v1311 = vunpack.c.l.b16 %v1305
      %v1312 = vpack.c.b16 %v1311, %v1310
      %v1315 = vsel %vm252, %v1307, 0
      %1317 = vmatprep.subr.bf16.mxu0 0
      %1318 = vmatpush1.bf16.msra.mxu0 0
      %1319 = vmatprep.subr.bf16.mxu0 0
      %1320 = vmatpush1.bf16.msra.mxu0 0
      %1321 = vmatprep.subr.bf16.mxu0 0
      %1322 = vmatpush1.bf16.msra.mxu0 0
      %1323 = vmatprep.subr.bf16.mxu0 0
      %1324 = vmatpush1.bf16.msra.mxu0 0
      %1325 = vmatprep.subr.bf16.mxu0 0
      %1326 = vmatpush1.bf16.msra.mxu0 0
      %1327 = vmatprep.subr.bf16.mxu0 0
      %1328 = vmatpush1.bf16.msra.mxu0 0
      %1329 = vmatprep.subr.bf16.mxu0 0
      %1330 = vmatpush1.bf16.msra.mxu0 0
      %1331 = vmatprep.subr.bf16.mxu0 0
      %1332 = vmatpush1.bf16.msra.mxu0 %v1312
      %1333 = vmatprep.subr.bf16.mxu0 0
      %1334 = vmatpush2.bf16.msra.mxu0 0
      %1335 = vmatprep.subr.bf16.mxu0 0
      %1336 = vmatpush2.bf16.msra.mxu0 0
      %1337 = vmatprep.subr.bf16.mxu0 0
      %1338 = vmatpush2.bf16.msra.mxu0 0
      %1339 = vmatprep.subr.bf16.mxu0 0
      %1340 = vmatpush2.bf16.msra.mxu0 0
      %1341 = vmatprep.subr.bf16.mxu0 0
      %1342 = vmatpush2.bf16.msra.mxu0 0
      %1343 = vmatprep.subr.bf16.mxu0 0
      %1344 = vmatpush2.bf16.msra.mxu0 0
      %1345 = vmatprep.subr.bf16.mxu0 0
      %1346 = vmatpush2.bf16.msra.mxu0 0
      %1347 = vmatprep.subr.bf16.mxu0 0
      %1348 = vmatpush2.bf16.msra.mxu0 0
      %1349 = vmatprep.mubr.bf16.mxu0 0
      %1350 = vmatmul.mubr.bf16.gmra.mxu0 %v1315
      %v1351 = vpop.f32.mrf.mxu0
      %v1352 = vadd.f32 0.0, %v1351
      %v1353 = vpop.f32.mrf.mxu0
      %v1354 = vpop.f32.mrf.mxu0
      %v1355 = vadd.f32 0.0, %v1354
      %v1356 = vpop.f32.mrf.mxu0
      %1357 = vdwg.mxu0
      %v1358 = vadd.f32 %v1128, %v1352
      %v1359 = vadd.f32 %v1129, %v1355
      %v1360 = vld [vmem:[%s219 + $0x5] sm:$0xff]
      %v1361 = vld [vmem:[%s219 + $0xd] sm:$0x7f]
      %v1362 = vpack.c.bf16 %v1361, %v1360
      %s1363 = scalar_lea.vmem %s1, 160
      %v1364 = vld [vmem:[%s1363] sm:$0xf]
      %v1365 = vld [vmem:[%s1363 + $0x4] sm:$0xf]
      %v1368 = vunpack.c.l.b16 %v1364
      %v1369 = vunpack.c.l.b16 %v1365
      %v1370 = vpack.c.b16 %v1369, %v1368
      %v1373 = vsel %vm252, %v1362, 0
      %1375 = vmatprep.subr.bf16.mxu0 0
      %1376 = vmatpush1.bf16.msra.mxu0 0
      %1377 = vmatprep.subr.bf16.mxu0 0
      %1378 = vmatpush1.bf16.msra.mxu0 0
      %1379 = vmatprep.subr.bf16.mxu0 0
      %1380 = vmatpush1.bf16.msra.mxu0 0
      %1381 = vmatprep.subr.bf16.mxu0 0
      %1382 = vmatpush1.bf16.msra.mxu0 0
      %1383 = vmatprep.subr.bf16.mxu0 0
      %1384 = vmatpush1.bf16.msra.mxu0 0
      %1385 = vmatprep.subr.bf16.mxu0 0
      %1386 = vmatpush1.bf16.msra.mxu0 0
      %1387 = vmatprep.subr.bf16.mxu0 0
      %1388 = vmatpush1.bf16.msra.mxu0 0
      %1389 = vmatprep.subr.bf16.mxu0 0
      %1390 = vmatpush1.bf16.msra.mxu0 %v1370
      %1391 = vmatprep.subr.bf16.mxu0 0
      %1392 = vmatpush2.bf16.msra.mxu0 0
      %1393 = vmatprep.subr.bf16.mxu0 0
      %1394 = vmatpush2.bf16.msra.mxu0 0
      %1395 = vmatprep.subr.bf16.mxu0 0
      %1396 = vmatpush2.bf16.msra.mxu0 0
      %1397 = vmatprep.subr.bf16.mxu0 0
      %1398 = vmatpush2.bf16.msra.mxu0 0
      %1399 = vmatprep.subr.bf16.mxu0 0
      %1400 = vmatpush2.bf16.msra.mxu0 0
      %1401 = vmatprep.subr.bf16.mxu0 0
      %1402 = vmatpush2.bf16.msra.mxu0 0
      %1403 = vmatprep.subr.bf16.mxu0 0
      %1404 = vmatpush2.bf16.msra.mxu0 0
      %1405 = vmatprep.subr.bf16.mxu0 0
      %1406 = vmatpush2.bf16.msra.mxu0 0
      %1407 = vmatprep.mubr.bf16.mxu0 0
      %1408 = vmatmul.mubr.bf16.gmra.mxu0 %v1373
      %v1409 = vpop.f32.mrf.mxu0
      %v1410 = vadd.f32 0.0, %v1409
      %v1411 = vpop.f32.mrf.mxu0
      %v1412 = vpop.f32.mrf.mxu0
      %v1413 = vadd.f32 0.0, %v1412
      %v1414 = vpop.f32.mrf.mxu0
      %1415 = vdwg.mxu0
      %v1416 = vadd.f32 %v1186, %v1410
      %v1417 = vadd.f32 %v1187, %v1413
      %s1418 = scalar_lea.vmem %s1, 168
      %v1419 = vld [vmem:[%s1418] sm:$0xf]
      %v1420 = vld [vmem:[%s1418 + $0x4] sm:$0xf]
      %1422 = vrot.lane.b32.xlu0 %v1362, 112
      %v1423 = vpop.permute.xlu0 %1422
      %v1426 = vunpack.c.l.b16 %v1419
      %v1427 = vunpack.c.l.b16 %v1420
      %v1428 = vpack.c.b16 %v1427, %v1426
      %v1431 = vsel %vm252, %v1423, 0
      %1433 = vmatprep.subr.bf16.mxu0 0
      %1434 = vmatpush1.bf16.msra.mxu0 0
      %1435 = vmatprep.subr.bf16.mxu0 0
      %1436 = vmatpush1.bf16.msra.mxu0 0
      %1437 = vmatprep.subr.bf16.mxu0 0
      %1438 = vmatpush1.bf16.msra.mxu0 0
      %1439 = vmatprep.subr.bf16.mxu0 0
      %1440 = vmatpush1.bf16.msra.mxu0 0
      %1441 = vmatprep.subr.bf16.mxu0 0
      %1442 = vmatpush1.bf16.msra.mxu0 0
      %1443 = vmatprep.subr.bf16.mxu0 0
      %1444 = vmatpush1.bf16.msra.mxu0 0
      %1445 = vmatprep.subr.bf16.mxu0 0
      %1446 = vmatpush1.bf16.msra.mxu0 0
      %1447 = vmatprep.subr.bf16.mxu0 0
      %1448 = vmatpush1.bf16.msra.mxu0 %v1428
      %1449 = vmatprep.subr.bf16.mxu0 0
      %1450 = vmatpush2.bf16.msra.mxu0 0
      %1451 = vmatprep.subr.bf16.mxu0 0
      %1452 = vmatpush2.bf16.msra.mxu0 0
      %1453 = vmatprep.subr.bf16.mxu0 0
      %1454 = vmatpush2.bf16.msra.mxu0 0
      %1455 = vmatprep.subr.bf16.mxu0 0
      %1456 = vmatpush2.bf16.msra.mxu0 0
      %1457 = vmatprep.subr.bf16.mxu0 0
      %1458 = vmatpush2.bf16.msra.mxu0 0
      %1459 = vmatprep.subr.bf16.mxu0 0
      %1460 = vmatpush2.bf16.msra.mxu0 0
      %1461 = vmatprep.subr.bf16.mxu0 0
      %1462 = vmatpush2.bf16.msra.mxu0 0
      %1463 = vmatprep.subr.bf16.mxu0 0
      %1464 = vmatpush2.bf16.msra.mxu0 0
      %1465 = vmatprep.mubr.bf16.mxu0 0
      %1466 = vmatmul.mubr.bf16.gmra.mxu0 %v1431
      %v1467 = vpop.f32.mrf.mxu0
      %v1468 = vadd.f32 0.0, %v1467
      %v1469 = vpop.f32.mrf.mxu0
      %v1470 = vpop.f32.mrf.mxu0
      %v1471 = vadd.f32 0.0, %v1470
      %v1472 = vpop.f32.mrf.mxu0
      %1473 = vdwg.mxu0
      %v1474 = vadd.f32 %v1244, %v1468
      %v1475 = vadd.f32 %v1245, %v1471
      %s1476 = scalar_lea.vmem %s1, 176
      %v1477 = vld [vmem:[%s1476] sm:$0xf]
      %v1478 = vld [vmem:[%s1476 + $0x4] sm:$0xf]
      %1479 = vrot.lane.b32.xlu0 %v1362, 96
      %v1480 = vpop.permute.xlu0 %1479
      %v1483 = vunpack.c.l.b16 %v1477
      %v1484 = vunpack.c.l.b16 %v1478
      %v1485 = vpack.c.b16 %v1484, %v1483
      %v1488 = vsel %vm252, %v1480, 0
      %1490 = vmatprep.subr.bf16.mxu0 0
      %1491 = vmatpush1.bf16.msra.mxu0 0
      %1492 = vmatprep.subr.bf16.mxu0 0
      %1493 = vmatpush1.bf16.msra.mxu0 0
      %1494 = vmatprep.subr.bf16.mxu0 0
      %1495 = vmatpush1.bf16.msra.mxu0 0
      %1496 = vmatprep.subr.bf16.mxu0 0
      %1497 = vmatpush1.bf16.msra.mxu0 0
      %1498 = vmatprep.subr.bf16.mxu0 0
      %1499 = vmatpush1.bf16.msra.mxu0 0
      %1500 = vmatprep.subr.bf16.mxu0 0
      %1501 = vmatpush1.bf16.msra.mxu0 0
      %1502 = vmatprep.subr.bf16.mxu0 0
      %1503 = vmatpush1.bf16.msra.mxu0 0
      %1504 = vmatprep.subr.bf16.mxu0 0
      %1505 = vmatpush1.bf16.msra.mxu0 %v1485
      %1506 = vmatprep.subr.bf16.mxu0 0
      %1507 = vmatpush2.bf16.msra.mxu0 0
      %1508 = vmatprep.subr.bf16.mxu0 0
      %1509 = vmatpush2.bf16.msra.mxu0 0
      %1510 = vmatprep.subr.bf16.mxu0 0
      %1511 = vmatpush2.bf16.msra.mxu0 0
      %1512 = vmatprep.subr.bf16.mxu0 0
      %1513 = vmatpush2.bf16.msra.mxu0 0
      %1514 = vmatprep.subr.bf16.mxu0 0
      %1515 = vmatpush2.bf16.msra.mxu0 0
      %1516 = vmatprep.subr.bf16.mxu0 0
      %1517 = vmatpush2.bf16.msra.mxu0 0
      %1518 = vmatprep.subr.bf16.mxu0 0
      %1519 = vmatpush2.bf16.msra.mxu0 0
      %1520 = vmatprep.subr.bf16.mxu0 0
      %1521 = vmatpush2.bf16.msra.mxu0 0
      %1522 = vmatprep.mubr.bf16.mxu0 0
      %1523 = vmatmul.mubr.bf16.gmra.mxu0 %v1488
      %v1524 = vpop.f32.mrf.mxu0
      %v1525 = vadd.f32 0.0, %v1524
      %v1526 = vpop.f32.mrf.mxu0
      %v1527 = vpop.f32.mrf.mxu0
      %v1528 = vadd.f32 0.0, %v1527
      %v1529 = vpop.f32.mrf.mxu0
      %1530 = vdwg.mxu0
      %v1531 = vadd.f32 %v1301, %v1525
      %v1532 = vadd.f32 %v1302, %v1528
      %s1533 = scalar_lea.vmem %s1, 184
      %v1534 = vld [vmem:[%s1533] sm:$0xf]
      %v1535 = vld [vmem:[%s1533 + $0x4] sm:$0xf]
      %1536 = vrot.lane.b32.xlu0 %v1362, 80
      %v1537 = vpop.permute.xlu0 %1536
      %v1540 = vunpack.c.l.b16 %v1534
      %v1541 = vunpack.c.l.b16 %v1535
      %v1542 = vpack.c.b16 %v1541, %v1540
      %v1545 = vsel %vm252, %v1537, 0
      %1547 = vmatprep.subr.bf16.mxu0 0
      %1548 = vmatpush1.bf16.msra.mxu0 0
      %1549 = vmatprep.subr.bf16.mxu0 0
      %1550 = vmatpush1.bf16.msra.mxu0 0
      %1551 = vmatprep.subr.bf16.mxu0 0
      %1552 = vmatpush1.bf16.msra.mxu0 0
      %1553 = vmatprep.subr.bf16.mxu0 0
      %1554 = vmatpush1.bf16.msra.mxu0 0
      %1555 = vmatprep.subr.bf16.mxu0 0
      %1556 = vmatpush1.bf16.msra.mxu0 0
      %1557 = vmatprep.subr.bf16.mxu0 0
      %1558 = vmatpush1.bf16.msra.mxu0 0
      %1559 = vmatprep.subr.bf16.mxu0 0
      %1560 = vmatpush1.bf16.msra.mxu0 0
      %1561 = vmatprep.subr.bf16.mxu0 0
      %1562 = vmatpush1.bf16.msra.mxu0 %v1542
      %1563 = vmatprep.subr.bf16.mxu0 0
      %1564 = vmatpush2.bf16.msra.mxu0 0
      %1565 = vmatprep.subr.bf16.mxu0 0
      %1566 = vmatpush2.bf16.msra.mxu0 0
      %1567 = vmatprep.subr.bf16.mxu0 0
      %1568 = vmatpush2.bf16.msra.mxu0 0
      %1569 = vmatprep.subr.bf16.mxu0 0
      %1570 = vmatpush2.bf16.msra.mxu0 0
      %1571 = vmatprep.subr.bf16.mxu0 0
      %1572 = vmatpush2.bf16.msra.mxu0 0
      %1573 = vmatprep.subr.bf16.mxu0 0
      %1574 = vmatpush2.bf16.msra.mxu0 0
      %1575 = vmatprep.subr.bf16.mxu0 0
      %1576 = vmatpush2.bf16.msra.mxu0 0
      %1577 = vmatprep.subr.bf16.mxu0 0
      %1578 = vmatpush2.bf16.msra.mxu0 0
      %1579 = vmatprep.mubr.bf16.mxu0 0
      %1580 = vmatmul.mubr.bf16.gmra.mxu0 %v1545
      %v1581 = vpop.f32.mrf.mxu0
      %v1582 = vadd.f32 0.0, %v1581
      %v1583 = vpop.f32.mrf.mxu0
      %v1584 = vpop.f32.mrf.mxu0
      %v1585 = vadd.f32 0.0, %v1584
      %v1586 = vpop.f32.mrf.mxu0
      %1587 = vdwg.mxu0
      %v1588 = vadd.f32 %v1358, %v1582
      %v1589 = vadd.f32 %v1359, %v1585
      %v1590 = vld [vmem:[%s219 + $0x6] sm:$0xff]
      %v1591 = vld [vmem:[%s219 + $0xe] sm:$0x7f]
      %v1592 = vpack.c.bf16 %v1591, %v1590
      %s1593 = scalar_lea.vmem %s1, 192
      %v1594 = vld [vmem:[%s1593] sm:$0xf]
      %v1595 = vld [vmem:[%s1593 + $0x4] sm:$0xf]
      %v1598 = vunpack.c.l.b16 %v1594
      %v1599 = vunpack.c.l.b16 %v1595
      %v1600 = vpack.c.b16 %v1599, %v1598
      %v1603 = vsel %vm252, %v1592, 0
      %1605 = vmatprep.subr.bf16.mxu0 0
      %1606 = vmatpush1.bf16.msra.mxu0 0
      %1607 = vmatprep.subr.bf16.mxu0 0
      %1608 = vmatpush1.bf16.msra.mxu0 0
      %1609 = vmatprep.subr.bf16.mxu0 0
      %1610 = vmatpush1.bf16.msra.mxu0 0
      %1611 = vmatprep.subr.bf16.mxu0 0
      %1612 = vmatpush1.bf16.msra.mxu0 0
      %1613 = vmatprep.subr.bf16.mxu0 0
      %1614 = vmatpush1.bf16.msra.mxu0 0
      %1615 = vmatprep.subr.bf16.mxu0 0
      %1616 = vmatpush1.bf16.msra.mxu0 0
      %1617 = vmatprep.subr.bf16.mxu0 0
      %1618 = vmatpush1.bf16.msra.mxu0 0
      %1619 = vmatprep.subr.bf16.mxu0 0
      %1620 = vmatpush1.bf16.msra.mxu0 %v1600
      %1621 = vmatprep.subr.bf16.mxu0 0
      %1622 = vmatpush2.bf16.msra.mxu0 0
      %1623 = vmatprep.subr.bf16.mxu0 0
      %1624 = vmatpush2.bf16.msra.mxu0 0
      %1625 = vmatprep.subr.bf16.mxu0 0
      %1626 = vmatpush2.bf16.msra.mxu0 0
      %1627 = vmatprep.subr.bf16.mxu0 0
      %1628 = vmatpush2.bf16.msra.mxu0 0
      %1629 = vmatprep.subr.bf16.mxu0 0
      %1630 = vmatpush2.bf16.msra.mxu0 0
      %1631 = vmatprep.subr.bf16.mxu0 0
      %1632 = vmatpush2.bf16.msra.mxu0 0
      %1633 = vmatprep.subr.bf16.mxu0 0
      %1634 = vmatpush2.bf16.msra.mxu0 0
      %1635 = vmatprep.subr.bf16.mxu0 0
      %1636 = vmatpush2.bf16.msra.mxu0 0
      %1637 = vmatprep.mubr.bf16.mxu0 0
      %1638 = vmatmul.mubr.bf16.gmra.mxu0 %v1603
      %v1639 = vpop.f32.mrf.mxu0
      %v1640 = vadd.f32 0.0, %v1639
      %v1641 = vpop.f32.mrf.mxu0
      %v1642 = vpop.f32.mrf.mxu0
      %v1643 = vadd.f32 0.0, %v1642
      %v1644 = vpop.f32.mrf.mxu0
      %1645 = vdwg.mxu0
      %v1646 = vadd.f32 %v1416, %v1640
      %v1647 = vadd.f32 %v1417, %v1643
      %s1648 = scalar_lea.vmem %s1, 200
      %v1649 = vld [vmem:[%s1648] sm:$0xf]
      %v1650 = vld [vmem:[%s1648 + $0x4] sm:$0xf]
      %1652 = vrot.lane.b32.xlu0 %v1592, 112
      %v1653 = vpop.permute.xlu0 %1652
      %v1656 = vunpack.c.l.b16 %v1649
      %v1657 = vunpack.c.l.b16 %v1650
      %v1658 = vpack.c.b16 %v1657, %v1656
      %v1661 = vsel %vm252, %v1653, 0
      %1663 = vmatprep.subr.bf16.mxu0 0
      %1664 = vmatpush1.bf16.msra.mxu0 0
      %1665 = vmatprep.subr.bf16.mxu0 0
      %1666 = vmatpush1.bf16.msra.mxu0 0
      %1667 = vmatprep.subr.bf16.mxu0 0
      %1668 = vmatpush1.bf16.msra.mxu0 0
      %1669 = vmatprep.subr.bf16.mxu0 0
      %1670 = vmatpush1.bf16.msra.mxu0 0
      %1671 = vmatprep.subr.bf16.mxu0 0
      %1672 = vmatpush1.bf16.msra.mxu0 0
      %1673 = vmatprep.subr.bf16.mxu0 0
      %1674 = vmatpush1.bf16.msra.mxu0 0
      %1675 = vmatprep.subr.bf16.mxu0 0
      %1676 = vmatpush1.bf16.msra.mxu0 0
      %1677 = vmatprep.subr.bf16.mxu0 0
      %1678 = vmatpush1.bf16.msra.mxu0 %v1658
      %1679 = vmatprep.subr.bf16.mxu0 0
      %1680 = vmatpush2.bf16.msra.mxu0 0
      %1681 = vmatprep.subr.bf16.mxu0 0
      %1682 = vmatpush2.bf16.msra.mxu0 0
      %1683 = vmatprep.subr.bf16.mxu0 0
      %1684 = vmatpush2.bf16.msra.mxu0 0
      %1685 = vmatprep.subr.bf16.mxu0 0
      %1686 = vmatpush2.bf16.msra.mxu0 0
      %1687 = vmatprep.subr.bf16.mxu0 0
      %1688 = vmatpush2.bf16.msra.mxu0 0
      %1689 = vmatprep.subr.bf16.mxu0 0
      %1690 = vmatpush2.bf16.msra.mxu0 0
      %1691 = vmatprep.subr.bf16.mxu0 0
      %1692 = vmatpush2.bf16.msra.mxu0 0
      %1693 = vmatprep.subr.bf16.mxu0 0
      %1694 = vmatpush2.bf16.msra.mxu0 0
      %1695 = vmatprep.mubr.bf16.mxu0 0
      %1696 = vmatmul.mubr.bf16.gmra.mxu0 %v1661
      %v1697 = vpop.f32.mrf.mxu0
      %v1698 = vadd.f32 0.0, %v1697
      %v1699 = vpop.f32.mrf.mxu0
      %v1700 = vpop.f32.mrf.mxu0
      %v1701 = vadd.f32 0.0, %v1700
      %v1702 = vpop.f32.mrf.mxu0
      %1703 = vdwg.mxu0
      %v1704 = vadd.f32 %v1474, %v1698
      %v1705 = vadd.f32 %v1475, %v1701
      %s1706 = scalar_lea.vmem %s1, 208
      %v1707 = vld [vmem:[%s1706] sm:$0xf]
      %v1708 = vld [vmem:[%s1706 + $0x4] sm:$0xf]
      %1709 = vrot.lane.b32.xlu0 %v1592, 96
      %v1710 = vpop.permute.xlu0 %1709
      %v1713 = vunpack.c.l.b16 %v1707
      %v1714 = vunpack.c.l.b16 %v1708
      %v1715 = vpack.c.b16 %v1714, %v1713
      %v1718 = vsel %vm252, %v1710, 0
      %1720 = vmatprep.subr.bf16.mxu0 0
      %1721 = vmatpush1.bf16.msra.mxu0 0
      %1722 = vmatprep.subr.bf16.mxu0 0
      %1723 = vmatpush1.bf16.msra.mxu0 0
      %1724 = vmatprep.subr.bf16.mxu0 0
      %1725 = vmatpush1.bf16.msra.mxu0 0
      %1726 = vmatprep.subr.bf16.mxu0 0
      %1727 = vmatpush1.bf16.msra.mxu0 0
      %1728 = vmatprep.subr.bf16.mxu0 0
      %1729 = vmatpush1.bf16.msra.mxu0 0
      %1730 = vmatprep.subr.bf16.mxu0 0
      %1731 = vmatpush1.bf16.msra.mxu0 0
      %1732 = vmatprep.subr.bf16.mxu0 0
      %1733 = vmatpush1.bf16.msra.mxu0 0
      %1734 = vmatprep.subr.bf16.mxu0 0
      %1735 = vmatpush1.bf16.msra.mxu0 %v1715
      %1736 = vmatprep.subr.bf16.mxu0 0
      %1737 = vmatpush2.bf16.msra.mxu0 0
      %1738 = vmatprep.subr.bf16.mxu0 0
      %1739 = vmatpush2.bf16.msra.mxu0 0
      %1740 = vmatprep.subr.bf16.mxu0 0
      %1741 = vmatpush2.bf16.msra.mxu0 0
      %1742 = vmatprep.subr.bf16.mxu0 0
      %1743 = vmatpush2.bf16.msra.mxu0 0
      %1744 = vmatprep.subr.bf16.mxu0 0
      %1745 = vmatpush2.bf16.msra.mxu0 0
      %1746 = vmatprep.subr.bf16.mxu0 0
      %1747 = vmatpush2.bf16.msra.mxu0 0
      %1748 = vmatprep.subr.bf16.mxu0 0
      %1749 = vmatpush2.bf16.msra.mxu0 0
      %1750 = vmatprep.subr.bf16.mxu0 0
      %1751 = vmatpush2.bf16.msra.mxu0 0
      %1752 = vmatprep.mubr.bf16.mxu0 0
      %1753 = vmatmul.mubr.bf16.gmra.mxu0 %v1718
      %v1754 = vpop.f32.mrf.mxu0
      %v1755 = vadd.f32 0.0, %v1754
      %v1756 = vpop.f32.mrf.mxu0
      %v1757 = vpop.f32.mrf.mxu0
      %v1758 = vadd.f32 0.0, %v1757
      %v1759 = vpop.f32.mrf.mxu0
      %1760 = vdwg.mxu0
      %v1761 = vadd.f32 %v1531, %v1755
      %v1762 = vadd.f32 %v1532, %v1758
      %s1763 = scalar_lea.vmem %s1, 216
      %v1764 = vld [vmem:[%s1763] sm:$0xf]
      %v1765 = vld [vmem:[%s1763 + $0x4] sm:$0xf]
      %1766 = vrot.lane.b32.xlu0 %v1592, 80
      %v1767 = vpop.permute.xlu0 %1766
      %v1770 = vunpack.c.l.b16 %v1764
      %v1771 = vunpack.c.l.b16 %v1765
      %v1772 = vpack.c.b16 %v1771, %v1770
      %v1775 = vsel %vm252, %v1767, 0
      %1777 = vmatprep.subr.bf16.mxu0 0
      %1778 = vmatpush1.bf16.msra.mxu0 0
      %1779 = vmatprep.subr.bf16.mxu0 0
      %1780 = vmatpush1.bf16.msra.mxu0 0
      %1781 = vmatprep.subr.bf16.mxu0 0
      %1782 = vmatpush1.bf16.msra.mxu0 0
      %1783 = vmatprep.subr.bf16.mxu0 0
      %1784 = vmatpush1.bf16.msra.mxu0 0
      %1785 = vmatprep.subr.bf16.mxu0 0
      %1786 = vmatpush1.bf16.msra.mxu0 0
      %1787 = vmatprep.subr.bf16.mxu0 0
      %1788 = vmatpush1.bf16.msra.mxu0 0
      %1789 = vmatprep.subr.bf16.mxu0 0
      %1790 = vmatpush1.bf16.msra.mxu0 0
      %1791 = vmatprep.subr.bf16.mxu0 0
      %1792 = vmatpush1.bf16.msra.mxu0 %v1772
      %1793 = vmatprep.subr.bf16.mxu0 0
      %1794 = vmatpush2.bf16.msra.mxu0 0
      %1795 = vmatprep.subr.bf16.mxu0 0
      %1796 = vmatpush2.bf16.msra.mxu0 0
      %1797 = vmatprep.subr.bf16.mxu0 0
      %1798 = vmatpush2.bf16.msra.mxu0 0
      %1799 = vmatprep.subr.bf16.mxu0 0
      %1800 = vmatpush2.bf16.msra.mxu0 0
      %1801 = vmatprep.subr.bf16.mxu0 0
      %1802 = vmatpush2.bf16.msra.mxu0 0
      %1803 = vmatprep.subr.bf16.mxu0 0
      %1804 = vmatpush2.bf16.msra.mxu0 0
      %1805 = vmatprep.subr.bf16.mxu0 0
      %1806 = vmatpush2.bf16.msra.mxu0 0
      %1807 = vmatprep.subr.bf16.mxu0 0
      %1808 = vmatpush2.bf16.msra.mxu0 0
      %1809 = vmatprep.mubr.bf16.mxu0 0
      %1810 = vmatmul.mubr.bf16.gmra.mxu0 %v1775
      %v1811 = vpop.f32.mrf.mxu0
      %v1812 = vadd.f32 0.0, %v1811
      %v1813 = vpop.f32.mrf.mxu0
      %v1814 = vpop.f32.mrf.mxu0
      %v1815 = vadd.f32 0.0, %v1814
      %v1816 = vpop.f32.mrf.mxu0
      %1817 = vdwg.mxu0
      %v1818 = vadd.f32 %v1588, %v1812
      %v1819 = vadd.f32 %v1589, %v1815
      %v1820 = vld [vmem:[%s219 + $0x7] sm:$0xff]
      %v1821 = vld [vmem:[%s219 + $0xf] sm:$0x7f]
      %v1822 = vpack.c.bf16 %v1821, %v1820
      %s1823 = scalar_lea.vmem %s1, 224
      %v1824 = vld [vmem:[%s1823] sm:$0xf]
      %v1825 = vld [vmem:[%s1823 + $0x4] sm:$0xf]
      %v1828 = vunpack.c.l.b16 %v1824
      %v1829 = vunpack.c.l.b16 %v1825
      %v1830 = vpack.c.b16 %v1829, %v1828
      %v1833 = vsel %vm252, %v1822, 0
      %1835 = vmatprep.subr.bf16.mxu0 0
      %1836 = vmatpush1.bf16.msra.mxu0 0
      %1837 = vmatprep.subr.bf16.mxu0 0
      %1838 = vmatpush1.bf16.msra.mxu0 0
      %1839 = vmatprep.subr.bf16.mxu0 0
      %1840 = vmatpush1.bf16.msra.mxu0 0
      %1841 = vmatprep.subr.bf16.mxu0 0
      %1842 = vmatpush1.bf16.msra.mxu0 0
      %1843 = vmatprep.subr.bf16.mxu0 0
      %1844 = vmatpush1.bf16.msra.mxu0 0
      %1845 = vmatprep.subr.bf16.mxu0 0
      %1846 = vmatpush1.bf16.msra.mxu0 0
      %1847 = vmatprep.subr.bf16.mxu0 0
      %1848 = vmatpush1.bf16.msra.mxu0 0
      %1849 = vmatprep.subr.bf16.mxu0 0
      %1850 = vmatpush1.bf16.msra.mxu0 %v1830
      %1851 = vmatprep.subr.bf16.mxu0 0
      %1852 = vmatpush2.bf16.msra.mxu0 0
      %1853 = vmatprep.subr.bf16.mxu0 0
      %1854 = vmatpush2.bf16.msra.mxu0 0
      %1855 = vmatprep.subr.bf16.mxu0 0
      %1856 = vmatpush2.bf16.msra.mxu0 0
      %1857 = vmatprep.subr.bf16.mxu0 0
      %1858 = vmatpush2.bf16.msra.mxu0 0
      %1859 = vmatprep.subr.bf16.mxu0 0
      %1860 = vmatpush2.bf16.msra.mxu0 0
      %1861 = vmatprep.subr.bf16.mxu0 0
      %1862 = vmatpush2.bf16.msra.mxu0 0
      %1863 = vmatprep.subr.bf16.mxu0 0
      %1864 = vmatpush2.bf16.msra.mxu0 0
      %1865 = vmatprep.subr.bf16.mxu0 0
      %1866 = vmatpush2.bf16.msra.mxu0 0
      %1867 = vmatprep.mubr.bf16.mxu0 0
      %1868 = vmatmul.mubr.bf16.gmra.mxu0 %v1833
      %v1869 = vpop.f32.mrf.mxu0
      %v1870 = vadd.f32 0.0, %v1869
      %v1871 = vpop.f32.mrf.mxu0
      %v1872 = vpop.f32.mrf.mxu0
      %v1873 = vadd.f32 0.0, %v1872
      %v1874 = vpop.f32.mrf.mxu0
      %1875 = vdwg.mxu0
      %v1876 = vadd.f32 %v1646, %v1870
      %v1877 = vadd.f32 %v1647, %v1873
      %s1878 = scalar_lea.vmem %s1, 232
      %v1879 = vld [vmem:[%s1878] sm:$0xf]
      %v1880 = vld [vmem:[%s1878 + $0x4] sm:$0xf]
      %1882 = vrot.lane.b32.xlu0 %v1822, 112
      %v1883 = vpop.permute.xlu0 %1882
      %v1886 = vunpack.c.l.b16 %v1879
      %v1887 = vunpack.c.l.b16 %v1880
      %v1888 = vpack.c.b16 %v1887, %v1886
      %v1891 = vsel %vm252, %v1883, 0
      %1893 = vmatprep.subr.bf16.mxu0 0
      %1894 = vmatpush1.bf16.msra.mxu0 0
      %1895 = vmatprep.subr.bf16.mxu0 0
      %1896 = vmatpush1.bf16.msra.mxu0 0
      %1897 = vmatprep.subr.bf16.mxu0 0
      %1898 = vmatpush1.bf16.msra.mxu0 0
      %1899 = vmatprep.subr.bf16.mxu0 0
      %1900 = vmatpush1.bf16.msra.mxu0 0
      %1901 = vmatprep.subr.bf16.mxu0 0
      %1902 = vmatpush1.bf16.msra.mxu0 0
      %1903 = vmatprep.subr.bf16.mxu0 0
      %1904 = vmatpush1.bf16.msra.mxu0 0
      %1905 = vmatprep.subr.bf16.mxu0 0
      %1906 = vmatpush1.bf16.msra.mxu0 0
      %1907 = vmatprep.subr.bf16.mxu0 0
      %1908 = vmatpush1.bf16.msra.mxu0 %v1888
      %1909 = vmatprep.subr.bf16.mxu0 0
      %1910 = vmatpush2.bf16.msra.mxu0 0
      %1911 = vmatprep.subr.bf16.mxu0 0
      %1912 = vmatpush2.bf16.msra.mxu0 0
      %1913 = vmatprep.subr.bf16.mxu0 0
      %1914 = vmatpush2.bf16.msra.mxu0 0
      %1915 = vmatprep.subr.bf16.mxu0 0
      %1916 = vmatpush2.bf16.msra.mxu0 0
      %1917 = vmatprep.subr.bf16.mxu0 0
      %1918 = vmatpush2.bf16.msra.mxu0 0
      %1919 = vmatprep.subr.bf16.mxu0 0
      %1920 = vmatpush2.bf16.msra.mxu0 0
      %1921 = vmatprep.subr.bf16.mxu0 0
      %1922 = vmatpush2.bf16.msra.mxu0 0
      %1923 = vmatprep.subr.bf16.mxu0 0
      %1924 = vmatpush2.bf16.msra.mxu0 0
      %1925 = vmatprep.mubr.bf16.mxu0 0
      %1926 = vmatmul.mubr.bf16.gmra.mxu0 %v1891
      %v1927 = vpop.f32.mrf.mxu0
      %v1928 = vadd.f32 0.0, %v1927
      %v1929 = vpop.f32.mrf.mxu0
      %v1930 = vpop.f32.mrf.mxu0
      %v1931 = vadd.f32 0.0, %v1930
      %v1932 = vpop.f32.mrf.mxu0
      %1933 = vdwg.mxu0
      %v1934 = vadd.f32 %v1704, %v1928
      %v1935 = vadd.f32 %v1705, %v1931
      %s1936 = scalar_lea.vmem %s1, 240
      %v1937 = vld [vmem:[%s1936] sm:$0xf]
      %v1938 = vld [vmem:[%s1936 + $0x4] sm:$0xf]
      %1939 = vrot.lane.b32.xlu0 %v1822, 96
      %v1940 = vpop.permute.xlu0 %1939
      %v1943 = vunpack.c.l.b16 %v1937
      %v1944 = vunpack.c.l.b16 %v1938
      %v1945 = vpack.c.b16 %v1944, %v1943
      %v1948 = vsel %vm252, %v1940, 0
      %1950 = vmatprep.subr.bf16.mxu0 0
      %1951 = vmatpush1.bf16.msra.mxu0 0
      %1952 = vmatprep.subr.bf16.mxu0 0
      %1953 = vmatpush1.bf16.msra.mxu0 0
      %1954 = vmatprep.subr.bf16.mxu0 0
      %1955 = vmatpush1.bf16.msra.mxu0 0
      %1956 = vmatprep.subr.bf16.mxu0 0
      %1957 = vmatpush1.bf16.msra.mxu0 0
      %1958 = vmatprep.subr.bf16.mxu0 0
      %1959 = vmatpush1.bf16.msra.mxu0 0
      %1960 = vmatprep.subr.bf16.mxu0 0
      %1961 = vmatpush1.bf16.msra.mxu0 0
      %1962 = vmatprep.subr.bf16.mxu0 0
      %1963 = vmatpush1.bf16.msra.mxu0 0
      %1964 = vmatprep.subr.bf16.mxu0 0
      %1965 = vmatpush1.bf16.msra.mxu0 %v1945
      %1966 = vmatprep.subr.bf16.mxu0 0
      %1967 = vmatpush2.bf16.msra.mxu0 0
      %1968 = vmatprep.subr.bf16.mxu0 0
      %1969 = vmatpush2.bf16.msra.mxu0 0
      %1970 = vmatprep.subr.bf16.mxu0 0
      %1971 = vmatpush2.bf16.msra.mxu0 0
      %1972 = vmatprep.subr.bf16.mxu0 0
      %1973 = vmatpush2.bf16.msra.mxu0 0
      %1974 = vmatprep.subr.bf16.mxu0 0
      %1975 = vmatpush2.bf16.msra.mxu0 0
      %1976 = vmatprep.subr.bf16.mxu0 0
      %1977 = vmatpush2.bf16.msra.mxu0 0
      %1978 = vmatprep.subr.bf16.mxu0 0
      %1979 = vmatpush2.bf16.msra.mxu0 0
      %1980 = vmatprep.subr.bf16.mxu0 0
      %1981 = vmatpush2.bf16.msra.mxu0 0
      %1982 = vmatprep.mubr.bf16.mxu0 0
      %1983 = vmatmul.mubr.bf16.gmra.mxu0 %v1948
      %v1984 = vpop.f32.mrf.mxu0
      %v1985 = vadd.f32 0.0, %v1984
      %v1986 = vpop.f32.mrf.mxu0
      %v1987 = vpop.f32.mrf.mxu0
      %v1988 = vadd.f32 0.0, %v1987
      %v1989 = vpop.f32.mrf.mxu0
      %1990 = vdwg.mxu0
      %v1991 = vadd.f32 %v1761, %v1985
      %v1992 = vadd.f32 %v1762, %v1988
      %s1993 = scalar_lea.vmem %s1, 248
      %v1994 = vld [vmem:[%s1993] sm:$0xf]
      %v1995 = vld [vmem:[%s1993 + $0x4] sm:$0xf]
      %1996 = vrot.lane.b32.xlu0 %v1822, 80
      %v1997 = vpop.permute.xlu0 %1996
      %v2000 = vunpack.c.l.b16 %v1994
      %v2001 = vunpack.c.l.b16 %v1995
      %v2002 = vpack.c.b16 %v2001, %v2000
      %v2005 = vsel %vm252, %v1997, 0
      %2007 = vmatprep.subr.bf16.mxu0 0
      %2008 = vmatpush1.bf16.msra.mxu0 0
      %2009 = vmatprep.subr.bf16.mxu0 0
      %2010 = vmatpush1.bf16.msra.mxu0 0
      %2011 = vmatprep.subr.bf16.mxu0 0
      %2012 = vmatpush1.bf16.msra.mxu0 0
      %2013 = vmatprep.subr.bf16.mxu0 0
      %2014 = vmatpush1.bf16.msra.mxu0 0
      %2015 = vmatprep.subr.bf16.mxu0 0
      %2016 = vmatpush1.bf16.msra.mxu0 0
      %2017 = vmatprep.subr.bf16.mxu0 0
      %2018 = vmatpush1.bf16.msra.mxu0 0
      %2019 = vmatprep.subr.bf16.mxu0 0
      %2020 = vmatpush1.bf16.msra.mxu0 0
      %2021 = vmatprep.subr.bf16.mxu0 0
      %2022 = vmatpush1.bf16.msra.mxu0 %v2002
      %2023 = vmatprep.subr.bf16.mxu0 0
      %2024 = vmatpush2.bf16.msra.mxu0 0
      %2025 = vmatprep.subr.bf16.mxu0 0
      %2026 = vmatpush2.bf16.msra.mxu0 0
      %2027 = vmatprep.subr.bf16.mxu0 0
      %2028 = vmatpush2.bf16.msra.mxu0 0
      %2029 = vmatprep.subr.bf16.mxu0 0
      %2030 = vmatpush2.bf16.msra.mxu0 0
      %2031 = vmatprep.subr.bf16.mxu0 0
      %2032 = vmatpush2.bf16.msra.mxu0 0
      %2033 = vmatprep.subr.bf16.mxu0 0
      %2034 = vmatpush2.bf16.msra.mxu0 0
      %2035 = vmatprep.subr.bf16.mxu0 0
      %2036 = vmatpush2.bf16.msra.mxu0 0
      %2037 = vmatprep.subr.bf16.mxu0 0
      %2038 = vmatpush2.bf16.msra.mxu0 0
      %2039 = vmatprep.mubr.bf16.mxu0 0
      %2040 = vmatmul.mubr.bf16.gmra.mxu0 %v2005
      %v2041 = vpop.f32.mrf.mxu0
      %v2042 = vadd.f32 0.0, %v2041
      %v2043 = vpop.f32.mrf.mxu0
      %v2044 = vpop.f32.mrf.mxu0
      %v2045 = vadd.f32 0.0, %v2044
      %v2046 = vpop.f32.mrf.mxu0
      %2047 = vdwg.mxu0
      %v2048 = vadd.f32 %v1818, %v2042
      %v2049 = vadd.f32 %v1819, %v2045
      %2052 = vrot.lane.b32.xlu0 %v1934, 16
      %v2053 = vpop.permute.xlu0 %2052
      %2054 = vrot.lane.b32.xlu0 %v1935, 16
      %v2055 = vpop.permute.xlu0 %2054
      %2060 = vrot.lane.b32.xlu0 %v1991, 32
      %v2061 = vpop.permute.xlu0 %2060
      %2062 = vrot.lane.b32.xlu0 %v1992, 32
      %v2063 = vpop.permute.xlu0 %2062
      %2068 = vrot.lane.b32.xlu0 %v2048, 48
      %v2069 = vpop.permute.xlu0 %2068
      %2070 = vrot.lane.b32.xlu0 %v2049, 48
      %v2071 = vpop.permute.xlu0 %2070
      %v2074 = vsel %vm252, %v1876, %v2053
      %v2075 = vsel %vm252, %v1877, %v2055
      %vm2076 = vcmask 261120
      %v2077 = vsel %vm2076, %v2074, %v2061
      %v2078 = vsel %vm2076, %v2075, %v2063
      %vm2079 = vcmask 392192
      %v2080 = vsel %vm2079, %v2077, %v2069
      %v2081 = vsel %vm2079, %v2078, %v2071
      %v2082 = vld [vmem:[%s2] sm:$0x1]
      %v2084 = vlaneseq
      %v2085 = vshrl.u32 %v2084, 7
      %v2086 = vsub.s32 0, %v2085
      %v2087 = vrot.slane %v2082, %v2086
      %v2089 = vadd.f32 %v2080, %v2087
      %v2090 = vadd.f32 %v2081, %v2087
      %v2091 = vmul.f32 %v2089, 0.5
      %v2092 = vmul.f32 %v2090, 0.5
      %v2093 = vmul.f32 %v2089, 0.044715
      %v2094 = vmul.f32 %v2090, 0.044715
      %v2095 = vmul.f32 %v2093, %v2089
      %v2096 = vmul.f32 %v2094, %v2090
      %v2097 = vmul.f32 %v2095, %v2089
      %v2098 = vmul.f32 %v2096, %v2090
      %v2099 = vadd.f32 %v2089, %v2097
      %v2100 = vadd.f32 %v2090, %v2098
      %v2101 = vmul.f32 %v2099, 0.7978846
      %v2102 = vmul.f32 %v2100, 0.7978846
      %v2103 = vtanh.pop %v2101
      %v2104 = vtanh.pop %v2102
      %v2105 = vadd.f32 %v2103, 1.0
      %v2106 = vadd.f32 %v2104, 1.0
      %v2107 = vmul.f32 %v2091, %v2105
      %v2108 = vmul.f32 %v2092, %v2106
      %v2109 = vadd.f32 %v2107, %v1130
      %v2110 = vadd.f32 %v2108, %v1131
      %v2111 = vld [vmem:[%s3] sm:$0x1]
      %v2112 = vld [vmem:[%s4] sm:$0x1]
      %vm2113 = vcmask 523264
      %v2114 = vsel %vm2113, %v2109, 0.0
      %2115 = vadd.xlane.f32.xlu0 %v2114
      %v2116 = vpop.xlane.xlu0 %2115
      %vm2117 = vcmask 522240
      %v2118 = vsel %vm2117, %v2110, 0.0
      %2119 = vadd.xlane.f32.xlu0 %v2118
      %v2120 = vpop.xlane.xlu0 %2119
      %v2121 = vrcp.pop 64.0
      %v2122 = vmul.f32 %v2116, %v2121
      %v2123 = vmul.f32 %v2120, %v2121
      %v2124 = vsub.f32 %v2109, %v2122
      %v2125 = vsub.f32 %v2110, %v2123
      %v2126 = vmul.f32 %v2124, %v2124
      %v2127 = vmul.f32 %v2125, %v2125
      %v2128 = vsel %vm2113, %v2126, 0.0
      %2129 = vadd.xlane.f32.xlu0 %v2128
      %v2130 = vpop.xlane.xlu0 %2129
      %v2131 = vsel %vm2117, %v2127, 0.0
      %2132 = vadd.xlane.f32.xlu0 %v2131
      %v2133 = vpop.xlane.xlu0 %2132
      %v2134 = vmul.f32 %v2130, %v2121
      %v2135 = vmul.f32 %v2133, %v2121
      %v2136 = vadd.f32 %v2134, 1e-05
      %v2137 = vadd.f32 %v2135, 1e-05
      %v2138 = vrsqrt.pop %v2136
      %v2139 = vrsqrt.pop %v2137
      %v2140 = vmul.f32 %v2124, %v2138
      %v2141 = vmul.f32 %v2125, %v2139
      %v2143 = vlaneseq
      %v2144 = vshrl.u32 %v2143, 7
      %v2145 = vsub.s32 0, %v2144
      %v2146 = vrot.slane %v2111, %v2145
      %v2148 = vmul.f32 %v2140, %v2146
      %v2149 = vmul.f32 %v2141, %v2146
      %v2151 = vlaneseq
      %v2152 = vshrl.u32 %v2151, 7
      %v2153 = vsub.s32 0, %v2152
      %v2154 = vrot.slane %v2112, %v2153
      %v2156 = vadd.f32 %v2148, %v2154
      %v2157 = vadd.f32 %v2149, %v2154
      %2158 = vst.msk [vmem:[%s224] sm:$0xff] %vm2113, %v2156
      %2159 = vst.msk [vmem:[%s224 + $0x8] sm:$0x7f] %vm2117, %v2157
      %p2160 = scmp.lt.s32.totalorder %s16, 1
      %s2161 = scalar_select %p2160, %s16, 1
      %s2162 = smul.addr %s2161, 2
      %s2163 = smul.addr %s2162, 8
      %s2164 = scalar_lea.vmem %s5, %s2163
      // Predicated region
      $region41: #{forward.14} parent=39 // pred_check
        %p2165 = pneg %p144
      $region42: #{forward.14} parent=39 // pred_check_branch
        %2167 = sbr.rel (%p2165) target = $region44
      $region43: #{forward.14} parent=39 // pred_region
        _
      $region44: #{forward.14} parent=39 // pred_fallthru
        _
    $region40: #{forward.14} parent=5 // pred_fallthru
      _
    %p2168 = scmp.le.s32.totalorder 2, %s11
    // Predicated region
    $region45: #{forward.14} parent=5 // pred_check
      %p2169 = pneg %p2168
    $region46: #{forward.14} parent=5 // pred_check_branch
      %2171 = sbr.rel (%p2169) target = $region48
    $region47: #{forward.14} parent=5 // pred_region
      %s2172 = ssub.s32 %s11, 2
      // Predicated region
      $region49: #{forward.14} parent=47 // pred_check
        %p2173 = pneg %p150
      $region50: #{forward.14} parent=47 // pred_check_branch
        %2175 = sbr.rel (%p2173) target = $region52
      $region51: #{forward.14} parent=47 // pred_region
        %p2176 = scmp.lt.s32.totalorder %s17, 1
        %s2177 = scalar_select %p2176, %s17, 1
        %s2178 = smul.addr %s2177, 2
        %s2179 = smul.addr %s2178, 8
        %s2180 = scalar_lea.vmem %s5, %s2179
      $region52: #{forward.14} parent=47 // pred_fallthru
        _
    $region48: #{forward.14} parent=5 // pred_fallthru
      _
  $region6: #{forward.14} parent=0 // loop_footer
    %s15 = sadd.s32 1, %s11
  $region7: #{forward.14} parent=0 // loop_footer_branch
    %10 = sbr.rel target = $region3
  $region8: #{forward.14} parent=0 // loop_exit
    _

</llo_original>
